<compile_context>
chip_gen: v7x
topology: tpu7x:2x2x1
jax: 0.10.0
libtpu: 0.0.40
codegen_flags: <defaults>
</compile_context>

<pallas_src>
import functools
import math

import numpy as np
import jax
import jax.numpy as jnp
from jax.experimental import pallas as pl
from jax.experimental.pallas import tpu as pltpu

# ----------------------------------------------------------------------------
# Amino-acid bin widths (replicates get_bins_assigments: bin = floor(mz / res))
# ----------------------------------------------------------------------------
AA_MZ_VALS = np.array([
    57.021464, 71.037114, 87.032028, 97.052764, 99.068414, 101.047679,
    113.084064, 114.042927, 115.026943, 128.058578, 128.094963, 129.042593,
    131.040485, 137.058912, 147.035395, 147.068414, 156.101111,
    160.0306487236, 163.063329, 186.079313])


def aa_bin_weights(bin_resolution=1):
    idx = np.floor(AA_MZ_VALS / bin_resolution).astype(np.int64)
    return tuple(sorted(set(int(i) for i in idx)))


AA_WEIGHTS = aa_bin_weights(1)          # 18 unique integer widths, max = 186
PAD = 256                               # one-sided halo: >= max width, mult of 128
# Contraction-block order of the packed matmul: 18 left taps, 1 shared middle
# tap (weights pre-summed over the 18 widths), 18 right taps.
OFFSETS = tuple(-w for w in AA_WEIGHTS) + (0,) + tuple(AA_WEIGHTS)
N_BLOCKS = len(OFFSETS)                 # 37


# ----------------------------------------------------------------------------
# Fused whole-network Pallas kernel (one grid step = one batch element)
# ----------------------------------------------------------------------------
def p2pnet_kernel(x_ref, ws_ref, ps_ref, wm_ref, pm_ref, we_ref, be_ref,
                  o_ref, hb_ref, h_ref, slab_ref, *,
                  offsets, pad, num_bins, n_mid, in_ch, in_ch_p, k_chunk,
                  fold_bn):
    C = h_ref.shape[0]                  # working channel count (= hidden)
    out_ch = o_ref.shape[1]
    L = num_bins
    n_blocks = len(offsets)

    # ---- per-grid-step init of the padded bf16 shadow activation -----------
    # Zeroing the whole (C, Lp) shadow is a tiny store and keeps halo + channel
    # padding correct on megacore parts, where scratch is per-core (so a
    # pl.when(program_id == 0)-only memset would leave one core uninitialized).
    hb_ref[...] = jnp.zeros_like(hb_ref)
    hb_ref[:in_ch, pad:pad + L] = x_ref[0].astype(jnp.bfloat16)

    def conv_layer(load_w, cw, c_out):
        """One packed dilated-conv layer, K-chunked.

        load_w(a, b) -> (c_out, b-a) bf16 column slice of the packed weights.
        cw = channels per offset block of the contraction.
        Builds n_off lane-shifted ref-slices of the activation window into the
        slab scratch (K_chunk = n_off*cw rows), matmuls against the matching
        weight columns and accumulates in f32.  The next chunk's slab stores
        co-issue under the previous chunk's MXU pushes.
        """
        n_off = max(1, k_chunk // cw)
        y = jnp.zeros((c_out, L), jnp.float32)
        for c0 in range(0, n_blocks, n_off):
            n = min(n_off, n_blocks - c0)
            for j in range(n):
                s = pad + offsets[c0 + j]          # 0 <= s and s + L <= Lp
                slab_ref[j * cw:(j + 1) * cw, :] = hb_ref[:cw, s:s + L]
            y = y + jnp.dot(load_w(c0 * cw, (c0 + n) * cw),
                            slab_ref[:n * cw, :],
                            preferred_element_type=jnp.float32)
        return y

    def bn_epilogue(y, load_p):
        # conv bias -> ReLU -> eval-BN affine.  When fold_bn, the BN scale is
        # already folded into the bf16 weights and the bias, so only `+ shift`
        # remains after the ReLU.
        y = jnp.maximum(y + load_p(0), 0.0)
        if not fold_bn:
            y = y * load_p(1)
        return y + load_p(2)

    # ---- start block: conv -> ReLU -> BN (reads only the in_ch_p lead rows) -
    y = conv_layer(lambda a, b: ws_ref[:, a:b], in_ch_p, C)
    y = bn_epilogue(y, lambda j: ps_ref[j])
    h_ref[...] = y                                       # f32 residual state
    hb_ref[:, pad:pad + L] = y.astype(jnp.bfloat16)      # bf16 conv input

    # ---- residual mid blocks: h <- h + BN(ReLU(conv(h))) --------------------
    for i in range(n_mid):
        y = conv_layer(lambda a, b, i=i: wm_ref[i, :, a:b], C, C)
        y = bn_epilogue(y, lambda j, i=i: pm_ref[i, j])
        h_new = h_ref[...] + y
        h_ref[...] = h_new
        hb_ref[:, pad:pad + L] = h_new.astype(jnp.bfloat16)

    # ---- end block: conv + bias only (no ReLU, no BN) -----------------------
    y = conv_layer(lambda a, b: we_ref[:, a:b], C, out_ch)
    o_ref[0] = (y + be_ref[...]).astype(o_ref.dtype)


def p2pnet_forward(x, packed, *, pad=PAD, offsets=OFFSETS, k_chunk=256):
    """x: (B, in_ch, L) f32 (raw, unpadded).  packed: dict from pack_params()."""
    ws, ps, wm, pm, we, be = (packed[k] for k in ("ws", "ps", "wm", "pm", "we", "be"))
    n_mid = packed["n_mid"]
    fold_bn = packed["fold_bn"]
    in_ch_p = packed["in_ch_p"]
    B, in_ch, L = x.shape
    C = ws.shape[0]                      # hidden channels
    out_ch = we.shape[0]
    n_blocks = len(offsets)

    # bf16 packs 16 sublanes per vreg: C must be a multiple of 16 so the slab /
    # shadow row strides stay packed-sublane aligned.
    assert in_ch <= C and C % 16 == 0
    assert pad >= max(AA_WEIGHTS) and pad % 128 == 0
    assert ws.shape[1] == n_blocks * in_ch_p
    assert we.shape[1] == n_blocks * C
    Lp = L + 2 * pad

    # Slab scratch holds one K-chunk of lane-shifted activation copies.
    # k_chunk = 256 matches the v6e/v7x MXU contraction tile (use 128 on v5e).
    def _rows_for(cw):
        return max(1, k_chunk // cw) * cw
    slab_rows = max(_rows_for(C), _rows_for(in_ch_p))

    kern = functools.partial(
        p2pnet_kernel, offsets=tuple(offsets), pad=pad, num_bins=L,
        n_mid=n_mid, in_ch=in_ch, in_ch_p=in_ch_p, k_chunk=k_chunk,
        fold_bn=fold_bn)

    flops = 2 * B * L * n_blocks * (C * in_ch_p + n_mid * C * C + out_ch * C)
    param_bytes = sum(int(t.size) * t.dtype.itemsize
                      for t in (ws, ps, wm, pm, we, be))
    bytes_accessed = int(x.size) * 4 + param_bytes + B * out_ch * L * 4

    # Explicit VMEM budget: scratch + double-buffered blocks, with margin.
    scratch_bytes = C * Lp * 2 + C * L * 4 + slab_rows * L * 2
    block_bytes = 2 * (in_ch * L * 4) + 2 * (out_ch * L * 4) + 2 * param_bytes
    vmem_limit = int(min(max(2 * (scratch_bytes + block_bytes) + (4 << 20),
                             32 << 20), 100 << 20))

    return pl.pallas_call(
        kern,
        out_shape=jax.ShapeDtypeStruct((B, out_ch, L), jnp.float32),
        grid=(B,),
        in_specs=[
            pl.BlockSpec((1, in_ch, L), lambda b: (b, 0, 0)),   # raw input
            pl.BlockSpec(ws.shape, lambda b: (0, 0)),           # W_start packed
            pl.BlockSpec(ps.shape, lambda b: (0, 0, 0)),        # bias/scale/shift
            pl.BlockSpec(wm.shape, lambda b: (0, 0, 0)),        # W_mid packed
            pl.BlockSpec(pm.shape, lambda b: (0, 0, 0, 0)),     # mid params
            pl.BlockSpec(we.shape, lambda b: (0, 0)),           # W_end packed
            pl.BlockSpec(be.shape, lambda b: (0, 0)),           # end bias
        ],
        out_specs=pl.BlockSpec((1, out_ch, L), lambda b: (b, 0, 0)),
        scratch_shapes=[
            pltpu.VMEM((C, Lp), jnp.bfloat16),         # padded bf16 shadow act.
            pltpu.VMEM((C, L), jnp.float32),           # f32 residual accumulator
            pltpu.VMEM((slab_rows, L), jnp.bfloat16),  # one K-chunk of shifts
        ],
        compiler_params=pltpu.CompilerParams(
            dimension_semantics=("parallel",),
            vmem_limit_bytes=vmem_limit),
        cost_estimate=pl.CostEstimate(flops=int(flops), transcendentals=0,
                                      bytes_accessed=int(bytes_accessed)),
    )(x, ws, ps, wm, pm, we, be)


# ----------------------------------------------------------------------------
# Parameters (deterministic synthetic init), packing, and pure-JAX reference
# ----------------------------------------------------------------------------
def _init_layer(key, c_in, c_out, with_bn, n_w):
    k1, k2, k3, k4 = jax.random.split(key, 4)
    W = 0.05 * jax.random.normal(k1, (n_w, 3, c_out, c_in), jnp.float32)
    b = 0.05 * jax.random.normal(k2, (n_w, c_out), jnp.float32)
    if with_bn:
        gamma = 1.0 + 0.1 * jax.random.normal(k3, (c_out,), jnp.float32)
        beta = 0.1 * jax.random.normal(k4, (c_out,), jnp.float32)
    else:
        gamma = jnp.ones((c_out,), jnp.float32)
        beta = jnp.zeros((c_out,), jnp.float32)
    return {"W": W, "b": b, "gamma": gamma, "beta": beta}


def init_params(key, in_ch, hidden, out_ch, num_convs, n_w=len(AA_WEIGHTS)):
    keys = jax.random.split(key, num_convs)
    return {
        "start": _init_layer(keys[0], in_ch, hidden, True, n_w),
        "mid": [_init_layer(keys[i + 1], hidden, hidden, True, n_w)
                for i in range(num_convs - 2)],
        "end": _init_layer(keys[num_convs - 1], in_ch_dummy := hidden, out_ch, False, n_w)
        if False else _init_layer(keys[num_convs - 1], hidden, out_ch, False, n_w),
    }


def _pack_viewconv(layer, c_pack, fold_scale):
    """Pack one ViewConv into (C_out, 37*c_pack) bf16 weights + f32 affine."""
    W, b, gamma, beta = layer["W"], layer["b"], layer["gamma"], layer["beta"]
    n_w, _, c_out, c_in = W.shape
    mid = jnp.sum(W[:, 1], axis=0)                        # shared middle tap
    blocks = ([W[i, 0] for i in range(n_w)] + [mid] +     # order matches OFFSETS
              [W[i, 2] for i in range(n_w)])
    blocks = [jnp.pad(blk, ((0, 0), (0, c_pack - c_in))) for blk in blocks]
    w = jnp.concatenate(blocks, axis=1)                   # (c_out, 37*c_pack) f32
    bias = jnp.sum(b, axis=0)                             # (c_out,)
    eps = 1e-5                                            # eval BN: mean=0, var=1
    scale = gamma / jnp.sqrt(1.0 + eps)
    shift = beta
    if fold_scale:
        # relu(z)*s == relu(s*z) only for s > 0; pack_params gates this fold on
        # every gamma being positive (trained checkpoints may violate it).
        w = w * scale[:, None]
        bias = bias * scale
    return (w.astype(jnp.bfloat16), bias[:, None].astype(jnp.float32),
            scale[:, None], shift[:, None])


def pack_params(params, hidden):
    in_ch = params["start"]["W"].shape[3]
    assert in_ch <= hidden
    in_ch_p = min(((in_ch + 15) // 16) * 16, hidden)      # bf16-sublane aligned

    gammas = [params["start"]["gamma"]] + [p["gamma"] for p in params["mid"]]
    fold_bn = bool(np.all(np.concatenate([np.asarray(g) for g in gammas]) > 0))

    ws, b0, s0, h0 = _pack_viewconv(params["start"], c_pack=in_ch_p,
                                    fold_scale=fold_bn)
    ps = jnp.stack([b0, s0, h0])                          # (3, hidden, 1)
    mids = [_pack_viewconv(p, c_pack=hidden, fold_scale=fold_bn)
            for p in params["mid"]]
    n_mid = len(mids)
    K = N_BLOCKS * hidden
    if n_mid:
        wm = jnp.stack([m[0] for m in mids])              # (n_mid, hidden, K)
        pm = jnp.stack([jnp.stack([m[1], m[2], m[3]]) for m in mids])
    else:                                                 # dummies, never read
        wm = jnp.zeros((1, hidden, K), jnp.bfloat16)
        pm = jnp.zeros((1, 3, hidden, 1), jnp.float32)
    we, be, _, _ = _pack_viewconv(params["end"], c_pack=hidden, fold_scale=False)
    return {"ws": ws, "ps": ps, "wm": wm, "pm": pm, "we": we, "be": be,
            "n_mid": n_mid, "fold_bn": fold_bn, "in_ch_p": in_ch_p}


def viewconv_ref(x, layer, *, relu, bn, aa_weights=AA_WEIGHTS):
    """Literal pad/view/Conv2d(3,1)/flatten/truncate path, f32 HIGHEST precision."""
    W, b, gamma, beta = layer["W"], layer["b"], layer["gamma"], layer["beta"]
    B, C, L = x.shape
    c_out = W.shape[2]
    total = jnp.zeros((B, c_out, L), jnp.float32)
    for wi, w in enumerate(aa_weights):
        padr = int(math.ceil(w - L % w))
        xp = jnp.pad(x, ((0, 0), (0, 0), (0, padr)))
        H = xp.shape[2] // w
        xv = xp.reshape(B, C, H, w)
        xr = jnp.pad(xv, ((0, 0), (0, 0), (1, 1), (0, 0)))
        y = jnp.zeros((B, c_out, H, w), jnp.float32)
        for tap in range(3):
            y = y + jnp.einsum("oc,bchw->bohw", W[wi, tap],
                               xr[:, :, tap:tap + H, :],
                               precision=jax.lax.Precision.HIGHEST)
        total = total + y.reshape(B, c_out, -1)[:, :, :L]
    total = total + jnp.sum(b, axis=0)[None, :, None]
    if relu:
        total = jnp.maximum(total, 0.0)
    if bn:
        eps = 1e-5
        total = (total * (gamma / jnp.sqrt(1.0 + eps))[None, :, None]
                 + beta[None, :, None])
    return total


def p2pnet_ref(x, params):
    h = viewconv_ref(x, params["start"], relu=True, bn=True)
    for p in params["mid"]:
        h = h + viewconv_ref(h, p, relu=True, bn=True)
    return viewconv_ref(h, params["end"], relu=False, bn=False)


# ----------------------------------------------------------------------------
if __name__ == "__main__":
    B, IN_CH, HIDDEN, OUT_CH, NUM_CONVS, NUM_BINS = 2, 4, 32, 2, 3, 256

    key = jax.random.PRNGKey(0)
    kx, kp = jax.random.split(key)
    x = jax.random.normal(kx, (B, IN_CH, NUM_BINS), jnp.float32)
    params = init_params(kp, IN_CH, HIDDEN, OUT_CH, NUM_CONVS)
    packed = pack_params(params, HIDDEN)

    out = jax.block_until_ready(p2pnet_forward(x, packed))
    assert out.shape == (B, OUT_CH, NUM_BINS), out.shape

    ref = jax.block_until_ready(p2pnet_ref(x, params))
    # bf16 MXU operands (f32 accumulation) through 3 stacked layers: tolerance
    # sized to bf16 operand rounding; f32-HIGHEST reference above.
    np.testing.assert_allclose(np.asarray(out), np.asarray(ref),
                               rtol=2e-2, atol=5e-2)
    print("KERNEL_OK")
</pallas_src>

<mosaic_0001>
module attributes {stable_mosaic.version = 11 : i64} {
  func.func @p2pnet_kernel(%arg0: i32, %arg1: memref<1x4x256xf32, #tpu.memory_space<vmem>>, %arg2: memref<32x592xbf16, #tpu.memory_space<vmem>>, %arg3: memref<3x32x1xf32, #tpu.memory_space<vmem>>, %arg4: memref<1x32x1184xbf16, #tpu.memory_space<vmem>>, %arg5: memref<1x3x32x1xf32, #tpu.memory_space<vmem>>, %arg6: memref<2x1184xbf16, #tpu.memory_space<vmem>>, %arg7: memref<2x1xf32, #tpu.memory_space<vmem>>, %arg8: memref<1x2x256xf32, #tpu.memory_space<vmem>>, %arg9: memref<32x768xbf16, #tpu.memory_space<vmem>>, %arg10: memref<32x256xf32, #tpu.memory_space<vmem>>, %arg11: memref<256x256xbf16, #tpu.memory_space<vmem>>) attributes {dimension_semantics = [#tpu.dimension_semantics<parallel>], iteration_bounds = array<i64: 2>, scalar_prefetch = 0 : i64, scratch_operands = 3 : i64, tpu.core_type = #tpu.core_type<tc>, window_params = [{transform_indices = @transform_0, window_bounds = array<i64: 1, 4, 256>}, {pipeline_mode = #tpu.pipeline_mode<synchronous>, transform_indices = @transform_1, window_bounds = array<i64: 32, 592>}, {pipeline_mode = #tpu.pipeline_mode<synchronous>, transform_indices = @transform_2, window_bounds = array<i64: 3, 32, 1>}, {pipeline_mode = #tpu.pipeline_mode<synchronous>, transform_indices = @transform_3, window_bounds = array<i64: 1, 32, 1184>}, {pipeline_mode = #tpu.pipeline_mode<synchronous>, transform_indices = @transform_4, window_bounds = array<i64: 1, 3, 32, 1>}, {pipeline_mode = #tpu.pipeline_mode<synchronous>, transform_indices = @transform_5, window_bounds = array<i64: 2, 1184>}, {pipeline_mode = #tpu.pipeline_mode<synchronous>, transform_indices = @transform_6, window_bounds = array<i64: 2, 1>}, {transform_indices = @transform_7, window_bounds = array<i64: 1, 2, 256>}]} {
    %cst = arith.constant 0.000000e+00 : bf16
    %0 = vector.broadcast %cst : bf16 to vector<32x768xbf16>
    %c0 = arith.constant 0 : index
    %c0_0 = arith.constant 0 : index
    %1 = vector.load %arg9[%c0, %c0_0] : memref<32x768xbf16, #tpu.memory_space<vmem>>, vector<32x768xbf16>
    tpu.vector_store %arg9[%c0, %c0_0], %0 {strides = array<i32>} : memref<32x768xbf16, #tpu.memory_space<vmem>>, vector<32x768xbf16>,
    %c0_1 = arith.constant 0 : index
    %c0_2 = arith.constant 0 : index
    %c0_3 = arith.constant 0 : index
    %2 = vector.load %arg1[%c0_1, %c0_2, %c0_3] : memref<1x4x256xf32, #tpu.memory_space<vmem>>, vector<1x4x256xf32>
    %3 = vector.shape_cast %2 : vector<1x4x256xf32> to vector<4x256xf32>
    %4 = arith.truncf %3 : vector<4x256xf32> to vector<4x256xbf16>
    %c0_4 = arith.constant 0 : index
    %c256 = arith.constant 256 : index
    %5 = vector.load %arg9[%c0_4, %c256] : memref<32x768xbf16, #tpu.memory_space<vmem>>, vector<4x256xbf16>
    tpu.vector_store %arg9[%c0_4, %c256], %4 {strides = array<i32>} : memref<32x768xbf16, #tpu.memory_space<vmem>>, vector<4x256xbf16>,
    %cst_5 = arith.constant 0.000000e+00 : f32
    %6 = vector.broadcast %cst_5 : f32 to vector<32x256xf32>
    %c0_6 = arith.constant 0 : index
    %c199 = arith.constant 199 : index
    %7 = vector.load %arg9[%c0_6, %c199] : memref<32x768xbf16, #tpu.memory_space<vmem>>, vector<16x256xbf16>
    %c0_7 = arith.constant 0 : index
    %c0_8 = arith.constant 0 : index
    %8 = vector.load %arg11[%c0_7, %c0_8] : memref<256x256xbf16, #tpu.memory_space<vmem>>, vector<16x256xbf16>
    tpu.vector_store %arg11[%c0_7, %c0_8], %7 {strides = array<i32>} : memref<256x256xbf16, #tpu.memory_space<vmem>>, vector<16x256xbf16>,
    %c0_9 = arith.constant 0 : index
    %c185 = arith.constant 185 : index
    %9 = vector.load %arg9[%c0_9, %c185] : memref<32x768xbf16, #tpu.memory_space<vmem>>, vector<16x256xbf16>
    %c16 = arith.constant 16 : index
    %c0_10 = arith.constant 0 : index
    %10 = vector.load %arg11[%c16, %c0_10] : memref<256x256xbf16, #tpu.memory_space<vmem>>, vector<16x256xbf16>
    tpu.vector_store %arg11[%c16, %c0_10], %9 {strides = array<i32>} : memref<256x256xbf16, #tpu.memory_space<vmem>>, vector<16x256xbf16>,
    %c0_11 = arith.constant 0 : index
    %c169 = arith.constant 169 : index
    %11 = vector.load %arg9[%c0_11, %c169] : memref<32x768xbf16, #tpu.memory_space<vmem>>, vector<16x256xbf16>
    %c32 = arith.constant 32 : index
    %c0_12 = arith.constant 0 : index
    %12 = vector.load %arg11[%c32, %c0_12] : memref<256x256xbf16, #tpu.memory_space<vmem>>, vector<16x256xbf16>
    tpu.vector_store %arg11[%c32, %c0_12], %11 {strides = array<i32>} : memref<256x256xbf16, #tpu.memory_space<vmem>>, vector<16x256xbf16>,
    %c0_13 = arith.constant 0 : index
    %c159 = arith.constant 159 : index
    %13 = vector.load %arg9[%c0_13, %c159] : memref<32x768xbf16, #tpu.memory_space<vmem>>, vector<16x256xbf16>
    %c48 = arith.constant 48 : index
    %c0_14 = arith.constant 0 : index
    %14 = vector.load %arg11[%c48, %c0_14] : memref<256x256xbf16, #tpu.memory_space<vmem>>, vector<16x256xbf16>
    tpu.vector_store %arg11[%c48, %c0_14], %13 {strides = array<i32>} : memref<256x256xbf16, #tpu.memory_space<vmem>>, vector<16x256xbf16>,
    %c0_15 = arith.constant 0 : index
    %c157 = arith.constant 157 : index
    %15 = vector.load %arg9[%c0_15, %c157] : memref<32x768xbf16, #tpu.memory_space<vmem>>, vector<16x256xbf16>
    %c64 = arith.constant 64 : index
    %c0_16 = arith.constant 0 : index
    %16 = vector.load %arg11[%c64, %c0_16] : memref<256x256xbf16, #tpu.memory_space<vmem>>, vector<16x256xbf16>
    tpu.vector_store %arg11[%c64, %c0_16], %15 {strides = array<i32>} : memref<256x256xbf16, #tpu.memory_space<vmem>>, vector<16x256xbf16>,
    %c0_17 = arith.constant 0 : index
    %c155 = arith.constant 155 : index
    %17 = vector.load %arg9[%c0_17, %c155] : memref<32x768xbf16, #tpu.memory_space<vmem>>, vector<16x256xbf16>
    %c80 = arith.constant 80 : index
    %c0_18 = arith.constant 0 : index
    %18 = vector.load %arg11[%c80, %c0_18] : memref<256x256xbf16, #tpu.memory_space<vmem>>, vector<16x256xbf16>
    tpu.vector_store %arg11[%c80, %c0_18], %17 {strides = array<i32>} : memref<256x256xbf16, #tpu.memory_space<vmem>>, vector<16x256xbf16>,
    %c0_19 = arith.constant 0 : index
    %c143 = arith.constant 143 : index
    %19 = vector.load %arg9[%c0_19, %c143] : memref<32x768xbf16, #tpu.memory_space<vmem>>, vector<16x256xbf16>
    %c96 = arith.constant 96 : index
    %c0_20 = arith.constant 0 : index
    %20 = vector.load %arg11[%c96, %c0_20] : memref<256x256xbf16, #tpu.memory_space<vmem>>, vector<16x256xbf16>
    tpu.vector_store %arg11[%c96, %c0_20], %19 {strides = array<i32>} : memref<256x256xbf16, #tpu.memory_space<vmem>>, vector<16x256xbf16>,
    %c0_21 = arith.constant 0 : index
    %c142 = arith.constant 142 : index
    %21 = vector.load %arg9[%c0_21, %c142] : memref<32x768xbf16, #tpu.memory_space<vmem>>, vector<16x256xbf16>
    %c112 = arith.constant 112 : index
    %c0_22 = arith.constant 0 : index
    %22 = vector.load %arg11[%c112, %c0_22] : memref<256x256xbf16, #tpu.memory_space<vmem>>, vector<16x256xbf16>
    tpu.vector_store %arg11[%c112, %c0_22], %21 {strides = array<i32>} : memref<256x256xbf16, #tpu.memory_space<vmem>>, vector<16x256xbf16>,
    %c0_23 = arith.constant 0 : index
    %c141 = arith.constant 141 : index
    %23 = vector.load %arg9[%c0_23, %c141] : memref<32x768xbf16, #tpu.memory_space<vmem>>, vector<16x256xbf16>
    %c128 = arith.constant 128 : index
    %c0_24 = arith.constant 0 : index
    %24 = vector.load %arg11[%c128, %c0_24] : memref<256x256xbf16, #tpu.memory_space<vmem>>, vector<16x256xbf16>
    tpu.vector_store %arg11[%c128, %c0_24], %23 {strides = array<i32>} : memref<256x256xbf16, #tpu.memory_space<vmem>>, vector<16x256xbf16>,
    %c0_25 = arith.constant 0 : index
    %c128_26 = arith.constant 128 : index
    %25 = vector.load %arg9[%c0_25, %c128_26] : memref<32x768xbf16, #tpu.memory_space<vmem>>, vector<16x256xbf16>
    %c144 = arith.constant 144 : index
    %c0_27 = arith.constant 0 : index
    %26 = vector.load %arg11[%c144, %c0_27] : memref<256x256xbf16, #tpu.memory_space<vmem>>, vector<16x256xbf16>
    tpu.vector_store %arg11[%c144, %c0_27], %25 {strides = array<i32>} : memref<256x256xbf16, #tpu.memory_space<vmem>>, vector<16x256xbf16>,
    %c0_28 = arith.constant 0 : index
    %c127 = arith.constant 127 : index
    %27 = vector.load %arg9[%c0_28, %c127] : memref<32x768xbf16, #tpu.memory_space<vmem>>, vector<16x256xbf16>
    %c160 = arith.constant 160 : index
    %c0_29 = arith.constant 0 : index
    %28 = vector.load %arg11[%c160, %c0_29] : memref<256x256xbf16, #tpu.memory_space<vmem>>, vector<16x256xbf16>
    tpu.vector_store %arg11[%c160, %c0_29], %27 {strides = array<i32>} : memref<256x256xbf16, #tpu.memory_space<vmem>>, vector<16x256xbf16>,
    %c0_30 = arith.constant 0 : index
    %c125 = arith.constant 125 : index
    %29 = vector.load %arg9[%c0_30, %c125] : memref<32x768xbf16, #tpu.memory_space<vmem>>, vector<16x256xbf16>
    %c176 = arith.constant 176 : index
    %c0_31 = arith.constant 0 : index
    %30 = vector.load %arg11[%c176, %c0_31] : memref<256x256xbf16, #tpu.memory_space<vmem>>, vector<16x256xbf16>
    tpu.vector_store %arg11[%c176, %c0_31], %29 {strides = array<i32>} : memref<256x256xbf16, #tpu.memory_space<vmem>>, vector<16x256xbf16>,
    %c0_32 = arith.constant 0 : index
    %c119 = arith.constant 119 : index
    %31 = vector.load %arg9[%c0_32, %c119] : memref<32x768xbf16, #tpu.memory_space<vmem>>, vector<16x256xbf16>
    %c192 = arith.constant 192 : index
    %c0_33 = arith.constant 0 : index
    %32 = vector.load %arg11[%c192, %c0_33] : memref<256x256xbf16, #tpu.memory_space<vmem>>, vector<16x256xbf16>
    tpu.vector_store %arg11[%c192, %c0_33], %31 {strides = array<i32>} : memref<256x256xbf16, #tpu.memory_space<vmem>>, vector<16x256xbf16>,
    %c0_34 = arith.constant 0 : index
    %c109 = arith.constant 109 : index
    %33 = vector.load %arg9[%c0_34, %c109] : memref<32x768xbf16, #tpu.memory_space<vmem>>, vector<16x256xbf16>
    %c208 = arith.constant 208 : index
    %c0_35 = arith.constant 0 : index
    %34 = vector.load %arg11[%c208, %c0_35] : memref<256x256xbf16, #tpu.memory_space<vmem>>, vector<16x256xbf16>
    tpu.vector_store %arg11[%c208, %c0_35], %33 {strides = array<i32>} : memref<256x256xbf16, #tpu.memory_space<vmem>>, vector<16x256xbf16>,
    %c0_36 = arith.constant 0 : index
    %c100 = arith.constant 100 : index
    %35 = vector.load %arg9[%c0_36, %c100] : memref<32x768xbf16, #tpu.memory_space<vmem>>, vector<16x256xbf16>
    %c224 = arith.constant 224 : index
    %c0_37 = arith.constant 0 : index
    %36 = vector.load %arg11[%c224, %c0_37] : memref<256x256xbf16, #tpu.memory_space<vmem>>, vector<16x256xbf16>
    tpu.vector_store %arg11[%c224, %c0_37], %35 {strides = array<i32>} : memref<256x256xbf16, #tpu.memory_space<vmem>>, vector<16x256xbf16>,
    %c0_38 = arith.constant 0 : index
    %c96_39 = arith.constant 96 : index
    %37 = vector.load %arg9[%c0_38, %c96_39] : memref<32x768xbf16, #tpu.memory_space<vmem>>, vector<16x256xbf16>
    %c240 = arith.constant 240 : index
    %c0_40 = arith.constant 0 : index
    %38 = vector.load %arg11[%c240, %c0_40] : memref<256x256xbf16, #tpu.memory_space<vmem>>, vector<16x256xbf16>
    tpu.vector_store %arg11[%c240, %c0_40], %37 {strides = array<i32>} : memref<256x256xbf16, #tpu.memory_space<vmem>>, vector<16x256xbf16>,
    %c0_41 = arith.constant 0 : index
    %c0_42 = arith.constant 0 : index
    %39 = vector.load %arg2[%c0_41, %c0_42] : memref<32x592xbf16, #tpu.memory_space<vmem>>, vector<32x256xbf16>
    %c0_43 = arith.constant 0 : index
    %c0_44 = arith.constant 0 : index
    %40 = vector.load %arg11[%c0_43, %c0_44] : memref<256x256xbf16, #tpu.memory_space<vmem>>, vector<256x256xbf16>
    %cst_45 = arith.constant dense<0.000000e+00> : vector<32x256xf32>
    %41 = tpu.matmul %39, %40, %cst_45 {dimension_numbers = #tpu.dot_dimension_numbers<[1], [0], [0], [1], [0, 0, 1, 1], [], []>} : vector<32x256xbf16>, vector<256x256xbf16>, vector<32x256xf32> -> vector<32x256xf32>
    %42 = arith.addf %6, %41 : vector<32x256xf32>
    %c0_46 = arith.constant 0 : index
    %c93 = arith.constant 93 : index
    %43 = vector.load %arg9[%c0_46, %c93] : memref<32x768xbf16, #tpu.memory_space<vmem>>, vector<16x256xbf16>
    %c0_47 = arith.constant 0 : index
    %c0_48 = arith.constant 0 : index
    %44 = vector.load %arg11[%c0_47, %c0_48] : memref<256x256xbf16, #tpu.memory_space<vmem>>, vector<16x256xbf16>
    tpu.vector_store %arg11[%c0_47, %c0_48], %43 {strides = array<i32>} : memref<256x256xbf16, #tpu.memory_space<vmem>>, vector<16x256xbf16>,
    %c0_49 = arith.constant 0 : index
    %c70 = arith.constant 70 : index
    %45 = vector.load %arg9[%c0_49, %c70] : memref<32x768xbf16, #tpu.memory_space<vmem>>, vector<16x256xbf16>
    %c16_50 = arith.constant 16 : index
    %c0_51 = arith.constant 0 : index
    %46 = vector.load %arg11[%c16_50, %c0_51] : memref<256x256xbf16, #tpu.memory_space<vmem>>, vector<16x256xbf16>
    tpu.vector_store %arg11[%c16_50, %c0_51], %45 {strides = array<i32>} : memref<256x256xbf16, #tpu.memory_space<vmem>>, vector<16x256xbf16>,
    %c0_52 = arith.constant 0 : index
    %c256_53 = arith.constant 256 : index
    %47 = vector.load %arg9[%c0_52, %c256_53] : memref<32x768xbf16, #tpu.memory_space<vmem>>, vector<16x256xbf16>
    %c32_54 = arith.constant 32 : index
    %c0_55 = arith.constant 0 : index
    %48 = vector.load %arg11[%c32_54, %c0_55] : memref<256x256xbf16, #tpu.memory_space<vmem>>, vector<16x256xbf16>
    tpu.vector_store %arg11[%c32_54, %c0_55], %47 {strides = array<i32>} : memref<256x256xbf16, #tpu.memory_space<vmem>>, vector<16x256xbf16>,
    %c0_56 = arith.constant 0 : index
    %c313 = arith.constant 313 : index
    %49 = vector.load %arg9[%c0_56, %c313] : memref<32x768xbf16, #tpu.memory_space<vmem>>, vector<16x256xbf16>
    %c48_57 = arith.constant 48 : index
    %c0_58 = arith.constant 0 : index
    %50 = vector.load %arg11[%c48_57, %c0_58] : memref<256x256xbf16, #tpu.memory_space<vmem>>, vector<16x256xbf16>
    tpu.vector_store %arg11[%c48_57, %c0_58], %49 {strides = array<i32>} : memref<256x256xbf16, #tpu.memory_space<vmem>>, vector<16x256xbf16>,
    %c0_59 = arith.constant 0 : index
    %c327 = arith.constant 327 : index
    %51 = vector.load %arg9[%c0_59, %c327] : memref<32x768xbf16, #tpu.memory_space<vmem>>, vector<16x256xbf16>
    %c64_60 = arith.constant 64 : index
    %c0_61 = arith.constant 0 : index
    %52 = vector.load %arg11[%c64_60, %c0_61] : memref<256x256xbf16, #tpu.memory_space<vmem>>, vector<16x256xbf16>
    tpu.vector_store %arg11[%c64_60, %c0_61], %51 {strides = array<i32>} : memref<256x256xbf16, #tpu.memory_space<vmem>>, vector<16x256xbf16>,
    %c0_62 = arith.constant 0 : index
    %c343 = arith.constant 343 : index
    %53 = vector.load %arg9[%c0_62, %c343] : memref<32x768xbf16, #tpu.memory_space<vmem>>, vector<16x256xbf16>
    %c80_63 = arith.constant 80 : index
    %c0_64 = arith.constant 0 : index
    %54 = vector.load %arg11[%c80_63, %c0_64] : memref<256x256xbf16, #tpu.memory_space<vmem>>, vector<16x256xbf16>
    tpu.vector_store %arg11[%c80_63, %c0_64], %53 {strides = array<i32>} : memref<256x256xbf16, #tpu.memory_space<vmem>>, vector<16x256xbf16>,
    %c0_65 = arith.constant 0 : index
    %c353 = arith.constant 353 : index
    %55 = vector.load %arg9[%c0_65, %c353] : memref<32x768xbf16, #tpu.memory_space<vmem>>, vector<16x256xbf16>
    %c96_66 = arith.constant 96 : index
    %c0_67 = arith.constant 0 : index
    %56 = vector.load %arg11[%c96_66, %c0_67] : memref<256x256xbf16, #tpu.memory_space<vmem>>, vector<16x256xbf16>
    tpu.vector_store %arg11[%c96_66, %c0_67], %55 {strides = array<i32>} : memref<256x256xbf16, #tpu.memory_space<vmem>>, vector<16x256xbf16>,
    %c0_68 = arith.constant 0 : index
    %c355 = arith.constant 355 : index
    %57 = vector.load %arg9[%c0_68, %c355] : memref<32x768xbf16, #tpu.memory_space<vmem>>, vector<16x256xbf16>
    %c112_69 = arith.constant 112 : index
    %c0_70 = arith.constant 0 : index
    %58 = vector.load %arg11[%c112_69, %c0_70] : memref<256x256xbf16, #tpu.memory_space<vmem>>, vector<16x256xbf16>
    tpu.vector_store %arg11[%c112_69, %c0_70], %57 {strides = array<i32>} : memref<256x256xbf16, #tpu.memory_space<vmem>>, vector<16x256xbf16>,
    %c0_71 = arith.constant 0 : index
    %c357 = arith.constant 357 : index
    %59 = vector.load %arg9[%c0_71, %c357] : memref<32x768xbf16, #tpu.memory_space<vmem>>, vector<16x256xbf16>
    %c128_72 = arith.constant 128 : index
    %c0_73 = arith.constant 0 : index
    %60 = vector.load %arg11[%c128_72, %c0_73] : memref<256x256xbf16, #tpu.memory_space<vmem>>, vector<16x256xbf16>
    tpu.vector_store %arg11[%c128_72, %c0_73], %59 {strides = array<i32>} : memref<256x256xbf16, #tpu.memory_space<vmem>>, vector<16x256xbf16>,
    %c0_74 = arith.constant 0 : index
    %c369 = arith.constant 369 : index
    %61 = vector.load %arg9[%c0_74, %c369] : memref<32x768xbf16, #tpu.memory_space<vmem>>, vector<16x256xbf16>
    %c144_75 = arith.constant 144 : index
    %c0_76 = arith.constant 0 : index
    %62 = vector.load %arg11[%c144_75, %c0_76] : memref<256x256xbf16, #tpu.memory_space<vmem>>, vector<16x256xbf16>
    tpu.vector_store %arg11[%c144_75, %c0_76], %61 {strides = array<i32>} : memref<256x256xbf16, #tpu.memory_space<vmem>>, vector<16x256xbf16>,
    %c0_77 = arith.constant 0 : index
    %c370 = arith.constant 370 : index
    %63 = vector.load %arg9[%c0_77, %c370] : memref<32x768xbf16, #tpu.memory_space<vmem>>, vector<16x256xbf16>
    %c160_78 = arith.constant 160 : index
    %c0_79 = arith.constant 0 : index
    %64 = vector.load %arg11[%c160_78, %c0_79] : memref<256x256xbf16, #tpu.memory_space<vmem>>, vector<16x256xbf16>
    tpu.vector_store %arg11[%c160_78, %c0_79], %63 {strides = array<i32>} : memref<256x256xbf16, #tpu.memory_space<vmem>>, vector<16x256xbf16>,
    %c0_80 = arith.constant 0 : index
    %c371 = arith.constant 371 : index
    %65 = vector.load %arg9[%c0_80, %c371] : memref<32x768xbf16, #tpu.memory_space<vmem>>, vector<16x256xbf16>
    %c176_81 = arith.constant 176 : index
    %c0_82 = arith.constant 0 : index
    %66 = vector.load %arg11[%c176_81, %c0_82] : memref<256x256xbf16, #tpu.memory_space<vmem>>, vector<16x256xbf16>
    tpu.vector_store %arg11[%c176_81, %c0_82], %65 {strides = array<i32>} : memref<256x256xbf16, #tpu.memory_space<vmem>>, vector<16x256xbf16>,
    %c0_83 = arith.constant 0 : index
    %c384 = arith.constant 384 : index
    %67 = vector.load %arg9[%c0_83, %c384] : memref<32x768xbf16, #tpu.memory_space<vmem>>, vector<16x256xbf16>
    %c192_84 = arith.constant 192 : index
    %c0_85 = arith.constant 0 : index
    %68 = vector.load %arg11[%c192_84, %c0_85] : memref<256x256xbf16, #tpu.memory_space<vmem>>, vector<16x256xbf16>
    tpu.vector_store %arg11[%c192_84, %c0_85], %67 {strides = array<i32>} : memref<256x256xbf16, #tpu.memory_space<vmem>>, vector<16x256xbf16>,
    %c0_86 = arith.constant 0 : index
    %c385 = arith.constant 385 : index
    %69 = vector.load %arg9[%c0_86, %c385] : memref<32x768xbf16, #tpu.memory_space<vmem>>, vector<16x256xbf16>
    %c208_87 = arith.constant 208 : index
    %c0_88 = arith.constant 0 : index
    %70 = vector.load %arg11[%c208_87, %c0_88] : memref<256x256xbf16, #tpu.memory_space<vmem>>, vector<16x256xbf16>
    tpu.vector_store %arg11[%c208_87, %c0_88], %69 {strides = array<i32>} : memref<256x256xbf16, #tpu.memory_space<vmem>>, vector<16x256xbf16>,
    %c0_89 = arith.constant 0 : index
    %c387 = arith.constant 387 : index
    %71 = vector.load %arg9[%c0_89, %c387] : memref<32x768xbf16, #tpu.memory_space<vmem>>, vector<16x256xbf16>
    %c224_90 = arith.constant 224 : index
    %c0_91 = arith.constant 0 : index
    %72 = vector.load %arg11[%c224_90, %c0_91] : memref<256x256xbf16, #tpu.memory_space<vmem>>, vector<16x256xbf16>
    tpu.vector_store %arg11[%c224_90, %c0_91], %71 {strides = array<i32>} : memref<256x256xbf16, #tpu.memory_space<vmem>>, vector<16x256xbf16>,
    %c0_92 = arith.constant 0 : index
    %c393 = arith.constant 393 : index
    %73 = vector.load %arg9[%c0_92, %c393] : memref<32x768xbf16, #tpu.memory_space<vmem>>, vector<16x256xbf16>
    %c240_93 = arith.constant 240 : index
    %c0_94 = arith.constant 0 : index
    %74 = vector.load %arg11[%c240_93, %c0_94] : memref<256x256xbf16, #tpu.memory_space<vmem>>, vector<16x256xbf16>
    tpu.vector_store %arg11[%c240_93, %c0_94], %73 {strides = array<i32>} : memref<256x256xbf16, #tpu.memory_space<vmem>>, vector<16x256xbf16>,
    %c0_95 = arith.constant 0 : index
    %c256_96 = arith.constant 256 : index
    %75 = vector.load %arg2[%c0_95, %c256_96] : memref<32x592xbf16, #tpu.memory_space<vmem>>, vector<32x256xbf16>
    %c0_97 = arith.constant 0 : index
    %c0_98 = arith.constant 0 : index
    %76 = vector.load %arg11[%c0_97, %c0_98] : memref<256x256xbf16, #tpu.memory_space<vmem>>, vector<256x256xbf16>
    %cst_99 = arith.constant dense<0.000000e+00> : vector<32x256xf32>
    %77 = tpu.matmul %75, %76, %cst_99 {dimension_numbers = #tpu.dot_dimension_numbers<[1], [0], [0], [1], [0, 0, 1, 1], [], []>} : vector<32x256xbf16>, vector<256x256xbf16>, vector<32x256xf32> -> vector<32x256xf32>
    %78 = arith.addf %42, %77 : vector<32x256xf32>
    %c0_100 = arith.constant 0 : index
    %c403 = arith.constant 403 : index
    %79 = vector.load %arg9[%c0_100, %c403] : memref<32x768xbf16, #tpu.memory_space<vmem>>, vector<16x256xbf16>
    %c0_101 = arith.constant 0 : index
    %c0_102 = arith.constant 0 : index
    %80 = vector.load %arg11[%c0_101, %c0_102] : memref<256x256xbf16, #tpu.memory_space<vmem>>, vector<16x256xbf16>
    tpu.vector_store %arg11[%c0_101, %c0_102], %79 {strides = array<i32>} : memref<256x256xbf16, #tpu.memory_space<vmem>>, vector<16x256xbf16>,
    %c0_103 = arith.constant 0 : index
    %c412 = arith.constant 412 : index
    %81 = vector.load %arg9[%c0_103, %c412] : memref<32x768xbf16, #tpu.memory_space<vmem>>, vector<16x256xbf16>
    %c16_104 = arith.constant 16 : index
    %c0_105 = arith.constant 0 : index
    %82 = vector.load %arg11[%c16_104, %c0_105] : memref<256x256xbf16, #tpu.memory_space<vmem>>, vector<16x256xbf16>
    tpu.vector_store %arg11[%c16_104, %c0_105], %81 {strides = array<i32>} : memref<256x256xbf16, #tpu.memory_space<vmem>>, vector<16x256xbf16>,
    %c0_106 = arith.constant 0 : index
    %c416 = arith.constant 416 : index
    %83 = vector.load %arg9[%c0_106, %c416] : memref<32x768xbf16, #tpu.memory_space<vmem>>, vector<16x256xbf16>
    %c32_107 = arith.constant 32 : index
    %c0_108 = arith.constant 0 : index
    %84 = vector.load %arg11[%c32_107, %c0_108] : memref<256x256xbf16, #tpu.memory_space<vmem>>, vector<16x256xbf16>
    tpu.vector_store %arg11[%c32_107, %c0_108], %83 {strides = array<i32>} : memref<256x256xbf16, #tpu.memory_space<vmem>>, vector<16x256xbf16>,
    %c0_109 = arith.constant 0 : index
    %c419 = arith.constant 419 : index
    %85 = vector.load %arg9[%c0_109, %c419] : memref<32x768xbf16, #tpu.memory_space<vmem>>, vector<16x256xbf16>
    %c48_110 = arith.constant 48 : index
    %c0_111 = arith.constant 0 : index
    %86 = vector.load %arg11[%c48_110, %c0_111] : memref<256x256xbf16, #tpu.memory_space<vmem>>, vector<16x256xbf16>
    tpu.vector_store %arg11[%c48_110, %c0_111], %85 {strides = array<i32>} : memref<256x256xbf16, #tpu.memory_space<vmem>>, vector<16x256xbf16>,
    %c0_112 = arith.constant 0 : index
    %c442 = arith.constant 442 : index
    %87 = vector.load %arg9[%c0_112, %c442] : memref<32x768xbf16, #tpu.memory_space<vmem>>, vector<16x256xbf16>
    %c64_113 = arith.constant 64 : index
    %c0_114 = arith.constant 0 : index
    %88 = vector.load %arg11[%c64_113, %c0_114] : memref<256x256xbf16, #tpu.memory_space<vmem>>, vector<16x256xbf16>
    tpu.vector_store %arg11[%c64_113, %c0_114], %87 {strides = array<i32>} : memref<256x256xbf16, #tpu.memory_space<vmem>>, vector<16x256xbf16>,
    %c0_115 = arith.constant 0 : index
    %c512 = arith.constant 512 : index
    %89 = vector.load %arg2[%c0_115, %c512] : memref<32x592xbf16, #tpu.memory_space<vmem>>, vector<32x80xbf16>
    %c0_116 = arith.constant 0 : index
    %c0_117 = arith.constant 0 : index
    %90 = vector.load %arg11[%c0_116, %c0_117] : memref<256x256xbf16, #tpu.memory_space<vmem>>, vector<80x256xbf16>
    %cst_118 = arith.constant dense<0.000000e+00> : vector<32x256xf32>
    %91 = tpu.matmul %89, %90, %cst_118 {dimension_numbers = #tpu.dot_dimension_numbers<[1], [0], [0], [1], [0, 0, 1, 1], [], []>} : vector<32x80xbf16>, vector<80x256xbf16>, vector<32x256xf32> -> vector<32x256xf32>
    %92 = arith.addf %78, %91 : vector<32x256xf32>
    %c0_119 = arith.constant 0 : index
    %c0_120 = arith.constant 0 : index
    %c0_121 = arith.constant 0 : index
    %93 = vector.load %arg3[%c0_119, %c0_120, %c0_121] : memref<3x32x1xf32, #tpu.memory_space<vmem>>, vector<1x32x1xf32>
    %94 = vector.shape_cast %93 : vector<1x32x1xf32> to vector<32x1xf32>
    %95 = vector.broadcast %94 : vector<32x1xf32> to vector<32x256xf32>
    %96 = arith.addf %92, %95 : vector<32x256xf32>
    %cst_122 = arith.constant 0.000000e+00 : f32
    %97 = vector.broadcast %cst_122 : f32 to vector<32x256xf32>
    %98 = arith.maximumf %96, %97 : vector<32x256xf32>
    %c2 = arith.constant 2 : index
    %c0_123 = arith.constant 0 : index
    %c0_124 = arith.constant 0 : index
    %99 = vector.load %arg3[%c2, %c0_123, %c0_124] : memref<3x32x1xf32, #tpu.memory_space<vmem>>, vector<1x32x1xf32>
    %100 = vector.shape_cast %99 : vector<1x32x1xf32> to vector<32x1xf32>
    %101 = vector.broadcast %100 : vector<32x1xf32> to vector<32x256xf32>
    %102 = arith.addf %98, %101 : vector<32x256xf32>
    %c0_125 = arith.constant 0 : index
    %c0_126 = arith.constant 0 : index
    %103 = vector.load %arg10[%c0_125, %c0_126] : memref<32x256xf32, #tpu.memory_space<vmem>>, vector<32x256xf32>
    tpu.vector_store %arg10[%c0_125, %c0_126], %102 {strides = array<i32>} : memref<32x256xf32, #tpu.memory_space<vmem>>, vector<32x256xf32>,
    %104 = arith.truncf %102 : vector<32x256xf32> to vector<32x256xbf16>
    %c0_127 = arith.constant 0 : index
    %c256_128 = arith.constant 256 : index
    %105 = vector.load %arg9[%c0_127, %c256_128] : memref<32x768xbf16, #tpu.memory_space<vmem>>, vector<32x256xbf16>
    tpu.vector_store %arg9[%c0_127, %c256_128], %104 {strides = array<i32>} : memref<32x768xbf16, #tpu.memory_space<vmem>>, vector<32x256xbf16>,
    %cst_129 = arith.constant 0.000000e+00 : f32
    %106 = vector.broadcast %cst_129 : f32 to vector<32x256xf32>
    %c0_130 = arith.constant 0 : index
    %c199_131 = arith.constant 199 : index
    %107 = vector.load %arg9[%c0_130, %c199_131] : memref<32x768xbf16, #tpu.memory_space<vmem>>, vector<32x256xbf16>
    %c0_132 = arith.constant 0 : index
    %c0_133 = arith.constant 0 : index
    %108 = vector.load %arg11[%c0_132, %c0_133] : memref<256x256xbf16, #tpu.memory_space<vmem>>, vector<32x256xbf16>
    tpu.vector_store %arg11[%c0_132, %c0_133], %107 {strides = array<i32>} : memref<256x256xbf16, #tpu.memory_space<vmem>>, vector<32x256xbf16>,
    %c0_134 = arith.constant 0 : index
    %c185_135 = arith.constant 185 : index
    %109 = vector.load %arg9[%c0_134, %c185_135] : memref<32x768xbf16, #tpu.memory_space<vmem>>, vector<32x256xbf16>
    %c32_136 = arith.constant 32 : index
    %c0_137 = arith.constant 0 : index
    %110 = vector.load %arg11[%c32_136, %c0_137] : memref<256x256xbf16, #tpu.memory_space<vmem>>, vector<32x256xbf16>
    tpu.vector_store %arg11[%c32_136, %c0_137], %109 {strides = array<i32>} : memref<256x256xbf16, #tpu.memory_space<vmem>>, vector<32x256xbf16>,
    %c0_138 = arith.constant 0 : index
    %c169_139 = arith.constant 169 : index
    %111 = vector.load %arg9[%c0_138, %c169_139] : memref<32x768xbf16, #tpu.memory_space<vmem>>, vector<32x256xbf16>
    %c64_140 = arith.constant 64 : index
    %c0_141 = arith.constant 0 : index
    %112 = vector.load %arg11[%c64_140, %c0_141] : memref<256x256xbf16, #tpu.memory_space<vmem>>, vector<32x256xbf16>
    tpu.vector_store %arg11[%c64_140, %c0_141], %111 {strides = array<i32>} : memref<256x256xbf16, #tpu.memory_space<vmem>>, vector<32x256xbf16>,
    %c0_142 = arith.constant 0 : index
    %c159_143 = arith.constant 159 : index
    %113 = vector.load %arg9[%c0_142, %c159_143] : memref<32x768xbf16, #tpu.memory_space<vmem>>, vector<32x256xbf16>
    %c96_144 = arith.constant 96 : index
    %c0_145 = arith.constant 0 : index
    %114 = vector.load %arg11[%c96_144, %c0_145] : memref<256x256xbf16, #tpu.memory_space<vmem>>, vector<32x256xbf16>
    tpu.vector_store %arg11[%c96_144, %c0_145], %113 {strides = array<i32>} : memref<256x256xbf16, #tpu.memory_space<vmem>>, vector<32x256xbf16>,
    %c0_146 = arith.constant 0 : index
    %c157_147 = arith.constant 157 : index
    %115 = vector.load %arg9[%c0_146, %c157_147] : memref<32x768xbf16, #tpu.memory_space<vmem>>, vector<32x256xbf16>
    %c128_148 = arith.constant 128 : index
    %c0_149 = arith.constant 0 : index
    %116 = vector.load %arg11[%c128_148, %c0_149] : memref<256x256xbf16, #tpu.memory_space<vmem>>, vector<32x256xbf16>
    tpu.vector_store %arg11[%c128_148, %c0_149], %115 {strides = array<i32>} : memref<256x256xbf16, #tpu.memory_space<vmem>>, vector<32x256xbf16>,
    %c0_150 = arith.constant 0 : index
    %c155_151 = arith.constant 155 : index
    %117 = vector.load %arg9[%c0_150, %c155_151] : memref<32x768xbf16, #tpu.memory_space<vmem>>, vector<32x256xbf16>
    %c160_152 = arith.constant 160 : index
    %c0_153 = arith.constant 0 : index
    %118 = vector.load %arg11[%c160_152, %c0_153] : memref<256x256xbf16, #tpu.memory_space<vmem>>, vector<32x256xbf16>
    tpu.vector_store %arg11[%c160_152, %c0_153], %117 {strides = array<i32>} : memref<256x256xbf16, #tpu.memory_space<vmem>>, vector<32x256xbf16>,
    %c0_154 = arith.constant 0 : index
    %c143_155 = arith.constant 143 : index
    %119 = vector.load %arg9[%c0_154, %c143_155] : memref<32x768xbf16, #tpu.memory_space<vmem>>, vector<32x256xbf16>
    %c192_156 = arith.constant 192 : index
    %c0_157 = arith.constant 0 : index
    %120 = vector.load %arg11[%c192_156, %c0_157] : memref<256x256xbf16, #tpu.memory_space<vmem>>, vector<32x256xbf16>
    tpu.vector_store %arg11[%c192_156, %c0_157], %119 {strides = array<i32>} : memref<256x256xbf16, #tpu.memory_space<vmem>>, vector<32x256xbf16>,
    %c0_158 = arith.constant 0 : index
    %c142_159 = arith.constant 142 : index
    %121 = vector.load %arg9[%c0_158, %c142_159] : memref<32x768xbf16, #tpu.memory_space<vmem>>, vector<32x256xbf16>
    %c224_160 = arith.constant 224 : index
    %c0_161 = arith.constant 0 : index
    %122 = vector.load %arg11[%c224_160, %c0_161] : memref<256x256xbf16, #tpu.memory_space<vmem>>, vector<32x256xbf16>
    tpu.vector_store %arg11[%c224_160, %c0_161], %121 {strides = array<i32>} : memref<256x256xbf16, #tpu.memory_space<vmem>>, vector<32x256xbf16>,
    %c0_162 = arith.constant 0 : index
    %c0_163 = arith.constant 0 : index
    %c0_164 = arith.constant 0 : index
    %123 = vector.load %arg4[%c0_162, %c0_163, %c0_164] : memref<1x32x1184xbf16, #tpu.memory_space<vmem>>, vector<1x32x256xbf16>
    %124 = vector.shape_cast %123 : vector<1x32x256xbf16> to vector<32x256xbf16>
    %c0_165 = arith.constant 0 : index
    %c0_166 = arith.constant 0 : index
    %125 = vector.load %arg11[%c0_165, %c0_166] : memref<256x256xbf16, #tpu.memory_space<vmem>>, vector<256x256xbf16>
    %cst_167 = arith.constant dense<0.000000e+00> : vector<32x256xf32>
    %126 = tpu.matmul %124, %125, %cst_167 {dimension_numbers = #tpu.dot_dimension_numbers<[1], [0], [0], [1], [0, 0, 1, 1], [], []>} : vector<32x256xbf16>, vector<256x256xbf16>, vector<32x256xf32> -> vector<32x256xf32>
    %127 = arith.addf %106, %126 : vector<32x256xf32>
    %c0_168 = arith.constant 0 : index
    %c141_169 = arith.constant 141 : index
    %128 = vector.load %arg9[%c0_168, %c141_169] : memref<32x768xbf16, #tpu.memory_space<vmem>>, vector<32x256xbf16>
    %c0_170 = arith.constant 0 : index
    %c0_171 = arith.constant 0 : index
    %129 = vector.load %arg11[%c0_170, %c0_171] : memref<256x256xbf16, #tpu.memory_space<vmem>>, vector<32x256xbf16>
    tpu.vector_store %arg11[%c0_170, %c0_171], %128 {strides = array<i32>} : memref<256x256xbf16, #tpu.memory_space<vmem>>, vector<32x256xbf16>,
    %c0_172 = arith.constant 0 : index
    %c128_173 = arith.constant 128 : index
    %130 = vector.load %arg9[%c0_172, %c128_173] : memref<32x768xbf16, #tpu.memory_space<vmem>>, vector<32x256xbf16>
    %c32_174 = arith.constant 32 : index
    %c0_175 = arith.constant 0 : index
    %131 = vector.load %arg11[%c32_174, %c0_175] : memref<256x256xbf16, #tpu.memory_space<vmem>>, vector<32x256xbf16>
    tpu.vector_store %arg11[%c32_174, %c0_175], %130 {strides = array<i32>} : memref<256x256xbf16, #tpu.memory_space<vmem>>, vector<32x256xbf16>,
    %c0_176 = arith.constant 0 : index
    %c127_177 = arith.constant 127 : index
    %132 = vector.load %arg9[%c0_176, %c127_177] : memref<32x768xbf16, #tpu.memory_space<vmem>>, vector<32x256xbf16>
    %c64_178 = arith.constant 64 : index
    %c0_179 = arith.constant 0 : index
    %133 = vector.load %arg11[%c64_178, %c0_179] : memref<256x256xbf16, #tpu.memory_space<vmem>>, vector<32x256xbf16>
    tpu.vector_store %arg11[%c64_178, %c0_179], %132 {strides = array<i32>} : memref<256x256xbf16, #tpu.memory_space<vmem>>, vector<32x256xbf16>,
    %c0_180 = arith.constant 0 : index
    %c125_181 = arith.constant 125 : index
    %134 = vector.load %arg9[%c0_180, %c125_181] : memref<32x768xbf16, #tpu.memory_space<vmem>>, vector<32x256xbf16>
    %c96_182 = arith.constant 96 : index
    %c0_183 = arith.constant 0 : index
    %135 = vector.load %arg11[%c96_182, %c0_183] : memref<256x256xbf16, #tpu.memory_space<vmem>>, vector<32x256xbf16>
    tpu.vector_store %arg11[%c96_182, %c0_183], %134 {strides = array<i32>} : memref<256x256xbf16, #tpu.memory_space<vmem>>, vector<32x256xbf16>,
    %c0_184 = arith.constant 0 : index
    %c119_185 = arith.constant 119 : index
    %136 = vector.load %arg9[%c0_184, %c119_185] : memref<32x768xbf16, #tpu.memory_space<vmem>>, vector<32x256xbf16>
    %c128_186 = arith.constant 128 : index
    %c0_187 = arith.constant 0 : index
    %137 = vector.load %arg11[%c128_186, %c0_187] : memref<256x256xbf16, #tpu.memory_space<vmem>>, vector<32x256xbf16>
    tpu.vector_store %arg11[%c128_186, %c0_187], %136 {strides = array<i32>} : memref<256x256xbf16, #tpu.memory_space<vmem>>, vector<32x256xbf16>,
    %c0_188 = arith.constant 0 : index
    %c109_189 = arith.constant 109 : index
    %138 = vector.load %arg9[%c0_188, %c109_189] : memref<32x768xbf16, #tpu.memory_space<vmem>>, vector<32x256xbf16>
    %c160_190 = arith.constant 160 : index
    %c0_191 = arith.constant 0 : index
    %139 = vector.load %arg11[%c160_190, %c0_191] : memref<256x256xbf16, #tpu.memory_space<vmem>>, vector<32x256xbf16>
    tpu.vector_store %arg11[%c160_190, %c0_191], %138 {strides = array<i32>} : memref<256x256xbf16, #tpu.memory_space<vmem>>, vector<32x256xbf16>,
    %c0_192 = arith.constant 0 : index
    %c100_193 = arith.constant 100 : index
    %140 = vector.load %arg9[%c0_192, %c100_193] : memref<32x768xbf16, #tpu.memory_space<vmem>>, vector<32x256xbf16>
    %c192_194 = arith.constant 192 : index
    %c0_195 = arith.constant 0 : index
    %141 = vector.load %arg11[%c192_194, %c0_195] : memref<256x256xbf16, #tpu.memory_space<vmem>>, vector<32x256xbf16>
    tpu.vector_store %arg11[%c192_194, %c0_195], %140 {strides = array<i32>} : memref<256x256xbf16, #tpu.memory_space<vmem>>, vector<32x256xbf16>,
    %c0_196 = arith.constant 0 : index
    %c96_197 = arith.constant 96 : index
    %142 = vector.load %arg9[%c0_196, %c96_197] : memref<32x768xbf16, #tpu.memory_space<vmem>>, vector<32x256xbf16>
    %c224_198 = arith.constant 224 : index
    %c0_199 = arith.constant 0 : index
    %143 = vector.load %arg11[%c224_198, %c0_199] : memref<256x256xbf16, #tpu.memory_space<vmem>>, vector<32x256xbf16>
    tpu.vector_store %arg11[%c224_198, %c0_199], %142 {strides = array<i32>} : memref<256x256xbf16, #tpu.memory_space<vmem>>, vector<32x256xbf16>,
    %c0_200 = arith.constant 0 : index
    %c0_201 = arith.constant 0 : index
    %c256_202 = arith.constant 256 : index
    %144 = vector.load %arg4[%c0_200, %c0_201, %c256_202] : memref<1x32x1184xbf16, #tpu.memory_space<vmem>>, vector<1x32x256xbf16>
    %145 = vector.shape_cast %144 : vector<1x32x256xbf16> to vector<32x256xbf16>
    %c0_203 = arith.constant 0 : index
    %c0_204 = arith.constant 0 : index
    %146 = vector.load %arg11[%c0_203, %c0_204] : memref<256x256xbf16, #tpu.memory_space<vmem>>, vector<256x256xbf16>
    %cst_205 = arith.constant dense<0.000000e+00> : vector<32x256xf32>
    %147 = tpu.matmul %145, %146, %cst_205 {dimension_numbers = #tpu.dot_dimension_numbers<[1], [0], [0], [1], [0, 0, 1, 1], [], []>} : vector<32x256xbf16>, vector<256x256xbf16>, vector<32x256xf32> -> vector<32x256xf32>
    %148 = arith.addf %127, %147 : vector<32x256xf32>
    %c0_206 = arith.constant 0 : index
    %c93_207 = arith.constant 93 : index
    %149 = vector.load %arg9[%c0_206, %c93_207] : memref<32x768xbf16, #tpu.memory_space<vmem>>, vector<32x256xbf16>
    %c0_208 = arith.constant 0 : index
    %c0_209 = arith.constant 0 : index
    %150 = vector.load %arg11[%c0_208, %c0_209] : memref<256x256xbf16, #tpu.memory_space<vmem>>, vector<32x256xbf16>
    tpu.vector_store %arg11[%c0_208, %c0_209], %149 {strides = array<i32>} : memref<256x256xbf16, #tpu.memory_space<vmem>>, vector<32x256xbf16>,
    %c0_210 = arith.constant 0 : index
    %c70_211 = arith.constant 70 : index
    %151 = vector.load %arg9[%c0_210, %c70_211] : memref<32x768xbf16, #tpu.memory_space<vmem>>, vector<32x256xbf16>
    %c32_212 = arith.constant 32 : index
    %c0_213 = arith.constant 0 : index
    %152 = vector.load %arg11[%c32_212, %c0_213] : memref<256x256xbf16, #tpu.memory_space<vmem>>, vector<32x256xbf16>
    tpu.vector_store %arg11[%c32_212, %c0_213], %151 {strides = array<i32>} : memref<256x256xbf16, #tpu.memory_space<vmem>>, vector<32x256xbf16>,
    %c0_214 = arith.constant 0 : index
    %c256_215 = arith.constant 256 : index
    %153 = vector.load %arg9[%c0_214, %c256_215] : memref<32x768xbf16, #tpu.memory_space<vmem>>, vector<32x256xbf16>
    %c64_216 = arith.constant 64 : index
    %c0_217 = arith.constant 0 : index
    %154 = vector.load %arg11[%c64_216, %c0_217] : memref<256x256xbf16, #tpu.memory_space<vmem>>, vector<32x256xbf16>
    tpu.vector_store %arg11[%c64_216, %c0_217], %153 {strides = array<i32>} : memref<256x256xbf16, #tpu.memory_space<vmem>>, vector<32x256xbf16>,
    %c0_218 = arith.constant 0 : index
    %c313_219 = arith.constant 313 : index
    %155 = vector.load %arg9[%c0_218, %c313_219] : memref<32x768xbf16, #tpu.memory_space<vmem>>, vector<32x256xbf16>
    %c96_220 = arith.constant 96 : index
    %c0_221 = arith.constant 0 : index
    %156 = vector.load %arg11[%c96_220, %c0_221] : memref<256x256xbf16, #tpu.memory_space<vmem>>, vector<32x256xbf16>
    tpu.vector_store %arg11[%c96_220, %c0_221], %155 {strides = array<i32>} : memref<256x256xbf16, #tpu.memory_space<vmem>>, vector<32x256xbf16>,
    %c0_222 = arith.constant 0 : index
    %c327_223 = arith.constant 327 : index
    %157 = vector.load %arg9[%c0_222, %c327_223] : memref<32x768xbf16, #tpu.memory_space<vmem>>, vector<32x256xbf16>
    %c128_224 = arith.constant 128 : index
    %c0_225 = arith.constant 0 : index
    %158 = vector.load %arg11[%c128_224, %c0_225] : memref<256x256xbf16, #tpu.memory_space<vmem>>, vector<32x256xbf16>
    tpu.vector_store %arg11[%c128_224, %c0_225], %157 {strides = array<i32>} : memref<256x256xbf16, #tpu.memory_space<vmem>>, vector<32x256xbf16>,
    %c0_226 = arith.constant 0 : index
    %c343_227 = arith.constant 343 : index
    %159 = vector.load %arg9[%c0_226, %c343_227] : memref<32x768xbf16, #tpu.memory_space<vmem>>, vector<32x256xbf16>
    %c160_228 = arith.constant 160 : index
    %c0_229 = arith.constant 0 : index
    %160 = vector.load %arg11[%c160_228, %c0_229] : memref<256x256xbf16, #tpu.memory_space<vmem>>, vector<32x256xbf16>
    tpu.vector_store %arg11[%c160_228, %c0_229], %159 {strides = array<i32>} : memref<256x256xbf16, #tpu.memory_space<vmem>>, vector<32x256xbf16>,
    %c0_230 = arith.constant 0 : index
    %c353_231 = arith.constant 353 : index
    %161 = vector.load %arg9[%c0_230, %c353_231] : memref<32x768xbf16, #tpu.memory_space<vmem>>, vector<32x256xbf16>
    %c192_232 = arith.constant 192 : index
    %c0_233 = arith.constant 0 : index
    %162 = vector.load %arg11[%c192_232, %c0_233] : memref<256x256xbf16, #tpu.memory_space<vmem>>, vector<32x256xbf16>
    tpu.vector_store %arg11[%c192_232, %c0_233], %161 {strides = array<i32>} : memref<256x256xbf16, #tpu.memory_space<vmem>>, vector<32x256xbf16>,
    %c0_234 = arith.constant 0 : index
    %c355_235 = arith.constant 355 : index
    %163 = vector.load %arg9[%c0_234, %c355_235] : memref<32x768xbf16, #tpu.memory_space<vmem>>, vector<32x256xbf16>
    %c224_236 = arith.constant 224 : index
    %c0_237 = arith.constant 0 : index
    %164 = vector.load %arg11[%c224_236, %c0_237] : memref<256x256xbf16, #tpu.memory_space<vmem>>, vector<32x256xbf16>
    tpu.vector_store %arg11[%c224_236, %c0_237], %163 {strides = array<i32>} : memref<256x256xbf16, #tpu.memory_space<vmem>>, vector<32x256xbf16>,
    %c0_238 = arith.constant 0 : index
    %c0_239 = arith.constant 0 : index
    %c512_240 = arith.constant 512 : index
    %165 = vector.load %arg4[%c0_238, %c0_239, %c512_240] : memref<1x32x1184xbf16, #tpu.memory_space<vmem>>, vector<1x32x256xbf16>
    %166 = vector.shape_cast %165 : vector<1x32x256xbf16> to vector<32x256xbf16>
    %c0_241 = arith.constant 0 : index
    %c0_242 = arith.constant 0 : index
    %167 = vector.load %arg11[%c0_241, %c0_242] : memref<256x256xbf16, #tpu.memory_space<vmem>>, vector<256x256xbf16>
    %cst_243 = arith.constant dense<0.000000e+00> : vector<32x256xf32>
    %168 = tpu.matmul %166, %167, %cst_243 {dimension_numbers = #tpu.dot_dimension_numbers<[1], [0], [0], [1], [0, 0, 1, 1], [], []>} : vector<32x256xbf16>, vector<256x256xbf16>, vector<32x256xf32> -> vector<32x256xf32>
    %169 = arith.addf %148, %168 : vector<32x256xf32>
    %c0_244 = arith.constant 0 : index
    %c357_245 = arith.constant 357 : index
    %170 = vector.load %arg9[%c0_244, %c357_245] : memref<32x768xbf16, #tpu.memory_space<vmem>>, vector<32x256xbf16>
    %c0_246 = arith.constant 0 : index
    %c0_247 = arith.constant 0 : index
    %171 = vector.load %arg11[%c0_246, %c0_247] : memref<256x256xbf16, #tpu.memory_space<vmem>>, vector<32x256xbf16>
    tpu.vector_store %arg11[%c0_246, %c0_247], %170 {strides = array<i32>} : memref<256x256xbf16, #tpu.memory_space<vmem>>, vector<32x256xbf16>,
    %c0_248 = arith.constant 0 : index
    %c369_249 = arith.constant 369 : index
    %172 = vector.load %arg9[%c0_248, %c369_249] : memref<32x768xbf16, #tpu.memory_space<vmem>>, vector<32x256xbf16>
    %c32_250 = arith.constant 32 : index
    %c0_251 = arith.constant 0 : index
    %173 = vector.load %arg11[%c32_250, %c0_251] : memref<256x256xbf16, #tpu.memory_space<vmem>>, vector<32x256xbf16>
    tpu.vector_store %arg11[%c32_250, %c0_251], %172 {strides = array<i32>} : memref<256x256xbf16, #tpu.memory_space<vmem>>, vector<32x256xbf16>,
    %c0_252 = arith.constant 0 : index
    %c370_253 = arith.constant 370 : index
    %174 = vector.load %arg9[%c0_252, %c370_253] : memref<32x768xbf16, #tpu.memory_space<vmem>>, vector<32x256xbf16>
    %c64_254 = arith.constant 64 : index
    %c0_255 = arith.constant 0 : index
    %175 = vector.load %arg11[%c64_254, %c0_255] : memref<256x256xbf16, #tpu.memory_space<vmem>>, vector<32x256xbf16>
    tpu.vector_store %arg11[%c64_254, %c0_255], %174 {strides = array<i32>} : memref<256x256xbf16, #tpu.memory_space<vmem>>, vector<32x256xbf16>,
    %c0_256 = arith.constant 0 : index
    %c371_257 = arith.constant 371 : index
    %176 = vector.load %arg9[%c0_256, %c371_257] : memref<32x768xbf16, #tpu.memory_space<vmem>>, vector<32x256xbf16>
    %c96_258 = arith.constant 96 : index
    %c0_259 = arith.constant 0 : index
    %177 = vector.load %arg11[%c96_258, %c0_259] : memref<256x256xbf16, #tpu.memory_space<vmem>>, vector<32x256xbf16>
    tpu.vector_store %arg11[%c96_258, %c0_259], %176 {strides = array<i32>} : memref<256x256xbf16, #tpu.memory_space<vmem>>, vector<32x256xbf16>,
    %c0_260 = arith.constant 0 : index
    %c384_261 = arith.constant 384 : index
    %178 = vector.load %arg9[%c0_260, %c384_261] : memref<32x768xbf16, #tpu.memory_space<vmem>>, vector<32x256xbf16>
    %c128_262 = arith.constant 128 : index
    %c0_263 = arith.constant 0 : index
    %179 = vector.load %arg11[%c128_262, %c0_263] : memref<256x256xbf16, #tpu.memory_space<vmem>>, vector<32x256xbf16>
    tpu.vector_store %arg11[%c128_262, %c0_263], %178 {strides = array<i32>} : memref<256x256xbf16, #tpu.memory_space<vmem>>, vector<32x256xbf16>,
    %c0_264 = arith.constant 0 : index
    %c385_265 = arith.constant 385 : index
    %180 = vector.load %arg9[%c0_264, %c385_265] : memref<32x768xbf16, #tpu.memory_space<vmem>>, vector<32x256xbf16>
    %c160_266 = arith.constant 160 : index
    %c0_267 = arith.constant 0 : index
    %181 = vector.load %arg11[%c160_266, %c0_267] : memref<256x256xbf16, #tpu.memory_space<vmem>>, vector<32x256xbf16>
    tpu.vector_store %arg11[%c160_266, %c0_267], %180 {strides = array<i32>} : memref<256x256xbf16, #tpu.memory_space<vmem>>, vector<32x256xbf16>,
    %c0_268 = arith.constant 0 : index
    %c387_269 = arith.constant 387 : index
    %182 = vector.load %arg9[%c0_268, %c387_269] : memref<32x768xbf16, #tpu.memory_space<vmem>>, vector<32x256xbf16>
    %c192_270 = arith.constant 192 : index
    %c0_271 = arith.constant 0 : index
    %183 = vector.load %arg11[%c192_270, %c0_271] : memref<256x256xbf16, #tpu.memory_space<vmem>>, vector<32x256xbf16>
    tpu.vector_store %arg11[%c192_270, %c0_271], %182 {strides = array<i32>} : memref<256x256xbf16, #tpu.memory_space<vmem>>, vector<32x256xbf16>,
    %c0_272 = arith.constant 0 : index
    %c393_273 = arith.constant 393 : index
    %184 = vector.load %arg9[%c0_272, %c393_273] : memref<32x768xbf16, #tpu.memory_space<vmem>>, vector<32x256xbf16>
    %c224_274 = arith.constant 224 : index
    %c0_275 = arith.constant 0 : index
    %185 = vector.load %arg11[%c224_274, %c0_275] : memref<256x256xbf16, #tpu.memory_space<vmem>>, vector<32x256xbf16>
    tpu.vector_store %arg11[%c224_274, %c0_275], %184 {strides = array<i32>} : memref<256x256xbf16, #tpu.memory_space<vmem>>, vector<32x256xbf16>,
    %c0_276 = arith.constant 0 : index
    %c0_277 = arith.constant 0 : index
    %c768 = arith.constant 768 : index
    %186 = vector.load %arg4[%c0_276, %c0_277, %c768] : memref<1x32x1184xbf16, #tpu.memory_space<vmem>>, vector<1x32x256xbf16>
    %187 = vector.shape_cast %186 : vector<1x32x256xbf16> to vector<32x256xbf16>
    %c0_278 = arith.constant 0 : index
    %c0_279 = arith.constant 0 : index
    %188 = vector.load %arg11[%c0_278, %c0_279] : memref<256x256xbf16, #tpu.memory_space<vmem>>, vector<256x256xbf16>
    %cst_280 = arith.constant dense<0.000000e+00> : vector<32x256xf32>
    %189 = tpu.matmul %187, %188, %cst_280 {dimension_numbers = #tpu.dot_dimension_numbers<[1], [0], [0], [1], [0, 0, 1, 1], [], []>} : vector<32x256xbf16>, vector<256x256xbf16>, vector<32x256xf32> -> vector<32x256xf32>
    %190 = arith.addf %169, %189 : vector<32x256xf32>
    %c0_281 = arith.constant 0 : index
    %c403_282 = arith.constant 403 : index
    %191 = vector.load %arg9[%c0_281, %c403_282] : memref<32x768xbf16, #tpu.memory_space<vmem>>, vector<32x256xbf16>
    %c0_283 = arith.constant 0 : index
    %c0_284 = arith.constant 0 : index
    %192 = vector.load %arg11[%c0_283, %c0_284] : memref<256x256xbf16, #tpu.memory_space<vmem>>, vector<32x256xbf16>
    tpu.vector_store %arg11[%c0_283, %c0_284], %191 {strides = array<i32>} : memref<256x256xbf16, #tpu.memory_space<vmem>>, vector<32x256xbf16>,
    %c0_285 = arith.constant 0 : index
    %c412_286 = arith.constant 412 : index
    %193 = vector.load %arg9[%c0_285, %c412_286] : memref<32x768xbf16, #tpu.memory_space<vmem>>, vector<32x256xbf16>
    %c32_287 = arith.constant 32 : index
    %c0_288 = arith.constant 0 : index
    %194 = vector.load %arg11[%c32_287, %c0_288] : memref<256x256xbf16, #tpu.memory_space<vmem>>, vector<32x256xbf16>
    tpu.vector_store %arg11[%c32_287, %c0_288], %193 {strides = array<i32>} : memref<256x256xbf16, #tpu.memory_space<vmem>>, vector<32x256xbf16>,
    %c0_289 = arith.constant 0 : index
    %c416_290 = arith.constant 416 : index
    %195 = vector.load %arg9[%c0_289, %c416_290] : memref<32x768xbf16, #tpu.memory_space<vmem>>, vector<32x256xbf16>
    %c64_291 = arith.constant 64 : index
    %c0_292 = arith.constant 0 : index
    %196 = vector.load %arg11[%c64_291, %c0_292] : memref<256x256xbf16, #tpu.memory_space<vmem>>, vector<32x256xbf16>
    tpu.vector_store %arg11[%c64_291, %c0_292], %195 {strides = array<i32>} : memref<256x256xbf16, #tpu.memory_space<vmem>>, vector<32x256xbf16>,
    %c0_293 = arith.constant 0 : index
    %c419_294 = arith.constant 419 : index
    %197 = vector.load %arg9[%c0_293, %c419_294] : memref<32x768xbf16, #tpu.memory_space<vmem>>, vector<32x256xbf16>
    %c96_295 = arith.constant 96 : index
    %c0_296 = arith.constant 0 : index
    %198 = vector.load %arg11[%c96_295, %c0_296] : memref<256x256xbf16, #tpu.memory_space<vmem>>, vector<32x256xbf16>
    tpu.vector_store %arg11[%c96_295, %c0_296], %197 {strides = array<i32>} : memref<256x256xbf16, #tpu.memory_space<vmem>>, vector<32x256xbf16>,
    %c0_297 = arith.constant 0 : index
    %c442_298 = arith.constant 442 : index
    %199 = vector.load %arg9[%c0_297, %c442_298] : memref<32x768xbf16, #tpu.memory_space<vmem>>, vector<32x256xbf16>
    %c128_299 = arith.constant 128 : index
    %c0_300 = arith.constant 0 : index
    %200 = vector.load %arg11[%c128_299, %c0_300] : memref<256x256xbf16, #tpu.memory_space<vmem>>, vector<32x256xbf16>
    tpu.vector_store %arg11[%c128_299, %c0_300], %199 {strides = array<i32>} : memref<256x256xbf16, #tpu.memory_space<vmem>>, vector<32x256xbf16>,
    %c0_301 = arith.constant 0 : index
    %c0_302 = arith.constant 0 : index
    %c1024 = arith.constant 1024 : index
    %201 = vector.load %arg4[%c0_301, %c0_302, %c1024] : memref<1x32x1184xbf16, #tpu.memory_space<vmem>>, vector<1x32x160xbf16>
    %202 = vector.shape_cast %201 : vector<1x32x160xbf16> to vector<32x160xbf16>
    %c0_303 = arith.constant 0 : index
    %c0_304 = arith.constant 0 : index
    %203 = vector.load %arg11[%c0_303, %c0_304] : memref<256x256xbf16, #tpu.memory_space<vmem>>, vector<160x256xbf16>
    %cst_305 = arith.constant dense<0.000000e+00> : vector<32x256xf32>
    %204 = tpu.matmul %202, %203, %cst_305 {dimension_numbers = #tpu.dot_dimension_numbers<[1], [0], [0], [1], [0, 0, 1, 1], [], []>} : vector<32x160xbf16>, vector<160x256xbf16>, vector<32x256xf32> -> vector<32x256xf32>
    %205 = arith.addf %190, %204 : vector<32x256xf32>
    %c0_306 = arith.constant 0 : index
    %c0_307 = arith.constant 0 : index
    %c0_308 = arith.constant 0 : index
    %c0_309 = arith.constant 0 : index
    %206 = vector.load %arg5[%c0_306, %c0_307, %c0_308, %c0_309] : memref<1x3x32x1xf32, #tpu.memory_space<vmem>>, vector<1x1x32x1xf32>
    %207 = vector.shape_cast %206 : vector<1x1x32x1xf32> to vector<32x1xf32>
    %208 = vector.broadcast %207 : vector<32x1xf32> to vector<32x256xf32>
    %209 = arith.addf %205, %208 : vector<32x256xf32>
    %cst_310 = arith.constant 0.000000e+00 : f32
    %210 = vector.broadcast %cst_310 : f32 to vector<32x256xf32>
    %211 = arith.maximumf %209, %210 : vector<32x256xf32>
    %c0_311 = arith.constant 0 : index
    %c2_312 = arith.constant 2 : index
    %c0_313 = arith.constant 0 : index
    %c0_314 = arith.constant 0 : index
    %212 = vector.load %arg5[%c0_311, %c2_312, %c0_313, %c0_314] : memref<1x3x32x1xf32, #tpu.memory_space<vmem>>, vector<1x1x32x1xf32>
    %213 = vector.shape_cast %212 : vector<1x1x32x1xf32> to vector<32x1xf32>
    %214 = vector.broadcast %213 : vector<32x1xf32> to vector<32x256xf32>
    %215 = arith.addf %211, %214 : vector<32x256xf32>
    %c0_315 = arith.constant 0 : index
    %c0_316 = arith.constant 0 : index
    %216 = vector.load %arg10[%c0_315, %c0_316] : memref<32x256xf32, #tpu.memory_space<vmem>>, vector<32x256xf32>
    %217 = arith.addf %216, %215 : vector<32x256xf32>
    %c0_317 = arith.constant 0 : index
    %c0_318 = arith.constant 0 : index
    %218 = vector.load %arg10[%c0_317, %c0_318] : memref<32x256xf32, #tpu.memory_space<vmem>>, vector<32x256xf32>
    tpu.vector_store %arg10[%c0_317, %c0_318], %217 {strides = array<i32>} : memref<32x256xf32, #tpu.memory_space<vmem>>, vector<32x256xf32>,
    %219 = arith.truncf %217 : vector<32x256xf32> to vector<32x256xbf16>
    %c0_319 = arith.constant 0 : index
    %c256_320 = arith.constant 256 : index
    %220 = vector.load %arg9[%c0_319, %c256_320] : memref<32x768xbf16, #tpu.memory_space<vmem>>, vector<32x256xbf16>
    tpu.vector_store %arg9[%c0_319, %c256_320], %219 {strides = array<i32>} : memref<32x768xbf16, #tpu.memory_space<vmem>>, vector<32x256xbf16>,
    %cst_321 = arith.constant 0.000000e+00 : f32
    %221 = vector.broadcast %cst_321 : f32 to vector<2x256xf32>
    %c0_322 = arith.constant 0 : index
    %c199_323 = arith.constant 199 : index
    %222 = vector.load %arg9[%c0_322, %c199_323] : memref<32x768xbf16, #tpu.memory_space<vmem>>, vector<32x256xbf16>
    %c0_324 = arith.constant 0 : index
    %c0_325 = arith.constant 0 : index
    %223 = vector.load %arg11[%c0_324, %c0_325] : memref<256x256xbf16, #tpu.memory_space<vmem>>, vector<32x256xbf16>
    tpu.vector_store %arg11[%c0_324, %c0_325], %222 {strides = array<i32>} : memref<256x256xbf16, #tpu.memory_space<vmem>>, vector<32x256xbf16>,
    %c0_326 = arith.constant 0 : index
    %c185_327 = arith.constant 185 : index
    %224 = vector.load %arg9[%c0_326, %c185_327] : memref<32x768xbf16, #tpu.memory_space<vmem>>, vector<32x256xbf16>
    %c32_328 = arith.constant 32 : index
    %c0_329 = arith.constant 0 : index
    %225 = vector.load %arg11[%c32_328, %c0_329] : memref<256x256xbf16, #tpu.memory_space<vmem>>, vector<32x256xbf16>
    tpu.vector_store %arg11[%c32_328, %c0_329], %224 {strides = array<i32>} : memref<256x256xbf16, #tpu.memory_space<vmem>>, vector<32x256xbf16>,
    %c0_330 = arith.constant 0 : index
    %c169_331 = arith.constant 169 : index
    %226 = vector.load %arg9[%c0_330, %c169_331] : memref<32x768xbf16, #tpu.memory_space<vmem>>, vector<32x256xbf16>
    %c64_332 = arith.constant 64 : index
    %c0_333 = arith.constant 0 : index
    %227 = vector.load %arg11[%c64_332, %c0_333] : memref<256x256xbf16, #tpu.memory_space<vmem>>, vector<32x256xbf16>
    tpu.vector_store %arg11[%c64_332, %c0_333], %226 {strides = array<i32>} : memref<256x256xbf16, #tpu.memory_space<vmem>>, vector<32x256xbf16>,
    %c0_334 = arith.constant 0 : index
    %c159_335 = arith.constant 159 : index
    %228 = vector.load %arg9[%c0_334, %c159_335] : memref<32x768xbf16, #tpu.memory_space<vmem>>, vector<32x256xbf16>
    %c96_336 = arith.constant 96 : index
    %c0_337 = arith.constant 0 : index
    %229 = vector.load %arg11[%c96_336, %c0_337] : memref<256x256xbf16, #tpu.memory_space<vmem>>, vector<32x256xbf16>
    tpu.vector_store %arg11[%c96_336, %c0_337], %228 {strides = array<i32>} : memref<256x256xbf16, #tpu.memory_space<vmem>>, vector<32x256xbf16>,
    %c0_338 = arith.constant 0 : index
    %c157_339 = arith.constant 157 : index
    %230 = vector.load %arg9[%c0_338, %c157_339] : memref<32x768xbf16, #tpu.memory_space<vmem>>, vector<32x256xbf16>
    %c128_340 = arith.constant 128 : index
    %c0_341 = arith.constant 0 : index
    %231 = vector.load %arg11[%c128_340, %c0_341] : memref<256x256xbf16, #tpu.memory_space<vmem>>, vector<32x256xbf16>
    tpu.vector_store %arg11[%c128_340, %c0_341], %230 {strides = array<i32>} : memref<256x256xbf16, #tpu.memory_space<vmem>>, vector<32x256xbf16>,
    %c0_342 = arith.constant 0 : index
    %c155_343 = arith.constant 155 : index
    %232 = vector.load %arg9[%c0_342, %c155_343] : memref<32x768xbf16, #tpu.memory_space<vmem>>, vector<32x256xbf16>
    %c160_344 = arith.constant 160 : index
    %c0_345 = arith.constant 0 : index
    %233 = vector.load %arg11[%c160_344, %c0_345] : memref<256x256xbf16, #tpu.memory_space<vmem>>, vector<32x256xbf16>
    tpu.vector_store %arg11[%c160_344, %c0_345], %232 {strides = array<i32>} : memref<256x256xbf16, #tpu.memory_space<vmem>>, vector<32x256xbf16>,
    %c0_346 = arith.constant 0 : index
    %c143_347 = arith.constant 143 : index
    %234 = vector.load %arg9[%c0_346, %c143_347] : memref<32x768xbf16, #tpu.memory_space<vmem>>, vector<32x256xbf16>
    %c192_348 = arith.constant 192 : index
    %c0_349 = arith.constant 0 : index
    %235 = vector.load %arg11[%c192_348, %c0_349] : memref<256x256xbf16, #tpu.memory_space<vmem>>, vector<32x256xbf16>
    tpu.vector_store %arg11[%c192_348, %c0_349], %234 {strides = array<i32>} : memref<256x256xbf16, #tpu.memory_space<vmem>>, vector<32x256xbf16>,
    %c0_350 = arith.constant 0 : index
    %c142_351 = arith.constant 142 : index
    %236 = vector.load %arg9[%c0_350, %c142_351] : memref<32x768xbf16, #tpu.memory_space<vmem>>, vector<32x256xbf16>
    %c224_352 = arith.constant 224 : index
    %c0_353 = arith.constant 0 : index
    %237 = vector.load %arg11[%c224_352, %c0_353] : memref<256x256xbf16, #tpu.memory_space<vmem>>, vector<32x256xbf16>
    tpu.vector_store %arg11[%c224_352, %c0_353], %236 {strides = array<i32>} : memref<256x256xbf16, #tpu.memory_space<vmem>>, vector<32x256xbf16>,
    %c0_354 = arith.constant 0 : index
    %c0_355 = arith.constant 0 : index
    %238 = vector.load %arg6[%c0_354, %c0_355] : memref<2x1184xbf16, #tpu.memory_space<vmem>>, vector<2x256xbf16>
    %c0_356 = arith.constant 0 : index
    %c0_357 = arith.constant 0 : index
    %239 = vector.load %arg11[%c0_356, %c0_357] : memref<256x256xbf16, #tpu.memory_space<vmem>>, vector<256x256xbf16>
    %cst_358 = arith.constant dense<0.000000e+00> : vector<2x256xf32>
    %240 = tpu.matmul %238, %239, %cst_358 {dimension_numbers = #tpu.dot_dimension_numbers<[1], [0], [0], [1], [0, 0, 1, 1], [], []>} : vector<2x256xbf16>, vector<256x256xbf16>, vector<2x256xf32> -> vector<2x256xf32>
    %241 = arith.addf %221, %240 : vector<2x256xf32>
    %c0_359 = arith.constant 0 : index
    %c141_360 = arith.constant 141 : index
    %242 = vector.load %arg9[%c0_359, %c141_360] : memref<32x768xbf16, #tpu.memory_space<vmem>>, vector<32x256xbf16>
    %c0_361 = arith.constant 0 : index
    %c0_362 = arith.constant 0 : index
    %243 = vector.load %arg11[%c0_361, %c0_362] : memref<256x256xbf16, #tpu.memory_space<vmem>>, vector<32x256xbf16>
    tpu.vector_store %arg11[%c0_361, %c0_362], %242 {strides = array<i32>} : memref<256x256xbf16, #tpu.memory_space<vmem>>, vector<32x256xbf16>,
    %c0_363 = arith.constant 0 : index
    %c128_364 = arith.constant 128 : index
    %244 = vector.load %arg9[%c0_363, %c128_364] : memref<32x768xbf16, #tpu.memory_space<vmem>>, vector<32x256xbf16>
    %c32_365 = arith.constant 32 : index
    %c0_366 = arith.constant 0 : index
    %245 = vector.load %arg11[%c32_365, %c0_366] : memref<256x256xbf16, #tpu.memory_space<vmem>>, vector<32x256xbf16>
    tpu.vector_store %arg11[%c32_365, %c0_366], %244 {strides = array<i32>} : memref<256x256xbf16, #tpu.memory_space<vmem>>, vector<32x256xbf16>,
    %c0_367 = arith.constant 0 : index
    %c127_368 = arith.constant 127 : index
    %246 = vector.load %arg9[%c0_367, %c127_368] : memref<32x768xbf16, #tpu.memory_space<vmem>>, vector<32x256xbf16>
    %c64_369 = arith.constant 64 : index
    %c0_370 = arith.constant 0 : index
    %247 = vector.load %arg11[%c64_369, %c0_370] : memref<256x256xbf16, #tpu.memory_space<vmem>>, vector<32x256xbf16>
    tpu.vector_store %arg11[%c64_369, %c0_370], %246 {strides = array<i32>} : memref<256x256xbf16, #tpu.memory_space<vmem>>, vector<32x256xbf16>,
    %c0_371 = arith.constant 0 : index
    %c125_372 = arith.constant 125 : index
    %248 = vector.load %arg9[%c0_371, %c125_372] : memref<32x768xbf16, #tpu.memory_space<vmem>>, vector<32x256xbf16>
    %c96_373 = arith.constant 96 : index
    %c0_374 = arith.constant 0 : index
    %249 = vector.load %arg11[%c96_373, %c0_374] : memref<256x256xbf16, #tpu.memory_space<vmem>>, vector<32x256xbf16>
    tpu.vector_store %arg11[%c96_373, %c0_374], %248 {strides = array<i32>} : memref<256x256xbf16, #tpu.memory_space<vmem>>, vector<32x256xbf16>,
    %c0_375 = arith.constant 0 : index
    %c119_376 = arith.constant 119 : index
    %250 = vector.load %arg9[%c0_375, %c119_376] : memref<32x768xbf16, #tpu.memory_space<vmem>>, vector<32x256xbf16>
    %c128_377 = arith.constant 128 : index
    %c0_378 = arith.constant 0 : index
    %251 = vector.load %arg11[%c128_377, %c0_378] : memref<256x256xbf16, #tpu.memory_space<vmem>>, vector<32x256xbf16>
    tpu.vector_store %arg11[%c128_377, %c0_378], %250 {strides = array<i32>} : memref<256x256xbf16, #tpu.memory_space<vmem>>, vector<32x256xbf16>,
    %c0_379 = arith.constant 0 : index
    %c109_380 = arith.constant 109 : index
    %252 = vector.load %arg9[%c0_379, %c109_380] : memref<32x768xbf16, #tpu.memory_space<vmem>>, vector<32x256xbf16>
    %c160_381 = arith.constant 160 : index
    %c0_382 = arith.constant 0 : index
    %253 = vector.load %arg11[%c160_381, %c0_382] : memref<256x256xbf16, #tpu.memory_space<vmem>>, vector<32x256xbf16>
    tpu.vector_store %arg11[%c160_381, %c0_382], %252 {strides = array<i32>} : memref<256x256xbf16, #tpu.memory_space<vmem>>, vector<32x256xbf16>,
    %c0_383 = arith.constant 0 : index
    %c100_384 = arith.constant 100 : index
    %254 = vector.load %arg9[%c0_383, %c100_384] : memref<32x768xbf16, #tpu.memory_space<vmem>>, vector<32x256xbf16>
    %c192_385 = arith.constant 192 : index
    %c0_386 = arith.constant 0 : index
    %255 = vector.load %arg11[%c192_385, %c0_386] : memref<256x256xbf16, #tpu.memory_space<vmem>>, vector<32x256xbf16>
    tpu.vector_store %arg11[%c192_385, %c0_386], %254 {strides = array<i32>} : memref<256x256xbf16, #tpu.memory_space<vmem>>, vector<32x256xbf16>,
    %c0_387 = arith.constant 0 : index
    %c96_388 = arith.constant 96 : index
    %256 = vector.load %arg9[%c0_387, %c96_388] : memref<32x768xbf16, #tpu.memory_space<vmem>>, vector<32x256xbf16>
    %c224_389 = arith.constant 224 : index
    %c0_390 = arith.constant 0 : index
    %257 = vector.load %arg11[%c224_389, %c0_390] : memref<256x256xbf16, #tpu.memory_space<vmem>>, vector<32x256xbf16>
    tpu.vector_store %arg11[%c224_389, %c0_390], %256 {strides = array<i32>} : memref<256x256xbf16, #tpu.memory_space<vmem>>, vector<32x256xbf16>,
    %c0_391 = arith.constant 0 : index
    %c256_392 = arith.constant 256 : index
    %258 = vector.load %arg6[%c0_391, %c256_392] : memref<2x1184xbf16, #tpu.memory_space<vmem>>, vector<2x256xbf16>
    %c0_393 = arith.constant 0 : index
    %c0_394 = arith.constant 0 : index
    %259 = vector.load %arg11[%c0_393, %c0_394] : memref<256x256xbf16, #tpu.memory_space<vmem>>, vector<256x256xbf16>
    %cst_395 = arith.constant dense<0.000000e+00> : vector<2x256xf32>
    %260 = tpu.matmul %258, %259, %cst_395 {dimension_numbers = #tpu.dot_dimension_numbers<[1], [0], [0], [1], [0, 0, 1, 1], [], []>} : vector<2x256xbf16>, vector<256x256xbf16>, vector<2x256xf32> -> vector<2x256xf32>
    %261 = arith.addf %241, %260 : vector<2x256xf32>
    %c0_396 = arith.constant 0 : index
    %c93_397 = arith.constant 93 : index
    %262 = vector.load %arg9[%c0_396, %c93_397] : memref<32x768xbf16, #tpu.memory_space<vmem>>, vector<32x256xbf16>
    %c0_398 = arith.constant 0 : index
    %c0_399 = arith.constant 0 : index
    %263 = vector.load %arg11[%c0_398, %c0_399] : memref<256x256xbf16, #tpu.memory_space<vmem>>, vector<32x256xbf16>
    tpu.vector_store %arg11[%c0_398, %c0_399], %262 {strides = array<i32>} : memref<256x256xbf16, #tpu.memory_space<vmem>>, vector<32x256xbf16>,
    %c0_400 = arith.constant 0 : index
    %c70_401 = arith.constant 70 : index
    %264 = vector.load %arg9[%c0_400, %c70_401] : memref<32x768xbf16, #tpu.memory_space<vmem>>, vector<32x256xbf16>
    %c32_402 = arith.constant 32 : index
    %c0_403 = arith.constant 0 : index
    %265 = vector.load %arg11[%c32_402, %c0_403] : memref<256x256xbf16, #tpu.memory_space<vmem>>, vector<32x256xbf16>
    tpu.vector_store %arg11[%c32_402, %c0_403], %264 {strides = array<i32>} : memref<256x256xbf16, #tpu.memory_space<vmem>>, vector<32x256xbf16>,
    %c0_404 = arith.constant 0 : index
    %c256_405 = arith.constant 256 : index
    %266 = vector.load %arg9[%c0_404, %c256_405] : memref<32x768xbf16, #tpu.memory_space<vmem>>, vector<32x256xbf16>
    %c64_406 = arith.constant 64 : index
    %c0_407 = arith.constant 0 : index
    %267 = vector.load %arg11[%c64_406, %c0_407] : memref<256x256xbf16, #tpu.memory_space<vmem>>, vector<32x256xbf16>
    tpu.vector_store %arg11[%c64_406, %c0_407], %266 {strides = array<i32>} : memref<256x256xbf16, #tpu.memory_space<vmem>>, vector<32x256xbf16>,
    %c0_408 = arith.constant 0 : index
    %c313_409 = arith.constant 313 : index
    %268 = vector.load %arg9[%c0_408, %c313_409] : memref<32x768xbf16, #tpu.memory_space<vmem>>, vector<32x256xbf16>
    %c96_410 = arith.constant 96 : index
    %c0_411 = arith.constant 0 : index
    %269 = vector.load %arg11[%c96_410, %c0_411] : memref<256x256xbf16, #tpu.memory_space<vmem>>, vector<32x256xbf16>
    tpu.vector_store %arg11[%c96_410, %c0_411], %268 {strides = array<i32>} : memref<256x256xbf16, #tpu.memory_space<vmem>>, vector<32x256xbf16>,
    %c0_412 = arith.constant 0 : index
    %c327_413 = arith.constant 327 : index
    %270 = vector.load %arg9[%c0_412, %c327_413] : memref<32x768xbf16, #tpu.memory_space<vmem>>, vector<32x256xbf16>
    %c128_414 = arith.constant 128 : index
    %c0_415 = arith.constant 0 : index
    %271 = vector.load %arg11[%c128_414, %c0_415] : memref<256x256xbf16, #tpu.memory_space<vmem>>, vector<32x256xbf16>
    tpu.vector_store %arg11[%c128_414, %c0_415], %270 {strides = array<i32>} : memref<256x256xbf16, #tpu.memory_space<vmem>>, vector<32x256xbf16>,
    %c0_416 = arith.constant 0 : index
    %c343_417 = arith.constant 343 : index
    %272 = vector.load %arg9[%c0_416, %c343_417] : memref<32x768xbf16, #tpu.memory_space<vmem>>, vector<32x256xbf16>
    %c160_418 = arith.constant 160 : index
    %c0_419 = arith.constant 0 : index
    %273 = vector.load %arg11[%c160_418, %c0_419] : memref<256x256xbf16, #tpu.memory_space<vmem>>, vector<32x256xbf16>
    tpu.vector_store %arg11[%c160_418, %c0_419], %272 {strides = array<i32>} : memref<256x256xbf16, #tpu.memory_space<vmem>>, vector<32x256xbf16>,
    %c0_420 = arith.constant 0 : index
    %c353_421 = arith.constant 353 : index
    %274 = vector.load %arg9[%c0_420, %c353_421] : memref<32x768xbf16, #tpu.memory_space<vmem>>, vector<32x256xbf16>
    %c192_422 = arith.constant 192 : index
    %c0_423 = arith.constant 0 : index
    %275 = vector.load %arg11[%c192_422, %c0_423] : memref<256x256xbf16, #tpu.memory_space<vmem>>, vector<32x256xbf16>
    tpu.vector_store %arg11[%c192_422, %c0_423], %274 {strides = array<i32>} : memref<256x256xbf16, #tpu.memory_space<vmem>>, vector<32x256xbf16>,
    %c0_424 = arith.constant 0 : index
    %c355_425 = arith.constant 355 : index
    %276 = vector.load %arg9[%c0_424, %c355_425] : memref<32x768xbf16, #tpu.memory_space<vmem>>, vector<32x256xbf16>
    %c224_426 = arith.constant 224 : index
    %c0_427 = arith.constant 0 : index
    %277 = vector.load %arg11[%c224_426, %c0_427] : memref<256x256xbf16, #tpu.memory_space<vmem>>, vector<32x256xbf16>
    tpu.vector_store %arg11[%c224_426, %c0_427], %276 {strides = array<i32>} : memref<256x256xbf16, #tpu.memory_space<vmem>>, vector<32x256xbf16>,
    %c0_428 = arith.constant 0 : index
    %c512_429 = arith.constant 512 : index
    %278 = vector.load %arg6[%c0_428, %c512_429] : memref<2x1184xbf16, #tpu.memory_space<vmem>>, vector<2x256xbf16>
    %c0_430 = arith.constant 0 : index
    %c0_431 = arith.constant 0 : index
    %279 = vector.load %arg11[%c0_430, %c0_431] : memref<256x256xbf16, #tpu.memory_space<vmem>>, vector<256x256xbf16>
    %cst_432 = arith.constant dense<0.000000e+00> : vector<2x256xf32>
    %280 = tpu.matmul %278, %279, %cst_432 {dimension_numbers = #tpu.dot_dimension_numbers<[1], [0], [0], [1], [0, 0, 1, 1], [], []>} : vector<2x256xbf16>, vector<256x256xbf16>, vector<2x256xf32> -> vector<2x256xf32>
    %281 = arith.addf %261, %280 : vector<2x256xf32>
    %c0_433 = arith.constant 0 : index
    %c357_434 = arith.constant 357 : index
    %282 = vector.load %arg9[%c0_433, %c357_434] : memref<32x768xbf16, #tpu.memory_space<vmem>>, vector<32x256xbf16>
    %c0_435 = arith.constant 0 : index
    %c0_436 = arith.constant 0 : index
    %283 = vector.load %arg11[%c0_435, %c0_436] : memref<256x256xbf16, #tpu.memory_space<vmem>>, vector<32x256xbf16>
    tpu.vector_store %arg11[%c0_435, %c0_436], %282 {strides = array<i32>} : memref<256x256xbf16, #tpu.memory_space<vmem>>, vector<32x256xbf16>,
    %c0_437 = arith.constant 0 : index
    %c369_438 = arith.constant 369 : index
    %284 = vector.load %arg9[%c0_437, %c369_438] : memref<32x768xbf16, #tpu.memory_space<vmem>>, vector<32x256xbf16>
    %c32_439 = arith.constant 32 : index
    %c0_440 = arith.constant 0 : index
    %285 = vector.load %arg11[%c32_439, %c0_440] : memref<256x256xbf16, #tpu.memory_space<vmem>>, vector<32x256xbf16>
    tpu.vector_store %arg11[%c32_439, %c0_440], %284 {strides = array<i32>} : memref<256x256xbf16, #tpu.memory_space<vmem>>, vector<32x256xbf16>,
    %c0_441 = arith.constant 0 : index
    %c370_442 = arith.constant 370 : index
    %286 = vector.load %arg9[%c0_441, %c370_442] : memref<32x768xbf16, #tpu.memory_space<vmem>>, vector<32x256xbf16>
    %c64_443 = arith.constant 64 : index
    %c0_444 = arith.constant 0 : index
    %287 = vector.load %arg11[%c64_443, %c0_444] : memref<256x256xbf16, #tpu.memory_space<vmem>>, vector<32x256xbf16>
    tpu.vector_store %arg11[%c64_443, %c0_444], %286 {strides = array<i32>} : memref<256x256xbf16, #tpu.memory_space<vmem>>, vector<32x256xbf16>,
    %c0_445 = arith.constant 0 : index
    %c371_446 = arith.constant 371 : index
    %288 = vector.load %arg9[%c0_445, %c371_446] : memref<32x768xbf16, #tpu.memory_space<vmem>>, vector<32x256xbf16>
    %c96_447 = arith.constant 96 : index
    %c0_448 = arith.constant 0 : index
    %289 = vector.load %arg11[%c96_447, %c0_448] : memref<256x256xbf16, #tpu.memory_space<vmem>>, vector<32x256xbf16>
    tpu.vector_store %arg11[%c96_447, %c0_448], %288 {strides = array<i32>} : memref<256x256xbf16, #tpu.memory_space<vmem>>, vector<32x256xbf16>,
    %c0_449 = arith.constant 0 : index
    %c384_450 = arith.constant 384 : index
    %290 = vector.load %arg9[%c0_449, %c384_450] : memref<32x768xbf16, #tpu.memory_space<vmem>>, vector<32x256xbf16>
    %c128_451 = arith.constant 128 : index
    %c0_452 = arith.constant 0 : index
    %291 = vector.load %arg11[%c128_451, %c0_452] : memref<256x256xbf16, #tpu.memory_space<vmem>>, vector<32x256xbf16>
    tpu.vector_store %arg11[%c128_451, %c0_452], %290 {strides = array<i32>} : memref<256x256xbf16, #tpu.memory_space<vmem>>, vector<32x256xbf16>,
    %c0_453 = arith.constant 0 : index
    %c385_454 = arith.constant 385 : index
    %292 = vector.load %arg9[%c0_453, %c385_454] : memref<32x768xbf16, #tpu.memory_space<vmem>>, vector<32x256xbf16>
    %c160_455 = arith.constant 160 : index
    %c0_456 = arith.constant 0 : index
    %293 = vector.load %arg11[%c160_455, %c0_456] : memref<256x256xbf16, #tpu.memory_space<vmem>>, vector<32x256xbf16>
    tpu.vector_store %arg11[%c160_455, %c0_456], %292 {strides = array<i32>} : memref<256x256xbf16, #tpu.memory_space<vmem>>, vector<32x256xbf16>,
    %c0_457 = arith.constant 0 : index
    %c387_458 = arith.constant 387 : index
    %294 = vector.load %arg9[%c0_457, %c387_458] : memref<32x768xbf16, #tpu.memory_space<vmem>>, vector<32x256xbf16>
    %c192_459 = arith.constant 192 : index
    %c0_460 = arith.constant 0 : index
    %295 = vector.load %arg11[%c192_459, %c0_460] : memref<256x256xbf16, #tpu.memory_space<vmem>>, vector<32x256xbf16>
    tpu.vector_store %arg11[%c192_459, %c0_460], %294 {strides = array<i32>} : memref<256x256xbf16, #tpu.memory_space<vmem>>, vector<32x256xbf16>,
    %c0_461 = arith.constant 0 : index
    %c393_462 = arith.constant 393 : index
    %296 = vector.load %arg9[%c0_461, %c393_462] : memref<32x768xbf16, #tpu.memory_space<vmem>>, vector<32x256xbf16>
    %c224_463 = arith.constant 224 : index
    %c0_464 = arith.constant 0 : index
    %297 = vector.load %arg11[%c224_463, %c0_464] : memref<256x256xbf16, #tpu.memory_space<vmem>>, vector<32x256xbf16>
    tpu.vector_store %arg11[%c224_463, %c0_464], %296 {strides = array<i32>} : memref<256x256xbf16, #tpu.memory_space<vmem>>, vector<32x256xbf16>,
    %c0_465 = arith.constant 0 : index
    %c768_466 = arith.constant 768 : index
    %298 = vector.load %arg6[%c0_465, %c768_466] : memref<2x1184xbf16, #tpu.memory_space<vmem>>, vector<2x256xbf16>
    %c0_467 = arith.constant 0 : index
    %c0_468 = arith.constant 0 : index
    %299 = vector.load %arg11[%c0_467, %c0_468] : memref<256x256xbf16, #tpu.memory_space<vmem>>, vector<256x256xbf16>
    %cst_469 = arith.constant dense<0.000000e+00> : vector<2x256xf32>
    %300 = tpu.matmul %298, %299, %cst_469 {dimension_numbers = #tpu.dot_dimension_numbers<[1], [0], [0], [1], [0, 0, 1, 1], [], []>} : vector<2x256xbf16>, vector<256x256xbf16>, vector<2x256xf32> -> vector<2x256xf32>
    %301 = arith.addf %281, %300 : vector<2x256xf32>
    %c0_470 = arith.constant 0 : index
    %c403_471 = arith.constant 403 : index
    %302 = vector.load %arg9[%c0_470, %c403_471] : memref<32x768xbf16, #tpu.memory_space<vmem>>, vector<32x256xbf16>
    %c0_472 = arith.constant 0 : index
    %c0_473 = arith.constant 0 : index
    %303 = vector.load %arg11[%c0_472, %c0_473] : memref<256x256xbf16, #tpu.memory_space<vmem>>, vector<32x256xbf16>
    tpu.vector_store %arg11[%c0_472, %c0_473], %302 {strides = array<i32>} : memref<256x256xbf16, #tpu.memory_space<vmem>>, vector<32x256xbf16>,
    %c0_474 = arith.constant 0 : index
    %c412_475 = arith.constant 412 : index
    %304 = vector.load %arg9[%c0_474, %c412_475] : memref<32x768xbf16, #tpu.memory_space<vmem>>, vector<32x256xbf16>
    %c32_476 = arith.constant 32 : index
    %c0_477 = arith.constant 0 : index
    %305 = vector.load %arg11[%c32_476, %c0_477] : memref<256x256xbf16, #tpu.memory_space<vmem>>, vector<32x256xbf16>
    tpu.vector_store %arg11[%c32_476, %c0_477], %304 {strides = array<i32>} : memref<256x256xbf16, #tpu.memory_space<vmem>>, vector<32x256xbf16>,
    %c0_478 = arith.constant 0 : index
    %c416_479 = arith.constant 416 : index
    %306 = vector.load %arg9[%c0_478, %c416_479] : memref<32x768xbf16, #tpu.memory_space<vmem>>, vector<32x256xbf16>
    %c64_480 = arith.constant 64 : index
    %c0_481 = arith.constant 0 : index
    %307 = vector.load %arg11[%c64_480, %c0_481] : memref<256x256xbf16, #tpu.memory_space<vmem>>, vector<32x256xbf16>
    tpu.vector_store %arg11[%c64_480, %c0_481], %306 {strides = array<i32>} : memref<256x256xbf16, #tpu.memory_space<vmem>>, vector<32x256xbf16>,
    %c0_482 = arith.constant 0 : index
    %c419_483 = arith.constant 419 : index
    %308 = vector.load %arg9[%c0_482, %c419_483] : memref<32x768xbf16, #tpu.memory_space<vmem>>, vector<32x256xbf16>
    %c96_484 = arith.constant 96 : index
    %c0_485 = arith.constant 0 : index
    %309 = vector.load %arg11[%c96_484, %c0_485] : memref<256x256xbf16, #tpu.memory_space<vmem>>, vector<32x256xbf16>
    tpu.vector_store %arg11[%c96_484, %c0_485], %308 {strides = array<i32>} : memref<256x256xbf16, #tpu.memory_space<vmem>>, vector<32x256xbf16>,
    %c0_486 = arith.constant 0 : index
    %c442_487 = arith.constant 442 : index
    %310 = vector.load %arg9[%c0_486, %c442_487] : memref<32x768xbf16, #tpu.memory_space<vmem>>, vector<32x256xbf16>
    %c128_488 = arith.constant 128 : index
    %c0_489 = arith.constant 0 : index
    %311 = vector.load %arg11[%c128_488, %c0_489] : memref<256x256xbf16, #tpu.memory_space<vmem>>, vector<32x256xbf16>
    tpu.vector_store %arg11[%c128_488, %c0_489], %310 {strides = array<i32>} : memref<256x256xbf16, #tpu.memory_space<vmem>>, vector<32x256xbf16>,
    %c0_490 = arith.constant 0 : index
    %c1024_491 = arith.constant 1024 : index
    %312 = vector.load %arg6[%c0_490, %c1024_491] : memref<2x1184xbf16, #tpu.memory_space<vmem>>, vector<2x160xbf16>
    %c0_492 = arith.constant 0 : index
    %c0_493 = arith.constant 0 : index
    %313 = vector.load %arg11[%c0_492, %c0_493] : memref<256x256xbf16, #tpu.memory_space<vmem>>, vector<160x256xbf16>
    %cst_494 = arith.constant dense<0.000000e+00> : vector<2x256xf32>
    %314 = tpu.matmul %312, %313, %cst_494 {dimension_numbers = #tpu.dot_dimension_numbers<[1], [0], [0], [1], [0, 0, 1, 1], [], []>} : vector<2x160xbf16>, vector<160x256xbf16>, vector<2x256xf32> -> vector<2x256xf32>
    %315 = arith.addf %301, %314 : vector<2x256xf32>
    %c0_495 = arith.constant 0 : index
    %c0_496 = arith.constant 0 : index
    %316 = vector.load %arg7[%c0_495, %c0_496] : memref<2x1xf32, #tpu.memory_space<vmem>>, vector<2x1xf32>
    %317 = vector.broadcast %316 : vector<2x1xf32> to vector<2x256xf32>
    %318 = arith.addf %315, %317 : vector<2x256xf32>
    %c0_497 = arith.constant 0 : index
    %c0_498 = arith.constant 0 : index
    %c0_499 = arith.constant 0 : index
    %319 = vector.load %arg8[%c0_497, %c0_498, %c0_499] : memref<1x2x256xf32, #tpu.memory_space<vmem>>, vector<1x2x256xf32>
    %320 = vector.shape_cast %319 : vector<1x2x256xf32> to vector<2x256xf32>
    %321 = vector.shape_cast %318 : vector<2x256xf32> to vector<1x2x256xf32>
    tpu.vector_store %arg8[%c0_497, %c0_498, %c0_499], %321 {strides = array<i32>} : memref<1x2x256xf32, #tpu.memory_space<vmem>>, vector<1x2x256xf32>,
    return
  }
  func.func @transform_0(%arg0: i32) -> (i32, i32, i32) {
    %c0_i32 = arith.constant 0 : i32
    %c0_i32_0 = arith.constant 0 : i32
    %c0_i32_1 = arith.constant 0 : i32
    return %arg0, %c0_i32, %c0_i32_0 : i32, i32, i32
  }
  func.func @transform_1(%arg0: i32) -> (i32, i32) {
    %c0_i32 = arith.constant 0 : i32
    %c0_i32_0 = arith.constant 0 : i32
    %c0_i32_1 = arith.constant 0 : i32
    return %c0_i32, %c0_i32_0 : i32, i32
  }
  func.func @transform_2(%arg0: i32) -> (i32, i32, i32) {
    %c0_i32 = arith.constant 0 : i32
    %c0_i32_0 = arith.constant 0 : i32
    %c0_i32_1 = arith.constant 0 : i32
    %c0_i32_2 = arith.constant 0 : i32
    return %c0_i32, %c0_i32_0, %c0_i32_1 : i32, i32, i32
  }
  func.func @transform_3(%arg0: i32) -> (i32, i32, i32) {
    %c0_i32 = arith.constant 0 : i32
    %c0_i32_0 = arith.constant 0 : i32
    %c0_i32_1 = arith.constant 0 : i32
    %c0_i32_2 = arith.constant 0 : i32
    return %c0_i32, %c0_i32_0, %c0_i32_1 : i32, i32, i32
  }
  func.func @transform_4(%arg0: i32) -> (i32, i32, i32, i32) {
    %c0_i32 = arith.constant 0 : i32
    %c0_i32_0 = arith.constant 0 : i32
    %c0_i32_1 = arith.constant 0 : i32
    %c0_i32_2 = arith.constant 0 : i32
    %c0_i32_3 = arith.constant 0 : i32
    return %c0_i32, %c0_i32_0, %c0_i32_1, %c0_i32_2 : i32, i32, i32, i32
  }
  func.func @transform_5(%arg0: i32) -> (i32, i32) {
    %c0_i32 = arith.constant 0 : i32
    %c0_i32_0 = arith.constant 0 : i32
    %c0_i32_1 = arith.constant 0 : i32
    return %c0_i32, %c0_i32_0 : i32, i32
  }
  func.func @transform_6(%arg0: i32) -> (i32, i32) {
    %c0_i32 = arith.constant 0 : i32
    %c0_i32_0 = arith.constant 0 : i32
    %c0_i32_1 = arith.constant 0 : i32
    return %c0_i32, %c0_i32_0 : i32, i32
  }
  func.func @transform_7(%arg0: i32) -> (i32, i32, i32) {
    %c0_i32 = arith.constant 0 : i32
    %c0_i32_0 = arith.constant 0 : i32
    %c0_i32_1 = arith.constant 0 : i32
    return %arg0, %c0_i32, %c0_i32_0 : i32, i32, i32
  }
}

</mosaic_0001>

<llo_original>
// kernel: tpu_custom_call.1
$region0: #{tpu_custom_call.1}
  #allocation0 [shape = 'u32[]', space=smem, size = 0x4, offset = 0x4, fixed_abs, tag = 'smem constant byte address 0x4 - core index']
  #allocation1 [shape = 'u32[144,128]{1,0:T(1,128)}', space=vmem, size = 0x12000, scoped, tag = 'internal scratch']
  #allocation2 [shape = 'bf16[32,768]{1,0:T(16,128)(2,1)}', space=vmem, size = 0xc000, scoped, tag = 'scratch operand']
  #allocation3 [shape = 'f32[32,256]{1,0:T(8,128)}', space=vmem, size = 0x8000, scoped, tag = 'scratch operand']
  #allocation4 [shape = 'bf16[256,256]{1,0:T(16,128)(2,1)}', space=vmem, size = 0x20000, scoped, tag = 'scratch operand']
  %s0 = inlined_call_operand.vmem [shape: f32[2,4,256], index: 0, kind: input, shape index: {}]
  %s1 = inlined_call_operand.hbm [shape: bf16[32,592], index: 1, kind: input, shape index: {}]
  %s2 = inlined_call_operand.vmem [shape: f32[3,32,1], index: 2, kind: input, shape index: {}]
  %s3 = inlined_call_operand.vmem [shape: bf16[1,32,1184], index: 3, kind: input, shape index: {}]
  %s4 = inlined_call_operand.vmem [shape: f32[1,3,32,1], index: 4, kind: input, shape index: {}]
  %s5 = inlined_call_operand.vmem [shape: bf16[2,1184], index: 5, kind: input, shape index: {}]
  %s6 = inlined_call_operand.vmem [shape: f32[2,1], index: 6, kind: input, shape index: {}]
  %s7 = inlined_call_operand.hbm [shape: f32[2,2,256], index: 7, kind: output, shape index: {}]
  %s8 = sld [smem:[#allocation0]]
  $region65: #{tpu_custom_call.1} parent=0
    _
  %s10 = ssub.s32 1, %s8
  %s11 = scalar_select 0, %s10, %s8
  $region1: #{tpu_custom_call.1} parent=0
    #allocation5 [shape = 'u8[40960]{0}', space=vmem, size = 0xa000, scoped, tag = 'input window, operand 1, single buffered']
    #allocation6 [shape = 's32[2]{0}', space=sflag, size = 0x8, scoped, tag = 'scoped memory for tpu_custom_call.1']
    #allocation7 [shape = 's32[2]{0}', space=sflag, size = 0x8, scoped, tag = 'scoped memory for tpu_custom_call.1']
    #allocation8 [shape = 'u8[4096]{0}', space=vmem, size = 0x1000, scoped, tag = 'output window, operand 0']
    %12 = vsyncpa [#allocation6], 0
    %13 = vsyncpa [#allocation7], 0
    %s14 = scalar_lea.sflag [#allocation7], 1
    %15 = vsyncpa %s14, 0
    loop: start=0, step=1, limit=4
    $region2: #{tpu_custom_call.1} parent=1 // loop_pre_header
      _
    $region3: #{tpu_custom_call.1} parent=1 // loop_header
      %s17 = sphi 0, %s21
      %p18 = scmp.ge.s32.totalorder %s17, 4
      %s27 = sphi 0, %s29
      %s30 = sphi 0, %s27
      %s31 = sphi 0, %s30
      %s47 = sphi 0, %s31
      %s51 = sphi 0, %s51
      %s53 = sphi 0, %s51
      %s54 = sphi 0, %s53
      %s68 = sphi 0, %s54
      %s72 = sphi 0, %s72
      %s74 = sphi 0, %s72
      %s75 = sphi 0, %s74
      %s89 = sphi 0, %s75
      %s93 = sphi 0, %s93
      %s95 = sphi 0, %s93
      %s96 = sphi 0, %s95
      %s110 = sphi 0, %s96
      %s114 = sphi 0, %s114
      %s116 = sphi 0, %s114
      %s117 = sphi 0, %s116
      %s131 = sphi 0, %s117
      %s135 = sphi 0, %s135
      %s137 = sphi 0, %s135
      %s138 = sphi 0, %s137
      %s152 = sphi 0, %s138
      %s156 = sphi 0, %s156
      %s158 = sphi 0, %s156
      %s159 = sphi 0, %s158
      %s173 = sphi 0, %s159
      %s179 = sphi 0, %s181
      %s182 = sphi 0, %s179
      %s183 = sphi 0, %s182
      %s199 = sphi 0, %s183
    $region4: #{tpu_custom_call.1} parent=1 // loop_header_branch
      %20 = sbr.rel (%p18) target = $region8
    $region5: #{tpu_custom_call.1} parent=1 // loop_body
      %s22 = ssub.s32 %s17, 1
      %s23 = ssub.s32 %s17, 2
      %s24 = sadd.s32 %s17, 1
      %s25 = ssub.s32 %s17, %s24
      %p26 = scmp.eq.s32.totalorder %s25, 0
      %s28 = sadd.s32 %s27, 1
      %s29 = scalar_select %p26, %s27, %s28
      %p32 = pneg %p26
      %p33 = scmp.eq.s32.totalorder %s17, 1
      %p34 = por %p32, %p33
      %p35 = scmp.ne.s32.totalorder %s27, %s30
      %p36 = scmp.eq.s32.totalorder %s17, 0
      %p37 = por %p35, %p36
      %p38 = scmp.ne.s32.totalorder %s27, %s30
      %p39 = scmp.eq.s32.totalorder %s22, 1
      %p40 = por %p38, %p39
      %p41 = scmp.ne.s32.totalorder %s30, %s31
      %p42 = scmp.eq.s32.totalorder %s22, 0
      %p43 = por %p41, %p42
      %p44 = scmp.ne.s32.totalorder %s30, %s31
      %p45 = scmp.eq.s32.totalorder %s23, 1
      %p46 = por %p44, %p45
      %p48 = scmp.ne.s32.totalorder %s31, %s47
      %p49 = scmp.eq.s32.totalorder %s23, 0
      %p50 = por %p48, %p49
      %s52 = sadd.s32 %s51, 1
      %p55 = scmp.eq.s32.totalorder %s17, 1
      %p56 = scmp.ne.s32.totalorder %s51, %s53
      %p57 = scmp.eq.s32.totalorder %s17, 0
      %p58 = por %p56, %p57
      %p59 = scmp.ne.s32.totalorder %s51, %s53
      %p60 = scmp.eq.s32.totalorder %s22, 1
      %p61 = por %p59, %p60
      %p62 = scmp.ne.s32.totalorder %s53, %s54
      %p63 = scmp.eq.s32.totalorder %s22, 0
      %p64 = por %p62, %p63
      %p65 = scmp.ne.s32.totalorder %s53, %s54
      %p66 = scmp.eq.s32.totalorder %s23, 1
      %p67 = por %p65, %p66
      %p69 = scmp.ne.s32.totalorder %s54, %s68
      %p70 = scmp.eq.s32.totalorder %s23, 0
      %p71 = por %p69, %p70
      %s73 = sadd.s32 %s72, 1
      %p76 = scmp.eq.s32.totalorder %s17, 1
      %p77 = scmp.ne.s32.totalorder %s72, %s74
      %p78 = scmp.eq.s32.totalorder %s17, 0
      %p79 = por %p77, %p78
      %p80 = scmp.ne.s32.totalorder %s72, %s74
      %p81 = scmp.eq.s32.totalorder %s22, 1
      %p82 = por %p80, %p81
      %p83 = scmp.ne.s32.totalorder %s74, %s75
      %p84 = scmp.eq.s32.totalorder %s22, 0
      %p85 = por %p83, %p84
      %p86 = scmp.ne.s32.totalorder %s74, %s75
      %p87 = scmp.eq.s32.totalorder %s23, 1
      %p88 = por %p86, %p87
      %p90 = scmp.ne.s32.totalorder %s75, %s89
      %p91 = scmp.eq.s32.totalorder %s23, 0
      %p92 = por %p90, %p91
      %s94 = sadd.s32 %s93, 1
      %p97 = scmp.eq.s32.totalorder %s17, 1
      %p98 = scmp.ne.s32.totalorder %s93, %s95
      %p99 = scmp.eq.s32.totalorder %s17, 0
      %p100 = por %p98, %p99
      %p101 = scmp.ne.s32.totalorder %s93, %s95
      %p102 = scmp.eq.s32.totalorder %s22, 1
      %p103 = por %p101, %p102
      %p104 = scmp.ne.s32.totalorder %s95, %s96
      %p105 = scmp.eq.s32.totalorder %s22, 0
      %p106 = por %p104, %p105
      %p107 = scmp.ne.s32.totalorder %s95, %s96
      %p108 = scmp.eq.s32.totalorder %s23, 1
      %p109 = por %p107, %p108
      %p111 = scmp.ne.s32.totalorder %s96, %s110
      %p112 = scmp.eq.s32.totalorder %s23, 0
      %p113 = por %p111, %p112
      %s115 = sadd.s32 %s114, 1
      %p118 = scmp.eq.s32.totalorder %s17, 1
      %p119 = scmp.ne.s32.totalorder %s114, %s116
      %p120 = scmp.eq.s32.totalorder %s17, 0
      %p121 = por %p119, %p120
      %p122 = scmp.ne.s32.totalorder %s114, %s116
      %p123 = scmp.eq.s32.totalorder %s22, 1
      %p124 = por %p122, %p123
      %p125 = scmp.ne.s32.totalorder %s116, %s117
      %p126 = scmp.eq.s32.totalorder %s22, 0
      %p127 = por %p125, %p126
      %p128 = scmp.ne.s32.totalorder %s116, %s117
      %p129 = scmp.eq.s32.totalorder %s23, 1
      %p130 = por %p128, %p129
      %p132 = scmp.ne.s32.totalorder %s117, %s131
      %p133 = scmp.eq.s32.totalorder %s23, 0
      %p134 = por %p132, %p133
      %s136 = sadd.s32 %s135, 1
      %p139 = scmp.eq.s32.totalorder %s17, 1
      %p140 = scmp.ne.s32.totalorder %s135, %s137
      %p141 = scmp.eq.s32.totalorder %s17, 0
      %p142 = por %p140, %p141
      %p143 = scmp.ne.s32.totalorder %s135, %s137
      %p144 = scmp.eq.s32.totalorder %s22, 1
      %p145 = por %p143, %p144
      %p146 = scmp.ne.s32.totalorder %s137, %s138
      %p147 = scmp.eq.s32.totalorder %s22, 0
      %p148 = por %p146, %p147
      %p149 = scmp.ne.s32.totalorder %s137, %s138
      %p150 = scmp.eq.s32.totalorder %s23, 1
      %p151 = por %p149, %p150
      %p153 = scmp.ne.s32.totalorder %s138, %s152
      %p154 = scmp.eq.s32.totalorder %s23, 0
      %p155 = por %p153, %p154
      %s157 = sadd.s32 %s156, 1
      %p160 = scmp.eq.s32.totalorder %s17, 1
      %p161 = scmp.ne.s32.totalorder %s156, %s158
      %p162 = scmp.eq.s32.totalorder %s17, 0
      %p163 = por %p161, %p162
      %p164 = scmp.ne.s32.totalorder %s156, %s158
      %p165 = scmp.eq.s32.totalorder %s22, 1
      %p166 = por %p164, %p165
      %p167 = scmp.ne.s32.totalorder %s158, %s159
      %p168 = scmp.eq.s32.totalorder %s22, 0
      %p169 = por %p167, %p168
      %p170 = scmp.ne.s32.totalorder %s158, %s159
      %p171 = scmp.eq.s32.totalorder %s23, 1
      %p172 = por %p170, %p171
      %p174 = scmp.ne.s32.totalorder %s159, %s173
      %p175 = scmp.eq.s32.totalorder %s23, 0
      %p176 = por %p174, %p175
      %s177 = ssub.s32 %s17, %s24
      %p178 = scmp.eq.s32.totalorder %s177, 0
      %s180 = sadd.s32 %s179, 1
      %s181 = scalar_select %p178, %s179, %s180
      %p184 = pneg %p178
      %p185 = scmp.eq.s32.totalorder %s17, 1
      %p186 = por %p184, %p185
      %p187 = scmp.ne.s32.totalorder %s179, %s182
      %p188 = scmp.eq.s32.totalorder %s17, 0
      %p189 = por %p187, %p188
      %p190 = scmp.ne.s32.totalorder %s179, %s182
      %p191 = scmp.eq.s32.totalorder %s22, 1
      %p192 = por %p190, %p191
      %p193 = scmp.ne.s32.totalorder %s182, %s183
      %p194 = scmp.eq.s32.totalorder %s22, 0
      %p195 = por %p193, %p194
      %p196 = scmp.ne.s32.totalorder %s182, %s183
      %p197 = scmp.eq.s32.totalorder %s23, 1
      %p198 = por %p196, %p197
      %p200 = scmp.ne.s32.totalorder %s183, %s199
      %p201 = scmp.eq.s32.totalorder %s23, 0
      %p202 = por %p200, %p201
      %p203 = scmp.le.s32.totalorder 1, %s17
      %p204 = scmp.lt.s32.totalorder %s17, 3
      %p205 = pnand %p203, %p204
      %p206 = pneg %p205
      // Predicated region
      $region9: #{tpu_custom_call.1} parent=5 // pred_check
        _
      $region10: #{tpu_custom_call.1} parent=5 // pred_check_branch
        %208 = sbr.rel (%p205) target = $region12
      $region11: #{tpu_custom_call.1} parent=5 // pred_region
        %s209 = ssub.s32 %s17, 1
        // Predicated region
        $region13: #{tpu_custom_call.1} parent=11 // pred_check
          %p210 = pneg %p64
        $region14: #{tpu_custom_call.1} parent=11 // pred_check_branch
          %212 = sbr.rel (%p210) target = $region16
        $region15: #{tpu_custom_call.1} parent=11 // pred_region
          %s214 = ssub.s32 1280, 1280
          %215 = vsyncadd [#allocation6], %s214
          %s216 = sshll.u32 [#allocation5], 4
          %s217 = int_to_ptr.vmem [resolvable:$true] %s216
          %222 = dma.hbm_to_vmem [thread:$0]  %s1, 1280, %s217, [#allocation6], 320, 320, 20
        $region16: #{tpu_custom_call.1} parent=11 // pred_fallthru
          _
        // Predicated region
        $region17: #{tpu_custom_call.1} parent=11 // pred_check
          %p223 = pneg %p85
        $region18: #{tpu_custom_call.1} parent=11 // pred_check_branch
          %225 = sbr.rel (%p223) target = $region20
        $region19: #{tpu_custom_call.1} parent=11 // pred_region
          _
        $region20: #{tpu_custom_call.1} parent=11 // pred_fallthru
          _
        // Predicated region
        $region21: #{tpu_custom_call.1} parent=11 // pred_check
          %p226 = pneg %p106
        $region22: #{tpu_custom_call.1} parent=11 // pred_check_branch
          %228 = sbr.rel (%p226) target = $region24
        $region23: #{tpu_custom_call.1} parent=11 // pred_region
          _
        $region24: #{tpu_custom_call.1} parent=11 // pred_fallthru
          _
        // Predicated region
        $region25: #{tpu_custom_call.1} parent=11 // pred_check
          %p229 = pneg %p127
        $region26: #{tpu_custom_call.1} parent=11 // pred_check_branch
          %231 = sbr.rel (%p229) target = $region28
        $region27: #{tpu_custom_call.1} parent=11 // pred_region
          _
        $region28: #{tpu_custom_call.1} parent=11 // pred_fallthru
          _
        // Predicated region
        $region29: #{tpu_custom_call.1} parent=11 // pred_check
          %p232 = pneg %p148
        $region30: #{tpu_custom_call.1} parent=11 // pred_check_branch
          %234 = sbr.rel (%p232) target = $region32
        $region31: #{tpu_custom_call.1} parent=11 // pred_region
          _
        $region32: #{tpu_custom_call.1} parent=11 // pred_fallthru
          _
        // Predicated region
        $region33: #{tpu_custom_call.1} parent=11 // pred_check
          %p235 = pneg %p169
        $region34: #{tpu_custom_call.1} parent=11 // pred_check_branch
          %237 = sbr.rel (%p235) target = $region36
        $region35: #{tpu_custom_call.1} parent=11 // pred_region
          _
        $region36: #{tpu_custom_call.1} parent=11 // pred_fallthru
          _
      $region12: #{tpu_custom_call.1} parent=5 // pred_fallthru
        _
      %p238 = scmp.lt.s32.totalorder %s17, 2
      // Predicated region
      $region37: #{tpu_custom_call.1} parent=5 // pred_check
        %p239 = pneg %p238
      $region38: #{tpu_custom_call.1} parent=5 // pred_check_branch
        %241 = sbr.rel (%p239) target = $region40
      $region39: #{tpu_custom_call.1} parent=5 // pred_region
        // Predicated region
        $region41: #{tpu_custom_call.1} parent=39 // pred_check
          %p242 = pneg %p37
        $region42: #{tpu_custom_call.1} parent=39 // pred_check_branch
          %244 = sbr.rel (%p242) target = $region44
        $region43: #{tpu_custom_call.1} parent=39 // pred_region
          %p245 = scmp.lt.s32.totalorder %s17, 1
          %s246 = scalar_select %p245, %s17, 1
          %s247 = smul.addr %s246, 2
          %s248 = smul.addr %s247, 4
          %s249 = scalar_lea.vmem %s0, %s248
        $region44: #{tpu_custom_call.1} parent=39 // pred_fallthru
          _
      $region40: #{tpu_custom_call.1} parent=5 // pred_fallthru
        _
      %p250 = scmp.le.s32.totalorder 1, %s17
      %p251 = scmp.lt.s32.totalorder %s17, 3
      %p252 = pnand %p250, %p251
      %p253 = pneg %p252
      // Predicated region
      $region45: #{tpu_custom_call.1} parent=5 // pred_check
        _
      $region46: #{tpu_custom_call.1} parent=5 // pred_check_branch
        %255 = sbr.rel (%p252) target = $region48
      $region47: #{tpu_custom_call.1} parent=5 // pred_region
        %s256 = ssub.s32 %s17, 1
        // Predicated region
        $region49: #{tpu_custom_call.1} parent=47 // pred_check
          %p257 = pneg %p64
        $region50: #{tpu_custom_call.1} parent=47 // pred_check_branch
          %259 = sbr.rel (%p257) target = $region52
        $region51: #{tpu_custom_call.1} parent=47 // pred_region
          %260 = dma.done [#allocation6], 1280
        $region52: #{tpu_custom_call.1} parent=47 // pred_fallthru
          _
        %p261 = scmp.lt.s32.totalorder %s22, 1
        %s262 = scalar_select %p261, %s22, 1
        %s263 = smul.addr %s262, 2
        %s264 = smul.addr %s263, 4
        %s265 = scalar_lea.vmem %s0, %s264
        %p266 = pneg %p43
        %p267 = pneg %p40
        %p268 = pneg %p64
        %p269 = pneg %p61
        %p270 = pneg %p85
        %p271 = pneg %p82
        %p272 = pneg %p106
        %p273 = pneg %p103
        %p274 = pneg %p127
        %p275 = pneg %p124
        %p276 = pneg %p148
        %p277 = pneg %p145
        %p278 = pneg %p169
        %p279 = pneg %p166
        %p280 = pneg %p195
        %p281 = pneg %p192
        %s282 = sand.u32 %s182, 1
        %s283 = scalar_lea.sflag [#allocation7], %s282
        %s284 = sand.u32 %s182, 1
        %s285 = smul.addr %s284, 4
        %s286 = scalar_lea.vmem [#allocation8], %s285
        %p287 = scmp.lt.s32.totalorder %s22, 1
        %s288 = scalar_select %p287, %s22, 1
        %s289 = smul.addr %s288, 2
        %s290 = smul.addr %s289, 4
        %s291 = scalar_lea.vmem %s0, %s290
        %293 = vst [vmem:[#allocation2] sm:$0xff] 0
        %294 = vst [vmem:[#allocation2 + $0x8] sm:$0xff] 0
        %295 = vst [vmem:[#allocation2 + $0x10] sm:$0xff] 0
        %296 = vst [vmem:[#allocation2 + $0x18] sm:$0xff] 0
        %297 = vst [vmem:[#allocation2 + $0x20] sm:$0xff] 0
        %298 = vst [vmem:[#allocation2 + $0x28] sm:$0xff] 0
        %299 = vst [vmem:[#allocation2 + $0x30] sm:$0xff] 0
        %300 = vst [vmem:[#allocation2 + $0x38] sm:$0xff] 0
        %301 = vst [vmem:[#allocation2 + $0x40] sm:$0xff] 0
        %302 = vst [vmem:[#allocation2 + $0x48] sm:$0xff] 0
        %303 = vst [vmem:[#allocation2 + $0x50] sm:$0xff] 0
        %304 = vst [vmem:[#allocation2 + $0x58] sm:$0xff] 0
        %v305 = vld [vmem:[%s291] sm:$0xff]
        %v307 = vcombine.high %v305, %v305
        %v309 = vpack.c.bf16 %v305, %v305
        %v310 = vpack.c.bf16 %v307, %v307
        %311 = vst [vmem:[#allocation2 + $0x10] sm:$0x3] %v309
        %312 = vst [vmem:[#allocation2 + $0x18] sm:$0x3] %v310
        %v313 = vld [vmem:[#allocation2 + $0x8] sm:$0xff]
        %v314 = vld [vmem:[#allocation2 + $0x10] sm:$0xff]
        %v315 = vld [vmem:[#allocation2 + $0x18] sm:$0xff]
        %319 = vrot.lane.b32.xlu0 %v313, 57
        %v320 = vpop.permute.xlu0 %319
        %321 = vrot.lane.b32.xlu0 %v314, 57
        %v322 = vpop.permute.xlu0 %321
        %323 = vrot.lane.b32.xlu0 %v315, 57
        %v324 = vpop.permute.xlu0 %323
        %vm325 = vcmask 465920
        %v326 = vsel %vm325, %v320, %v322
        %v327 = vsel %vm325, %v322, %v324
        %330 = vst [vmem:[#allocation4] sm:$0xff] %v326
        %331 = vst [vmem:[#allocation4 + $0x8] sm:$0xff] %v327
        %v332 = vld [vmem:[#allocation2 + $0x8] sm:$0xff]
        %v333 = vld [vmem:[#allocation2 + $0x10] sm:$0xff]
        %v334 = vld [vmem:[#allocation2 + $0x18] sm:$0xff]
        %338 = vrot.lane.b32.xlu0 %v332, 71
        %v339 = vpop.permute.xlu0 %338
        %340 = vrot.lane.b32.xlu0 %v333, 71
        %v341 = vpop.permute.xlu0 %340
        %342 = vrot.lane.b32.xlu0 %v334, 71
        %v343 = vpop.permute.xlu0 %342
        %vm344 = vcmask 580608
        %v345 = vsel %vm344, %v339, %v341
        %v346 = vsel %vm344, %v341, %v343
        %349 = vst [vmem:[#allocation4 + $0x10] sm:$0xff] %v345
        %350 = vst [vmem:[#allocation4 + $0x18] sm:$0xff] %v346
        %v351 = vld [vmem:[#allocation2 + $0x8] sm:$0xff]
        %v352 = vld [vmem:[#allocation2 + $0x10] sm:$0xff]
        %v353 = vld [vmem:[#allocation2 + $0x18] sm:$0xff]
        %357 = vrot.lane.b32.xlu0 %v351, 87
        %v358 = vpop.permute.xlu0 %357
        %359 = vrot.lane.b32.xlu0 %v352, 87
        %v360 = vpop.permute.xlu0 %359
        %361 = vrot.lane.b32.xlu0 %v353, 87
        %v362 = vpop.permute.xlu0 %361
        %vm363 = vcmask 711680
        %v364 = vsel %vm363, %v358, %v360
        %v365 = vsel %vm363, %v360, %v362
        %368 = vst [vmem:[#allocation4 + $0x20] sm:$0xff] %v364
        %369 = vst [vmem:[#allocation4 + $0x28] sm:$0xff] %v365
        %v370 = vld [vmem:[#allocation2 + $0x8] sm:$0xff]
        %v371 = vld [vmem:[#allocation2 + $0x10] sm:$0xff]
        %v372 = vld [vmem:[#allocation2 + $0x18] sm:$0xff]
        %376 = vrot.lane.b32.xlu0 %v370, 97
        %v377 = vpop.permute.xlu0 %376
        %378 = vrot.lane.b32.xlu0 %v371, 97
        %v379 = vpop.permute.xlu0 %378
        %380 = vrot.lane.b32.xlu0 %v372, 97
        %v381 = vpop.permute.xlu0 %380
        %vm382 = vcmask 793600
        %v383 = vsel %vm382, %v377, %v379
        %v384 = vsel %vm382, %v379, %v381
        %387 = vst [vmem:[#allocation4 + $0x30] sm:$0xff] %v383
        %388 = vst [vmem:[#allocation4 + $0x38] sm:$0xff] %v384
        %v389 = vld [vmem:[#allocation2 + $0x8] sm:$0xff]
        %v390 = vld [vmem:[#allocation2 + $0x10] sm:$0xff]
        %v391 = vld [vmem:[#allocation2 + $0x18] sm:$0xff]
        %395 = vrot.lane.b32.xlu0 %v389, 99
        %v396 = vpop.permute.xlu0 %395
        %397 = vrot.lane.b32.xlu0 %v390, 99
        %v398 = vpop.permute.xlu0 %397
        %399 = vrot.lane.b32.xlu0 %v391, 99
        %v400 = vpop.permute.xlu0 %399
        %vm401 = vcmask 809984
        %v402 = vsel %vm401, %v396, %v398
        %v403 = vsel %vm401, %v398, %v400
        %406 = vst [vmem:[#allocation4 + $0x40] sm:$0xff] %v402
        %407 = vst [vmem:[#allocation4 + $0x48] sm:$0xff] %v403
        %v408 = vld [vmem:[#allocation2 + $0x8] sm:$0xff]
        %v409 = vld [vmem:[#allocation2 + $0x10] sm:$0xff]
        %v410 = vld [vmem:[#allocation2 + $0x18] sm:$0xff]
        %414 = vrot.lane.b32.xlu0 %v408, 101
        %v415 = vpop.permute.xlu0 %414
        %416 = vrot.lane.b32.xlu0 %v409, 101
        %v417 = vpop.permute.xlu0 %416
        %418 = vrot.lane.b32.xlu0 %v410, 101
        %v419 = vpop.permute.xlu0 %418
        %vm420 = vcmask 826368
        %v421 = vsel %vm420, %v415, %v417
        %v422 = vsel %vm420, %v417, %v419
        %425 = vst [vmem:[#allocation4 + $0x50] sm:$0xff] %v421
        %426 = vst [vmem:[#allocation4 + $0x58] sm:$0xff] %v422
        %v427 = vld [vmem:[#allocation2 + $0x8] sm:$0xff]
        %v428 = vld [vmem:[#allocation2 + $0x10] sm:$0xff]
        %v429 = vld [vmem:[#allocation2 + $0x18] sm:$0xff]
        %433 = vrot.lane.b32.xlu0 %v427, 113
        %v434 = vpop.permute.xlu0 %433
        %435 = vrot.lane.b32.xlu0 %v428, 113
        %v436 = vpop.permute.xlu0 %435
        %437 = vrot.lane.b32.xlu0 %v429, 113
        %v438 = vpop.permute.xlu0 %437
        %vm439 = vcmask 924672
        %v440 = vsel %vm439, %v434, %v436
        %v441 = vsel %vm439, %v436, %v438
        %444 = vst [vmem:[#allocation4 + $0x60] sm:$0xff] %v440
        %445 = vst [vmem:[#allocation4 + $0x68] sm:$0xff] %v441
        %v446 = vld [vmem:[#allocation2 + $0x8] sm:$0xff]
        %v447 = vld [vmem:[#allocation2 + $0x10] sm:$0xff]
        %v448 = vld [vmem:[#allocation2 + $0x18] sm:$0xff]
        %452 = vrot.lane.b32.xlu0 %v446, 114
        %v453 = vpop.permute.xlu0 %452
        %454 = vrot.lane.b32.xlu0 %v447, 114
        %v455 = vpop.permute.xlu0 %454
        %456 = vrot.lane.b32.xlu0 %v448, 114
        %v457 = vpop.permute.xlu0 %456
        %vm458 = vcmask 932864
        %v459 = vsel %vm458, %v453, %v455
        %v460 = vsel %vm458, %v455, %v457
        %463 = vst [vmem:[#allocation4 + $0x70] sm:$0xff] %v459
        %464 = vst [vmem:[#allocation4 + $0x78] sm:$0xff] %v460
        %v465 = vld [vmem:[#allocation2 + $0x8] sm:$0xff]
        %v466 = vld [vmem:[#allocation2 + $0x10] sm:$0xff]
        %v467 = vld [vmem:[#allocation2 + $0x18] sm:$0xff]
        %471 = vrot.lane.b32.xlu0 %v465, 115
        %v472 = vpop.permute.xlu0 %471
        %473 = vrot.lane.b32.xlu0 %v466, 115
        %v474 = vpop.permute.xlu0 %473
        %475 = vrot.lane.b32.xlu0 %v467, 115
        %v476 = vpop.permute.xlu0 %475
        %vm477 = vcmask 941056
        %v478 = vsel %vm477, %v472, %v474
        %v479 = vsel %vm477, %v474, %v476
        %482 = vst [vmem:[#allocation4 + $0x80] sm:$0xff] %v478
        %483 = vst [vmem:[#allocation4 + $0x88] sm:$0xff] %v479
        %v484 = vld [vmem:[#allocation2 + $0x8] sm:$0xff]
        %v485 = vld [vmem:[#allocation2 + $0x10] sm:$0xff]
        %486 = vst [vmem:[#allocation4 + $0x90] sm:$0xff] %v484
        %487 = vst [vmem:[#allocation4 + $0x98] sm:$0xff] %v485
        %v488 = vld [vmem:[#allocation2] sm:$0xff]
        %v489 = vld [vmem:[#allocation2 + $0x8] sm:$0xff]
        %v490 = vld [vmem:[#allocation2 + $0x10] sm:$0xff]
        %494 = vrot.lane.b32.xlu0 %v488, 1
        %v495 = vpop.permute.xlu0 %494
        %496 = vrot.lane.b32.xlu0 %v489, 1
        %v497 = vpop.permute.xlu0 %496
        %498 = vrot.lane.b32.xlu0 %v490, 1
        %v499 = vpop.permute.xlu0 %498
        %vm500 = vcmask 7168
        %v501 = vsel %vm500, %v495, %v497
        %v502 = vsel %vm500, %v497, %v499
        %505 = vst [vmem:[#allocation4 + $0xa0] sm:$0xff] %v501
        %506 = vst [vmem:[#allocation4 + $0xa8] sm:$0xff] %v502
        %v507 = vld [vmem:[#allocation2] sm:$0xff]
        %v508 = vld [vmem:[#allocation2 + $0x8] sm:$0xff]
        %v509 = vld [vmem:[#allocation2 + $0x10] sm:$0xff]
        %513 = vrot.lane.b32.xlu0 %v507, 3
        %v514 = vpop.permute.xlu0 %513
        %515 = vrot.lane.b32.xlu0 %v508, 3
        %v516 = vpop.permute.xlu0 %515
        %517 = vrot.lane.b32.xlu0 %v509, 3
        %v518 = vpop.permute.xlu0 %517
        %vm519 = vcmask 23552
        %v520 = vsel %vm519, %v514, %v516
        %v521 = vsel %vm519, %v516, %v518
        %524 = vst [vmem:[#allocation4 + $0xb0] sm:$0xff] %v520
        %525 = vst [vmem:[#allocation4 + $0xb8] sm:$0xff] %v521
        %v526 = vld [vmem:[#allocation2] sm:$0xff]
        %v527 = vld [vmem:[#allocation2 + $0x8] sm:$0xff]
        %v528 = vld [vmem:[#allocation2 + $0x10] sm:$0xff]
        %532 = vrot.lane.b32.xlu0 %v526, 9
        %v533 = vpop.permute.xlu0 %532
        %534 = vrot.lane.b32.xlu0 %v527, 9
        %v535 = vpop.permute.xlu0 %534
        %536 = vrot.lane.b32.xlu0 %v528, 9
        %v537 = vpop.permute.xlu0 %536
        %vm538 = vcmask 72704
        %v539 = vsel %vm538, %v533, %v535
        %v540 = vsel %vm538, %v535, %v537
        %543 = vst [vmem:[#allocation4 + $0xc0] sm:$0xff] %v539
        %544 = vst [vmem:[#allocation4 + $0xc8] sm:$0xff] %v540
        %v545 = vld [vmem:[#allocation2] sm:$0xff]
        %v546 = vld [vmem:[#allocation2 + $0x8] sm:$0xff]
        %v547 = vld [vmem:[#allocation2 + $0x10] sm:$0xff]
        %551 = vrot.lane.b32.xlu0 %v545, 19
        %v552 = vpop.permute.xlu0 %551
        %553 = vrot.lane.b32.xlu0 %v546, 19
        %v554 = vpop.permute.xlu0 %553
        %555 = vrot.lane.b32.xlu0 %v547, 19
        %v556 = vpop.permute.xlu0 %555
        %vm557 = vcmask 154624
        %v558 = vsel %vm557, %v552, %v554
        %v559 = vsel %vm557, %v554, %v556
        %562 = vst [vmem:[#allocation4 + $0xd0] sm:$0xff] %v558
        %563 = vst [vmem:[#allocation4 + $0xd8] sm:$0xff] %v559
        %v564 = vld [vmem:[#allocation2] sm:$0xff]
        %v565 = vld [vmem:[#allocation2 + $0x8] sm:$0xff]
        %v566 = vld [vmem:[#allocation2 + $0x10] sm:$0xff]
        %570 = vrot.lane.b32.xlu0 %v564, 28
        %v571 = vpop.permute.xlu0 %570
        %572 = vrot.lane.b32.xlu0 %v565, 28
        %v573 = vpop.permute.xlu0 %572
        %574 = vrot.lane.b32.xlu0 %v566, 28
        %v575 = vpop.permute.xlu0 %574
        %vm576 = vcmask 228352
        %v577 = vsel %vm576, %v571, %v573
        %v578 = vsel %vm576, %v573, %v575
        %581 = vst [vmem:[#allocation4 + $0xe0] sm:$0xff] %v577
        %582 = vst [vmem:[#allocation4 + $0xe8] sm:$0xff] %v578
        %v583 = vld [vmem:[#allocation2] sm:$0xff]
        %v584 = vld [vmem:[#allocation2 + $0x8] sm:$0xff]
        %v585 = vld [vmem:[#allocation2 + $0x10] sm:$0xff]
        %589 = vrot.lane.b32.xlu0 %v583, 32
        %v590 = vpop.permute.xlu0 %589
        %591 = vrot.lane.b32.xlu0 %v584, 32
        %v592 = vpop.permute.xlu0 %591
        %593 = vrot.lane.b32.xlu0 %v585, 32
        %v594 = vpop.permute.xlu0 %593
        %vm595 = vcmask 261120
        %v596 = vsel %vm595, %v590, %v592
        %v597 = vsel %vm595, %v592, %v594
        %600 = vst [vmem:[#allocation4 + $0xf0] sm:$0xff] %v596
        %601 = vst [vmem:[#allocation4 + $0xf8] sm:$0xff] %v597
        %v602 = vld [vmem:[#allocation5] sm:$0xff]
        %v603 = vld [vmem:[#allocation5 + $0x14] sm:$0xff]
        %v604 = vld [vmem:[#allocation5 + $0x28] sm:$0xff]
        %v605 = vld [vmem:[#allocation5 + $0x3c] sm:$0xff]
        %v606 = vld [vmem:[#allocation4] sm:$0xff]
        %v607 = vld [vmem:[#allocation4 + $0x8] sm:$0xff]
        %v608 = vld [vmem:[#allocation4 + $0x10] sm:$0xff]
        %v609 = vld [vmem:[#allocation4 + $0x18] sm:$0xff]
        %v610 = vld [vmem:[#allocation4 + $0x20] sm:$0xff]
        %v611 = vld [vmem:[#allocation4 + $0x28] sm:$0xff]
        %v612 = vld [vmem:[#allocation4 + $0x30] sm:$0xff]
        %v613 = vld [vmem:[#allocation4 + $0x38] sm:$0xff]
        %v614 = vld [vmem:[#allocation4 + $0x40] sm:$0xff]
        %v615 = vld [vmem:[#allocation4 + $0x48] sm:$0xff]
        %v616 = vld [vmem:[#allocation4 + $0x50] sm:$0xff]
        %v617 = vld [vmem:[#allocation4 + $0x58] sm:$0xff]
        %v618 = vld [vmem:[#allocation4 + $0x60] sm:$0xff]
        %v619 = vld [vmem:[#allocation4 + $0x68] sm:$0xff]
        %v620 = vld [vmem:[#allocation4 + $0x70] sm:$0xff]
        %v621 = vld [vmem:[#allocation4 + $0x78] sm:$0xff]
        %v622 = vld [vmem:[#allocation4 + $0x80] sm:$0xff]
        %v623 = vld [vmem:[#allocation4 + $0x88] sm:$0xff]
        %v624 = vld [vmem:[#allocation4 + $0x90] sm:$0xff]
        %v625 = vld [vmem:[#allocation4 + $0x98] sm:$0xff]
        %v626 = vld [vmem:[#allocation4 + $0xa0] sm:$0xff]
        %v627 = vld [vmem:[#allocation4 + $0xa8] sm:$0xff]
        %v628 = vld [vmem:[#allocation4 + $0xb0] sm:$0xff]
        %v629 = vld [vmem:[#allocation4 + $0xb8] sm:$0xff]
        %v630 = vld [vmem:[#allocation4 + $0xc0] sm:$0xff]
        %v631 = vld [vmem:[#allocation4 + $0xc8] sm:$0xff]
        %v632 = vld [vmem:[#allocation4 + $0xd0] sm:$0xff]
        %v633 = vld [vmem:[#allocation4 + $0xd8] sm:$0xff]
        %v634 = vld [vmem:[#allocation4 + $0xe0] sm:$0xff]
        %v635 = vld [vmem:[#allocation4 + $0xe8] sm:$0xff]
        %v636 = vld [vmem:[#allocation4 + $0xf0] sm:$0xff]
        %v637 = vld [vmem:[#allocation4 + $0xf8] sm:$0xff]
        %v638 = vld [vmem:[#allocation2] sm:$0xff]
        %v639 = vld [vmem:[#allocation2 + $0x8] sm:$0xff]
        %v640 = vld [vmem:[#allocation2 + $0x10] sm:$0xff]
        %644 = vrot.lane.b32.xlu0 %v638, 35
        %v645 = vpop.permute.xlu0 %644
        %646 = vrot.lane.b32.xlu0 %v639, 35
        %v647 = vpop.permute.xlu0 %646
        %648 = vrot.lane.b32.xlu0 %v640, 35
        %v649 = vpop.permute.xlu0 %648
        %vm650 = vcmask 285696
        %v651 = vsel %vm650, %v645, %v647
        %v652 = vsel %vm650, %v647, %v649
        %655 = vst [vmem:[#allocation4] sm:$0xff] %v651
        %656 = vst [vmem:[#allocation4 + $0x8] sm:$0xff] %v652
        %v657 = vld [vmem:[#allocation2] sm:$0xff]
        %v658 = vld [vmem:[#allocation2 + $0x8] sm:$0xff]
        %v659 = vld [vmem:[#allocation2 + $0x10] sm:$0xff]
        %663 = vrot.lane.b32.xlu0 %v657, 58
        %v664 = vpop.permute.xlu0 %663
        %665 = vrot.lane.b32.xlu0 %v658, 58
        %v666 = vpop.permute.xlu0 %665
        %667 = vrot.lane.b32.xlu0 %v659, 58
        %v668 = vpop.permute.xlu0 %667
        %vm669 = vcmask 474112
        %v670 = vsel %vm669, %v664, %v666
        %v671 = vsel %vm669, %v666, %v668
        %674 = vst [vmem:[#allocation4 + $0x10] sm:$0xff] %v670
        %675 = vst [vmem:[#allocation4 + $0x18] sm:$0xff] %v671
        %v676 = vld [vmem:[#allocation2 + $0x10] sm:$0xff]
        %v677 = vld [vmem:[#allocation2 + $0x18] sm:$0xff]
        %678 = vst [vmem:[#allocation4 + $0x20] sm:$0xff] %v676
        %679 = vst [vmem:[#allocation4 + $0x28] sm:$0xff] %v677
        %v680 = vld [vmem:[#allocation2 + $0x10] sm:$0xff]
        %v681 = vld [vmem:[#allocation2 + $0x18] sm:$0xff]
        %v682 = vld [vmem:[#allocation2 + $0x20] sm:$0xff]
        %686 = vrot.lane.b32.xlu0 %v680, 71
        %v687 = vpop.permute.xlu0 %686
        %688 = vrot.lane.b32.xlu0 %v681, 71
        %v689 = vpop.permute.xlu0 %688
        %690 = vrot.lane.b32.xlu0 %v682, 71
        %v691 = vpop.permute.xlu0 %690
        %v692 = vsel %vm344, %v687, %v689
        %v693 = vsel %vm344, %v689, %v691
        %696 = vst [vmem:[#allocation4 + $0x30] sm:$0xff] %v692
        %697 = vst [vmem:[#allocation4 + $0x38] sm:$0xff] %v693
        %v698 = vld [vmem:[#allocation2 + $0x10] sm:$0xff]
        %v699 = vld [vmem:[#allocation2 + $0x18] sm:$0xff]
        %v700 = vld [vmem:[#allocation2 + $0x20] sm:$0xff]
        %704 = vrot.lane.b32.xlu0 %v698, 57
        %v705 = vpop.permute.xlu0 %704
        %706 = vrot.lane.b32.xlu0 %v699, 57
        %v707 = vpop.permute.xlu0 %706
        %708 = vrot.lane.b32.xlu0 %v700, 57
        %v709 = vpop.permute.xlu0 %708
        %v710 = vsel %vm325, %v705, %v707
        %v711 = vsel %vm325, %v707, %v709
        %714 = vst [vmem:[#allocation4 + $0x40] sm:$0xff] %v710
        %715 = vst [vmem:[#allocation4 + $0x48] sm:$0xff] %v711
        %v716 = vld [vmem:[#allocation2 + $0x10] sm:$0xff]
        %v717 = vld [vmem:[#allocation2 + $0x18] sm:$0xff]
        %v718 = vld [vmem:[#allocation2 + $0x20] sm:$0xff]
        %722 = vrot.lane.b32.xlu0 %v716, 41
        %v723 = vpop.permute.xlu0 %722
        %724 = vrot.lane.b32.xlu0 %v717, 41
        %v725 = vpop.permute.xlu0 %724
        %726 = vrot.lane.b32.xlu0 %v718, 41
        %v727 = vpop.permute.xlu0 %726
        %vm728 = vcmask 334848
        %v729 = vsel %vm728, %v723, %v725
        %v730 = vsel %vm728, %v725, %v727
        %733 = vst [vmem:[#allocation4 + $0x50] sm:$0xff] %v729
        %734 = vst [vmem:[#allocation4 + $0x58] sm:$0xff] %v730
        %v735 = vld [vmem:[#allocation2 + $0x10] sm:$0xff]
        %v736 = vld [vmem:[#allocation2 + $0x18] sm:$0xff]
        %v737 = vld [vmem:[#allocation2 + $0x20] sm:$0xff]
        %741 = vrot.lane.b32.xlu0 %v735, 31
        %v742 = vpop.permute.xlu0 %741
        %743 = vrot.lane.b32.xlu0 %v736, 31
        %v744 = vpop.permute.xlu0 %743
        %745 = vrot.lane.b32.xlu0 %v737, 31
        %v746 = vpop.permute.xlu0 %745
        %vm747 = vcmask 252928
        %v748 = vsel %vm747, %v742, %v744
        %v749 = vsel %vm747, %v744, %v746
        %752 = vst [vmem:[#allocation4 + $0x60] sm:$0xff] %v748
        %753 = vst [vmem:[#allocation4 + $0x68] sm:$0xff] %v749
        %v754 = vld [vmem:[#allocation2 + $0x10] sm:$0xff]
        %v755 = vld [vmem:[#allocation2 + $0x18] sm:$0xff]
        %v756 = vld [vmem:[#allocation2 + $0x20] sm:$0xff]
        %760 = vrot.lane.b32.xlu0 %v754, 29
        %v761 = vpop.permute.xlu0 %760
        %762 = vrot.lane.b32.xlu0 %v755, 29
        %v763 = vpop.permute.xlu0 %762
        %764 = vrot.lane.b32.xlu0 %v756, 29
        %v765 = vpop.permute.xlu0 %764
        %vm766 = vcmask 236544
        %v767 = vsel %vm766, %v761, %v763
        %v768 = vsel %vm766, %v763, %v765
        %771 = vst [vmem:[#allocation4 + $0x70] sm:$0xff] %v767
        %772 = vst [vmem:[#allocation4 + $0x78] sm:$0xff] %v768
        %v773 = vld [vmem:[#allocation2 + $0x10] sm:$0xff]
        %v774 = vld [vmem:[#allocation2 + $0x18] sm:$0xff]
        %v775 = vld [vmem:[#allocation2 + $0x20] sm:$0xff]
        %779 = vrot.lane.b32.xlu0 %v773, 27
        %v780 = vpop.permute.xlu0 %779
        %781 = vrot.lane.b32.xlu0 %v774, 27
        %v782 = vpop.permute.xlu0 %781
        %783 = vrot.lane.b32.xlu0 %v775, 27
        %v784 = vpop.permute.xlu0 %783
        %vm785 = vcmask 220160
        %v786 = vsel %vm785, %v780, %v782
        %v787 = vsel %vm785, %v782, %v784
        %790 = vst [vmem:[#allocation4 + $0x80] sm:$0xff] %v786
        %791 = vst [vmem:[#allocation4 + $0x88] sm:$0xff] %v787
        %v792 = vld [vmem:[#allocation2 + $0x10] sm:$0xff]
        %v793 = vld [vmem:[#allocation2 + $0x18] sm:$0xff]
        %v794 = vld [vmem:[#allocation2 + $0x20] sm:$0xff]
        %798 = vrot.lane.b32.xlu0 %v792, 15
        %v799 = vpop.permute.xlu0 %798
        %800 = vrot.lane.b32.xlu0 %v793, 15
        %v801 = vpop.permute.xlu0 %800
        %802 = vrot.lane.b32.xlu0 %v794, 15
        %v803 = vpop.permute.xlu0 %802
        %vm804 = vcmask 121856
        %v805 = vsel %vm804, %v799, %v801
        %v806 = vsel %vm804, %v801, %v803
        %809 = vst [vmem:[#allocation4 + $0x90] sm:$0xff] %v805
        %810 = vst [vmem:[#allocation4 + $0x98] sm:$0xff] %v806
        %v811 = vld [vmem:[#allocation2 + $0x10] sm:$0xff]
        %v812 = vld [vmem:[#allocation2 + $0x18] sm:$0xff]
        %v813 = vld [vmem:[#allocation2 + $0x20] sm:$0xff]
        %817 = vrot.lane.b32.xlu0 %v811, 14
        %v818 = vpop.permute.xlu0 %817
        %819 = vrot.lane.b32.xlu0 %v812, 14
        %v820 = vpop.permute.xlu0 %819
        %821 = vrot.lane.b32.xlu0 %v813, 14
        %v822 = vpop.permute.xlu0 %821
        %vm823 = vcmask 113664
        %v824 = vsel %vm823, %v818, %v820
        %v825 = vsel %vm823, %v820, %v822
        %828 = vst [vmem:[#allocation4 + $0xa0] sm:$0xff] %v824
        %829 = vst [vmem:[#allocation4 + $0xa8] sm:$0xff] %v825
        %v830 = vld [vmem:[#allocation2 + $0x10] sm:$0xff]
        %v831 = vld [vmem:[#allocation2 + $0x18] sm:$0xff]
        %v832 = vld [vmem:[#allocation2 + $0x20] sm:$0xff]
        %836 = vrot.lane.b32.xlu0 %v830, 13
        %v837 = vpop.permute.xlu0 %836
        %838 = vrot.lane.b32.xlu0 %v831, 13
        %v839 = vpop.permute.xlu0 %838
        %840 = vrot.lane.b32.xlu0 %v832, 13
        %v841 = vpop.permute.xlu0 %840
        %vm842 = vcmask 105472
        %v843 = vsel %vm842, %v837, %v839
        %v844 = vsel %vm842, %v839, %v841
        %847 = vst [vmem:[#allocation4 + $0xb0] sm:$0xff] %v843
        %848 = vst [vmem:[#allocation4 + $0xb8] sm:$0xff] %v844
        %v849 = vld [vmem:[#allocation2 + $0x18] sm:$0xff]
        %v850 = vld [vmem:[#allocation2 + $0x20] sm:$0xff]
        %851 = vst [vmem:[#allocation4 + $0xc0] sm:$0xff] %v849
        %852 = vst [vmem:[#allocation4 + $0xc8] sm:$0xff] %v850
        %v853 = vld [vmem:[#allocation2 + $0x18] sm:$0xff]
        %v854 = vld [vmem:[#allocation2 + $0x20] sm:$0xff]
        %v855 = vld [vmem:[#allocation2 + $0x28] sm:$0xff]
        %859 = vrot.lane.b32.xlu0 %v853, 127
        %v860 = vpop.permute.xlu0 %859
        %861 = vrot.lane.b32.xlu0 %v854, 127
        %v862 = vpop.permute.xlu0 %861
        %863 = vrot.lane.b32.xlu0 %v855, 127
        %v864 = vpop.permute.xlu0 %863
        %vm865 = vcmask 1039360
        %v866 = vsel %vm865, %v860, %v862
        %v867 = vsel %vm865, %v862, %v864
        %870 = vst [vmem:[#allocation4 + $0xd0] sm:$0xff] %v866
        %871 = vst [vmem:[#allocation4 + $0xd8] sm:$0xff] %v867
        %v872 = vld [vmem:[#allocation2 + $0x18] sm:$0xff]
        %v873 = vld [vmem:[#allocation2 + $0x20] sm:$0xff]
        %v874 = vld [vmem:[#allocation2 + $0x28] sm:$0xff]
        %878 = vrot.lane.b32.xlu0 %v872, 125
        %v879 = vpop.permute.xlu0 %878
        %880 = vrot.lane.b32.xlu0 %v873, 125
        %v881 = vpop.permute.xlu0 %880
        %882 = vrot.lane.b32.xlu0 %v874, 125
        %v883 = vpop.permute.xlu0 %882
        %vm884 = vcmask 1022976
        %v885 = vsel %vm884, %v879, %v881
        %v886 = vsel %vm884, %v881, %v883
        %889 = vst [vmem:[#allocation4 + $0xe0] sm:$0xff] %v885
        %890 = vst [vmem:[#allocation4 + $0xe8] sm:$0xff] %v886
        %v891 = vld [vmem:[#allocation2 + $0x18] sm:$0xff]
        %v892 = vld [vmem:[#allocation2 + $0x20] sm:$0xff]
        %v893 = vld [vmem:[#allocation2 + $0x28] sm:$0xff]
        %897 = vrot.lane.b32.xlu0 %v891, 119
        %v898 = vpop.permute.xlu0 %897
        %899 = vrot.lane.b32.xlu0 %v892, 119
        %v900 = vpop.permute.xlu0 %899
        %901 = vrot.lane.b32.xlu0 %v893, 119
        %v902 = vpop.permute.xlu0 %901
        %vm903 = vcmask 973824
        %v904 = vsel %vm903, %v898, %v900
        %v905 = vsel %vm903, %v900, %v902
        %908 = vst [vmem:[#allocation4 + $0xf0] sm:$0xff] %v904
        %909 = vst [vmem:[#allocation4 + $0xf8] sm:$0xff] %v905
        %v910 = vld [vmem:[#allocation5 + $0x8] sm:$0xff]
        %v911 = vld [vmem:[#allocation5 + $0x1c] sm:$0xff]
        %v912 = vld [vmem:[#allocation5 + $0x30] sm:$0xff]
        %v913 = vld [vmem:[#allocation5 + $0x44] sm:$0xff]
        %v914 = vld [vmem:[#allocation4] sm:$0xff]
        %v915 = vld [vmem:[#allocation4 + $0x8] sm:$0xff]
        %v916 = vld [vmem:[#allocation4 + $0x10] sm:$0xff]
        %v917 = vld [vmem:[#allocation4 + $0x18] sm:$0xff]
        %v918 = vld [vmem:[#allocation4 + $0x20] sm:$0xff]
        %v919 = vld [vmem:[#allocation4 + $0x28] sm:$0xff]
        %v920 = vld [vmem:[#allocation4 + $0x30] sm:$0xff]
        %v921 = vld [vmem:[#allocation4 + $0x38] sm:$0xff]
        %v922 = vld [vmem:[#allocation4 + $0x40] sm:$0xff]
        %v923 = vld [vmem:[#allocation4 + $0x48] sm:$0xff]
        %v924 = vld [vmem:[#allocation4 + $0x50] sm:$0xff]
        %v925 = vld [vmem:[#allocation4 + $0x58] sm:$0xff]
        %v926 = vld [vmem:[#allocation4 + $0x60] sm:$0xff]
        %v927 = vld [vmem:[#allocation4 + $0x68] sm:$0xff]
        %v928 = vld [vmem:[#allocation4 + $0x70] sm:$0xff]
        %v929 = vld [vmem:[#allocation4 + $0x78] sm:$0xff]
        %v930 = vld [vmem:[#allocation4 + $0x80] sm:$0xff]
        %v931 = vld [vmem:[#allocation4 + $0x88] sm:$0xff]
        %v932 = vld [vmem:[#allocation4 + $0x90] sm:$0xff]
        %v933 = vld [vmem:[#allocation4 + $0x98] sm:$0xff]
        %v934 = vld [vmem:[#allocation4 + $0xa0] sm:$0xff]
        %v935 = vld [vmem:[#allocation4 + $0xa8] sm:$0xff]
        %v936 = vld [vmem:[#allocation4 + $0xb0] sm:$0xff]
        %v937 = vld [vmem:[#allocation4 + $0xb8] sm:$0xff]
        %v938 = vld [vmem:[#allocation4 + $0xc0] sm:$0xff]
        %v939 = vld [vmem:[#allocation4 + $0xc8] sm:$0xff]
        %v940 = vld [vmem:[#allocation4 + $0xd0] sm:$0xff]
        %v941 = vld [vmem:[#allocation4 + $0xd8] sm:$0xff]
        %v942 = vld [vmem:[#allocation4 + $0xe0] sm:$0xff]
        %v943 = vld [vmem:[#allocation4 + $0xe8] sm:$0xff]
        %v944 = vld [vmem:[#allocation4 + $0xf0] sm:$0xff]
        %v945 = vld [vmem:[#allocation4 + $0xf8] sm:$0xff]
        %v950 = vunpack.c.l.b16 %v910
        %v951 = vunpack.c.h.b16 %v910
        %v952 = vunpack.c.l.b16 %v911
        %v953 = vunpack.c.h.b16 %v911
        %v954 = vunpack.c.l.b16 %v912
        %v955 = vunpack.c.h.b16 %v912
        %v956 = vunpack.c.l.b16 %v913
        %v957 = vunpack.c.h.b16 %v913
        %v958 = vpack.c.b16 %v952, %v950
        %v959 = vpack.c.b16 %v953, %v951
        %v960 = vpack.c.b16 %v956, %v954
        %v961 = vpack.c.b16 %v957, %v955
        %966 = vmatprep.subr.bf16.mxu0 %v915
        %967 = vmatpush1.bf16.msra.mxu0 %v914
        %968 = vmatprep.subr.bf16.mxu0 %v917
        %969 = vmatpush1.bf16.msra.mxu0 %v916
        %970 = vmatprep.subr.bf16.mxu0 %v919
        %971 = vmatpush1.bf16.msra.mxu0 %v918
        %972 = vmatprep.subr.bf16.mxu0 %v921
        %973 = vmatpush1.bf16.msra.mxu0 %v920
        %974 = vmatprep.subr.bf16.mxu0 %v923
        %975 = vmatpush1.bf16.msra.mxu0 %v922
        %976 = vmatprep.subr.bf16.mxu0 %v925
        %977 = vmatpush1.bf16.msra.mxu0 %v924
        %978 = vmatprep.subr.bf16.mxu0 %v927
        %979 = vmatpush1.bf16.msra.mxu0 %v926
        %980 = vmatprep.subr.bf16.mxu0 %v929
        %981 = vmatpush1.bf16.msra.mxu0 %v928
        %982 = vmatprep.subr.bf16.mxu0 %v931
        %983 = vmatpush1.bf16.msra.mxu0 %v930
        %984 = vmatprep.subr.bf16.mxu0 %v933
        %985 = vmatpush1.bf16.msra.mxu0 %v932
        %986 = vmatprep.subr.bf16.mxu0 %v935
        %987 = vmatpush1.bf16.msra.mxu0 %v934
        %988 = vmatprep.subr.bf16.mxu0 %v937
        %989 = vmatpush1.bf16.msra.mxu0 %v936
        %990 = vmatprep.subr.bf16.mxu0 %v939
        %991 = vmatpush1.bf16.msra.mxu0 %v938
        %992 = vmatprep.subr.bf16.mxu0 %v941
        %993 = vmatpush1.bf16.msra.mxu0 %v940
        %994 = vmatprep.subr.bf16.mxu0 %v943
        %995 = vmatpush1.bf16.msra.mxu0 %v942
        %996 = vmatprep.subr.bf16.mxu0 %v945
        %997 = vmatpush1.bf16.msra.mxu0 %v944
        %998 = vmatprep.mubr.bf16.mxu0 %v959
        %999 = vmatmul.mubr.bf16.gmra.mrb[0].mxu0 %v958
        %v1000 = vpop.f32.mrb[0].mxu0
        %v1001 = vadd.f32 0.0, %v1000
        %v1002 = vpop.f32.mrb[0].mxu0
        %v1003 = vadd.f32 0.0, %v1002
        %v1004 = vpop.f32.mrb[0].mxu0
        %v1005 = vadd.f32 0.0, %v1004
        %v1006 = vpop.f32.mrb[0].mxu0
        %v1007 = vadd.f32 0.0, %v1006
        %1008 = vmatprep.mubr.bf16.mxu0 %v961
        %1009 = vmatmul.mubr.bf16.gmra.mrb[0].mxu0 %v960
        %v1010 = vpop.f32.mrb[0].mxu0
        %v1011 = vadd.f32 0.0, %v1010
        %v1012 = vpop.f32.mrb[0].mxu0
        %v1013 = vadd.f32 0.0, %v1012
        %v1014 = vpop.f32.mrb[0].mxu0
        %v1015 = vadd.f32 0.0, %v1014
        %v1016 = vpop.f32.mrb[0].mxu0
        %v1017 = vadd.f32 0.0, %v1016
        %1018 = vdwg.mxu0
        %v1023 = vunpack.c.l.b16 %v602
        %v1024 = vunpack.c.h.b16 %v602
        %v1025 = vunpack.c.l.b16 %v603
        %v1026 = vunpack.c.h.b16 %v603
        %v1027 = vunpack.c.l.b16 %v604
        %v1028 = vunpack.c.h.b16 %v604
        %v1029 = vunpack.c.l.b16 %v605
        %v1030 = vunpack.c.h.b16 %v605
        %v1031 = vpack.c.b16 %v1025, %v1023
        %v1032 = vpack.c.b16 %v1026, %v1024
        %v1033 = vpack.c.b16 %v1029, %v1027
        %v1034 = vpack.c.b16 %v1030, %v1028
        %1039 = vmatprep.subr.bf16.mxu0 %v607
        %1040 = vmatpush1.bf16.msra.mxu0 %v606
        %1041 = vmatprep.subr.bf16.mxu0 %v609
        %1042 = vmatpush1.bf16.msra.mxu0 %v608
        %1043 = vmatprep.subr.bf16.mxu0 %v611
        %1044 = vmatpush1.bf16.msra.mxu0 %v610
        %1045 = vmatprep.subr.bf16.mxu0 %v613
        %1046 = vmatpush1.bf16.msra.mxu0 %v612
        %1047 = vmatprep.subr.bf16.mxu0 %v615
        %1048 = vmatpush1.bf16.msra.mxu0 %v614
        %1049 = vmatprep.subr.bf16.mxu0 %v617
        %1050 = vmatpush1.bf16.msra.mxu0 %v616
        %1051 = vmatprep.subr.bf16.mxu0 %v619
        %1052 = vmatpush1.bf16.msra.mxu0 %v618
        %1053 = vmatprep.subr.bf16.mxu0 %v621
        %1054 = vmatpush1.bf16.msra.mxu0 %v620
        %1055 = vmatprep.subr.bf16.mxu0 %v623
        %1056 = vmatpush1.bf16.msra.mxu0 %v622
        %1057 = vmatprep.subr.bf16.mxu0 %v625
        %1058 = vmatpush1.bf16.msra.mxu0 %v624
        %1059 = vmatprep.subr.bf16.mxu0 %v627
        %1060 = vmatpush1.bf16.msra.mxu0 %v626
        %1061 = vmatprep.subr.bf16.mxu0 %v629
        %1062 = vmatpush1.bf16.msra.mxu0 %v628
        %1063 = vmatprep.subr.bf16.mxu0 %v631
        %1064 = vmatpush1.bf16.msra.mxu0 %v630
        %1065 = vmatprep.subr.bf16.mxu0 %v633
        %1066 = vmatpush1.bf16.msra.mxu0 %v632
        %1067 = vmatprep.subr.bf16.mxu0 %v635
        %1068 = vmatpush1.bf16.msra.mxu0 %v634
        %1069 = vmatprep.subr.bf16.mxu0 %v637
        %1070 = vmatpush1.bf16.msra.mxu0 %v636
        %1071 = vmatprep.mubr.bf16.mxu0 %v1032
        %1072 = vmatmul.mubr.bf16.gmra.mrb[0].mxu0 %v1031
        %v1073 = vpop.f32.mrb[0].mxu0
        %v1074 = vadd.f32 %v1001, %v1073
        %v1075 = vpop.f32.mrb[0].mxu0
        %v1076 = vadd.f32 %v1003, %v1075
        %v1077 = vpop.f32.mrb[0].mxu0
        %v1078 = vadd.f32 %v1005, %v1077
        %v1079 = vpop.f32.mrb[0].mxu0
        %v1080 = vadd.f32 %v1007, %v1079
        %1081 = vmatprep.mubr.bf16.mxu0 %v1034
        %1082 = vmatmul.mubr.bf16.gmra.mrb[0].mxu0 %v1033
        %v1083 = vpop.f32.mrb[0].mxu0
        %v1084 = vadd.f32 %v1011, %v1083
        %v1085 = vpop.f32.mrb[0].mxu0
        %v1086 = vadd.f32 %v1013, %v1085
        %v1087 = vpop.f32.mrb[0].mxu0
        %v1088 = vadd.f32 %v1015, %v1087
        %v1089 = vpop.f32.mrb[0].mxu0
        %v1090 = vadd.f32 %v1017, %v1089
        %1091 = vdwg.mxu0
        %v1092 = vld [vmem:[#allocation2 + $0x18] sm:$0xff]
        %v1093 = vld [vmem:[#allocation2 + $0x20] sm:$0xff]
        %v1094 = vld [vmem:[#allocation2 + $0x28] sm:$0xff]
        %1098 = vrot.lane.b32.xlu0 %v1092, 109
        %v1099 = vpop.permute.xlu0 %1098
        %1100 = vrot.lane.b32.xlu0 %v1093, 109
        %v1101 = vpop.permute.xlu0 %1100
        %1102 = vrot.lane.b32.xlu0 %v1094, 109
        %v1103 = vpop.permute.xlu0 %1102
        %vm1104 = vcmask 891904
        %v1105 = vsel %vm1104, %v1099, %v1101
        %v1106 = vsel %vm1104, %v1101, %v1103
        %1109 = vst [vmem:[#allocation4] sm:$0xff] %v1105
        %1110 = vst [vmem:[#allocation4 + $0x8] sm:$0xff] %v1106
        %v1111 = vld [vmem:[#allocation2 + $0x18] sm:$0xff]
        %v1112 = vld [vmem:[#allocation2 + $0x20] sm:$0xff]
        %v1113 = vld [vmem:[#allocation2 + $0x28] sm:$0xff]
        %1117 = vrot.lane.b32.xlu0 %v1111, 100
        %v1118 = vpop.permute.xlu0 %1117
        %1119 = vrot.lane.b32.xlu0 %v1112, 100
        %v1120 = vpop.permute.xlu0 %1119
        %1121 = vrot.lane.b32.xlu0 %v1113, 100
        %v1122 = vpop.permute.xlu0 %1121
        %vm1123 = vcmask 818176
        %v1124 = vsel %vm1123, %v1118, %v1120
        %v1125 = vsel %vm1123, %v1120, %v1122
        %1128 = vst [vmem:[#allocation4 + $0x10] sm:$0xff] %v1124
        %1129 = vst [vmem:[#allocation4 + $0x18] sm:$0xff] %v1125
        %v1130 = vld [vmem:[#allocation2 + $0x18] sm:$0xff]
        %v1131 = vld [vmem:[#allocation2 + $0x20] sm:$0xff]
        %v1132 = vld [vmem:[#allocation2 + $0x28] sm:$0xff]
        %1136 = vrot.lane.b32.xlu0 %v1130, 96
        %v1137 = vpop.permute.xlu0 %1136
        %1138 = vrot.lane.b32.xlu0 %v1131, 96
        %v1139 = vpop.permute.xlu0 %1138
        %1140 = vrot.lane.b32.xlu0 %v1132, 96
        %v1141 = vpop.permute.xlu0 %1140
        %vm1142 = vcmask 785408
        %v1143 = vsel %vm1142, %v1137, %v1139
        %v1144 = vsel %vm1142, %v1139, %v1141
        %1147 = vst [vmem:[#allocation4 + $0x20] sm:$0xff] %v1143
        %1148 = vst [vmem:[#allocation4 + $0x28] sm:$0xff] %v1144
        %v1149 = vld [vmem:[#allocation2 + $0x18] sm:$0xff]
        %v1150 = vld [vmem:[#allocation2 + $0x20] sm:$0xff]
        %v1151 = vld [vmem:[#allocation2 + $0x28] sm:$0xff]
        %1155 = vrot.lane.b32.xlu0 %v1149, 93
        %v1156 = vpop.permute.xlu0 %1155
        %1157 = vrot.lane.b32.xlu0 %v1150, 93
        %v1158 = vpop.permute.xlu0 %1157
        %1159 = vrot.lane.b32.xlu0 %v1151, 93
        %v1160 = vpop.permute.xlu0 %1159
        %vm1161 = vcmask 760832
        %v1162 = vsel %vm1161, %v1156, %v1158
        %v1163 = vsel %vm1161, %v1158, %v1160
        %1166 = vst [vmem:[#allocation4 + $0x30] sm:$0xff] %v1162
        %1167 = vst [vmem:[#allocation4 + $0x38] sm:$0xff] %v1163
        %v1168 = vld [vmem:[#allocation2 + $0x18] sm:$0xff]
        %v1169 = vld [vmem:[#allocation2 + $0x20] sm:$0xff]
        %v1170 = vld [vmem:[#allocation2 + $0x28] sm:$0xff]
        %1174 = vrot.lane.b32.xlu0 %v1168, 70
        %v1175 = vpop.permute.xlu0 %1174
        %1176 = vrot.lane.b32.xlu0 %v1169, 70
        %v1177 = vpop.permute.xlu0 %1176
        %1178 = vrot.lane.b32.xlu0 %v1170, 70
        %v1179 = vpop.permute.xlu0 %1178
        %vm1180 = vcmask 572416
        %v1181 = vsel %vm1180, %v1175, %v1177
        %v1182 = vsel %vm1180, %v1177, %v1179
        %1185 = vst [vmem:[#allocation4 + $0x40] sm:$0xff] %v1181
        %1186 = vst [vmem:[#allocation4 + $0x48] sm:$0xff] %v1182
        %v1187 = vld [vmem:[#allocation5 + $0x10] sm:$0xf]
        %v1188 = vld [vmem:[#allocation5 + $0x24] sm:$0xf]
        %v1189 = vld [vmem:[#allocation5 + $0x38] sm:$0xf]
        %v1190 = vld [vmem:[#allocation5 + $0x4c] sm:$0xf]
        %v1191 = vld [vmem:[#allocation4] sm:$0xff]
        %v1192 = vld [vmem:[#allocation4 + $0x8] sm:$0xff]
        %v1193 = vld [vmem:[#allocation4 + $0x10] sm:$0xff]
        %v1194 = vld [vmem:[#allocation4 + $0x18] sm:$0xff]
        %v1195 = vld [vmem:[#allocation4 + $0x20] sm:$0xff]
        %v1196 = vld [vmem:[#allocation4 + $0x28] sm:$0xff]
        %v1197 = vld [vmem:[#allocation4 + $0x30] sm:$0xff]
        %v1198 = vld [vmem:[#allocation4 + $0x38] sm:$0xff]
        %v1199 = vld [vmem:[#allocation4 + $0x40] sm:$0xff]
        %v1200 = vld [vmem:[#allocation4 + $0x48] sm:$0xff]
        %v1205 = vunpack.c.l.b16 %v1187
        %v1206 = vunpack.c.l.b16 %v1188
        %v1207 = vunpack.c.l.b16 %v1189
        %v1208 = vunpack.c.l.b16 %v1190
        %v1209 = vpack.c.b16 %v1206, %v1205
        %v1210 = vpack.c.b16 %v1208, %v1207
        %vm1211 = vcmask 654336
        %v1213 = vsel %vm1211, %v1209, 0
        %v1216 = vsel %vm1211, %v1210, 0
        %1218 = vmatprep.subr.bf16.mxu0 %v1192
        %1219 = vmatpush1.bf16.msra.mxu0 %v1191
        %1220 = vmatprep.subr.bf16.mxu0 %v1194
        %1221 = vmatpush1.bf16.msra.mxu0 %v1193
        %1222 = vmatprep.subr.bf16.mxu0 %v1196
        %1223 = vmatpush1.bf16.msra.mxu0 %v1195
        %1224 = vmatprep.subr.bf16.mxu0 %v1198
        %1225 = vmatpush1.bf16.msra.mxu0 %v1197
        %1226 = vmatprep.subr.bf16.mxu0 %v1200
        %1227 = vmatpush1.bf16.msra.mxu0 %v1199
        %1228 = vmatprep.subr.bf16.mxu0 0
        %1229 = vmatpush1.bf16.msra.mxu0 0
        %1230 = vmatprep.subr.bf16.mxu0 0
        %1231 = vmatpush1.bf16.msra.mxu0 0
        %1232 = vmatprep.subr.bf16.mxu0 0
        %1233 = vmatpush1.bf16.msra.mxu0 0
        %1234 = vmatprep.subr.bf16.mxu0 0
        %1235 = vmatpush1.bf16.msra.mxu0 0
        %1236 = vmatprep.subr.bf16.mxu0 0
        %1237 = vmatpush1.bf16.msra.mxu0 0
        %1238 = vmatprep.subr.bf16.mxu0 0
        %1239 = vmatpush1.bf16.msra.mxu0 0
        %1240 = vmatprep.subr.bf16.mxu0 0
        %1241 = vmatpush1.bf16.msra.mxu0 0
        %1242 = vmatprep.subr.bf16.mxu0 0
        %1243 = vmatpush1.bf16.msra.mxu0 0
        %1244 = vmatprep.subr.bf16.mxu0 0
        %1245 = vmatpush1.bf16.msra.mxu0 0
        %1246 = vmatprep.subr.bf16.mxu0 0
        %1247 = vmatpush1.bf16.msra.mxu0 0
        %1248 = vmatprep.subr.bf16.mxu0 0
        %1249 = vmatpush1.bf16.msra.mxu0 0
        %1250 = vmatprep.mubr.bf16.mxu0 0
        %1251 = vmatmul.mubr.bf16.gmra.mrb[0].mxu0 %v1213
        %v1252 = vpop.f32.mrb[0].mxu0
        %v1253 = vadd.f32 0.0, %v1252
        %v1254 = vpop.f32.mrb[0].mxu0
        %v1255 = vadd.f32 0.0, %v1254
        %v1256 = vpop.f32.mrb[0].mxu0
        %v1257 = vadd.f32 0.0, %v1256
        %v1258 = vpop.f32.mrb[0].mxu0
        %v1259 = vadd.f32 0.0, %v1258
        %1260 = vmatprep.mubr.bf16.mxu0 0
        %1261 = vmatmul.mubr.bf16.gmra.mrb[0].mxu0 %v1216
        %v1262 = vpop.f32.mrb[0].mxu0
        %v1263 = vadd.f32 0.0, %v1262
        %v1264 = vpop.f32.mrb[0].mxu0
        %v1265 = vadd.f32 0.0, %v1264
        %v1266 = vpop.f32.mrb[0].mxu0
        %v1267 = vadd.f32 0.0, %v1266
        %v1268 = vpop.f32.mrb[0].mxu0
        %v1269 = vadd.f32 0.0, %v1268
        %1270 = vdwg.mxu0
        %v1271 = vadd.f32 %v1074, %v1253
        %v1272 = vadd.f32 %v1076, %v1255
        %v1273 = vadd.f32 %v1078, %v1257
        %v1274 = vadd.f32 %v1080, %v1259
        %v1275 = vadd.f32 %v1084, %v1263
        %v1276 = vadd.f32 %v1086, %v1265
        %v1277 = vadd.f32 %v1088, %v1267
        %v1278 = vadd.f32 %v1090, %v1269
        %v1279 = vld [vmem:[%s2] sm:$0xff]
        %v1280 = vld [vmem:[%s2 + $0x8] sm:$0xff]
        %v1281 = vld [vmem:[%s2 + $0x10] sm:$0xff]
        %v1282 = vld [vmem:[%s2 + $0x18] sm:$0xff]
        %1284 = vset.pattern.permute.xlu0 0
        %1285 = vperm.xlu0 %1284, %v1279
        %v1286 = vpop.permute.xlu0 %1285
        %1289 = vset.pattern.permute.xlu0 0
        %1290 = vperm.xlu0 %1289, %v1280
        %v1291 = vpop.permute.xlu0 %1290
        %1294 = vset.pattern.permute.xlu0 0
        %1295 = vperm.xlu0 %1294, %v1281
        %v1296 = vpop.permute.xlu0 %1295
        %1299 = vset.pattern.permute.xlu0 0
        %1300 = vperm.xlu0 %1299, %v1282
        %v1301 = vpop.permute.xlu0 %1300
        %v1303 = vadd.f32 %v1271, %v1286
        %v1304 = vadd.f32 %v1272, %v1286
        %v1305 = vadd.f32 %v1273, %v1291
        %v1306 = vadd.f32 %v1274, %v1291
        %v1307 = vadd.f32 %v1275, %v1296
        %v1308 = vadd.f32 %v1276, %v1296
        %v1309 = vadd.f32 %v1277, %v1301
        %v1310 = vadd.f32 %v1278, %v1301
        %v1311 = vmax.f32 %v1303, 0.0
        %v1312 = vmax.f32 %v1304, 0.0
        %v1313 = vmax.f32 %v1305, 0.0
        %v1314 = vmax.f32 %v1306, 0.0
        %v1315 = vmax.f32 %v1307, 0.0
        %v1316 = vmax.f32 %v1308, 0.0
        %v1317 = vmax.f32 %v1309, 0.0
        %v1318 = vmax.f32 %v1310, 0.0
        %s1319 = scalar_lea.vmem %s2, 64
        %v1320 = vld [vmem:[%s1319] sm:$0xff]
        %v1321 = vld [vmem:[%s1319 + $0x8] sm:$0xff]
        %v1322 = vld [vmem:[%s1319 + $0x10] sm:$0xff]
        %v1323 = vld [vmem:[%s1319 + $0x18] sm:$0xff]
        %1325 = vset.pattern.permute.xlu0 0
        %1326 = vperm.xlu0 %1325, %v1320
        %v1327 = vpop.permute.xlu0 %1326
        %1330 = vset.pattern.permute.xlu0 0
        %1331 = vperm.xlu0 %1330, %v1321
        %v1332 = vpop.permute.xlu0 %1331
        %1335 = vset.pattern.permute.xlu0 0
        %1336 = vperm.xlu0 %1335, %v1322
        %v1337 = vpop.permute.xlu0 %1336
        %1340 = vset.pattern.permute.xlu0 0
        %1341 = vperm.xlu0 %1340, %v1323
        %v1342 = vpop.permute.xlu0 %1341
        %v1344 = vadd.f32 %v1311, %v1327
        %v1345 = vadd.f32 %v1312, %v1327
        %v1346 = vadd.f32 %v1313, %v1332
        %v1347 = vadd.f32 %v1314, %v1332
        %v1348 = vadd.f32 %v1315, %v1337
        %v1349 = vadd.f32 %v1316, %v1337
        %v1350 = vadd.f32 %v1317, %v1342
        %v1351 = vadd.f32 %v1318, %v1342
        %1352 = vst [vmem:[#allocation3] sm:$0xff] %v1344
        %1353 = vst [vmem:[#allocation3 + $0x8] sm:$0xff] %v1345
        %1354 = vst [vmem:[#allocation3 + $0x10] sm:$0xff] %v1346
        %1355 = vst [vmem:[#allocation3 + $0x18] sm:$0xff] %v1347
        %1356 = vst [vmem:[#allocation3 + $0x20] sm:$0xff] %v1348
        %1357 = vst [vmem:[#allocation3 + $0x28] sm:$0xff] %v1349
        %1358 = vst [vmem:[#allocation3 + $0x30] sm:$0xff] %v1350
        %1359 = vst [vmem:[#allocation3 + $0x38] sm:$0xff] %v1351
        %v1360 = vpack.c.bf16 %v1346, %v1344
        %v1361 = vpack.c.bf16 %v1347, %v1345
        %v1362 = vpack.c.bf16 %v1350, %v1348
        %v1363 = vpack.c.bf16 %v1351, %v1349
        %1364 = vst [vmem:[#allocation2 + $0x10] sm:$0xff] %v1360
        %1365 = vst [vmem:[#allocation2 + $0x18] sm:$0xff] %v1361
        %1366 = vst [vmem:[#allocation2 + $0x40] sm:$0xff] %v1362
        %1367 = vst [vmem:[#allocation2 + $0x48] sm:$0xff] %v1363
        %v1368 = vld [vmem:[#allocation2 + $0x8] sm:$0xff]
        %v1369 = vld [vmem:[#allocation2 + $0x10] sm:$0xff]
        %v1370 = vld [vmem:[#allocation2 + $0x18] sm:$0xff]
        %v1371 = vld [vmem:[#allocation2 + $0x38] sm:$0xff]
        %v1372 = vld [vmem:[#allocation2 + $0x40] sm:$0xff]
        %v1373 = vld [vmem:[#allocation2 + $0x48] sm:$0xff]
        %1380 = vrot.lane.b32.xlu0 %v1368, 57
        %v1381 = vpop.permute.xlu0 %1380
        %1382 = vrot.lane.b32.xlu0 %v1369, 57
        %v1383 = vpop.permute.xlu0 %1382
        %1384 = vrot.lane.b32.xlu0 %v1370, 57
        %v1385 = vpop.permute.xlu0 %1384
        %1386 = vrot.lane.b32.xlu0 %v1371, 57
        %v1387 = vpop.permute.xlu0 %1386
        %1388 = vrot.lane.b32.xlu0 %v1372, 57
        %v1389 = vpop.permute.xlu0 %1388
        %1390 = vrot.lane.b32.xlu0 %v1373, 57
        %v1391 = vpop.permute.xlu0 %1390
        %v1392 = vsel %vm325, %v1381, %v1383
        %v1393 = vsel %vm325, %v1383, %v1385
        %v1394 = vsel %vm325, %v1387, %v1389
        %v1395 = vsel %vm325, %v1389, %v1391
        %1400 = vst [vmem:[#allocation4] sm:$0xff] %v1392
        %1401 = vst [vmem:[#allocation4 + $0x8] sm:$0xff] %v1393
        %1402 = vst [vmem:[#allocation4 + $0x10] sm:$0xff] %v1394
        %1403 = vst [vmem:[#allocation4 + $0x18] sm:$0xff] %v1395
        %v1404 = vld [vmem:[#allocation2 + $0x8] sm:$0xff]
        %v1405 = vld [vmem:[#allocation2 + $0x10] sm:$0xff]
        %v1406 = vld [vmem:[#allocation2 + $0x18] sm:$0xff]
        %v1407 = vld [vmem:[#allocation2 + $0x38] sm:$0xff]
        %v1408 = vld [vmem:[#allocation2 + $0x40] sm:$0xff]
        %v1409 = vld [vmem:[#allocation2 + $0x48] sm:$0xff]
        %1416 = vrot.lane.b32.xlu0 %v1404, 71
        %v1417 = vpop.permute.xlu0 %1416
        %1418 = vrot.lane.b32.xlu0 %v1405, 71
        %v1419 = vpop.permute.xlu0 %1418
        %1420 = vrot.lane.b32.xlu0 %v1406, 71
        %v1421 = vpop.permute.xlu0 %1420
        %1422 = vrot.lane.b32.xlu0 %v1407, 71
        %v1423 = vpop.permute.xlu0 %1422
        %1424 = vrot.lane.b32.xlu0 %v1408, 71
        %v1425 = vpop.permute.xlu0 %1424
        %1426 = vrot.lane.b32.xlu0 %v1409, 71
        %v1427 = vpop.permute.xlu0 %1426
        %v1428 = vsel %vm344, %v1417, %v1419
        %v1429 = vsel %vm344, %v1419, %v1421
        %v1430 = vsel %vm344, %v1423, %v1425
        %v1431 = vsel %vm344, %v1425, %v1427
        %1436 = vst [vmem:[#allocation4 + $0x20] sm:$0xff] %v1428
        %1437 = vst [vmem:[#allocation4 + $0x28] sm:$0xff] %v1429
        %1438 = vst [vmem:[#allocation4 + $0x30] sm:$0xff] %v1430
        %1439 = vst [vmem:[#allocation4 + $0x38] sm:$0xff] %v1431
        %v1440 = vld [vmem:[#allocation2 + $0x8] sm:$0xff]
        %v1441 = vld [vmem:[#allocation2 + $0x10] sm:$0xff]
        %v1442 = vld [vmem:[#allocation2 + $0x18] sm:$0xff]
        %v1443 = vld [vmem:[#allocation2 + $0x38] sm:$0xff]
        %v1444 = vld [vmem:[#allocation2 + $0x40] sm:$0xff]
        %v1445 = vld [vmem:[#allocation2 + $0x48] sm:$0xff]
        %1452 = vrot.lane.b32.xlu0 %v1440, 87
        %v1453 = vpop.permute.xlu0 %1452
        %1454 = vrot.lane.b32.xlu0 %v1441, 87
        %v1455 = vpop.permute.xlu0 %1454
        %1456 = vrot.lane.b32.xlu0 %v1442, 87
        %v1457 = vpop.permute.xlu0 %1456
        %1458 = vrot.lane.b32.xlu0 %v1443, 87
        %v1459 = vpop.permute.xlu0 %1458
        %1460 = vrot.lane.b32.xlu0 %v1444, 87
        %v1461 = vpop.permute.xlu0 %1460
        %1462 = vrot.lane.b32.xlu0 %v1445, 87
        %v1463 = vpop.permute.xlu0 %1462
        %v1464 = vsel %vm363, %v1453, %v1455
        %v1465 = vsel %vm363, %v1455, %v1457
        %v1466 = vsel %vm363, %v1459, %v1461
        %v1467 = vsel %vm363, %v1461, %v1463
        %1472 = vst [vmem:[#allocation4 + $0x40] sm:$0xff] %v1464
        %1473 = vst [vmem:[#allocation4 + $0x48] sm:$0xff] %v1465
        %1474 = vst [vmem:[#allocation4 + $0x50] sm:$0xff] %v1466
        %1475 = vst [vmem:[#allocation4 + $0x58] sm:$0xff] %v1467
        %v1476 = vld [vmem:[#allocation2 + $0x8] sm:$0xff]
        %v1477 = vld [vmem:[#allocation2 + $0x10] sm:$0xff]
        %v1478 = vld [vmem:[#allocation2 + $0x18] sm:$0xff]
        %v1479 = vld [vmem:[#allocation2 + $0x38] sm:$0xff]
        %v1480 = vld [vmem:[#allocation2 + $0x40] sm:$0xff]
        %v1481 = vld [vmem:[#allocation2 + $0x48] sm:$0xff]
        %1488 = vrot.lane.b32.xlu0 %v1476, 97
        %v1489 = vpop.permute.xlu0 %1488
        %1490 = vrot.lane.b32.xlu0 %v1477, 97
        %v1491 = vpop.permute.xlu0 %1490
        %1492 = vrot.lane.b32.xlu0 %v1478, 97
        %v1493 = vpop.permute.xlu0 %1492
        %1494 = vrot.lane.b32.xlu0 %v1479, 97
        %v1495 = vpop.permute.xlu0 %1494
        %1496 = vrot.lane.b32.xlu0 %v1480, 97
        %v1497 = vpop.permute.xlu0 %1496
        %1498 = vrot.lane.b32.xlu0 %v1481, 97
        %v1499 = vpop.permute.xlu0 %1498
        %v1500 = vsel %vm382, %v1489, %v1491
        %v1501 = vsel %vm382, %v1491, %v1493
        %v1502 = vsel %vm382, %v1495, %v1497
        %v1503 = vsel %vm382, %v1497, %v1499
        %1508 = vst [vmem:[#allocation4 + $0x60] sm:$0xff] %v1500
        %1509 = vst [vmem:[#allocation4 + $0x68] sm:$0xff] %v1501
        %1510 = vst [vmem:[#allocation4 + $0x70] sm:$0xff] %v1502
        %1511 = vst [vmem:[#allocation4 + $0x78] sm:$0xff] %v1503
        %v1512 = vld [vmem:[#allocation2 + $0x8] sm:$0xff]
        %v1513 = vld [vmem:[#allocation2 + $0x10] sm:$0xff]
        %v1514 = vld [vmem:[#allocation2 + $0x18] sm:$0xff]
        %v1515 = vld [vmem:[#allocation2 + $0x38] sm:$0xff]
        %v1516 = vld [vmem:[#allocation2 + $0x40] sm:$0xff]
        %v1517 = vld [vmem:[#allocation2 + $0x48] sm:$0xff]
        %1524 = vrot.lane.b32.xlu0 %v1512, 99
        %v1525 = vpop.permute.xlu0 %1524
        %1526 = vrot.lane.b32.xlu0 %v1513, 99
        %v1527 = vpop.permute.xlu0 %1526
        %1528 = vrot.lane.b32.xlu0 %v1514, 99
        %v1529 = vpop.permute.xlu0 %1528
        %1530 = vrot.lane.b32.xlu0 %v1515, 99
        %v1531 = vpop.permute.xlu0 %1530
        %1532 = vrot.lane.b32.xlu0 %v1516, 99
        %v1533 = vpop.permute.xlu0 %1532
        %1534 = vrot.lane.b32.xlu0 %v1517, 99
        %v1535 = vpop.permute.xlu0 %1534
        %v1536 = vsel %vm401, %v1525, %v1527
        %v1537 = vsel %vm401, %v1527, %v1529
        %v1538 = vsel %vm401, %v1531, %v1533
        %v1539 = vsel %vm401, %v1533, %v1535
        %1544 = vst [vmem:[#allocation4 + $0x80] sm:$0xff] %v1536
        %1545 = vst [vmem:[#allocation4 + $0x88] sm:$0xff] %v1537
        %1546 = vst [vmem:[#allocation4 + $0x90] sm:$0xff] %v1538
        %1547 = vst [vmem:[#allocation4 + $0x98] sm:$0xff] %v1539
        %v1548 = vld [vmem:[#allocation2 + $0x8] sm:$0xff]
        %v1549 = vld [vmem:[#allocation2 + $0x10] sm:$0xff]
        %v1550 = vld [vmem:[#allocation2 + $0x18] sm:$0xff]
        %v1551 = vld [vmem:[#allocation2 + $0x38] sm:$0xff]
        %v1552 = vld [vmem:[#allocation2 + $0x40] sm:$0xff]
        %v1553 = vld [vmem:[#allocation2 + $0x48] sm:$0xff]
        %1560 = vrot.lane.b32.xlu0 %v1548, 101
        %v1561 = vpop.permute.xlu0 %1560
        %1562 = vrot.lane.b32.xlu0 %v1549, 101
        %v1563 = vpop.permute.xlu0 %1562
        %1564 = vrot.lane.b32.xlu0 %v1550, 101
        %v1565 = vpop.permute.xlu0 %1564
        %1566 = vrot.lane.b32.xlu0 %v1551, 101
        %v1567 = vpop.permute.xlu0 %1566
        %1568 = vrot.lane.b32.xlu0 %v1552, 101
        %v1569 = vpop.permute.xlu0 %1568
        %1570 = vrot.lane.b32.xlu0 %v1553, 101
        %v1571 = vpop.permute.xlu0 %1570
        %v1572 = vsel %vm420, %v1561, %v1563
        %v1573 = vsel %vm420, %v1563, %v1565
        %v1574 = vsel %vm420, %v1567, %v1569
        %v1575 = vsel %vm420, %v1569, %v1571
        %1580 = vst [vmem:[#allocation4 + $0xa0] sm:$0xff] %v1572
        %1581 = vst [vmem:[#allocation4 + $0xa8] sm:$0xff] %v1573
        %1582 = vst [vmem:[#allocation4 + $0xb0] sm:$0xff] %v1574
        %1583 = vst [vmem:[#allocation4 + $0xb8] sm:$0xff] %v1575
        %v1584 = vld [vmem:[#allocation2 + $0x8] sm:$0xff]
        %v1585 = vld [vmem:[#allocation2 + $0x10] sm:$0xff]
        %v1586 = vld [vmem:[#allocation2 + $0x18] sm:$0xff]
        %v1587 = vld [vmem:[#allocation2 + $0x38] sm:$0xff]
        %v1588 = vld [vmem:[#allocation2 + $0x40] sm:$0xff]
        %v1589 = vld [vmem:[#allocation2 + $0x48] sm:$0xff]
        %1596 = vrot.lane.b32.xlu0 %v1584, 113
        %v1597 = vpop.permute.xlu0 %1596
        %1598 = vrot.lane.b32.xlu0 %v1585, 113
        %v1599 = vpop.permute.xlu0 %1598
        %1600 = vrot.lane.b32.xlu0 %v1586, 113
        %v1601 = vpop.permute.xlu0 %1600
        %1602 = vrot.lane.b32.xlu0 %v1587, 113
        %v1603 = vpop.permute.xlu0 %1602
        %1604 = vrot.lane.b32.xlu0 %v1588, 113
        %v1605 = vpop.permute.xlu0 %1604
        %1606 = vrot.lane.b32.xlu0 %v1589, 113
        %v1607 = vpop.permute.xlu0 %1606
        %v1608 = vsel %vm439, %v1597, %v1599
        %v1609 = vsel %vm439, %v1599, %v1601
        %v1610 = vsel %vm439, %v1603, %v1605
        %v1611 = vsel %vm439, %v1605, %v1607
        %1616 = vst [vmem:[#allocation4 + $0xc0] sm:$0xff] %v1608
        %1617 = vst [vmem:[#allocation4 + $0xc8] sm:$0xff] %v1609
        %1618 = vst [vmem:[#allocation4 + $0xd0] sm:$0xff] %v1610
        %1619 = vst [vmem:[#allocation4 + $0xd8] sm:$0xff] %v1611
        %v1620 = vld [vmem:[#allocation2 + $0x8] sm:$0xff]
        %v1621 = vld [vmem:[#allocation2 + $0x10] sm:$0xff]
        %v1622 = vld [vmem:[#allocation2 + $0x18] sm:$0xff]
        %v1623 = vld [vmem:[#allocation2 + $0x38] sm:$0xff]
        %v1624 = vld [vmem:[#allocation2 + $0x40] sm:$0xff]
        %v1625 = vld [vmem:[#allocation2 + $0x48] sm:$0xff]
        %1632 = vrot.lane.b32.xlu0 %v1620, 114
        %v1633 = vpop.permute.xlu0 %1632
        %1634 = vrot.lane.b32.xlu0 %v1621, 114
        %v1635 = vpop.permute.xlu0 %1634
        %1636 = vrot.lane.b32.xlu0 %v1622, 114
        %v1637 = vpop.permute.xlu0 %1636
        %1638 = vrot.lane.b32.xlu0 %v1623, 114
        %v1639 = vpop.permute.xlu0 %1638
        %1640 = vrot.lane.b32.xlu0 %v1624, 114
        %v1641 = vpop.permute.xlu0 %1640
        %1642 = vrot.lane.b32.xlu0 %v1625, 114
        %v1643 = vpop.permute.xlu0 %1642
        %v1644 = vsel %vm458, %v1633, %v1635
        %v1645 = vsel %vm458, %v1635, %v1637
        %v1646 = vsel %vm458, %v1639, %v1641
        %v1647 = vsel %vm458, %v1641, %v1643
        %1652 = vst [vmem:[#allocation4 + $0xe0] sm:$0xff] %v1644
        %1653 = vst [vmem:[#allocation4 + $0xe8] sm:$0xff] %v1645
        %1654 = vst [vmem:[#allocation4 + $0xf0] sm:$0xff] %v1646
        %1655 = vst [vmem:[#allocation4 + $0xf8] sm:$0xff] %v1647
        %v1656 = vld [vmem:[%s3] sm:$0xff]
        %v1657 = vld [vmem:[%s3 + $0x28] sm:$0xff]
        %v1658 = vld [vmem:[%s3 + $0x50] sm:$0xff]
        %v1659 = vld [vmem:[%s3 + $0x78] sm:$0xff]
        %v1660 = vld [vmem:[#allocation4] sm:$0xff]
        %v1661 = vld [vmem:[#allocation4 + $0x8] sm:$0xff]
        %v1662 = vld [vmem:[#allocation4 + $0x10] sm:$0xff]
        %v1663 = vld [vmem:[#allocation4 + $0x18] sm:$0xff]
        %v1664 = vld [vmem:[#allocation4 + $0x20] sm:$0xff]
        %v1665 = vld [vmem:[#allocation4 + $0x28] sm:$0xff]
        %v1666 = vld [vmem:[#allocation4 + $0x30] sm:$0xff]
        %v1667 = vld [vmem:[#allocation4 + $0x38] sm:$0xff]
        %v1668 = vld [vmem:[#allocation4 + $0x40] sm:$0xff]
        %v1669 = vld [vmem:[#allocation4 + $0x48] sm:$0xff]
        %v1670 = vld [vmem:[#allocation4 + $0x50] sm:$0xff]
        %v1671 = vld [vmem:[#allocation4 + $0x58] sm:$0xff]
        %v1672 = vld [vmem:[#allocation4 + $0x60] sm:$0xff]
        %v1673 = vld [vmem:[#allocation4 + $0x68] sm:$0xff]
        %v1674 = vld [vmem:[#allocation4 + $0x70] sm:$0xff]
        %v1675 = vld [vmem:[#allocation4 + $0x78] sm:$0xff]
        %v1676 = vld [vmem:[#allocation4 + $0x80] sm:$0xff]
        %v1677 = vld [vmem:[#allocation4 + $0x88] sm:$0xff]
        %v1678 = vld [vmem:[#allocation4 + $0x90] sm:$0xff]
        %v1679 = vld [vmem:[#allocation4 + $0x98] sm:$0xff]
        %v1680 = vld [vmem:[#allocation4 + $0xa0] sm:$0xff]
        %v1681 = vld [vmem:[#allocation4 + $0xa8] sm:$0xff]
        %v1682 = vld [vmem:[#allocation4 + $0xb0] sm:$0xff]
        %v1683 = vld [vmem:[#allocation4 + $0xb8] sm:$0xff]
        %v1684 = vld [vmem:[#allocation4 + $0xc0] sm:$0xff]
        %v1685 = vld [vmem:[#allocation4 + $0xc8] sm:$0xff]
        %v1686 = vld [vmem:[#allocation4 + $0xd0] sm:$0xff]
        %v1687 = vld [vmem:[#allocation4 + $0xd8] sm:$0xff]
        %v1688 = vld [vmem:[#allocation4 + $0xe0] sm:$0xff]
        %v1689 = vld [vmem:[#allocation4 + $0xe8] sm:$0xff]
        %v1690 = vld [vmem:[#allocation4 + $0xf0] sm:$0xff]
        %v1691 = vld [vmem:[#allocation4 + $0xf8] sm:$0xff]
        %v1692 = vld [vmem:[#allocation2 + $0x8] sm:$0xff]
        %v1693 = vld [vmem:[#allocation2 + $0x10] sm:$0xff]
        %v1694 = vld [vmem:[#allocation2 + $0x18] sm:$0xff]
        %v1695 = vld [vmem:[#allocation2 + $0x38] sm:$0xff]
        %v1696 = vld [vmem:[#allocation2 + $0x40] sm:$0xff]
        %v1697 = vld [vmem:[#allocation2 + $0x48] sm:$0xff]
        %1704 = vrot.lane.b32.xlu0 %v1692, 115
        %v1705 = vpop.permute.xlu0 %1704
        %1706 = vrot.lane.b32.xlu0 %v1693, 115
        %v1707 = vpop.permute.xlu0 %1706
        %1708 = vrot.lane.b32.xlu0 %v1694, 115
        %v1709 = vpop.permute.xlu0 %1708
        %1710 = vrot.lane.b32.xlu0 %v1695, 115
        %v1711 = vpop.permute.xlu0 %1710
        %1712 = vrot.lane.b32.xlu0 %v1696, 115
        %v1713 = vpop.permute.xlu0 %1712
        %1714 = vrot.lane.b32.xlu0 %v1697, 115
        %v1715 = vpop.permute.xlu0 %1714
        %v1716 = vsel %vm477, %v1705, %v1707
        %v1717 = vsel %vm477, %v1707, %v1709
        %v1718 = vsel %vm477, %v1711, %v1713
        %v1719 = vsel %vm477, %v1713, %v1715
        %1724 = vst [vmem:[#allocation4] sm:$0xff] %v1716
        %1725 = vst [vmem:[#allocation4 + $0x8] sm:$0xff] %v1717
        %1726 = vst [vmem:[#allocation4 + $0x10] sm:$0xff] %v1718
        %1727 = vst [vmem:[#allocation4 + $0x18] sm:$0xff] %v1719
        %v1728 = vld [vmem:[#allocation2 + $0x8] sm:$0xff]
        %v1729 = vld [vmem:[#allocation2 + $0x10] sm:$0xff]
        %v1730 = vld [vmem:[#allocation2 + $0x38] sm:$0xff]
        %v1731 = vld [vmem:[#allocation2 + $0x40] sm:$0xff]
        %1732 = vst [vmem:[#allocation4 + $0x20] sm:$0xff] %v1728
        %1733 = vst [vmem:[#allocation4 + $0x28] sm:$0xff] %v1729
        %1734 = vst [vmem:[#allocation4 + $0x30] sm:$0xff] %v1730
        %1735 = vst [vmem:[#allocation4 + $0x38] sm:$0xff] %v1731
        %v1736 = vld [vmem:[#allocation2] sm:$0xff]
        %v1737 = vld [vmem:[#allocation2 + $0x8] sm:$0xff]
        %v1738 = vld [vmem:[#allocation2 + $0x10] sm:$0xff]
        %v1739 = vld [vmem:[#allocation2 + $0x30] sm:$0xff]
        %v1740 = vld [vmem:[#allocation2 + $0x38] sm:$0xff]
        %v1741 = vld [vmem:[#allocation2 + $0x40] sm:$0xff]
        %1748 = vrot.lane.b32.xlu0 %v1736, 1
        %v1749 = vpop.permute.xlu0 %1748
        %1750 = vrot.lane.b32.xlu0 %v1737, 1
        %v1751 = vpop.permute.xlu0 %1750
        %1752 = vrot.lane.b32.xlu0 %v1738, 1
        %v1753 = vpop.permute.xlu0 %1752
        %1754 = vrot.lane.b32.xlu0 %v1739, 1
        %v1755 = vpop.permute.xlu0 %1754
        %1756 = vrot.lane.b32.xlu0 %v1740, 1
        %v1757 = vpop.permute.xlu0 %1756
        %1758 = vrot.lane.b32.xlu0 %v1741, 1
        %v1759 = vpop.permute.xlu0 %1758
        %v1760 = vsel %vm500, %v1749, %v1751
        %v1761 = vsel %vm500, %v1751, %v1753
        %v1762 = vsel %vm500, %v1755, %v1757
        %v1763 = vsel %vm500, %v1757, %v1759
        %1768 = vst [vmem:[#allocation4 + $0x40] sm:$0xff] %v1760
        %1769 = vst [vmem:[#allocation4 + $0x48] sm:$0xff] %v1761
        %1770 = vst [vmem:[#allocation4 + $0x50] sm:$0xff] %v1762
        %1771 = vst [vmem:[#allocation4 + $0x58] sm:$0xff] %v1763
        %v1772 = vld [vmem:[#allocation2] sm:$0xff]
        %v1773 = vld [vmem:[#allocation2 + $0x8] sm:$0xff]
        %v1774 = vld [vmem:[#allocation2 + $0x10] sm:$0xff]
        %v1775 = vld [vmem:[#allocation2 + $0x30] sm:$0xff]
        %v1776 = vld [vmem:[#allocation2 + $0x38] sm:$0xff]
        %v1777 = vld [vmem:[#allocation2 + $0x40] sm:$0xff]
        %1784 = vrot.lane.b32.xlu0 %v1772, 3
        %v1785 = vpop.permute.xlu0 %1784
        %1786 = vrot.lane.b32.xlu0 %v1773, 3
        %v1787 = vpop.permute.xlu0 %1786
        %1788 = vrot.lane.b32.xlu0 %v1774, 3
        %v1789 = vpop.permute.xlu0 %1788
        %1790 = vrot.lane.b32.xlu0 %v1775, 3
        %v1791 = vpop.permute.xlu0 %1790
        %1792 = vrot.lane.b32.xlu0 %v1776, 3
        %v1793 = vpop.permute.xlu0 %1792
        %1794 = vrot.lane.b32.xlu0 %v1777, 3
        %v1795 = vpop.permute.xlu0 %1794
        %v1796 = vsel %vm519, %v1785, %v1787
        %v1797 = vsel %vm519, %v1787, %v1789
        %v1798 = vsel %vm519, %v1791, %v1793
        %v1799 = vsel %vm519, %v1793, %v1795
        %1804 = vst [vmem:[#allocation4 + $0x60] sm:$0xff] %v1796
        %1805 = vst [vmem:[#allocation4 + $0x68] sm:$0xff] %v1797
        %1806 = vst [vmem:[#allocation4 + $0x70] sm:$0xff] %v1798
        %1807 = vst [vmem:[#allocation4 + $0x78] sm:$0xff] %v1799
        %v1808 = vld [vmem:[#allocation2] sm:$0xff]
        %v1809 = vld [vmem:[#allocation2 + $0x8] sm:$0xff]
        %v1810 = vld [vmem:[#allocation2 + $0x10] sm:$0xff]
        %v1811 = vld [vmem:[#allocation2 + $0x30] sm:$0xff]
        %v1812 = vld [vmem:[#allocation2 + $0x38] sm:$0xff]
        %v1813 = vld [vmem:[#allocation2 + $0x40] sm:$0xff]
        %1820 = vrot.lane.b32.xlu0 %v1808, 9
        %v1821 = vpop.permute.xlu0 %1820
        %1822 = vrot.lane.b32.xlu0 %v1809, 9
        %v1823 = vpop.permute.xlu0 %1822
        %1824 = vrot.lane.b32.xlu0 %v1810, 9
        %v1825 = vpop.permute.xlu0 %1824
        %1826 = vrot.lane.b32.xlu0 %v1811, 9
        %v1827 = vpop.permute.xlu0 %1826
        %1828 = vrot.lane.b32.xlu0 %v1812, 9
        %v1829 = vpop.permute.xlu0 %1828
        %1830 = vrot.lane.b32.xlu0 %v1813, 9
        %v1831 = vpop.permute.xlu0 %1830
        %v1832 = vsel %vm538, %v1821, %v1823
        %v1833 = vsel %vm538, %v1823, %v1825
        %v1834 = vsel %vm538, %v1827, %v1829
        %v1835 = vsel %vm538, %v1829, %v1831
        %1840 = vst [vmem:[#allocation4 + $0x80] sm:$0xff] %v1832
        %1841 = vst [vmem:[#allocation4 + $0x88] sm:$0xff] %v1833
        %1842 = vst [vmem:[#allocation4 + $0x90] sm:$0xff] %v1834
        %1843 = vst [vmem:[#allocation4 + $0x98] sm:$0xff] %v1835
        %v1844 = vld [vmem:[#allocation2] sm:$0xff]
        %v1845 = vld [vmem:[#allocation2 + $0x8] sm:$0xff]
        %v1846 = vld [vmem:[#allocation2 + $0x10] sm:$0xff]
        %v1847 = vld [vmem:[#allocation2 + $0x30] sm:$0xff]
        %v1848 = vld [vmem:[#allocation2 + $0x38] sm:$0xff]
        %v1849 = vld [vmem:[#allocation2 + $0x40] sm:$0xff]
        %1856 = vrot.lane.b32.xlu0 %v1844, 19
        %v1857 = vpop.permute.xlu0 %1856
        %1858 = vrot.lane.b32.xlu0 %v1845, 19
        %v1859 = vpop.permute.xlu0 %1858
        %1860 = vrot.lane.b32.xlu0 %v1846, 19
        %v1861 = vpop.permute.xlu0 %1860
        %1862 = vrot.lane.b32.xlu0 %v1847, 19
        %v1863 = vpop.permute.xlu0 %1862
        %1864 = vrot.lane.b32.xlu0 %v1848, 19
        %v1865 = vpop.permute.xlu0 %1864
        %1866 = vrot.lane.b32.xlu0 %v1849, 19
        %v1867 = vpop.permute.xlu0 %1866
        %v1868 = vsel %vm557, %v1857, %v1859
        %v1869 = vsel %vm557, %v1859, %v1861
        %v1870 = vsel %vm557, %v1863, %v1865
        %v1871 = vsel %vm557, %v1865, %v1867
        %1876 = vst [vmem:[#allocation4 + $0xa0] sm:$0xff] %v1868
        %1877 = vst [vmem:[#allocation4 + $0xa8] sm:$0xff] %v1869
        %1878 = vst [vmem:[#allocation4 + $0xb0] sm:$0xff] %v1870
        %1879 = vst [vmem:[#allocation4 + $0xb8] sm:$0xff] %v1871
        %v1880 = vld [vmem:[#allocation2] sm:$0xff]
        %v1881 = vld [vmem:[#allocation2 + $0x8] sm:$0xff]
        %v1882 = vld [vmem:[#allocation2 + $0x10] sm:$0xff]
        %v1883 = vld [vmem:[#allocation2 + $0x30] sm:$0xff]
        %v1884 = vld [vmem:[#allocation2 + $0x38] sm:$0xff]
        %v1885 = vld [vmem:[#allocation2 + $0x40] sm:$0xff]
        %1892 = vrot.lane.b32.xlu0 %v1880, 28
        %v1893 = vpop.permute.xlu0 %1892
        %1894 = vrot.lane.b32.xlu0 %v1881, 28
        %v1895 = vpop.permute.xlu0 %1894
        %1896 = vrot.lane.b32.xlu0 %v1882, 28
        %v1897 = vpop.permute.xlu0 %1896
        %1898 = vrot.lane.b32.xlu0 %v1883, 28
        %v1899 = vpop.permute.xlu0 %1898
        %1900 = vrot.lane.b32.xlu0 %v1884, 28
        %v1901 = vpop.permute.xlu0 %1900
        %1902 = vrot.lane.b32.xlu0 %v1885, 28
        %v1903 = vpop.permute.xlu0 %1902
        %v1904 = vsel %vm576, %v1893, %v1895
        %v1905 = vsel %vm576, %v1895, %v1897
        %v1906 = vsel %vm576, %v1899, %v1901
        %v1907 = vsel %vm576, %v1901, %v1903
        %1912 = vst [vmem:[#allocation4 + $0xc0] sm:$0xff] %v1904
        %1913 = vst [vmem:[#allocation4 + $0xc8] sm:$0xff] %v1905
        %1914 = vst [vmem:[#allocation4 + $0xd0] sm:$0xff] %v1906
        %1915 = vst [vmem:[#allocation4 + $0xd8] sm:$0xff] %v1907
        %v1916 = vld [vmem:[#allocation2] sm:$0xff]
        %v1917 = vld [vmem:[#allocation2 + $0x8] sm:$0xff]
        %v1918 = vld [vmem:[#allocation2 + $0x10] sm:$0xff]
        %v1919 = vld [vmem:[#allocation2 + $0x30] sm:$0xff]
        %v1920 = vld [vmem:[#allocation2 + $0x38] sm:$0xff]
        %v1921 = vld [vmem:[#allocation2 + $0x40] sm:$0xff]
        %1928 = vrot.lane.b32.xlu0 %v1916, 32
        %v1929 = vpop.permute.xlu0 %1928
        %1930 = vrot.lane.b32.xlu0 %v1917, 32
        %v1931 = vpop.permute.xlu0 %1930
        %1932 = vrot.lane.b32.xlu0 %v1918, 32
        %v1933 = vpop.permute.xlu0 %1932
        %1934 = vrot.lane.b32.xlu0 %v1919, 32
        %v1935 = vpop.permute.xlu0 %1934
        %1936 = vrot.lane.b32.xlu0 %v1920, 32
        %v1937 = vpop.permute.xlu0 %1936
        %1938 = vrot.lane.b32.xlu0 %v1921, 32
        %v1939 = vpop.permute.xlu0 %1938
        %v1940 = vsel %vm595, %v1929, %v1931
        %v1941 = vsel %vm595, %v1931, %v1933
        %v1942 = vsel %vm595, %v1935, %v1937
        %v1943 = vsel %vm595, %v1937, %v1939
        %1948 = vst [vmem:[#allocation4 + $0xe0] sm:$0xff] %v1940
        %1949 = vst [vmem:[#allocation4 + $0xe8] sm:$0xff] %v1941
        %1950 = vst [vmem:[#allocation4 + $0xf0] sm:$0xff] %v1942
        %1951 = vst [vmem:[#allocation4 + $0xf8] sm:$0xff] %v1943
        %v1952 = vld [vmem:[%s3 + $0x8] sm:$0xff]
        %v1953 = vld [vmem:[%s3 + $0x30] sm:$0xff]
        %v1954 = vld [vmem:[%s3 + $0x58] sm:$0xff]
        %v1955 = vld [vmem:[%s3 + $0x80] sm:$0xff]
        %v1956 = vld [vmem:[#allocation4] sm:$0xff]
        %v1957 = vld [vmem:[#allocation4 + $0x8] sm:$0xff]
        %v1958 = vld [vmem:[#allocation4 + $0x10] sm:$0xff]
        %v1959 = vld [vmem:[#allocation4 + $0x18] sm:$0xff]
        %v1960 = vld [vmem:[#allocation4 + $0x20] sm:$0xff]
        %v1961 = vld [vmem:[#allocation4 + $0x28] sm:$0xff]
        %v1962 = vld [vmem:[#allocation4 + $0x30] sm:$0xff]
        %v1963 = vld [vmem:[#allocation4 + $0x38] sm:$0xff]
        %v1964 = vld [vmem:[#allocation4 + $0x40] sm:$0xff]
        %v1965 = vld [vmem:[#allocation4 + $0x48] sm:$0xff]
        %v1966 = vld [vmem:[#allocation4 + $0x50] sm:$0xff]
        %v1967 = vld [vmem:[#allocation4 + $0x58] sm:$0xff]
        %v1968 = vld [vmem:[#allocation4 + $0x60] sm:$0xff]
        %v1969 = vld [vmem:[#allocation4 + $0x68] sm:$0xff]
        %v1970 = vld [vmem:[#allocation4 + $0x70] sm:$0xff]
        %v1971 = vld [vmem:[#allocation4 + $0x78] sm:$0xff]
        %v1972 = vld [vmem:[#allocation4 + $0x80] sm:$0xff]
        %v1973 = vld [vmem:[#allocation4 + $0x88] sm:$0xff]
        %v1974 = vld [vmem:[#allocation4 + $0x90] sm:$0xff]
        %v1975 = vld [vmem:[#allocation4 + $0x98] sm:$0xff]
        %v1976 = vld [vmem:[#allocation4 + $0xa0] sm:$0xff]
        %v1977 = vld [vmem:[#allocation4 + $0xa8] sm:$0xff]
        %v1978 = vld [vmem:[#allocation4 + $0xb0] sm:$0xff]
        %v1979 = vld [vmem:[#allocation4 + $0xb8] sm:$0xff]
        %v1980 = vld [vmem:[#allocation4 + $0xc0] sm:$0xff]
        %v1981 = vld [vmem:[#allocation4 + $0xc8] sm:$0xff]
        %v1982 = vld [vmem:[#allocation4 + $0xd0] sm:$0xff]
        %v1983 = vld [vmem:[#allocation4 + $0xd8] sm:$0xff]
        %v1984 = vld [vmem:[#allocation4 + $0xe0] sm:$0xff]
        %v1985 = vld [vmem:[#allocation4 + $0xe8] sm:$0xff]
        %v1986 = vld [vmem:[#allocation4 + $0xf0] sm:$0xff]
        %v1987 = vld [vmem:[#allocation4 + $0xf8] sm:$0xff]
        %v1992 = vunpack.c.l.b16 %v1952
        %v1993 = vunpack.c.h.b16 %v1952
        %v1994 = vunpack.c.l.b16 %v1953
        %v1995 = vunpack.c.h.b16 %v1953
        %v1996 = vunpack.c.l.b16 %v1954
        %v1997 = vunpack.c.h.b16 %v1954
        %v1998 = vunpack.c.l.b16 %v1955
        %v1999 = vunpack.c.h.b16 %v1955
        %v2000 = vpack.c.b16 %v1994, %v1992
        %v2001 = vpack.c.b16 %v1995, %v1993
        %v2002 = vpack.c.b16 %v1998, %v1996
        %v2003 = vpack.c.b16 %v1999, %v1997
        %2008 = vmatprep.subr.bf16.mxu0 %v1957
        %2009 = vmatpush1.bf16.msra.mxu0 %v1956
        %2010 = vmatprep.subr.bf16.mxu0 %v1959
        %2011 = vmatpush1.bf16.msra.mxu0 %v1958
        %2012 = vmatprep.subr.bf16.mxu0 %v1961
        %2013 = vmatpush1.bf16.msra.mxu0 %v1960
        %2014 = vmatprep.subr.bf16.mxu0 %v1963
        %2015 = vmatpush1.bf16.msra.mxu0 %v1962
        %2016 = vmatprep.subr.bf16.mxu0 %v1965
        %2017 = vmatpush1.bf16.msra.mxu0 %v1964
        %2018 = vmatprep.subr.bf16.mxu0 %v1967
        %2019 = vmatpush1.bf16.msra.mxu0 %v1966
        %2020 = vmatprep.subr.bf16.mxu0 %v1969
        %2021 = vmatpush1.bf16.msra.mxu0 %v1968
        %2022 = vmatprep.subr.bf16.mxu0 %v1971
        %2023 = vmatpush1.bf16.msra.mxu0 %v1970
        %2024 = vmatprep.subr.bf16.mxu0 %v1973
        %2025 = vmatpush1.bf16.msra.mxu0 %v1972
        %2026 = vmatprep.subr.bf16.mxu0 %v1975
        %2027 = vmatpush1.bf16.msra.mxu0 %v1974
        %2028 = vmatprep.subr.bf16.mxu0 %v1977
        %2029 = vmatpush1.bf16.msra.mxu0 %v1976
        %2030 = vmatprep.subr.bf16.mxu0 %v1979
        %2031 = vmatpush1.bf16.msra.mxu0 %v1978
        %2032 = vmatprep.subr.bf16.mxu0 %v1981
        %2033 = vmatpush1.bf16.msra.mxu0 %v1980
        %2034 = vmatprep.subr.bf16.mxu0 %v1983
        %2035 = vmatpush1.bf16.msra.mxu0 %v1982
        %2036 = vmatprep.subr.bf16.mxu0 %v1985
        %2037 = vmatpush1.bf16.msra.mxu0 %v1984
        %2038 = vmatprep.subr.bf16.mxu0 %v1987
        %2039 = vmatpush1.bf16.msra.mxu0 %v1986
        %2040 = vmatprep.mubr.bf16.mxu0 %v2001
        %2041 = vmatmul.mubr.bf16.gmra.mrb[0].mxu0 %v2000
        %v2042 = vpop.f32.mrb[0].mxu0
        %v2043 = vadd.f32 0.0, %v2042
        %v2044 = vpop.f32.mrb[0].mxu0
        %v2045 = vadd.f32 0.0, %v2044
        %v2046 = vpop.f32.mrb[0].mxu0
        %v2047 = vadd.f32 0.0, %v2046
        %v2048 = vpop.f32.mrb[0].mxu0
        %v2049 = vadd.f32 0.0, %v2048
        %2050 = vmatprep.mubr.bf16.mxu0 %v2003
        %2051 = vmatmul.mubr.bf16.gmra.mrb[0].mxu0 %v2002
        %v2052 = vpop.f32.mrb[0].mxu0
        %v2053 = vadd.f32 0.0, %v2052
        %v2054 = vpop.f32.mrb[0].mxu0
        %v2055 = vadd.f32 0.0, %v2054
        %v2056 = vpop.f32.mrb[0].mxu0
        %v2057 = vadd.f32 0.0, %v2056
        %v2058 = vpop.f32.mrb[0].mxu0
        %v2059 = vadd.f32 0.0, %v2058
        %2060 = vdwg.mxu0
        %v2065 = vunpack.c.l.b16 %v1656
        %v2066 = vunpack.c.h.b16 %v1656
        %v2067 = vunpack.c.l.b16 %v1657
        %v2068 = vunpack.c.h.b16 %v1657
        %v2069 = vunpack.c.l.b16 %v1658
        %v2070 = vunpack.c.h.b16 %v1658
        %v2071 = vunpack.c.l.b16 %v1659
        %v2072 = vunpack.c.h.b16 %v1659
        %v2073 = vpack.c.b16 %v2067, %v2065
        %v2074 = vpack.c.b16 %v2068, %v2066
        %v2075 = vpack.c.b16 %v2071, %v2069
        %v2076 = vpack.c.b16 %v2072, %v2070
        %2081 = vmatprep.subr.bf16.mxu0 %v1661
        %2082 = vmatpush1.bf16.msra.mxu0 %v1660
        %2083 = vmatprep.subr.bf16.mxu0 %v1663
        %2084 = vmatpush1.bf16.msra.mxu0 %v1662
        %2085 = vmatprep.subr.bf16.mxu0 %v1665
        %2086 = vmatpush1.bf16.msra.mxu0 %v1664
        %2087 = vmatprep.subr.bf16.mxu0 %v1667
        %2088 = vmatpush1.bf16.msra.mxu0 %v1666
        %2089 = vmatprep.subr.bf16.mxu0 %v1669
        %2090 = vmatpush1.bf16.msra.mxu0 %v1668
        %2091 = vmatprep.subr.bf16.mxu0 %v1671
        %2092 = vmatpush1.bf16.msra.mxu0 %v1670
        %2093 = vmatprep.subr.bf16.mxu0 %v1673
        %2094 = vmatpush1.bf16.msra.mxu0 %v1672
        %2095 = vmatprep.subr.bf16.mxu0 %v1675
        %2096 = vmatpush1.bf16.msra.mxu0 %v1674
        %2097 = vmatprep.subr.bf16.mxu0 %v1677
        %2098 = vmatpush1.bf16.msra.mxu0 %v1676
        %2099 = vmatprep.subr.bf16.mxu0 %v1679
        %2100 = vmatpush1.bf16.msra.mxu0 %v1678
        %2101 = vmatprep.subr.bf16.mxu0 %v1681
        %2102 = vmatpush1.bf16.msra.mxu0 %v1680
        %2103 = vmatprep.subr.bf16.mxu0 %v1683
        %2104 = vmatpush1.bf16.msra.mxu0 %v1682
        %2105 = vmatprep.subr.bf16.mxu0 %v1685
        %2106 = vmatpush1.bf16.msra.mxu0 %v1684
        %2107 = vmatprep.subr.bf16.mxu0 %v1687
        %2108 = vmatpush1.bf16.msra.mxu0 %v1686
        %2109 = vmatprep.subr.bf16.mxu0 %v1689
        %2110 = vmatpush1.bf16.msra.mxu0 %v1688
        %2111 = vmatprep.subr.bf16.mxu0 %v1691
        %2112 = vmatpush1.bf16.msra.mxu0 %v1690
        %2113 = vmatprep.mubr.bf16.mxu0 %v2074
        %2114 = vmatmul.mubr.bf16.gmra.mrb[0].mxu0 %v2073
        %v2115 = vpop.f32.mrb[0].mxu0
        %v2116 = vadd.f32 %v2043, %v2115
        %v2117 = vpop.f32.mrb[0].mxu0
        %v2118 = vadd.f32 %v2045, %v2117
        %v2119 = vpop.f32.mrb[0].mxu0
        %v2120 = vadd.f32 %v2047, %v2119
        %v2121 = vpop.f32.mrb[0].mxu0
        %v2122 = vadd.f32 %v2049, %v2121
        %2123 = vmatprep.mubr.bf16.mxu0 %v2076
        %2124 = vmatmul.mubr.bf16.gmra.mrb[0].mxu0 %v2075
        %v2125 = vpop.f32.mrb[0].mxu0
        %v2126 = vadd.f32 %v2053, %v2125
        %v2127 = vpop.f32.mrb[0].mxu0
        %v2128 = vadd.f32 %v2055, %v2127
        %v2129 = vpop.f32.mrb[0].mxu0
        %v2130 = vadd.f32 %v2057, %v2129
        %v2131 = vpop.f32.mrb[0].mxu0
        %v2132 = vadd.f32 %v2059, %v2131
        %2133 = vdwg.mxu0
        %v2134 = vld [vmem:[#allocation2] sm:$0xff]
        %v2135 = vld [vmem:[#allocation2 + $0x8] sm:$0xff]
        %v2136 = vld [vmem:[#allocation2 + $0x10] sm:$0xff]
        %v2137 = vld [vmem:[#allocation2 + $0x30] sm:$0xff]
        %v2138 = vld [vmem:[#allocation2 + $0x38] sm:$0xff]
        %v2139 = vld [vmem:[#allocation2 + $0x40] sm:$0xff]
        %2146 = vrot.lane.b32.xlu0 %v2134, 35
        %v2147 = vpop.permute.xlu0 %2146
        %2148 = vrot.lane.b32.xlu0 %v2135, 35
        %v2149 = vpop.permute.xlu0 %2148
        %2150 = vrot.lane.b32.xlu0 %v2136, 35
        %v2151 = vpop.permute.xlu0 %2150
        %2152 = vrot.lane.b32.xlu0 %v2137, 35
        %v2153 = vpop.permute.xlu0 %2152
        %2154 = vrot.lane.b32.xlu0 %v2138, 35
        %v2155 = vpop.permute.xlu0 %2154
        %2156 = vrot.lane.b32.xlu0 %v2139, 35
        %v2157 = vpop.permute.xlu0 %2156
        %v2158 = vsel %vm650, %v2147, %v2149
        %v2159 = vsel %vm650, %v2149, %v2151
        %v2160 = vsel %vm650, %v2153, %v2155
        %v2161 = vsel %vm650, %v2155, %v2157
        %2166 = vst [vmem:[#allocation4] sm:$0xff] %v2158
        %2167 = vst [vmem:[#allocation4 + $0x8] sm:$0xff] %v2159
        %2168 = vst [vmem:[#allocation4 + $0x10] sm:$0xff] %v2160
        %2169 = vst [vmem:[#allocation4 + $0x18] sm:$0xff] %v2161
        %v2170 = vld [vmem:[#allocation2] sm:$0xff]
        %v2171 = vld [vmem:[#allocation2 + $0x8] sm:$0xff]
        %v2172 = vld [vmem:[#allocation2 + $0x10] sm:$0xff]
        %v2173 = vld [vmem:[#allocation2 + $0x30] sm:$0xff]
        %v2174 = vld [vmem:[#allocation2 + $0x38] sm:$0xff]
        %v2175 = vld [vmem:[#allocation2 + $0x40] sm:$0xff]
        %2182 = vrot.lane.b32.xlu0 %v2170, 58
        %v2183 = vpop.permute.xlu0 %2182
        %2184 = vrot.lane.b32.xlu0 %v2171, 58
        %v2185 = vpop.permute.xlu0 %2184
        %2186 = vrot.lane.b32.xlu0 %v2172, 58
        %v2187 = vpop.permute.xlu0 %2186
        %2188 = vrot.lane.b32.xlu0 %v2173, 58
        %v2189 = vpop.permute.xlu0 %2188
        %2190 = vrot.lane.b32.xlu0 %v2174, 58
        %v2191 = vpop.permute.xlu0 %2190
        %2192 = vrot.lane.b32.xlu0 %v2175, 58
        %v2193 = vpop.permute.xlu0 %2192
        %v2194 = vsel %vm669, %v2183, %v2185
        %v2195 = vsel %vm669, %v2185, %v2187
        %v2196 = vsel %vm669, %v2189, %v2191
        %v2197 = vsel %vm669, %v2191, %v2193
        %2202 = vst [vmem:[#allocation4 + $0x20] sm:$0xff] %v2194
        %2203 = vst [vmem:[#allocation4 + $0x28] sm:$0xff] %v2195
        %2204 = vst [vmem:[#allocation4 + $0x30] sm:$0xff] %v2196
        %2205 = vst [vmem:[#allocation4 + $0x38] sm:$0xff] %v2197
        %v2206 = vld [vmem:[#allocation2 + $0x10] sm:$0xff]
        %v2207 = vld [vmem:[#allocation2 + $0x18] sm:$0xff]
        %v2208 = vld [vmem:[#allocation2 + $0x40] sm:$0xff]
        %v2209 = vld [vmem:[#allocation2 + $0x48] sm:$0xff]
        %2210 = vst [vmem:[#allocation4 + $0x40] sm:$0xff] %v2206
        %2211 = vst [vmem:[#allocation4 + $0x48] sm:$0xff] %v2207
        %2212 = vst [vmem:[#allocation4 + $0x50] sm:$0xff] %v2208
        %2213 = vst [vmem:[#allocation4 + $0x58] sm:$0xff] %v2209
        %v2214 = vld [vmem:[#allocation2 + $0x10] sm:$0xff]
        %v2215 = vld [vmem:[#allocation2 + $0x18] sm:$0xff]
        %v2216 = vld [vmem:[#allocation2 + $0x20] sm:$0xff]
        %v2217 = vld [vmem:[#allocation2 + $0x40] sm:$0xff]
        %v2218 = vld [vmem:[#allocation2 + $0x48] sm:$0xff]
        %v2219 = vld [vmem:[#allocation2 + $0x50] sm:$0xff]
        %2226 = vrot.lane.b32.xlu0 %v2214, 71
        %v2227 = vpop.permute.xlu0 %2226
        %2228 = vrot.lane.b32.xlu0 %v2215, 71
        %v2229 = vpop.permute.xlu0 %2228
        %2230 = vrot.lane.b32.xlu0 %v2216, 71
        %v2231 = vpop.permute.xlu0 %2230
        %2232 = vrot.lane.b32.xlu0 %v2217, 71
        %v2233 = vpop.permute.xlu0 %2232
        %2234 = vrot.lane.b32.xlu0 %v2218, 71
        %v2235 = vpop.permute.xlu0 %2234
        %2236 = vrot.lane.b32.xlu0 %v2219, 71
        %v2237 = vpop.permute.xlu0 %2236
        %v2238 = vsel %vm344, %v2227, %v2229
        %v2239 = vsel %vm344, %v2229, %v2231
        %v2240 = vsel %vm344, %v2233, %v2235
        %v2241 = vsel %vm344, %v2235, %v2237
        %2246 = vst [vmem:[#allocation4 + $0x60] sm:$0xff] %v2238
        %2247 = vst [vmem:[#allocation4 + $0x68] sm:$0xff] %v2239
        %2248 = vst [vmem:[#allocation4 + $0x70] sm:$0xff] %v2240
        %2249 = vst [vmem:[#allocation4 + $0x78] sm:$0xff] %v2241
        %v2250 = vld [vmem:[#allocation2 + $0x10] sm:$0xff]
        %v2251 = vld [vmem:[#allocation2 + $0x18] sm:$0xff]
        %v2252 = vld [vmem:[#allocation2 + $0x20] sm:$0xff]
        %v2253 = vld [vmem:[#allocation2 + $0x40] sm:$0xff]
        %v2254 = vld [vmem:[#allocation2 + $0x48] sm:$0xff]
        %v2255 = vld [vmem:[#allocation2 + $0x50] sm:$0xff]
        %2262 = vrot.lane.b32.xlu0 %v2250, 57
        %v2263 = vpop.permute.xlu0 %2262
        %2264 = vrot.lane.b32.xlu0 %v2251, 57
        %v2265 = vpop.permute.xlu0 %2264
        %2266 = vrot.lane.b32.xlu0 %v2252, 57
        %v2267 = vpop.permute.xlu0 %2266
        %2268 = vrot.lane.b32.xlu0 %v2253, 57
        %v2269 = vpop.permute.xlu0 %2268
        %2270 = vrot.lane.b32.xlu0 %v2254, 57
        %v2271 = vpop.permute.xlu0 %2270
        %2272 = vrot.lane.b32.xlu0 %v2255, 57
        %v2273 = vpop.permute.xlu0 %2272
        %v2274 = vsel %vm325, %v2263, %v2265
        %v2275 = vsel %vm325, %v2265, %v2267
        %v2276 = vsel %vm325, %v2269, %v2271
        %v2277 = vsel %vm325, %v2271, %v2273
        %2282 = vst [vmem:[#allocation4 + $0x80] sm:$0xff] %v2274
        %2283 = vst [vmem:[#allocation4 + $0x88] sm:$0xff] %v2275
        %2284 = vst [vmem:[#allocation4 + $0x90] sm:$0xff] %v2276
        %2285 = vst [vmem:[#allocation4 + $0x98] sm:$0xff] %v2277
        %v2286 = vld [vmem:[#allocation2 + $0x10] sm:$0xff]
        %v2287 = vld [vmem:[#allocation2 + $0x18] sm:$0xff]
        %v2288 = vld [vmem:[#allocation2 + $0x20] sm:$0xff]
        %v2289 = vld [vmem:[#allocation2 + $0x40] sm:$0xff]
        %v2290 = vld [vmem:[#allocation2 + $0x48] sm:$0xff]
        %v2291 = vld [vmem:[#allocation2 + $0x50] sm:$0xff]
        %2298 = vrot.lane.b32.xlu0 %v2286, 41
        %v2299 = vpop.permute.xlu0 %2298
        %2300 = vrot.lane.b32.xlu0 %v2287, 41
        %v2301 = vpop.permute.xlu0 %2300
        %2302 = vrot.lane.b32.xlu0 %v2288, 41
        %v2303 = vpop.permute.xlu0 %2302
        %2304 = vrot.lane.b32.xlu0 %v2289, 41
        %v2305 = vpop.permute.xlu0 %2304
        %2306 = vrot.lane.b32.xlu0 %v2290, 41
        %v2307 = vpop.permute.xlu0 %2306
        %2308 = vrot.lane.b32.xlu0 %v2291, 41
        %v2309 = vpop.permute.xlu0 %2308
        %v2310 = vsel %vm728, %v2299, %v2301
        %v2311 = vsel %vm728, %v2301, %v2303
        %v2312 = vsel %vm728, %v2305, %v2307
        %v2313 = vsel %vm728, %v2307, %v2309
        %2318 = vst [vmem:[#allocation4 + $0xa0] sm:$0xff] %v2310
        %2319 = vst [vmem:[#allocation4 + $0xa8] sm:$0xff] %v2311
        %2320 = vst [vmem:[#allocation4 + $0xb0] sm:$0xff] %v2312
        %2321 = vst [vmem:[#allocation4 + $0xb8] sm:$0xff] %v2313
        %v2322 = vld [vmem:[#allocation2 + $0x10] sm:$0xff]
        %v2323 = vld [vmem:[#allocation2 + $0x18] sm:$0xff]
        %v2324 = vld [vmem:[#allocation2 + $0x20] sm:$0xff]
        %v2325 = vld [vmem:[#allocation2 + $0x40] sm:$0xff]
        %v2326 = vld [vmem:[#allocation2 + $0x48] sm:$0xff]
        %v2327 = vld [vmem:[#allocation2 + $0x50] sm:$0xff]
        %2334 = vrot.lane.b32.xlu0 %v2322, 31
        %v2335 = vpop.permute.xlu0 %2334
        %2336 = vrot.lane.b32.xlu0 %v2323, 31
        %v2337 = vpop.permute.xlu0 %2336
        %2338 = vrot.lane.b32.xlu0 %v2324, 31
        %v2339 = vpop.permute.xlu0 %2338
        %2340 = vrot.lane.b32.xlu0 %v2325, 31
        %v2341 = vpop.permute.xlu0 %2340
        %2342 = vrot.lane.b32.xlu0 %v2326, 31
        %v2343 = vpop.permute.xlu0 %2342
        %2344 = vrot.lane.b32.xlu0 %v2327, 31
        %v2345 = vpop.permute.xlu0 %2344
        %v2346 = vsel %vm747, %v2335, %v2337
        %v2347 = vsel %vm747, %v2337, %v2339
        %v2348 = vsel %vm747, %v2341, %v2343
        %v2349 = vsel %vm747, %v2343, %v2345
        %2354 = vst [vmem:[#allocation4 + $0xc0] sm:$0xff] %v2346
        %2355 = vst [vmem:[#allocation4 + $0xc8] sm:$0xff] %v2347
        %2356 = vst [vmem:[#allocation4 + $0xd0] sm:$0xff] %v2348
        %2357 = vst [vmem:[#allocation4 + $0xd8] sm:$0xff] %v2349
        %v2358 = vld [vmem:[#allocation2 + $0x10] sm:$0xff]
        %v2359 = vld [vmem:[#allocation2 + $0x18] sm:$0xff]
        %v2360 = vld [vmem:[#allocation2 + $0x20] sm:$0xff]
        %v2361 = vld [vmem:[#allocation2 + $0x40] sm:$0xff]
        %v2362 = vld [vmem:[#allocation2 + $0x48] sm:$0xff]
        %v2363 = vld [vmem:[#allocation2 + $0x50] sm:$0xff]
        %2370 = vrot.lane.b32.xlu0 %v2358, 29
        %v2371 = vpop.permute.xlu0 %2370
        %2372 = vrot.lane.b32.xlu0 %v2359, 29
        %v2373 = vpop.permute.xlu0 %2372
        %2374 = vrot.lane.b32.xlu0 %v2360, 29
        %v2375 = vpop.permute.xlu0 %2374
        %2376 = vrot.lane.b32.xlu0 %v2361, 29
        %v2377 = vpop.permute.xlu0 %2376
        %2378 = vrot.lane.b32.xlu0 %v2362, 29
        %v2379 = vpop.permute.xlu0 %2378
        %2380 = vrot.lane.b32.xlu0 %v2363, 29
        %v2381 = vpop.permute.xlu0 %2380
        %v2382 = vsel %vm766, %v2371, %v2373
        %v2383 = vsel %vm766, %v2373, %v2375
        %v2384 = vsel %vm766, %v2377, %v2379
        %v2385 = vsel %vm766, %v2379, %v2381
        %2390 = vst [vmem:[#allocation4 + $0xe0] sm:$0xff] %v2382
        %2391 = vst [vmem:[#allocation4 + $0xe8] sm:$0xff] %v2383
        %2392 = vst [vmem:[#allocation4 + $0xf0] sm:$0xff] %v2384
        %2393 = vst [vmem:[#allocation4 + $0xf8] sm:$0xff] %v2385
        %v2394 = vld [vmem:[%s3 + $0x10] sm:$0xff]
        %v2395 = vld [vmem:[%s3 + $0x38] sm:$0xff]
        %v2396 = vld [vmem:[%s3 + $0x60] sm:$0xff]
        %v2397 = vld [vmem:[%s3 + $0x88] sm:$0xff]
        %v2398 = vld [vmem:[#allocation4] sm:$0xff]
        %v2399 = vld [vmem:[#allocation4 + $0x8] sm:$0xff]
        %v2400 = vld [vmem:[#allocation4 + $0x10] sm:$0xff]
        %v2401 = vld [vmem:[#allocation4 + $0x18] sm:$0xff]
        %v2402 = vld [vmem:[#allocation4 + $0x20] sm:$0xff]
        %v2403 = vld [vmem:[#allocation4 + $0x28] sm:$0xff]
        %v2404 = vld [vmem:[#allocation4 + $0x30] sm:$0xff]
        %v2405 = vld [vmem:[#allocation4 + $0x38] sm:$0xff]
        %v2406 = vld [vmem:[#allocation4 + $0x40] sm:$0xff]
        %v2407 = vld [vmem:[#allocation4 + $0x48] sm:$0xff]
        %v2408 = vld [vmem:[#allocation4 + $0x50] sm:$0xff]
        %v2409 = vld [vmem:[#allocation4 + $0x58] sm:$0xff]
        %v2410 = vld [vmem:[#allocation4 + $0x60] sm:$0xff]
        %v2411 = vld [vmem:[#allocation4 + $0x68] sm:$0xff]
        %v2412 = vld [vmem:[#allocation4 + $0x70] sm:$0xff]
        %v2413 = vld [vmem:[#allocation4 + $0x78] sm:$0xff]
        %v2414 = vld [vmem:[#allocation4 + $0x80] sm:$0xff]
        %v2415 = vld [vmem:[#allocation4 + $0x88] sm:$0xff]
        %v2416 = vld [vmem:[#allocation4 + $0x90] sm:$0xff]
        %v2417 = vld [vmem:[#allocation4 + $0x98] sm:$0xff]
        %v2418 = vld [vmem:[#allocation4 + $0xa0] sm:$0xff]
        %v2419 = vld [vmem:[#allocation4 + $0xa8] sm:$0xff]
        %v2420 = vld [vmem:[#allocation4 + $0xb0] sm:$0xff]
        %v2421 = vld [vmem:[#allocation4 + $0xb8] sm:$0xff]
        %v2422 = vld [vmem:[#allocation4 + $0xc0] sm:$0xff]
        %v2423 = vld [vmem:[#allocation4 + $0xc8] sm:$0xff]
        %v2424 = vld [vmem:[#allocation4 + $0xd0] sm:$0xff]
        %v2425 = vld [vmem:[#allocation4 + $0xd8] sm:$0xff]
        %v2426 = vld [vmem:[#allocation4 + $0xe0] sm:$0xff]
        %v2427 = vld [vmem:[#allocation4 + $0xe8] sm:$0xff]
        %v2428 = vld [vmem:[#allocation4 + $0xf0] sm:$0xff]
        %v2429 = vld [vmem:[#allocation4 + $0xf8] sm:$0xff]
        %v2434 = vunpack.c.l.b16 %v2394
        %v2435 = vunpack.c.h.b16 %v2394
        %v2436 = vunpack.c.l.b16 %v2395
        %v2437 = vunpack.c.h.b16 %v2395
        %v2438 = vunpack.c.l.b16 %v2396
        %v2439 = vunpack.c.h.b16 %v2396
        %v2440 = vunpack.c.l.b16 %v2397
        %v2441 = vunpack.c.h.b16 %v2397
        %v2442 = vpack.c.b16 %v2436, %v2434
        %v2443 = vpack.c.b16 %v2437, %v2435
        %v2444 = vpack.c.b16 %v2440, %v2438
        %v2445 = vpack.c.b16 %v2441, %v2439
        %2450 = vmatprep.subr.bf16.mxu0 %v2399
        %2451 = vmatpush1.bf16.msra.mxu0 %v2398
        %2452 = vmatprep.subr.bf16.mxu0 %v2401
        %2453 = vmatpush1.bf16.msra.mxu0 %v2400
        %2454 = vmatprep.subr.bf16.mxu0 %v2403
        %2455 = vmatpush1.bf16.msra.mxu0 %v2402
        %2456 = vmatprep.subr.bf16.mxu0 %v2405
        %2457 = vmatpush1.bf16.msra.mxu0 %v2404
        %2458 = vmatprep.subr.bf16.mxu0 %v2407
        %2459 = vmatpush1.bf16.msra.mxu0 %v2406
        %2460 = vmatprep.subr.bf16.mxu0 %v2409
        %2461 = vmatpush1.bf16.msra.mxu0 %v2408
        %2462 = vmatprep.subr.bf16.mxu0 %v2411
        %2463 = vmatpush1.bf16.msra.mxu0 %v2410
        %2464 = vmatprep.subr.bf16.mxu0 %v2413
        %2465 = vmatpush1.bf16.msra.mxu0 %v2412
        %2466 = vmatprep.subr.bf16.mxu0 %v2415
        %2467 = vmatpush1.bf16.msra.mxu0 %v2414
        %2468 = vmatprep.subr.bf16.mxu0 %v2417
        %2469 = vmatpush1.bf16.msra.mxu0 %v2416
        %2470 = vmatprep.subr.bf16.mxu0 %v2419
        %2471 = vmatpush1.bf16.msra.mxu0 %v2418
        %2472 = vmatprep.subr.bf16.mxu0 %v2421
        %2473 = vmatpush1.bf16.msra.mxu0 %v2420
        %2474 = vmatprep.subr.bf16.mxu0 %v2423
        %2475 = vmatpush1.bf16.msra.mxu0 %v2422
        %2476 = vmatprep.subr.bf16.mxu0 %v2425
        %2477 = vmatpush1.bf16.msra.mxu0 %v2424
        %2478 = vmatprep.subr.bf16.mxu0 %v2427
        %2479 = vmatpush1.bf16.msra.mxu0 %v2426
        %2480 = vmatprep.subr.bf16.mxu0 %v2429
        %2481 = vmatpush1.bf16.msra.mxu0 %v2428
        %2482 = vmatprep.mubr.bf16.mxu0 %v2443
        %2483 = vmatmul.mubr.bf16.gmra.mrb[0].mxu0 %v2442
        %v2484 = vpop.f32.mrb[0].mxu0
        %v2485 = vadd.f32 0.0, %v2484
        %v2486 = vpop.f32.mrb[0].mxu0
        %v2487 = vadd.f32 0.0, %v2486
        %v2488 = vpop.f32.mrb[0].mxu0
        %v2489 = vadd.f32 0.0, %v2488
        %v2490 = vpop.f32.mrb[0].mxu0
        %v2491 = vadd.f32 0.0, %v2490
        %2492 = vmatprep.mubr.bf16.mxu0 %v2445
        %2493 = vmatmul.mubr.bf16.gmra.mrb[0].mxu0 %v2444
        %v2494 = vpop.f32.mrb[0].mxu0
        %v2495 = vadd.f32 0.0, %v2494
        %v2496 = vpop.f32.mrb[0].mxu0
        %v2497 = vadd.f32 0.0, %v2496
        %v2498 = vpop.f32.mrb[0].mxu0
        %v2499 = vadd.f32 0.0, %v2498
        %v2500 = vpop.f32.mrb[0].mxu0
        %v2501 = vadd.f32 0.0, %v2500
        %2502 = vdwg.mxu0
        %v2503 = vadd.f32 %v2116, %v2485
        %v2504 = vadd.f32 %v2118, %v2487
        %v2505 = vadd.f32 %v2120, %v2489
        %v2506 = vadd.f32 %v2122, %v2491
        %v2507 = vadd.f32 %v2126, %v2495
        %v2508 = vadd.f32 %v2128, %v2497
        %v2509 = vadd.f32 %v2130, %v2499
        %v2510 = vadd.f32 %v2132, %v2501
        %v2511 = vld [vmem:[#allocation2 + $0x10] sm:$0xff]
        %v2512 = vld [vmem:[#allocation2 + $0x18] sm:$0xff]
        %v2513 = vld [vmem:[#allocation2 + $0x20] sm:$0xff]
        %v2514 = vld [vmem:[#allocation2 + $0x40] sm:$0xff]
        %v2515 = vld [vmem:[#allocation2 + $0x48] sm:$0xff]
        %v2516 = vld [vmem:[#allocation2 + $0x50] sm:$0xff]
        %2523 = vrot.lane.b32.xlu0 %v2511, 27
        %v2524 = vpop.permute.xlu0 %2523
        %2525 = vrot.lane.b32.xlu0 %v2512, 27
        %v2526 = vpop.permute.xlu0 %2525
        %2527 = vrot.lane.b32.xlu0 %v2513, 27
        %v2528 = vpop.permute.xlu0 %2527
        %2529 = vrot.lane.b32.xlu0 %v2514, 27
        %v2530 = vpop.permute.xlu0 %2529
        %2531 = vrot.lane.b32.xlu0 %v2515, 27
        %v2532 = vpop.permute.xlu0 %2531
        %2533 = vrot.lane.b32.xlu0 %v2516, 27
        %v2534 = vpop.permute.xlu0 %2533
        %v2535 = vsel %vm785, %v2524, %v2526
        %v2536 = vsel %vm785, %v2526, %v2528
        %v2537 = vsel %vm785, %v2530, %v2532
        %v2538 = vsel %vm785, %v2532, %v2534
        %2543 = vst [vmem:[#allocation4] sm:$0xff] %v2535
        %2544 = vst [vmem:[#allocation4 + $0x8] sm:$0xff] %v2536
        %2545 = vst [vmem:[#allocation4 + $0x10] sm:$0xff] %v2537
        %2546 = vst [vmem:[#allocation4 + $0x18] sm:$0xff] %v2538
        %v2547 = vld [vmem:[#allocation2 + $0x10] sm:$0xff]
        %v2548 = vld [vmem:[#allocation2 + $0x18] sm:$0xff]
        %v2549 = vld [vmem:[#allocation2 + $0x20] sm:$0xff]
        %v2550 = vld [vmem:[#allocation2 + $0x40] sm:$0xff]
        %v2551 = vld [vmem:[#allocation2 + $0x48] sm:$0xff]
        %v2552 = vld [vmem:[#allocation2 + $0x50] sm:$0xff]
        %2559 = vrot.lane.b32.xlu0 %v2547, 15
        %v2560 = vpop.permute.xlu0 %2559
        %2561 = vrot.lane.b32.xlu0 %v2548, 15
        %v2562 = vpop.permute.xlu0 %2561
        %2563 = vrot.lane.b32.xlu0 %v2549, 15
        %v2564 = vpop.permute.xlu0 %2563
        %2565 = vrot.lane.b32.xlu0 %v2550, 15
        %v2566 = vpop.permute.xlu0 %2565
        %2567 = vrot.lane.b32.xlu0 %v2551, 15
        %v2568 = vpop.permute.xlu0 %2567
        %2569 = vrot.lane.b32.xlu0 %v2552, 15
        %v2570 = vpop.permute.xlu0 %2569
        %v2571 = vsel %vm804, %v2560, %v2562
        %v2572 = vsel %vm804, %v2562, %v2564
        %v2573 = vsel %vm804, %v2566, %v2568
        %v2574 = vsel %vm804, %v2568, %v2570
        %2579 = vst [vmem:[#allocation4 + $0x20] sm:$0xff] %v2571
        %2580 = vst [vmem:[#allocation4 + $0x28] sm:$0xff] %v2572
        %2581 = vst [vmem:[#allocation4 + $0x30] sm:$0xff] %v2573
        %2582 = vst [vmem:[#allocation4 + $0x38] sm:$0xff] %v2574
        %v2583 = vld [vmem:[#allocation2 + $0x10] sm:$0xff]
        %v2584 = vld [vmem:[#allocation2 + $0x18] sm:$0xff]
        %v2585 = vld [vmem:[#allocation2 + $0x20] sm:$0xff]
        %v2586 = vld [vmem:[#allocation2 + $0x40] sm:$0xff]
        %v2587 = vld [vmem:[#allocation2 + $0x48] sm:$0xff]
        %v2588 = vld [vmem:[#allocation2 + $0x50] sm:$0xff]
        %2595 = vrot.lane.b32.xlu0 %v2583, 14
        %v2596 = vpop.permute.xlu0 %2595
        %2597 = vrot.lane.b32.xlu0 %v2584, 14
        %v2598 = vpop.permute.xlu0 %2597
        %2599 = vrot.lane.b32.xlu0 %v2585, 14
        %v2600 = vpop.permute.xlu0 %2599
        %2601 = vrot.lane.b32.xlu0 %v2586, 14
        %v2602 = vpop.permute.xlu0 %2601
        %2603 = vrot.lane.b32.xlu0 %v2587, 14
        %v2604 = vpop.permute.xlu0 %2603
        %2605 = vrot.lane.b32.xlu0 %v2588, 14
        %v2606 = vpop.permute.xlu0 %2605
        %v2607 = vsel %vm823, %v2596, %v2598
        %v2608 = vsel %vm823, %v2598, %v2600
        %v2609 = vsel %vm823, %v2602, %v2604
        %v2610 = vsel %vm823, %v2604, %v2606
        %2615 = vst [vmem:[#allocation4 + $0x40] sm:$0xff] %v2607
        %2616 = vst [vmem:[#allocation4 + $0x48] sm:$0xff] %v2608
        %2617 = vst [vmem:[#allocation4 + $0x50] sm:$0xff] %v2609
        %2618 = vst [vmem:[#allocation4 + $0x58] sm:$0xff] %v2610
        %v2619 = vld [vmem:[#allocation2 + $0x10] sm:$0xff]
        %v2620 = vld [vmem:[#allocation2 + $0x18] sm:$0xff]
        %v2621 = vld [vmem:[#allocation2 + $0x20] sm:$0xff]
        %v2622 = vld [vmem:[#allocation2 + $0x40] sm:$0xff]
        %v2623 = vld [vmem:[#allocation2 + $0x48] sm:$0xff]
        %v2624 = vld [vmem:[#allocation2 + $0x50] sm:$0xff]
        %2631 = vrot.lane.b32.xlu0 %v2619, 13
        %v2632 = vpop.permute.xlu0 %2631
        %2633 = vrot.lane.b32.xlu0 %v2620, 13
        %v2634 = vpop.permute.xlu0 %2633
        %2635 = vrot.lane.b32.xlu0 %v2621, 13
        %v2636 = vpop.permute.xlu0 %2635
        %2637 = vrot.lane.b32.xlu0 %v2622, 13
        %v2638 = vpop.permute.xlu0 %2637
        %2639 = vrot.lane.b32.xlu0 %v2623, 13
        %v2640 = vpop.permute.xlu0 %2639
        %2641 = vrot.lane.b32.xlu0 %v2624, 13
        %v2642 = vpop.permute.xlu0 %2641
        %v2643 = vsel %vm842, %v2632, %v2634
        %v2644 = vsel %vm842, %v2634, %v2636
        %v2645 = vsel %vm842, %v2638, %v2640
        %v2646 = vsel %vm842, %v2640, %v2642
        %2651 = vst [vmem:[#allocation4 + $0x60] sm:$0xff] %v2643
        %2652 = vst [vmem:[#allocation4 + $0x68] sm:$0xff] %v2644
        %2653 = vst [vmem:[#allocation4 + $0x70] sm:$0xff] %v2645
        %2654 = vst [vmem:[#allocation4 + $0x78] sm:$0xff] %v2646
        %v2655 = vld [vmem:[#allocation2 + $0x18] sm:$0xff]
        %v2656 = vld [vmem:[#allocation2 + $0x20] sm:$0xff]
        %v2657 = vld [vmem:[#allocation2 + $0x48] sm:$0xff]
        %v2658 = vld [vmem:[#allocation2 + $0x50] sm:$0xff]
        %2659 = vst [vmem:[#allocation4 + $0x80] sm:$0xff] %v2655
        %2660 = vst [vmem:[#allocation4 + $0x88] sm:$0xff] %v2656
        %2661 = vst [vmem:[#allocation4 + $0x90] sm:$0xff] %v2657
        %2662 = vst [vmem:[#allocation4 + $0x98] sm:$0xff] %v2658
        %v2663 = vld [vmem:[#allocation2 + $0x18] sm:$0xff]
        %v2664 = vld [vmem:[#allocation2 + $0x20] sm:$0xff]
        %v2665 = vld [vmem:[#allocation2 + $0x28] sm:$0xff]
        %v2666 = vld [vmem:[#allocation2 + $0x48] sm:$0xff]
        %v2667 = vld [vmem:[#allocation2 + $0x50] sm:$0xff]
        %v2668 = vld [vmem:[#allocation2 + $0x58] sm:$0xff]
        %2675 = vrot.lane.b32.xlu0 %v2663, 127
        %v2676 = vpop.permute.xlu0 %2675
        %2677 = vrot.lane.b32.xlu0 %v2664, 127
        %v2678 = vpop.permute.xlu0 %2677
        %2679 = vrot.lane.b32.xlu0 %v2665, 127
        %v2680 = vpop.permute.xlu0 %2679
        %2681 = vrot.lane.b32.xlu0 %v2666, 127
        %v2682 = vpop.permute.xlu0 %2681
        %2683 = vrot.lane.b32.xlu0 %v2667, 127
        %v2684 = vpop.permute.xlu0 %2683
        %2685 = vrot.lane.b32.xlu0 %v2668, 127
        %v2686 = vpop.permute.xlu0 %2685
        %v2687 = vsel %vm865, %v2676, %v2678
        %v2688 = vsel %vm865, %v2678, %v2680
        %v2689 = vsel %vm865, %v2682, %v2684
        %v2690 = vsel %vm865, %v2684, %v2686
        %2695 = vst [vmem:[#allocation4 + $0xa0] sm:$0xff] %v2687
        %2696 = vst [vmem:[#allocation4 + $0xa8] sm:$0xff] %v2688
        %2697 = vst [vmem:[#allocation4 + $0xb0] sm:$0xff] %v2689
        %2698 = vst [vmem:[#allocation4 + $0xb8] sm:$0xff] %v2690
        %v2699 = vld [vmem:[#allocation2 + $0x18] sm:$0xff]
        %v2700 = vld [vmem:[#allocation2 + $0x20] sm:$0xff]
        %v2701 = vld [vmem:[#allocation2 + $0x28] sm:$0xff]
        %v2702 = vld [vmem:[#allocation2 + $0x48] sm:$0xff]
        %v2703 = vld [vmem:[#allocation2 + $0x50] sm:$0xff]
        %v2704 = vld [vmem:[#allocation2 + $0x58] sm:$0xff]
        %2711 = vrot.lane.b32.xlu0 %v2699, 125
        %v2712 = vpop.permute.xlu0 %2711
        %2713 = vrot.lane.b32.xlu0 %v2700, 125
        %v2714 = vpop.permute.xlu0 %2713
        %2715 = vrot.lane.b32.xlu0 %v2701, 125
        %v2716 = vpop.permute.xlu0 %2715
        %2717 = vrot.lane.b32.xlu0 %v2702, 125
        %v2718 = vpop.permute.xlu0 %2717
        %2719 = vrot.lane.b32.xlu0 %v2703, 125
        %v2720 = vpop.permute.xlu0 %2719
        %2721 = vrot.lane.b32.xlu0 %v2704, 125
        %v2722 = vpop.permute.xlu0 %2721
        %v2723 = vsel %vm884, %v2712, %v2714
        %v2724 = vsel %vm884, %v2714, %v2716
        %v2725 = vsel %vm884, %v2718, %v2720
        %v2726 = vsel %vm884, %v2720, %v2722
        %2731 = vst [vmem:[#allocation4 + $0xc0] sm:$0xff] %v2723
        %2732 = vst [vmem:[#allocation4 + $0xc8] sm:$0xff] %v2724
        %2733 = vst [vmem:[#allocation4 + $0xd0] sm:$0xff] %v2725
        %2734 = vst [vmem:[#allocation4 + $0xd8] sm:$0xff] %v2726
        %v2735 = vld [vmem:[#allocation2 + $0x18] sm:$0xff]
        %v2736 = vld [vmem:[#allocation2 + $0x20] sm:$0xff]
        %v2737 = vld [vmem:[#allocation2 + $0x28] sm:$0xff]
        %v2738 = vld [vmem:[#allocation2 + $0x48] sm:$0xff]
        %v2739 = vld [vmem:[#allocation2 + $0x50] sm:$0xff]
        %v2740 = vld [vmem:[#allocation2 + $0x58] sm:$0xff]
        %2747 = vrot.lane.b32.xlu0 %v2735, 119
        %v2748 = vpop.permute.xlu0 %2747
        %2749 = vrot.lane.b32.xlu0 %v2736, 119
        %v2750 = vpop.permute.xlu0 %2749
        %2751 = vrot.lane.b32.xlu0 %v2737, 119
        %v2752 = vpop.permute.xlu0 %2751
        %2753 = vrot.lane.b32.xlu0 %v2738, 119
        %v2754 = vpop.permute.xlu0 %2753
        %2755 = vrot.lane.b32.xlu0 %v2739, 119
        %v2756 = vpop.permute.xlu0 %2755
        %2757 = vrot.lane.b32.xlu0 %v2740, 119
        %v2758 = vpop.permute.xlu0 %2757
        %v2759 = vsel %vm903, %v2748, %v2750
        %v2760 = vsel %vm903, %v2750, %v2752
        %v2761 = vsel %vm903, %v2754, %v2756
        %v2762 = vsel %vm903, %v2756, %v2758
        %2767 = vst [vmem:[#allocation4 + $0xe0] sm:$0xff] %v2759
        %2768 = vst [vmem:[#allocation4 + $0xe8] sm:$0xff] %v2760
        %2769 = vst [vmem:[#allocation4 + $0xf0] sm:$0xff] %v2761
        %2770 = vst [vmem:[#allocation4 + $0xf8] sm:$0xff] %v2762
        %v2771 = vld [vmem:[%s3 + $0x18] sm:$0xff]
        %v2772 = vld [vmem:[%s3 + $0x40] sm:$0xff]
        %v2773 = vld [vmem:[%s3 + $0x68] sm:$0xff]
        %v2774 = vld [vmem:[%s3 + $0x90] sm:$0xff]
        %v2775 = vld [vmem:[#allocation4] sm:$0xff]
        %v2776 = vld [vmem:[#allocation4 + $0x8] sm:$0xff]
        %v2777 = vld [vmem:[#allocation4 + $0x10] sm:$0xff]
        %v2778 = vld [vmem:[#allocation4 + $0x18] sm:$0xff]
        %v2779 = vld [vmem:[#allocation4 + $0x20] sm:$0xff]
        %v2780 = vld [vmem:[#allocation4 + $0x28] sm:$0xff]
        %v2781 = vld [vmem:[#allocation4 + $0x30] sm:$0xff]
        %v2782 = vld [vmem:[#allocation4 + $0x38] sm:$0xff]
        %v2783 = vld [vmem:[#allocation4 + $0x40] sm:$0xff]
        %v2784 = vld [vmem:[#allocation4 + $0x48] sm:$0xff]
        %v2785 = vld [vmem:[#allocation4 + $0x50] sm:$0xff]
        %v2786 = vld [vmem:[#allocation4 + $0x58] sm:$0xff]
        %v2787 = vld [vmem:[#allocation4 + $0x60] sm:$0xff]
        %v2788 = vld [vmem:[#allocation4 + $0x68] sm:$0xff]
        %v2789 = vld [vmem:[#allocation4 + $0x70] sm:$0xff]
        %v2790 = vld [vmem:[#allocation4 + $0x78] sm:$0xff]
        %v2791 = vld [vmem:[#allocation4 + $0x80] sm:$0xff]
        %v2792 = vld [vmem:[#allocation4 + $0x88] sm:$0xff]
        %v2793 = vld [vmem:[#allocation4 + $0x90] sm:$0xff]
        %v2794 = vld [vmem:[#allocation4 + $0x98] sm:$0xff]
        %v2795 = vld [vmem:[#allocation4 + $0xa0] sm:$0xff]
        %v2796 = vld [vmem:[#allocation4 + $0xa8] sm:$0xff]
        %v2797 = vld [vmem:[#allocation4 + $0xb0] sm:$0xff]
        %v2798 = vld [vmem:[#allocation4 + $0xb8] sm:$0xff]
        %v2799 = vld [vmem:[#allocation4 + $0xc0] sm:$0xff]
        %v2800 = vld [vmem:[#allocation4 + $0xc8] sm:$0xff]
        %v2801 = vld [vmem:[#allocation4 + $0xd0] sm:$0xff]
        %v2802 = vld [vmem:[#allocation4 + $0xd8] sm:$0xff]
        %v2803 = vld [vmem:[#allocation4 + $0xe0] sm:$0xff]
        %v2804 = vld [vmem:[#allocation4 + $0xe8] sm:$0xff]
        %v2805 = vld [vmem:[#allocation4 + $0xf0] sm:$0xff]
        %v2806 = vld [vmem:[#allocation4 + $0xf8] sm:$0xff]
        %v2811 = vunpack.c.l.b16 %v2771
        %v2812 = vunpack.c.h.b16 %v2771
        %v2813 = vunpack.c.l.b16 %v2772
        %v2814 = vunpack.c.h.b16 %v2772
        %v2815 = vunpack.c.l.b16 %v2773
        %v2816 = vunpack.c.h.b16 %v2773
        %v2817 = vunpack.c.l.b16 %v2774
        %v2818 = vunpack.c.h.b16 %v2774
        %v2819 = vpack.c.b16 %v2813, %v2811
        %v2820 = vpack.c.b16 %v2814, %v2812
        %v2821 = vpack.c.b16 %v2817, %v2815
        %v2822 = vpack.c.b16 %v2818, %v2816
        %2827 = vmatprep.subr.bf16.mxu0 %v2776
        %2828 = vmatpush1.bf16.msra.mxu0 %v2775
        %2829 = vmatprep.subr.bf16.mxu0 %v2778
        %2830 = vmatpush1.bf16.msra.mxu0 %v2777
        %2831 = vmatprep.subr.bf16.mxu0 %v2780
        %2832 = vmatpush1.bf16.msra.mxu0 %v2779
        %2833 = vmatprep.subr.bf16.mxu0 %v2782
        %2834 = vmatpush1.bf16.msra.mxu0 %v2781
        %2835 = vmatprep.subr.bf16.mxu0 %v2784
        %2836 = vmatpush1.bf16.msra.mxu0 %v2783
        %2837 = vmatprep.subr.bf16.mxu0 %v2786
        %2838 = vmatpush1.bf16.msra.mxu0 %v2785
        %2839 = vmatprep.subr.bf16.mxu0 %v2788
        %2840 = vmatpush1.bf16.msra.mxu0 %v2787
        %2841 = vmatprep.subr.bf16.mxu0 %v2790
        %2842 = vmatpush1.bf16.msra.mxu0 %v2789
        %2843 = vmatprep.subr.bf16.mxu0 %v2792
        %2844 = vmatpush1.bf16.msra.mxu0 %v2791
        %2845 = vmatprep.subr.bf16.mxu0 %v2794
        %2846 = vmatpush1.bf16.msra.mxu0 %v2793
        %2847 = vmatprep.subr.bf16.mxu0 %v2796
        %2848 = vmatpush1.bf16.msra.mxu0 %v2795
        %2849 = vmatprep.subr.bf16.mxu0 %v2798
        %2850 = vmatpush1.bf16.msra.mxu0 %v2797
        %2851 = vmatprep.subr.bf16.mxu0 %v2800
        %2852 = vmatpush1.bf16.msra.mxu0 %v2799
        %2853 = vmatprep.subr.bf16.mxu0 %v2802
        %2854 = vmatpush1.bf16.msra.mxu0 %v2801
        %2855 = vmatprep.subr.bf16.mxu0 %v2804
        %2856 = vmatpush1.bf16.msra.mxu0 %v2803
        %2857 = vmatprep.subr.bf16.mxu0 %v2806
        %2858 = vmatpush1.bf16.msra.mxu0 %v2805
        %2859 = vmatprep.mubr.bf16.mxu0 %v2820
        %2860 = vmatmul.mubr.bf16.gmra.mrb[0].mxu0 %v2819
        %v2861 = vpop.f32.mrb[0].mxu0
        %v2862 = vadd.f32 0.0, %v2861
        %v2863 = vpop.f32.mrb[0].mxu0
        %v2864 = vadd.f32 0.0, %v2863
        %v2865 = vpop.f32.mrb[0].mxu0
        %v2866 = vadd.f32 0.0, %v2865
        %v2867 = vpop.f32.mrb[0].mxu0
        %v2868 = vadd.f32 0.0, %v2867
        %2869 = vmatprep.mubr.bf16.mxu0 %v2822
        %2870 = vmatmul.mubr.bf16.gmra.mrb[0].mxu0 %v2821
        %v2871 = vpop.f32.mrb[0].mxu0
        %v2872 = vadd.f32 0.0, %v2871
        %v2873 = vpop.f32.mrb[0].mxu0
        %v2874 = vadd.f32 0.0, %v2873
        %v2875 = vpop.f32.mrb[0].mxu0
        %v2876 = vadd.f32 0.0, %v2875
        %v2877 = vpop.f32.mrb[0].mxu0
        %v2878 = vadd.f32 0.0, %v2877
        %2879 = vdwg.mxu0
        %v2880 = vadd.f32 %v2503, %v2862
        %v2881 = vadd.f32 %v2504, %v2864
        %v2882 = vadd.f32 %v2505, %v2866
        %v2883 = vadd.f32 %v2506, %v2868
        %v2884 = vadd.f32 %v2507, %v2872
        %v2885 = vadd.f32 %v2508, %v2874
        %v2886 = vadd.f32 %v2509, %v2876
        %v2887 = vadd.f32 %v2510, %v2878
        %v2888 = vld [vmem:[#allocation2 + $0x18] sm:$0xff]
        %v2889 = vld [vmem:[#allocation2 + $0x20] sm:$0xff]
        %v2890 = vld [vmem:[#allocation2 + $0x28] sm:$0xff]
        %v2891 = vld [vmem:[#allocation2 + $0x48] sm:$0xff]
        %v2892 = vld [vmem:[#allocation2 + $0x50] sm:$0xff]
        %v2893 = vld [vmem:[#allocation2 + $0x58] sm:$0xff]
        %2900 = vrot.lane.b32.xlu0 %v2888, 109
        %v2901 = vpop.permute.xlu0 %2900
        %2902 = vrot.lane.b32.xlu0 %v2889, 109
        %v2903 = vpop.permute.xlu0 %2902
        %2904 = vrot.lane.b32.xlu0 %v2890, 109
        %v2905 = vpop.permute.xlu0 %2904
        %2906 = vrot.lane.b32.xlu0 %v2891, 109
        %v2907 = vpop.permute.xlu0 %2906
        %2908 = vrot.lane.b32.xlu0 %v2892, 109
        %v2909 = vpop.permute.xlu0 %2908
        %2910 = vrot.lane.b32.xlu0 %v2893, 109
        %v2911 = vpop.permute.xlu0 %2910
        %v2912 = vsel %vm1104, %v2901, %v2903
        %v2913 = vsel %vm1104, %v2903, %v2905
        %v2914 = vsel %vm1104, %v2907, %v2909
        %v2915 = vsel %vm1104, %v2909, %v2911
        %2920 = vst [vmem:[#allocation4] sm:$0xff] %v2912
        %2921 = vst [vmem:[#allocation4 + $0x8] sm:$0xff] %v2913
        %2922 = vst [vmem:[#allocation4 + $0x10] sm:$0xff] %v2914
        %2923 = vst [vmem:[#allocation4 + $0x18] sm:$0xff] %v2915
        %v2924 = vld [vmem:[#allocation2 + $0x18] sm:$0xff]
        %v2925 = vld [vmem:[#allocation2 + $0x20] sm:$0xff]
        %v2926 = vld [vmem:[#allocation2 + $0x28] sm:$0xff]
        %v2927 = vld [vmem:[#allocation2 + $0x48] sm:$0xff]
        %v2928 = vld [vmem:[#allocation2 + $0x50] sm:$0xff]
        %v2929 = vld [vmem:[#allocation2 + $0x58] sm:$0xff]
        %2936 = vrot.lane.b32.xlu0 %v2924, 100
        %v2937 = vpop.permute.xlu0 %2936
        %2938 = vrot.lane.b32.xlu0 %v2925, 100
        %v2939 = vpop.permute.xlu0 %2938
        %2940 = vrot.lane.b32.xlu0 %v2926, 100
        %v2941 = vpop.permute.xlu0 %2940
        %2942 = vrot.lane.b32.xlu0 %v2927, 100
        %v2943 = vpop.permute.xlu0 %2942
        %2944 = vrot.lane.b32.xlu0 %v2928, 100
        %v2945 = vpop.permute.xlu0 %2944
        %2946 = vrot.lane.b32.xlu0 %v2929, 100
        %v2947 = vpop.permute.xlu0 %2946
        %v2948 = vsel %vm1123, %v2937, %v2939
        %v2949 = vsel %vm1123, %v2939, %v2941
        %v2950 = vsel %vm1123, %v2943, %v2945
        %v2951 = vsel %vm1123, %v2945, %v2947
        %2956 = vst [vmem:[#allocation4 + $0x20] sm:$0xff] %v2948
        %2957 = vst [vmem:[#allocation4 + $0x28] sm:$0xff] %v2949
        %2958 = vst [vmem:[#allocation4 + $0x30] sm:$0xff] %v2950
        %2959 = vst [vmem:[#allocation4 + $0x38] sm:$0xff] %v2951
        %v2960 = vld [vmem:[#allocation2 + $0x18] sm:$0xff]
        %v2961 = vld [vmem:[#allocation2 + $0x20] sm:$0xff]
        %v2962 = vld [vmem:[#allocation2 + $0x28] sm:$0xff]
        %v2963 = vld [vmem:[#allocation2 + $0x48] sm:$0xff]
        %v2964 = vld [vmem:[#allocation2 + $0x50] sm:$0xff]
        %v2965 = vld [vmem:[#allocation2 + $0x58] sm:$0xff]
        %2972 = vrot.lane.b32.xlu0 %v2960, 96
        %v2973 = vpop.permute.xlu0 %2972
        %2974 = vrot.lane.b32.xlu0 %v2961, 96
        %v2975 = vpop.permute.xlu0 %2974
        %2976 = vrot.lane.b32.xlu0 %v2962, 96
        %v2977 = vpop.permute.xlu0 %2976
        %2978 = vrot.lane.b32.xlu0 %v2963, 96
        %v2979 = vpop.permute.xlu0 %2978
        %2980 = vrot.lane.b32.xlu0 %v2964, 96
        %v2981 = vpop.permute.xlu0 %2980
        %2982 = vrot.lane.b32.xlu0 %v2965, 96
        %v2983 = vpop.permute.xlu0 %2982
        %v2984 = vsel %vm1142, %v2973, %v2975
        %v2985 = vsel %vm1142, %v2975, %v2977
        %v2986 = vsel %vm1142, %v2979, %v2981
        %v2987 = vsel %vm1142, %v2981, %v2983
        %2992 = vst [vmem:[#allocation4 + $0x40] sm:$0xff] %v2984
        %2993 = vst [vmem:[#allocation4 + $0x48] sm:$0xff] %v2985
        %2994 = vst [vmem:[#allocation4 + $0x50] sm:$0xff] %v2986
        %2995 = vst [vmem:[#allocation4 + $0x58] sm:$0xff] %v2987
        %v2996 = vld [vmem:[#allocation2 + $0x18] sm:$0xff]
        %v2997 = vld [vmem:[#allocation2 + $0x20] sm:$0xff]
        %v2998 = vld [vmem:[#allocation2 + $0x28] sm:$0xff]
        %v2999 = vld [vmem:[#allocation2 + $0x48] sm:$0xff]
        %v3000 = vld [vmem:[#allocation2 + $0x50] sm:$0xff]
        %v3001 = vld [vmem:[#allocation2 + $0x58] sm:$0xff]
        %3008 = vrot.lane.b32.xlu0 %v2996, 93
        %v3009 = vpop.permute.xlu0 %3008
        %3010 = vrot.lane.b32.xlu0 %v2997, 93
        %v3011 = vpop.permute.xlu0 %3010
        %3012 = vrot.lane.b32.xlu0 %v2998, 93
        %v3013 = vpop.permute.xlu0 %3012
        %3014 = vrot.lane.b32.xlu0 %v2999, 93
        %v3015 = vpop.permute.xlu0 %3014
        %3016 = vrot.lane.b32.xlu0 %v3000, 93
        %v3017 = vpop.permute.xlu0 %3016
        %3018 = vrot.lane.b32.xlu0 %v3001, 93
        %v3019 = vpop.permute.xlu0 %3018
        %v3020 = vsel %vm1161, %v3009, %v3011
        %v3021 = vsel %vm1161, %v3011, %v3013
        %v3022 = vsel %vm1161, %v3015, %v3017
        %v3023 = vsel %vm1161, %v3017, %v3019
        %3028 = vst [vmem:[#allocation4 + $0x60] sm:$0xff] %v3020
        %3029 = vst [vmem:[#allocation4 + $0x68] sm:$0xff] %v3021
        %3030 = vst [vmem:[#allocation4 + $0x70] sm:$0xff] %v3022
        %3031 = vst [vmem:[#allocation4 + $0x78] sm:$0xff] %v3023
        %v3032 = vld [vmem:[#allocation2 + $0x18] sm:$0xff]
        %v3033 = vld [vmem:[#allocation2 + $0x20] sm:$0xff]
        %v3034 = vld [vmem:[#allocation2 + $0x28] sm:$0xff]
        %v3035 = vld [vmem:[#allocation2 + $0x48] sm:$0xff]
        %v3036 = vld [vmem:[#allocation2 + $0x50] sm:$0xff]
        %v3037 = vld [vmem:[#allocation2 + $0x58] sm:$0xff]
        %3044 = vrot.lane.b32.xlu0 %v3032, 70
        %v3045 = vpop.permute.xlu0 %3044
        %3046 = vrot.lane.b32.xlu0 %v3033, 70
        %v3047 = vpop.permute.xlu0 %3046
        %3048 = vrot.lane.b32.xlu0 %v3034, 70
        %v3049 = vpop.permute.xlu0 %3048
        %3050 = vrot.lane.b32.xlu0 %v3035, 70
        %v3051 = vpop.permute.xlu0 %3050
        %3052 = vrot.lane.b32.xlu0 %v3036, 70
        %v3053 = vpop.permute.xlu0 %3052
        %3054 = vrot.lane.b32.xlu0 %v3037, 70
        %v3055 = vpop.permute.xlu0 %3054
        %v3056 = vsel %vm1180, %v3045, %v3047
        %v3057 = vsel %vm1180, %v3047, %v3049
        %v3058 = vsel %vm1180, %v3051, %v3053
        %v3059 = vsel %vm1180, %v3053, %v3055
        %3064 = vst [vmem:[#allocation4 + $0x80] sm:$0xff] %v3056
        %3065 = vst [vmem:[#allocation4 + $0x88] sm:$0xff] %v3057
        %3066 = vst [vmem:[#allocation4 + $0x90] sm:$0xff] %v3058
        %3067 = vst [vmem:[#allocation4 + $0x98] sm:$0xff] %v3059
        %v3068 = vld [vmem:[%s3 + $0x20] sm:$0xff]
        %v3069 = vld [vmem:[%s3 + $0x48] sm:$0xff]
        %v3070 = vld [vmem:[%s3 + $0x70] sm:$0xff]
        %v3071 = vld [vmem:[%s3 + $0x98] sm:$0xff]
        %v3072 = vld [vmem:[#allocation4] sm:$0xff]
        %v3073 = vld [vmem:[#allocation4 + $0x8] sm:$0xff]
        %v3074 = vld [vmem:[#allocation4 + $0x10] sm:$0xff]
        %v3075 = vld [vmem:[#allocation4 + $0x18] sm:$0xff]
        %v3076 = vld [vmem:[#allocation4 + $0x20] sm:$0xff]
        %v3077 = vld [vmem:[#allocation4 + $0x28] sm:$0xff]
        %v3078 = vld [vmem:[#allocation4 + $0x30] sm:$0xff]
        %v3079 = vld [vmem:[#allocation4 + $0x38] sm:$0xff]
        %v3080 = vld [vmem:[#allocation4 + $0x40] sm:$0xff]
        %v3081 = vld [vmem:[#allocation4 + $0x48] sm:$0xff]
        %v3082 = vld [vmem:[#allocation4 + $0x50] sm:$0xff]
        %v3083 = vld [vmem:[#allocation4 + $0x58] sm:$0xff]
        %v3084 = vld [vmem:[#allocation4 + $0x60] sm:$0xff]
        %v3085 = vld [vmem:[#allocation4 + $0x68] sm:$0xff]
        %v3086 = vld [vmem:[#allocation4 + $0x70] sm:$0xff]
        %v3087 = vld [vmem:[#allocation4 + $0x78] sm:$0xff]
        %v3088 = vld [vmem:[#allocation4 + $0x80] sm:$0xff]
        %v3089 = vld [vmem:[#allocation4 + $0x88] sm:$0xff]
        %v3090 = vld [vmem:[#allocation4 + $0x90] sm:$0xff]
        %v3091 = vld [vmem:[#allocation4 + $0x98] sm:$0xff]
        %v3096 = vunpack.c.l.b16 %v3068
        %v3097 = vunpack.c.h.b16 %v3068
        %v3098 = vunpack.c.l.b16 %v3069
        %v3099 = vunpack.c.h.b16 %v3069
        %v3100 = vunpack.c.l.b16 %v3070
        %v3101 = vunpack.c.h.b16 %v3070
        %v3102 = vunpack.c.l.b16 %v3071
        %v3103 = vunpack.c.h.b16 %v3071
        %v3104 = vpack.c.b16 %v3098, %v3096
        %v3105 = vpack.c.b16 %v3099, %v3097
        %v3106 = vpack.c.b16 %v3102, %v3100
        %v3107 = vpack.c.b16 %v3103, %v3101
        %vm3110 = vcmask 261120
        %v3112 = vsel %vm3110, %v3105, 0
        %v3115 = vsel %vm3110, %v3107, 0
        %3117 = vmatprep.subr.bf16.mxu0 %v3073
        %3118 = vmatpush1.bf16.msra.mxu0 %v3072
        %3119 = vmatprep.subr.bf16.mxu0 %v3075
        %3120 = vmatpush1.bf16.msra.mxu0 %v3074
        %3121 = vmatprep.subr.bf16.mxu0 %v3077
        %3122 = vmatpush1.bf16.msra.mxu0 %v3076
        %3123 = vmatprep.subr.bf16.mxu0 %v3079
        %3124 = vmatpush1.bf16.msra.mxu0 %v3078
        %3125 = vmatprep.subr.bf16.mxu0 %v3081
        %3126 = vmatpush1.bf16.msra.mxu0 %v3080
        %3127 = vmatprep.subr.bf16.mxu0 %v3083
        %3128 = vmatpush1.bf16.msra.mxu0 %v3082
        %3129 = vmatprep.subr.bf16.mxu0 %v3085
        %3130 = vmatpush1.bf16.msra.mxu0 %v3084
        %3131 = vmatprep.subr.bf16.mxu0 %v3087
        %3132 = vmatpush1.bf16.msra.mxu0 %v3086
        %3133 = vmatprep.subr.bf16.mxu0 %v3089
        %3134 = vmatpush1.bf16.msra.mxu0 %v3088
        %3135 = vmatprep.subr.bf16.mxu0 %v3091
        %3136 = vmatpush1.bf16.msra.mxu0 %v3090
        %3137 = vmatprep.subr.bf16.mxu0 0
        %3138 = vmatpush1.bf16.msra.mxu0 0
        %3139 = vmatprep.subr.bf16.mxu0 0
        %3140 = vmatpush1.bf16.msra.mxu0 0
        %3141 = vmatprep.subr.bf16.mxu0 0
        %3142 = vmatpush1.bf16.msra.mxu0 0
        %3143 = vmatprep.subr.bf16.mxu0 0
        %3144 = vmatpush1.bf16.msra.mxu0 0
        %3145 = vmatprep.subr.bf16.mxu0 0
        %3146 = vmatpush1.bf16.msra.mxu0 0
        %3147 = vmatprep.subr.bf16.mxu0 0
        %3148 = vmatpush1.bf16.msra.mxu0 0
        %3149 = vmatprep.mubr.bf16.mxu0 %v3112
        %3150 = vmatmul.mubr.bf16.gmra.mrb[0].mxu0 %v3104
        %v3151 = vpop.f32.mrb[0].mxu0
        %v3152 = vadd.f32 0.0, %v3151
        %v3153 = vpop.f32.mrb[0].mxu0
        %v3154 = vadd.f32 0.0, %v3153
        %v3155 = vpop.f32.mrb[0].mxu0
        %v3156 = vadd.f32 0.0, %v3155
        %v3157 = vpop.f32.mrb[0].mxu0
        %v3158 = vadd.f32 0.0, %v3157
        %3159 = vmatprep.mubr.bf16.mxu0 %v3115
        %3160 = vmatmul.mubr.bf16.gmra.mrb[0].mxu0 %v3106
        %v3161 = vpop.f32.mrb[0].mxu0
        %v3162 = vadd.f32 0.0, %v3161
        %v3163 = vpop.f32.mrb[0].mxu0
        %v3164 = vadd.f32 0.0, %v3163
        %v3165 = vpop.f32.mrb[0].mxu0
        %v3166 = vadd.f32 0.0, %v3165
        %v3167 = vpop.f32.mrb[0].mxu0
        %v3168 = vadd.f32 0.0, %v3167
        %3169 = vdwg.mxu0
        %v3170 = vadd.f32 %v2880, %v3152
        %v3171 = vadd.f32 %v2881, %v3154
        %v3172 = vadd.f32 %v2882, %v3156
        %v3173 = vadd.f32 %v2883, %v3158
        %v3174 = vadd.f32 %v2884, %v3162
        %v3175 = vadd.f32 %v2885, %v3164
        %v3176 = vadd.f32 %v2886, %v3166
        %v3177 = vadd.f32 %v2887, %v3168
        %v3178 = vld [vmem:[%s4] sm:$0xff]
        %v3179 = vld [vmem:[%s4 + $0x8] sm:$0xff]
        %v3180 = vld [vmem:[%s4 + $0x10] sm:$0xff]
        %v3181 = vld [vmem:[%s4 + $0x18] sm:$0xff]
        %3183 = vset.pattern.permute.xlu0 0
        %3184 = vperm.xlu0 %3183, %v3178
        %v3185 = vpop.permute.xlu0 %3184
        %3188 = vset.pattern.permute.xlu0 0
        %3189 = vperm.xlu0 %3188, %v3179
        %v3190 = vpop.permute.xlu0 %3189
        %3193 = vset.pattern.permute.xlu0 0
        %3194 = vperm.xlu0 %3193, %v3180
        %v3195 = vpop.permute.xlu0 %3194
        %3198 = vset.pattern.permute.xlu0 0
        %3199 = vperm.xlu0 %3198, %v3181
        %v3200 = vpop.permute.xlu0 %3199
        %v3202 = vadd.f32 %v3170, %v3185
        %v3203 = vadd.f32 %v3171, %v3185
        %v3204 = vadd.f32 %v3172, %v3190
        %v3205 = vadd.f32 %v3173, %v3190
        %v3206 = vadd.f32 %v3174, %v3195
        %v3207 = vadd.f32 %v3175, %v3195
        %v3208 = vadd.f32 %v3176, %v3200
        %v3209 = vadd.f32 %v3177, %v3200
        %v3210 = vmax.f32 %v3202, 0.0
        %v3211 = vmax.f32 %v3203, 0.0
        %v3212 = vmax.f32 %v3204, 0.0
        %v3213 = vmax.f32 %v3205, 0.0
        %v3214 = vmax.f32 %v3206, 0.0
        %v3215 = vmax.f32 %v3207, 0.0
        %v3216 = vmax.f32 %v3208, 0.0
        %v3217 = vmax.f32 %v3209, 0.0
        %s3218 = scalar_lea.vmem %s4, 64
        %v3219 = vld [vmem:[%s3218] sm:$0xff]
        %v3220 = vld [vmem:[%s3218 + $0x8] sm:$0xff]
        %v3221 = vld [vmem:[%s3218 + $0x10] sm:$0xff]
        %v3222 = vld [vmem:[%s3218 + $0x18] sm:$0xff]
        %3224 = vset.pattern.permute.xlu0 0
        %3225 = vperm.xlu0 %3224, %v3219
        %v3226 = vpop.permute.xlu0 %3225
        %3229 = vset.pattern.permute.xlu0 0
        %3230 = vperm.xlu0 %3229, %v3220
        %v3231 = vpop.permute.xlu0 %3230
        %3234 = vset.pattern.permute.xlu0 0
        %3235 = vperm.xlu0 %3234, %v3221
        %v3236 = vpop.permute.xlu0 %3235
        %3239 = vset.pattern.permute.xlu0 0
        %3240 = vperm.xlu0 %3239, %v3222
        %v3241 = vpop.permute.xlu0 %3240
        %v3243 = vadd.f32 %v3210, %v3226
        %v3244 = vadd.f32 %v3211, %v3226
        %v3245 = vadd.f32 %v3212, %v3231
        %v3246 = vadd.f32 %v3213, %v3231
        %v3247 = vadd.f32 %v3214, %v3236
        %v3248 = vadd.f32 %v3215, %v3236
        %v3249 = vadd.f32 %v3216, %v3241
        %v3250 = vadd.f32 %v3217, %v3241
        %v3251 = vld [vmem:[#allocation3] sm:$0xff]
        %v3252 = vld [vmem:[#allocation3 + $0x8] sm:$0xff]
        %v3253 = vld [vmem:[#allocation3 + $0x10] sm:$0xff]
        %v3254 = vld [vmem:[#allocation3 + $0x18] sm:$0xff]
        %v3255 = vld [vmem:[#allocation3 + $0x20] sm:$0xff]
        %v3256 = vld [vmem:[#allocation3 + $0x28] sm:$0xff]
        %v3257 = vld [vmem:[#allocation3 + $0x30] sm:$0xff]
        %v3258 = vld [vmem:[#allocation3 + $0x38] sm:$0xff]
        %v3259 = vadd.f32 %v3251, %v3243
        %v3260 = vadd.f32 %v3252, %v3244
        %v3261 = vadd.f32 %v3253, %v3245
        %v3262 = vadd.f32 %v3254, %v3246
        %v3263 = vadd.f32 %v3255, %v3247
        %v3264 = vadd.f32 %v3256, %v3248
        %v3265 = vadd.f32 %v3257, %v3249
        %v3266 = vadd.f32 %v3258, %v3250
        %3267 = vst [vmem:[#allocation3] sm:$0xff] %v3259
        %3268 = vst [vmem:[#allocation3 + $0x8] sm:$0xff] %v3260
        %3269 = vst [vmem:[#allocation3 + $0x10] sm:$0xff] %v3261
        %3270 = vst [vmem:[#allocation3 + $0x18] sm:$0xff] %v3262
        %3271 = vst [vmem:[#allocation3 + $0x20] sm:$0xff] %v3263
        %3272 = vst [vmem:[#allocation3 + $0x28] sm:$0xff] %v3264
        %3273 = vst [vmem:[#allocation3 + $0x30] sm:$0xff] %v3265
        %3274 = vst [vmem:[#allocation3 + $0x38] sm:$0xff] %v3266
        %v3275 = vpack.c.bf16 %v3261, %v3259
        %v3276 = vpack.c.bf16 %v3262, %v3260
        %v3277 = vpack.c.bf16 %v3265, %v3263
        %v3278 = vpack.c.bf16 %v3266, %v3264
        %3279 = vst [vmem:[#allocation2 + $0x10] sm:$0xff] %v3275
        %3280 = vst [vmem:[#allocation2 + $0x18] sm:$0xff] %v3276
        %3281 = vst [vmem:[#allocation2 + $0x40] sm:$0xff] %v3277
        %3282 = vst [vmem:[#allocation2 + $0x48] sm:$0xff] %v3278
        %v3283 = vld [vmem:[#allocation2 + $0x8] sm:$0xff]
        %v3284 = vld [vmem:[#allocation2 + $0x10] sm:$0xff]
        %v3285 = vld [vmem:[#allocation2 + $0x18] sm:$0xff]
        %v3286 = vld [vmem:[#allocation2 + $0x38] sm:$0xff]
        %v3287 = vld [vmem:[#allocation2 + $0x40] sm:$0xff]
        %v3288 = vld [vmem:[#allocation2 + $0x48] sm:$0xff]
        %3295 = vrot.lane.b32.xlu0 %v3283, 57
        %v3296 = vpop.permute.xlu0 %3295
        %3297 = vrot.lane.b32.xlu0 %v3284, 57
        %v3298 = vpop.permute.xlu0 %3297
        %3299 = vrot.lane.b32.xlu0 %v3285, 57
        %v3300 = vpop.permute.xlu0 %3299
        %3301 = vrot.lane.b32.xlu0 %v3286, 57
        %v3302 = vpop.permute.xlu0 %3301
        %3303 = vrot.lane.b32.xlu0 %v3287, 57
        %v3304 = vpop.permute.xlu0 %3303
        %3305 = vrot.lane.b32.xlu0 %v3288, 57
        %v3306 = vpop.permute.xlu0 %3305
        %v3307 = vsel %vm325, %v3296, %v3298
        %v3308 = vsel %vm325, %v3298, %v3300
        %v3309 = vsel %vm325, %v3302, %v3304
        %v3310 = vsel %vm325, %v3304, %v3306
        %3315 = vst [vmem:[#allocation4] sm:$0xff] %v3307
        %3316 = vst [vmem:[#allocation4 + $0x8] sm:$0xff] %v3308
        %3317 = vst [vmem:[#allocation4 + $0x10] sm:$0xff] %v3309
        %3318 = vst [vmem:[#allocation4 + $0x18] sm:$0xff] %v3310
        %v3319 = vld [vmem:[#allocation2 + $0x8] sm:$0xff]
        %v3320 = vld [vmem:[#allocation2 + $0x10] sm:$0xff]
        %v3321 = vld [vmem:[#allocation2 + $0x18] sm:$0xff]
        %v3322 = vld [vmem:[#allocation2 + $0x38] sm:$0xff]
        %v3323 = vld [vmem:[#allocation2 + $0x40] sm:$0xff]
        %v3324 = vld [vmem:[#allocation2 + $0x48] sm:$0xff]
        %3331 = vrot.lane.b32.xlu0 %v3319, 71
        %v3332 = vpop.permute.xlu0 %3331
        %3333 = vrot.lane.b32.xlu0 %v3320, 71
        %v3334 = vpop.permute.xlu0 %3333
        %3335 = vrot.lane.b32.xlu0 %v3321, 71
        %v3336 = vpop.permute.xlu0 %3335
        %3337 = vrot.lane.b32.xlu0 %v3322, 71
        %v3338 = vpop.permute.xlu0 %3337
        %3339 = vrot.lane.b32.xlu0 %v3323, 71
        %v3340 = vpop.permute.xlu0 %3339
        %3341 = vrot.lane.b32.xlu0 %v3324, 71
        %v3342 = vpop.permute.xlu0 %3341
        %v3343 = vsel %vm344, %v3332, %v3334
        %v3344 = vsel %vm344, %v3334, %v3336
        %v3345 = vsel %vm344, %v3338, %v3340
        %v3346 = vsel %vm344, %v3340, %v3342
        %3351 = vst [vmem:[#allocation4 + $0x20] sm:$0xff] %v3343
        %3352 = vst [vmem:[#allocation4 + $0x28] sm:$0xff] %v3344
        %3353 = vst [vmem:[#allocation4 + $0x30] sm:$0xff] %v3345
        %3354 = vst [vmem:[#allocation4 + $0x38] sm:$0xff] %v3346
        %v3355 = vld [vmem:[#allocation2 + $0x8] sm:$0xff]
        %v3356 = vld [vmem:[#allocation2 + $0x10] sm:$0xff]
        %v3357 = vld [vmem:[#allocation2 + $0x18] sm:$0xff]
        %v3358 = vld [vmem:[#allocation2 + $0x38] sm:$0xff]
        %v3359 = vld [vmem:[#allocation2 + $0x40] sm:$0xff]
        %v3360 = vld [vmem:[#allocation2 + $0x48] sm:$0xff]
        %3367 = vrot.lane.b32.xlu0 %v3355, 87
        %v3368 = vpop.permute.xlu0 %3367
        %3369 = vrot.lane.b32.xlu0 %v3356, 87
        %v3370 = vpop.permute.xlu0 %3369
        %3371 = vrot.lane.b32.xlu0 %v3357, 87
        %v3372 = vpop.permute.xlu0 %3371
        %3373 = vrot.lane.b32.xlu0 %v3358, 87
        %v3374 = vpop.permute.xlu0 %3373
        %3375 = vrot.lane.b32.xlu0 %v3359, 87
        %v3376 = vpop.permute.xlu0 %3375
        %3377 = vrot.lane.b32.xlu0 %v3360, 87
        %v3378 = vpop.permute.xlu0 %3377
        %v3379 = vsel %vm363, %v3368, %v3370
        %v3380 = vsel %vm363, %v3370, %v3372
        %v3381 = vsel %vm363, %v3374, %v3376
        %v3382 = vsel %vm363, %v3376, %v3378
        %3387 = vst [vmem:[#allocation4 + $0x40] sm:$0xff] %v3379
        %3388 = vst [vmem:[#allocation4 + $0x48] sm:$0xff] %v3380
        %3389 = vst [vmem:[#allocation4 + $0x50] sm:$0xff] %v3381
        %3390 = vst [vmem:[#allocation4 + $0x58] sm:$0xff] %v3382
        %v3391 = vld [vmem:[#allocation2 + $0x8] sm:$0xff]
        %v3392 = vld [vmem:[#allocation2 + $0x10] sm:$0xff]
        %v3393 = vld [vmem:[#allocation2 + $0x18] sm:$0xff]
        %v3394 = vld [vmem:[#allocation2 + $0x38] sm:$0xff]
        %v3395 = vld [vmem:[#allocation2 + $0x40] sm:$0xff]
        %v3396 = vld [vmem:[#allocation2 + $0x48] sm:$0xff]
        %3403 = vrot.lane.b32.xlu0 %v3391, 97
        %v3404 = vpop.permute.xlu0 %3403
        %3405 = vrot.lane.b32.xlu0 %v3392, 97
        %v3406 = vpop.permute.xlu0 %3405
        %3407 = vrot.lane.b32.xlu0 %v3393, 97
        %v3408 = vpop.permute.xlu0 %3407
        %3409 = vrot.lane.b32.xlu0 %v3394, 97
        %v3410 = vpop.permute.xlu0 %3409
        %3411 = vrot.lane.b32.xlu0 %v3395, 97
        %v3412 = vpop.permute.xlu0 %3411
        %3413 = vrot.lane.b32.xlu0 %v3396, 97
        %v3414 = vpop.permute.xlu0 %3413
        %v3415 = vsel %vm382, %v3404, %v3406
        %v3416 = vsel %vm382, %v3406, %v3408
        %v3417 = vsel %vm382, %v3410, %v3412
        %v3418 = vsel %vm382, %v3412, %v3414
        %3423 = vst [vmem:[#allocation4 + $0x60] sm:$0xff] %v3415
        %3424 = vst [vmem:[#allocation4 + $0x68] sm:$0xff] %v3416
        %3425 = vst [vmem:[#allocation4 + $0x70] sm:$0xff] %v3417
        %3426 = vst [vmem:[#allocation4 + $0x78] sm:$0xff] %v3418
        %v3427 = vld [vmem:[#allocation2 + $0x8] sm:$0xff]
        %v3428 = vld [vmem:[#allocation2 + $0x10] sm:$0xff]
        %v3429 = vld [vmem:[#allocation2 + $0x18] sm:$0xff]
        %v3430 = vld [vmem:[#allocation2 + $0x38] sm:$0xff]
        %v3431 = vld [vmem:[#allocation2 + $0x40] sm:$0xff]
        %v3432 = vld [vmem:[#allocation2 + $0x48] sm:$0xff]
        %3439 = vrot.lane.b32.xlu0 %v3427, 99
        %v3440 = vpop.permute.xlu0 %3439
        %3441 = vrot.lane.b32.xlu0 %v3428, 99
        %v3442 = vpop.permute.xlu0 %3441
        %3443 = vrot.lane.b32.xlu0 %v3429, 99
        %v3444 = vpop.permute.xlu0 %3443
        %3445 = vrot.lane.b32.xlu0 %v3430, 99
        %v3446 = vpop.permute.xlu0 %3445
        %3447 = vrot.lane.b32.xlu0 %v3431, 99
        %v3448 = vpop.permute.xlu0 %3447
        %3449 = vrot.lane.b32.xlu0 %v3432, 99
        %v3450 = vpop.permute.xlu0 %3449
        %v3451 = vsel %vm401, %v3440, %v3442
        %v3452 = vsel %vm401, %v3442, %v3444
        %v3453 = vsel %vm401, %v3446, %v3448
        %v3454 = vsel %vm401, %v3448, %v3450
        %3459 = vst [vmem:[#allocation4 + $0x80] sm:$0xff] %v3451
        %3460 = vst [vmem:[#allocation4 + $0x88] sm:$0xff] %v3452
        %3461 = vst [vmem:[#allocation4 + $0x90] sm:$0xff] %v3453
        %3462 = vst [vmem:[#allocation4 + $0x98] sm:$0xff] %v3454
        %v3463 = vld [vmem:[#allocation2 + $0x8] sm:$0xff]
        %v3464 = vld [vmem:[#allocation2 + $0x10] sm:$0xff]
        %v3465 = vld [vmem:[#allocation2 + $0x18] sm:$0xff]
        %v3466 = vld [vmem:[#allocation2 + $0x38] sm:$0xff]
        %v3467 = vld [vmem:[#allocation2 + $0x40] sm:$0xff]
        %v3468 = vld [vmem:[#allocation2 + $0x48] sm:$0xff]
        %3475 = vrot.lane.b32.xlu0 %v3463, 101
        %v3476 = vpop.permute.xlu0 %3475
        %3477 = vrot.lane.b32.xlu0 %v3464, 101
        %v3478 = vpop.permute.xlu0 %3477
        %3479 = vrot.lane.b32.xlu0 %v3465, 101
        %v3480 = vpop.permute.xlu0 %3479
        %3481 = vrot.lane.b32.xlu0 %v3466, 101
        %v3482 = vpop.permute.xlu0 %3481
        %3483 = vrot.lane.b32.xlu0 %v3467, 101
        %v3484 = vpop.permute.xlu0 %3483
        %3485 = vrot.lane.b32.xlu0 %v3468, 101
        %v3486 = vpop.permute.xlu0 %3485
        %v3487 = vsel %vm420, %v3476, %v3478
        %v3488 = vsel %vm420, %v3478, %v3480
        %v3489 = vsel %vm420, %v3482, %v3484
        %v3490 = vsel %vm420, %v3484, %v3486
        %3495 = vst [vmem:[#allocation4 + $0xa0] sm:$0xff] %v3487
        %3496 = vst [vmem:[#allocation4 + $0xa8] sm:$0xff] %v3488
        %3497 = vst [vmem:[#allocation4 + $0xb0] sm:$0xff] %v3489
        %3498 = vst [vmem:[#allocation4 + $0xb8] sm:$0xff] %v3490
        %v3499 = vld [vmem:[#allocation2 + $0x8] sm:$0xff]
        %v3500 = vld [vmem:[#allocation2 + $0x10] sm:$0xff]
        %v3501 = vld [vmem:[#allocation2 + $0x18] sm:$0xff]
        %v3502 = vld [vmem:[#allocation2 + $0x38] sm:$0xff]
        %v3503 = vld [vmem:[#allocation2 + $0x40] sm:$0xff]
        %v3504 = vld [vmem:[#allocation2 + $0x48] sm:$0xff]
        %3511 = vrot.lane.b32.xlu0 %v3499, 113
        %v3512 = vpop.permute.xlu0 %3511
        %3513 = vrot.lane.b32.xlu0 %v3500, 113
        %v3514 = vpop.permute.xlu0 %3513
        %3515 = vrot.lane.b32.xlu0 %v3501, 113
        %v3516 = vpop.permute.xlu0 %3515
        %3517 = vrot.lane.b32.xlu0 %v3502, 113
        %v3518 = vpop.permute.xlu0 %3517
        %3519 = vrot.lane.b32.xlu0 %v3503, 113
        %v3520 = vpop.permute.xlu0 %3519
        %3521 = vrot.lane.b32.xlu0 %v3504, 113
        %v3522 = vpop.permute.xlu0 %3521
        %v3523 = vsel %vm439, %v3512, %v3514
        %v3524 = vsel %vm439, %v3514, %v3516
        %v3525 = vsel %vm439, %v3518, %v3520
        %v3526 = vsel %vm439, %v3520, %v3522
        %3531 = vst [vmem:[#allocation4 + $0xc0] sm:$0xff] %v3523
        %3532 = vst [vmem:[#allocation4 + $0xc8] sm:$0xff] %v3524
        %3533 = vst [vmem:[#allocation4 + $0xd0] sm:$0xff] %v3525
        %3534 = vst [vmem:[#allocation4 + $0xd8] sm:$0xff] %v3526
        %v3535 = vld [vmem:[#allocation2 + $0x8] sm:$0xff]
        %v3536 = vld [vmem:[#allocation2 + $0x10] sm:$0xff]
        %v3537 = vld [vmem:[#allocation2 + $0x18] sm:$0xff]
        %v3538 = vld [vmem:[#allocation2 + $0x38] sm:$0xff]
        %v3539 = vld [vmem:[#allocation2 + $0x40] sm:$0xff]
        %v3540 = vld [vmem:[#allocation2 + $0x48] sm:$0xff]
        %3547 = vrot.lane.b32.xlu0 %v3535, 114
        %v3548 = vpop.permute.xlu0 %3547
        %3549 = vrot.lane.b32.xlu0 %v3536, 114
        %v3550 = vpop.permute.xlu0 %3549
        %3551 = vrot.lane.b32.xlu0 %v3537, 114
        %v3552 = vpop.permute.xlu0 %3551
        %3553 = vrot.lane.b32.xlu0 %v3538, 114
        %v3554 = vpop.permute.xlu0 %3553
        %3555 = vrot.lane.b32.xlu0 %v3539, 114
        %v3556 = vpop.permute.xlu0 %3555
        %3557 = vrot.lane.b32.xlu0 %v3540, 114
        %v3558 = vpop.permute.xlu0 %3557
        %v3559 = vsel %vm458, %v3548, %v3550
        %v3560 = vsel %vm458, %v3550, %v3552
        %v3561 = vsel %vm458, %v3554, %v3556
        %v3562 = vsel %vm458, %v3556, %v3558
        %3567 = vst [vmem:[#allocation4 + $0xe0] sm:$0xff] %v3559
        %3568 = vst [vmem:[#allocation4 + $0xe8] sm:$0xff] %v3560
        %3569 = vst [vmem:[#allocation4 + $0xf0] sm:$0xff] %v3561
        %3570 = vst [vmem:[#allocation4 + $0xf8] sm:$0xff] %v3562
        %v3571 = vld [vmem:[%s5] sm:$0x3]
        %v3572 = vld [vmem:[#allocation4] sm:$0xff]
        %v3573 = vld [vmem:[#allocation4 + $0x8] sm:$0xff]
        %v3574 = vld [vmem:[#allocation4 + $0x10] sm:$0xff]
        %v3575 = vld [vmem:[#allocation4 + $0x18] sm:$0xff]
        %v3576 = vld [vmem:[#allocation4 + $0x20] sm:$0xff]
        %v3577 = vld [vmem:[#allocation4 + $0x28] sm:$0xff]
        %v3578 = vld [vmem:[#allocation4 + $0x30] sm:$0xff]
        %v3579 = vld [vmem:[#allocation4 + $0x38] sm:$0xff]
        %v3580 = vld [vmem:[#allocation4 + $0x40] sm:$0xff]
        %v3581 = vld [vmem:[#allocation4 + $0x48] sm:$0xff]
        %v3582 = vld [vmem:[#allocation4 + $0x50] sm:$0xff]
        %v3583 = vld [vmem:[#allocation4 + $0x58] sm:$0xff]
        %v3584 = vld [vmem:[#allocation4 + $0x60] sm:$0xff]
        %v3585 = vld [vmem:[#allocation4 + $0x68] sm:$0xff]
        %v3586 = vld [vmem:[#allocation4 + $0x70] sm:$0xff]
        %v3587 = vld [vmem:[#allocation4 + $0x78] sm:$0xff]
        %v3588 = vld [vmem:[#allocation4 + $0x80] sm:$0xff]
        %v3589 = vld [vmem:[#allocation4 + $0x88] sm:$0xff]
        %v3590 = vld [vmem:[#allocation4 + $0x90] sm:$0xff]
        %v3591 = vld [vmem:[#allocation4 + $0x98] sm:$0xff]
        %v3592 = vld [vmem:[#allocation4 + $0xa0] sm:$0xff]
        %v3593 = vld [vmem:[#allocation4 + $0xa8] sm:$0xff]
        %v3594 = vld [vmem:[#allocation4 + $0xb0] sm:$0xff]
        %v3595 = vld [vmem:[#allocation4 + $0xb8] sm:$0xff]
        %v3596 = vld [vmem:[#allocation4 + $0xc0] sm:$0xff]
        %v3597 = vld [vmem:[#allocation4 + $0xc8] sm:$0xff]
        %v3598 = vld [vmem:[#allocation4 + $0xd0] sm:$0xff]
        %v3599 = vld [vmem:[#allocation4 + $0xd8] sm:$0xff]
        %v3600 = vld [vmem:[#allocation4 + $0xe0] sm:$0xff]
        %v3601 = vld [vmem:[#allocation4 + $0xe8] sm:$0xff]
        %v3602 = vld [vmem:[#allocation4 + $0xf0] sm:$0xff]
        %v3603 = vld [vmem:[#allocation4 + $0xf8] sm:$0xff]
        %v3604 = vld [vmem:[#allocation2 + $0x8] sm:$0xff]
        %v3605 = vld [vmem:[#allocation2 + $0x10] sm:$0xff]
        %v3606 = vld [vmem:[#allocation2 + $0x18] sm:$0xff]
        %v3607 = vld [vmem:[#allocation2 + $0x38] sm:$0xff]
        %v3608 = vld [vmem:[#allocation2 + $0x40] sm:$0xff]
        %v3609 = vld [vmem:[#allocation2 + $0x48] sm:$0xff]
        %3616 = vrot.lane.b32.xlu0 %v3604, 115
        %v3617 = vpop.permute.xlu0 %3616
        %3618 = vrot.lane.b32.xlu0 %v3605, 115
        %v3619 = vpop.permute.xlu0 %3618
        %3620 = vrot.lane.b32.xlu0 %v3606, 115
        %v3621 = vpop.permute.xlu0 %3620
        %3622 = vrot.lane.b32.xlu0 %v3607, 115
        %v3623 = vpop.permute.xlu0 %3622
        %3624 = vrot.lane.b32.xlu0 %v3608, 115
        %v3625 = vpop.permute.xlu0 %3624
        %3626 = vrot.lane.b32.xlu0 %v3609, 115
        %v3627 = vpop.permute.xlu0 %3626
        %v3628 = vsel %vm477, %v3617, %v3619
        %v3629 = vsel %vm477, %v3619, %v3621
        %v3630 = vsel %vm477, %v3623, %v3625
        %v3631 = vsel %vm477, %v3625, %v3627
        %3636 = vst [vmem:[#allocation4] sm:$0xff] %v3628
        %3637 = vst [vmem:[#allocation4 + $0x8] sm:$0xff] %v3629
        %3638 = vst [vmem:[#allocation4 + $0x10] sm:$0xff] %v3630
        %3639 = vst [vmem:[#allocation4 + $0x18] sm:$0xff] %v3631
        %v3640 = vld [vmem:[#allocation2 + $0x8] sm:$0xff]
        %v3641 = vld [vmem:[#allocation2 + $0x10] sm:$0xff]
        %v3642 = vld [vmem:[#allocation2 + $0x38] sm:$0xff]
        %v3643 = vld [vmem:[#allocation2 + $0x40] sm:$0xff]
        %3644 = vst [vmem:[#allocation4 + $0x20] sm:$0xff] %v3640
        %3645 = vst [vmem:[#allocation4 + $0x28] sm:$0xff] %v3641
        %3646 = vst [vmem:[#allocation4 + $0x30] sm:$0xff] %v3642
        %3647 = vst [vmem:[#allocation4 + $0x38] sm:$0xff] %v3643
        %v3648 = vld [vmem:[#allocation2] sm:$0xff]
        %v3649 = vld [vmem:[#allocation2 + $0x8] sm:$0xff]
        %v3650 = vld [vmem:[#allocation2 + $0x10] sm:$0xff]
        %v3651 = vld [vmem:[#allocation2 + $0x30] sm:$0xff]
        %v3652 = vld [vmem:[#allocation2 + $0x38] sm:$0xff]
        %v3653 = vld [vmem:[#allocation2 + $0x40] sm:$0xff]
        %3660 = vrot.lane.b32.xlu0 %v3648, 1
        %v3661 = vpop.permute.xlu0 %3660
        %3662 = vrot.lane.b32.xlu0 %v3649, 1
        %v3663 = vpop.permute.xlu0 %3662
        %3664 = vrot.lane.b32.xlu0 %v3650, 1
        %v3665 = vpop.permute.xlu0 %3664
        %3666 = vrot.lane.b32.xlu0 %v3651, 1
        %v3667 = vpop.permute.xlu0 %3666
        %3668 = vrot.lane.b32.xlu0 %v3652, 1
        %v3669 = vpop.permute.xlu0 %3668
        %3670 = vrot.lane.b32.xlu0 %v3653, 1
        %v3671 = vpop.permute.xlu0 %3670
        %v3672 = vsel %vm500, %v3661, %v3663
        %v3673 = vsel %vm500, %v3663, %v3665
        %v3674 = vsel %vm500, %v3667, %v3669
        %v3675 = vsel %vm500, %v3669, %v3671
        %3680 = vst [vmem:[#allocation4 + $0x40] sm:$0xff] %v3672
        %3681 = vst [vmem:[#allocation4 + $0x48] sm:$0xff] %v3673
        %3682 = vst [vmem:[#allocation4 + $0x50] sm:$0xff] %v3674
        %3683 = vst [vmem:[#allocation4 + $0x58] sm:$0xff] %v3675
        %v3684 = vld [vmem:[#allocation2] sm:$0xff]
        %v3685 = vld [vmem:[#allocation2 + $0x8] sm:$0xff]
        %v3686 = vld [vmem:[#allocation2 + $0x10] sm:$0xff]
        %v3687 = vld [vmem:[#allocation2 + $0x30] sm:$0xff]
        %v3688 = vld [vmem:[#allocation2 + $0x38] sm:$0xff]
        %v3689 = vld [vmem:[#allocation2 + $0x40] sm:$0xff]
        %3696 = vrot.lane.b32.xlu0 %v3684, 3
        %v3697 = vpop.permute.xlu0 %3696
        %3698 = vrot.lane.b32.xlu0 %v3685, 3
        %v3699 = vpop.permute.xlu0 %3698
        %3700 = vrot.lane.b32.xlu0 %v3686, 3
        %v3701 = vpop.permute.xlu0 %3700
        %3702 = vrot.lane.b32.xlu0 %v3687, 3
        %v3703 = vpop.permute.xlu0 %3702
        %3704 = vrot.lane.b32.xlu0 %v3688, 3
        %v3705 = vpop.permute.xlu0 %3704
        %3706 = vrot.lane.b32.xlu0 %v3689, 3
        %v3707 = vpop.permute.xlu0 %3706
        %v3708 = vsel %vm519, %v3697, %v3699
        %v3709 = vsel %vm519, %v3699, %v3701
        %v3710 = vsel %vm519, %v3703, %v3705
        %v3711 = vsel %vm519, %v3705, %v3707
        %3716 = vst [vmem:[#allocation4 + $0x60] sm:$0xff] %v3708
        %3717 = vst [vmem:[#allocation4 + $0x68] sm:$0xff] %v3709
        %3718 = vst [vmem:[#allocation4 + $0x70] sm:$0xff] %v3710
        %3719 = vst [vmem:[#allocation4 + $0x78] sm:$0xff] %v3711
        %v3720 = vld [vmem:[#allocation2] sm:$0xff]
        %v3721 = vld [vmem:[#allocation2 + $0x8] sm:$0xff]
        %v3722 = vld [vmem:[#allocation2 + $0x10] sm:$0xff]
        %v3723 = vld [vmem:[#allocation2 + $0x30] sm:$0xff]
        %v3724 = vld [vmem:[#allocation2 + $0x38] sm:$0xff]
        %v3725 = vld [vmem:[#allocation2 + $0x40] sm:$0xff]
        %3732 = vrot.lane.b32.xlu0 %v3720, 9
        %v3733 = vpop.permute.xlu0 %3732
        %3734 = vrot.lane.b32.xlu0 %v3721, 9
        %v3735 = vpop.permute.xlu0 %3734
        %3736 = vrot.lane.b32.xlu0 %v3722, 9
        %v3737 = vpop.permute.xlu0 %3736
        %3738 = vrot.lane.b32.xlu0 %v3723, 9
        %v3739 = vpop.permute.xlu0 %3738
        %3740 = vrot.lane.b32.xlu0 %v3724, 9
        %v3741 = vpop.permute.xlu0 %3740
        %3742 = vrot.lane.b32.xlu0 %v3725, 9
        %v3743 = vpop.permute.xlu0 %3742
        %v3744 = vsel %vm538, %v3733, %v3735
        %v3745 = vsel %vm538, %v3735, %v3737
        %v3746 = vsel %vm538, %v3739, %v3741
        %v3747 = vsel %vm538, %v3741, %v3743
        %3752 = vst [vmem:[#allocation4 + $0x80] sm:$0xff] %v3744
        %3753 = vst [vmem:[#allocation4 + $0x88] sm:$0xff] %v3745
        %3754 = vst [vmem:[#allocation4 + $0x90] sm:$0xff] %v3746
        %3755 = vst [vmem:[#allocation4 + $0x98] sm:$0xff] %v3747
        %v3756 = vld [vmem:[#allocation2] sm:$0xff]
        %v3757 = vld [vmem:[#allocation2 + $0x8] sm:$0xff]
        %v3758 = vld [vmem:[#allocation2 + $0x10] sm:$0xff]
        %v3759 = vld [vmem:[#allocation2 + $0x30] sm:$0xff]
        %v3760 = vld [vmem:[#allocation2 + $0x38] sm:$0xff]
        %v3761 = vld [vmem:[#allocation2 + $0x40] sm:$0xff]
        %3768 = vrot.lane.b32.xlu0 %v3756, 19
        %v3769 = vpop.permute.xlu0 %3768
        %3770 = vrot.lane.b32.xlu0 %v3757, 19
        %v3771 = vpop.permute.xlu0 %3770
        %3772 = vrot.lane.b32.xlu0 %v3758, 19
        %v3773 = vpop.permute.xlu0 %3772
        %3774 = vrot.lane.b32.xlu0 %v3759, 19
        %v3775 = vpop.permute.xlu0 %3774
        %3776 = vrot.lane.b32.xlu0 %v3760, 19
        %v3777 = vpop.permute.xlu0 %3776
        %3778 = vrot.lane.b32.xlu0 %v3761, 19
        %v3779 = vpop.permute.xlu0 %3778
        %v3780 = vsel %vm557, %v3769, %v3771
        %v3781 = vsel %vm557, %v3771, %v3773
        %v3782 = vsel %vm557, %v3775, %v3777
        %v3783 = vsel %vm557, %v3777, %v3779
        %3788 = vst [vmem:[#allocation4 + $0xa0] sm:$0xff] %v3780
        %3789 = vst [vmem:[#allocation4 + $0xa8] sm:$0xff] %v3781
        %3790 = vst [vmem:[#allocation4 + $0xb0] sm:$0xff] %v3782
        %3791 = vst [vmem:[#allocation4 + $0xb8] sm:$0xff] %v3783
        %v3792 = vld [vmem:[#allocation2] sm:$0xff]
        %v3793 = vld [vmem:[#allocation2 + $0x8] sm:$0xff]
        %v3794 = vld [vmem:[#allocation2 + $0x10] sm:$0xff]
        %v3795 = vld [vmem:[#allocation2 + $0x30] sm:$0xff]
        %v3796 = vld [vmem:[#allocation2 + $0x38] sm:$0xff]
        %v3797 = vld [vmem:[#allocation2 + $0x40] sm:$0xff]
        %3804 = vrot.lane.b32.xlu0 %v3792, 28
        %v3805 = vpop.permute.xlu0 %3804
        %3806 = vrot.lane.b32.xlu0 %v3793, 28
        %v3807 = vpop.permute.xlu0 %3806
        %3808 = vrot.lane.b32.xlu0 %v3794, 28
        %v3809 = vpop.permute.xlu0 %3808
        %3810 = vrot.lane.b32.xlu0 %v3795, 28
        %v3811 = vpop.permute.xlu0 %3810
        %3812 = vrot.lane.b32.xlu0 %v3796, 28
        %v3813 = vpop.permute.xlu0 %3812
        %3814 = vrot.lane.b32.xlu0 %v3797, 28
        %v3815 = vpop.permute.xlu0 %3814
        %v3816 = vsel %vm576, %v3805, %v3807
        %v3817 = vsel %vm576, %v3807, %v3809
        %v3818 = vsel %vm576, %v3811, %v3813
        %v3819 = vsel %vm576, %v3813, %v3815
        %3824 = vst [vmem:[#allocation4 + $0xc0] sm:$0xff] %v3816
        %3825 = vst [vmem:[#allocation4 + $0xc8] sm:$0xff] %v3817
        %3826 = vst [vmem:[#allocation4 + $0xd0] sm:$0xff] %v3818
        %3827 = vst [vmem:[#allocation4 + $0xd8] sm:$0xff] %v3819
        %v3828 = vld [vmem:[#allocation2] sm:$0xff]
        %v3829 = vld [vmem:[#allocation2 + $0x8] sm:$0xff]
        %v3830 = vld [vmem:[#allocation2 + $0x10] sm:$0xff]
        %v3831 = vld [vmem:[#allocation2 + $0x30] sm:$0xff]
        %v3832 = vld [vmem:[#allocation2 + $0x38] sm:$0xff]
        %v3833 = vld [vmem:[#allocation2 + $0x40] sm:$0xff]
        %3840 = vrot.lane.b32.xlu0 %v3828, 32
        %v3841 = vpop.permute.xlu0 %3840
        %3842 = vrot.lane.b32.xlu0 %v3829, 32
        %v3843 = vpop.permute.xlu0 %3842
        %3844 = vrot.lane.b32.xlu0 %v3830, 32
        %v3845 = vpop.permute.xlu0 %3844
        %3846 = vrot.lane.b32.xlu0 %v3831, 32
        %v3847 = vpop.permute.xlu0 %3846
        %3848 = vrot.lane.b32.xlu0 %v3832, 32
        %v3849 = vpop.permute.xlu0 %3848
        %3850 = vrot.lane.b32.xlu0 %v3833, 32
        %v3851 = vpop.permute.xlu0 %3850
        %v3852 = vsel %vm595, %v3841, %v3843
        %v3853 = vsel %vm595, %v3843, %v3845
        %v3854 = vsel %vm595, %v3847, %v3849
        %v3855 = vsel %vm595, %v3849, %v3851
        %3860 = vst [vmem:[#allocation4 + $0xe0] sm:$0xff] %v3852
        %3861 = vst [vmem:[#allocation4 + $0xe8] sm:$0xff] %v3853
        %3862 = vst [vmem:[#allocation4 + $0xf0] sm:$0xff] %v3854
        %3863 = vst [vmem:[#allocation4 + $0xf8] sm:$0xff] %v3855
        %v3864 = vld [vmem:[%s5 + $0x2] sm:$0x3]
        %v3865 = vld [vmem:[#allocation4] sm:$0xff]
        %v3866 = vld [vmem:[#allocation4 + $0x8] sm:$0xff]
        %v3867 = vld [vmem:[#allocation4 + $0x10] sm:$0xff]
        %v3868 = vld [vmem:[#allocation4 + $0x18] sm:$0xff]
        %v3869 = vld [vmem:[#allocation4 + $0x20] sm:$0xff]
        %v3870 = vld [vmem:[#allocation4 + $0x28] sm:$0xff]
        %v3871 = vld [vmem:[#allocation4 + $0x30] sm:$0xff]
        %v3872 = vld [vmem:[#allocation4 + $0x38] sm:$0xff]
        %v3873 = vld [vmem:[#allocation4 + $0x40] sm:$0xff]
        %v3874 = vld [vmem:[#allocation4 + $0x48] sm:$0xff]
        %v3875 = vld [vmem:[#allocation4 + $0x50] sm:$0xff]
        %v3876 = vld [vmem:[#allocation4 + $0x58] sm:$0xff]
        %v3877 = vld [vmem:[#allocation4 + $0x60] sm:$0xff]
        %v3878 = vld [vmem:[#allocation4 + $0x68] sm:$0xff]
        %v3879 = vld [vmem:[#allocation4 + $0x70] sm:$0xff]
        %v3880 = vld [vmem:[#allocation4 + $0x78] sm:$0xff]
        %v3881 = vld [vmem:[#allocation4 + $0x80] sm:$0xff]
        %v3882 = vld [vmem:[#allocation4 + $0x88] sm:$0xff]
        %v3883 = vld [vmem:[#allocation4 + $0x90] sm:$0xff]
        %v3884 = vld [vmem:[#allocation4 + $0x98] sm:$0xff]
        %v3885 = vld [vmem:[#allocation4 + $0xa0] sm:$0xff]
        %v3886 = vld [vmem:[#allocation4 + $0xa8] sm:$0xff]
        %v3887 = vld [vmem:[#allocation4 + $0xb0] sm:$0xff]
        %v3888 = vld [vmem:[#allocation4 + $0xb8] sm:$0xff]
        %v3889 = vld [vmem:[#allocation4 + $0xc0] sm:$0xff]
        %v3890 = vld [vmem:[#allocation4 + $0xc8] sm:$0xff]
        %v3891 = vld [vmem:[#allocation4 + $0xd0] sm:$0xff]
        %v3892 = vld [vmem:[#allocation4 + $0xd8] sm:$0xff]
        %v3893 = vld [vmem:[#allocation4 + $0xe0] sm:$0xff]
        %v3894 = vld [vmem:[#allocation4 + $0xe8] sm:$0xff]
        %v3895 = vld [vmem:[#allocation4 + $0xf0] sm:$0xff]
        %v3896 = vld [vmem:[#allocation4 + $0xf8] sm:$0xff]
        %v3899 = vunpack.c.l.s4 1966171168
        %v3900 = vunpack.c.0.s8 %v3899
        %v3901 = vlaneseq
        %v3902 = vshrl.u32 %v3901, 7
        %v3903 = vsub.s32 %v3900, %v3902
        %v3904 = vrot.slane %v3864, %v3903
        %v3905 = vcombine.high %v3904, %v3904
        %v3907 = vunpack.c.l.s4 1966171168
        %v3908 = vunpack.c.0.s8 %v3907
        %v3909 = vlaneseq
        %v3910 = vshrl.u32 %v3909, 7
        %v3911 = vsub.s32 %v3908, %v3910
        %v3912 = vrot.slane %v3904, %v3911
        %v3914 = vunpack.c.l.s4 1966171168
        %v3915 = vunpack.c.0.s8 %v3914
        %v3916 = vlaneseq
        %v3917 = vshrl.u32 %v3916, 7
        %v3918 = vsub.s32 %v3915, %v3917
        %v3919 = vrot.slane %v3905, %v3918
        %3922 = vmatprep.subr.bf16.mxu0 %v3866
        %3923 = vmatpush1.bf16.msra.mxu0 %v3865
        %3924 = vmatprep.subr.bf16.mxu0 %v3868
        %3925 = vmatpush1.bf16.msra.mxu0 %v3867
        %3926 = vmatprep.subr.bf16.mxu0 %v3870
        %3927 = vmatpush1.bf16.msra.mxu0 %v3869
        %3928 = vmatprep.subr.bf16.mxu0 %v3872
        %3929 = vmatpush1.bf16.msra.mxu0 %v3871
        %3930 = vmatprep.subr.bf16.mxu0 %v3874
        %3931 = vmatpush1.bf16.msra.mxu0 %v3873
        %3932 = vmatprep.subr.bf16.mxu0 %v3876
        %3933 = vmatpush1.bf16.msra.mxu0 %v3875
        %3934 = vmatprep.subr.bf16.mxu0 %v3878
        %3935 = vmatpush1.bf16.msra.mxu0 %v3877
        %3936 = vmatprep.subr.bf16.mxu0 %v3880
        %3937 = vmatpush1.bf16.msra.mxu0 %v3879
        %3938 = vmatprep.subr.bf16.mxu0 %v3882
        %3939 = vmatpush1.bf16.msra.mxu0 %v3881
        %3940 = vmatprep.subr.bf16.mxu0 %v3884
        %3941 = vmatpush1.bf16.msra.mxu0 %v3883
        %3942 = vmatprep.subr.bf16.mxu0 %v3886
        %3943 = vmatpush1.bf16.msra.mxu0 %v3885
        %3944 = vmatprep.subr.bf16.mxu0 %v3888
        %3945 = vmatpush1.bf16.msra.mxu0 %v3887
        %3946 = vmatprep.subr.bf16.mxu0 %v3890
        %3947 = vmatpush1.bf16.msra.mxu0 %v3889
        %3948 = vmatprep.subr.bf16.mxu0 %v3892
        %3949 = vmatpush1.bf16.msra.mxu0 %v3891
        %3950 = vmatprep.subr.bf16.mxu0 %v3894
        %3951 = vmatpush1.bf16.msra.mxu0 %v3893
        %3952 = vmatprep.subr.bf16.mxu0 %v3896
        %3953 = vmatpush1.bf16.msra.mxu0 %v3895
        %3954 = vmatprep.mubr.bf16.mxu0 %v3919
        %3955 = vmatmul.mubr.bf16.gmra.mrb[0].mxu0 %v3912
        %v3956 = vpop.f32.mrb[0].mxu0
        %v3957 = vadd.f32 0.0, %v3956
        %v3958 = vpop.f32.mrb[0].mxu0
        %v3959 = vadd.f32 0.0, %v3958
        %v3960 = vpop.f32.mrb[0].mxu0
        %v3961 = vpop.f32.mrb[0].mxu0
        %3962 = vdwg.mxu0
        %v3965 = vunpack.c.l.s4 1966171168
        %v3966 = vunpack.c.0.s8 %v3965
        %v3967 = vlaneseq
        %v3968 = vshrl.u32 %v3967, 7
        %v3969 = vsub.s32 %v3966, %v3968
        %v3970 = vrot.slane %v3571, %v3969
        %v3971 = vcombine.high %v3970, %v3970
        %v3973 = vunpack.c.l.s4 1966171168
        %v3974 = vunpack.c.0.s8 %v3973
        %v3975 = vlaneseq
        %v3976 = vshrl.u32 %v3975, 7
        %v3977 = vsub.s32 %v3974, %v3976
        %v3978 = vrot.slane %v3970, %v3977
        %v3980 = vunpack.c.l.s4 1966171168
        %v3981 = vunpack.c.0.s8 %v3980
        %v3982 = vlaneseq
        %v3983 = vshrl.u32 %v3982, 7
        %v3984 = vsub.s32 %v3981, %v3983
        %v3985 = vrot.slane %v3971, %v3984
        %3988 = vmatprep.subr.bf16.mxu0 %v3573
        %3989 = vmatpush1.bf16.msra.mxu0 %v3572
        %3990 = vmatprep.subr.bf16.mxu0 %v3575
        %3991 = vmatpush1.bf16.msra.mxu0 %v3574
        %3992 = vmatprep.subr.bf16.mxu0 %v3577
        %3993 = vmatpush1.bf16.msra.mxu0 %v3576
        %3994 = vmatprep.subr.bf16.mxu0 %v3579
        %3995 = vmatpush1.bf16.msra.mxu0 %v3578
        %3996 = vmatprep.subr.bf16.mxu0 %v3581
        %3997 = vmatpush1.bf16.msra.mxu0 %v3580
        %3998 = vmatprep.subr.bf16.mxu0 %v3583
        %3999 = vmatpush1.bf16.msra.mxu0 %v3582
        %4000 = vmatprep.subr.bf16.mxu0 %v3585
        %4001 = vmatpush1.bf16.msra.mxu0 %v3584
        %4002 = vmatprep.subr.bf16.mxu0 %v3587
        %4003 = vmatpush1.bf16.msra.mxu0 %v3586
        %4004 = vmatprep.subr.bf16.mxu0 %v3589
        %4005 = vmatpush1.bf16.msra.mxu0 %v3588
        %4006 = vmatprep.subr.bf16.mxu0 %v3591
        %4007 = vmatpush1.bf16.msra.mxu0 %v3590
        %4008 = vmatprep.subr.bf16.mxu0 %v3593
        %4009 = vmatpush1.bf16.msra.mxu0 %v3592
        %4010 = vmatprep.subr.bf16.mxu0 %v3595
        %4011 = vmatpush1.bf16.msra.mxu0 %v3594
        %4012 = vmatprep.subr.bf16.mxu0 %v3597
        %4013 = vmatpush1.bf16.msra.mxu0 %v3596
        %4014 = vmatprep.subr.bf16.mxu0 %v3599
        %4015 = vmatpush1.bf16.msra.mxu0 %v3598
        %4016 = vmatprep.subr.bf16.mxu0 %v3601
        %4017 = vmatpush1.bf16.msra.mxu0 %v3600
        %4018 = vmatprep.subr.bf16.mxu0 %v3603
        %4019 = vmatpush1.bf16.msra.mxu0 %v3602
        %4020 = vmatprep.mubr.bf16.mxu0 %v3985
        %4021 = vmatmul.mubr.bf16.gmra.mrb[0].mxu0 %v3978
        %v4022 = vpop.f32.mrb[0].mxu0
        %v4023 = vadd.f32 %v3957, %v4022
        %v4024 = vpop.f32.mrb[0].mxu0
        %v4025 = vadd.f32 %v3959, %v4024
        %v4026 = vpop.f32.mrb[0].mxu0
        %v4027 = vpop.f32.mrb[0].mxu0
        %4028 = vdwg.mxu0
        %v4029 = vld [vmem:[#allocation2] sm:$0xff]
        %v4030 = vld [vmem:[#allocation2 + $0x8] sm:$0xff]
        %v4031 = vld [vmem:[#allocation2 + $0x10] sm:$0xff]
        %v4032 = vld [vmem:[#allocation2 + $0x30] sm:$0xff]
        %v4033 = vld [vmem:[#allocation2 + $0x38] sm:$0xff]
        %v4034 = vld [vmem:[#allocation2 + $0x40] sm:$0xff]
        %4041 = vrot.lane.b32.xlu0 %v4029, 35
        %v4042 = vpop.permute.xlu0 %4041
        %4043 = vrot.lane.b32.xlu0 %v4030, 35
        %v4044 = vpop.permute.xlu0 %4043
        %4045 = vrot.lane.b32.xlu0 %v4031, 35
        %v4046 = vpop.permute.xlu0 %4045
        %4047 = vrot.lane.b32.xlu0 %v4032, 35
        %v4048 = vpop.permute.xlu0 %4047
        %4049 = vrot.lane.b32.xlu0 %v4033, 35
        %v4050 = vpop.permute.xlu0 %4049
        %4051 = vrot.lane.b32.xlu0 %v4034, 35
        %v4052 = vpop.permute.xlu0 %4051
        %v4053 = vsel %vm650, %v4042, %v4044
        %v4054 = vsel %vm650, %v4044, %v4046
        %v4055 = vsel %vm650, %v4048, %v4050
        %v4056 = vsel %vm650, %v4050, %v4052
        %4061 = vst [vmem:[#allocation4] sm:$0xff] %v4053
        %4062 = vst [vmem:[#allocation4 + $0x8] sm:$0xff] %v4054
        %4063 = vst [vmem:[#allocation4 + $0x10] sm:$0xff] %v4055
        %4064 = vst [vmem:[#allocation4 + $0x18] sm:$0xff] %v4056
        %v4065 = vld [vmem:[#allocation2] sm:$0xff]
        %v4066 = vld [vmem:[#allocation2 + $0x8] sm:$0xff]
        %v4067 = vld [vmem:[#allocation2 + $0x10] sm:$0xff]
        %v4068 = vld [vmem:[#allocation2 + $0x30] sm:$0xff]
        %v4069 = vld [vmem:[#allocation2 + $0x38] sm:$0xff]
        %v4070 = vld [vmem:[#allocation2 + $0x40] sm:$0xff]
        %4077 = vrot.lane.b32.xlu0 %v4065, 58
        %v4078 = vpop.permute.xlu0 %4077
        %4079 = vrot.lane.b32.xlu0 %v4066, 58
        %v4080 = vpop.permute.xlu0 %4079
        %4081 = vrot.lane.b32.xlu0 %v4067, 58
        %v4082 = vpop.permute.xlu0 %4081
        %4083 = vrot.lane.b32.xlu0 %v4068, 58
        %v4084 = vpop.permute.xlu0 %4083
        %4085 = vrot.lane.b32.xlu0 %v4069, 58
        %v4086 = vpop.permute.xlu0 %4085
        %4087 = vrot.lane.b32.xlu0 %v4070, 58
        %v4088 = vpop.permute.xlu0 %4087
        %v4089 = vsel %vm669, %v4078, %v4080
        %v4090 = vsel %vm669, %v4080, %v4082
        %v4091 = vsel %vm669, %v4084, %v4086
        %v4092 = vsel %vm669, %v4086, %v4088
        %4097 = vst [vmem:[#allocation4 + $0x20] sm:$0xff] %v4089
        %4098 = vst [vmem:[#allocation4 + $0x28] sm:$0xff] %v4090
        %4099 = vst [vmem:[#allocation4 + $0x30] sm:$0xff] %v4091
        %4100 = vst [vmem:[#allocation4 + $0x38] sm:$0xff] %v4092
        %v4101 = vld [vmem:[#allocation2 + $0x10] sm:$0xff]
        %v4102 = vld [vmem:[#allocation2 + $0x18] sm:$0xff]
        %v4103 = vld [vmem:[#allocation2 + $0x40] sm:$0xff]
        %v4104 = vld [vmem:[#allocation2 + $0x48] sm:$0xff]
        %4105 = vst [vmem:[#allocation4 + $0x40] sm:$0xff] %v4101
        %4106 = vst [vmem:[#allocation4 + $0x48] sm:$0xff] %v4102
        %4107 = vst [vmem:[#allocation4 + $0x50] sm:$0xff] %v4103
        %4108 = vst [vmem:[#allocation4 + $0x58] sm:$0xff] %v4104
        %v4109 = vld [vmem:[#allocation2 + $0x10] sm:$0xff]
        %v4110 = vld [vmem:[#allocation2 + $0x18] sm:$0xff]
        %v4111 = vld [vmem:[#allocation2 + $0x20] sm:$0xff]
        %v4112 = vld [vmem:[#allocation2 + $0x40] sm:$0xff]
        %v4113 = vld [vmem:[#allocation2 + $0x48] sm:$0xff]
        %v4114 = vld [vmem:[#allocation2 + $0x50] sm:$0xff]
        %4121 = vrot.lane.b32.xlu0 %v4109, 71
        %v4122 = vpop.permute.xlu0 %4121
        %4123 = vrot.lane.b32.xlu0 %v4110, 71
        %v4124 = vpop.permute.xlu0 %4123
        %4125 = vrot.lane.b32.xlu0 %v4111, 71
        %v4126 = vpop.permute.xlu0 %4125
        %4127 = vrot.lane.b32.xlu0 %v4112, 71
        %v4128 = vpop.permute.xlu0 %4127
        %4129 = vrot.lane.b32.xlu0 %v4113, 71
        %v4130 = vpop.permute.xlu0 %4129
        %4131 = vrot.lane.b32.xlu0 %v4114, 71
        %v4132 = vpop.permute.xlu0 %4131
        %v4133 = vsel %vm344, %v4122, %v4124
        %v4134 = vsel %vm344, %v4124, %v4126
        %v4135 = vsel %vm344, %v4128, %v4130
        %v4136 = vsel %vm344, %v4130, %v4132
        %4141 = vst [vmem:[#allocation4 + $0x60] sm:$0xff] %v4133
        %4142 = vst [vmem:[#allocation4 + $0x68] sm:$0xff] %v4134
        %4143 = vst [vmem:[#allocation4 + $0x70] sm:$0xff] %v4135
        %4144 = vst [vmem:[#allocation4 + $0x78] sm:$0xff] %v4136
        %v4145 = vld [vmem:[#allocation2 + $0x10] sm:$0xff]
        %v4146 = vld [vmem:[#allocation2 + $0x18] sm:$0xff]
        %v4147 = vld [vmem:[#allocation2 + $0x20] sm:$0xff]
        %v4148 = vld [vmem:[#allocation2 + $0x40] sm:$0xff]
        %v4149 = vld [vmem:[#allocation2 + $0x48] sm:$0xff]
        %v4150 = vld [vmem:[#allocation2 + $0x50] sm:$0xff]
        %4157 = vrot.lane.b32.xlu0 %v4145, 57
        %v4158 = vpop.permute.xlu0 %4157
        %4159 = vrot.lane.b32.xlu0 %v4146, 57
        %v4160 = vpop.permute.xlu0 %4159
        %4161 = vrot.lane.b32.xlu0 %v4147, 57
        %v4162 = vpop.permute.xlu0 %4161
        %4163 = vrot.lane.b32.xlu0 %v4148, 57
        %v4164 = vpop.permute.xlu0 %4163
        %4165 = vrot.lane.b32.xlu0 %v4149, 57
        %v4166 = vpop.permute.xlu0 %4165
        %4167 = vrot.lane.b32.xlu0 %v4150, 57
        %v4168 = vpop.permute.xlu0 %4167
        %v4169 = vsel %vm325, %v4158, %v4160
        %v4170 = vsel %vm325, %v4160, %v4162
        %v4171 = vsel %vm325, %v4164, %v4166
        %v4172 = vsel %vm325, %v4166, %v4168
        %4177 = vst [vmem:[#allocation4 + $0x80] sm:$0xff] %v4169
        %4178 = vst [vmem:[#allocation4 + $0x88] sm:$0xff] %v4170
        %4179 = vst [vmem:[#allocation4 + $0x90] sm:$0xff] %v4171
        %4180 = vst [vmem:[#allocation4 + $0x98] sm:$0xff] %v4172
        %v4181 = vld [vmem:[#allocation2 + $0x10] sm:$0xff]
        %v4182 = vld [vmem:[#allocation2 + $0x18] sm:$0xff]
        %v4183 = vld [vmem:[#allocation2 + $0x20] sm:$0xff]
        %v4184 = vld [vmem:[#allocation2 + $0x40] sm:$0xff]
        %v4185 = vld [vmem:[#allocation2 + $0x48] sm:$0xff]
        %v4186 = vld [vmem:[#allocation2 + $0x50] sm:$0xff]
        %4193 = vrot.lane.b32.xlu0 %v4181, 41
        %v4194 = vpop.permute.xlu0 %4193
        %4195 = vrot.lane.b32.xlu0 %v4182, 41
        %v4196 = vpop.permute.xlu0 %4195
        %4197 = vrot.lane.b32.xlu0 %v4183, 41
        %v4198 = vpop.permute.xlu0 %4197
        %4199 = vrot.lane.b32.xlu0 %v4184, 41
        %v4200 = vpop.permute.xlu0 %4199
        %4201 = vrot.lane.b32.xlu0 %v4185, 41
        %v4202 = vpop.permute.xlu0 %4201
        %4203 = vrot.lane.b32.xlu0 %v4186, 41
        %v4204 = vpop.permute.xlu0 %4203
        %v4205 = vsel %vm728, %v4194, %v4196
        %v4206 = vsel %vm728, %v4196, %v4198
        %v4207 = vsel %vm728, %v4200, %v4202
        %v4208 = vsel %vm728, %v4202, %v4204
        %4213 = vst [vmem:[#allocation4 + $0xa0] sm:$0xff] %v4205
        %4214 = vst [vmem:[#allocation4 + $0xa8] sm:$0xff] %v4206
        %4215 = vst [vmem:[#allocation4 + $0xb0] sm:$0xff] %v4207
        %4216 = vst [vmem:[#allocation4 + $0xb8] sm:$0xff] %v4208
        %v4217 = vld [vmem:[#allocation2 + $0x10] sm:$0xff]
        %v4218 = vld [vmem:[#allocation2 + $0x18] sm:$0xff]
        %v4219 = vld [vmem:[#allocation2 + $0x20] sm:$0xff]
        %v4220 = vld [vmem:[#allocation2 + $0x40] sm:$0xff]
        %v4221 = vld [vmem:[#allocation2 + $0x48] sm:$0xff]
        %v4222 = vld [vmem:[#allocation2 + $0x50] sm:$0xff]
        %4229 = vrot.lane.b32.xlu0 %v4217, 31
        %v4230 = vpop.permute.xlu0 %4229
        %4231 = vrot.lane.b32.xlu0 %v4218, 31
        %v4232 = vpop.permute.xlu0 %4231
        %4233 = vrot.lane.b32.xlu0 %v4219, 31
        %v4234 = vpop.permute.xlu0 %4233
        %4235 = vrot.lane.b32.xlu0 %v4220, 31
        %v4236 = vpop.permute.xlu0 %4235
        %4237 = vrot.lane.b32.xlu0 %v4221, 31
        %v4238 = vpop.permute.xlu0 %4237
        %4239 = vrot.lane.b32.xlu0 %v4222, 31
        %v4240 = vpop.permute.xlu0 %4239
        %v4241 = vsel %vm747, %v4230, %v4232
        %v4242 = vsel %vm747, %v4232, %v4234
        %v4243 = vsel %vm747, %v4236, %v4238
        %v4244 = vsel %vm747, %v4238, %v4240
        %4249 = vst [vmem:[#allocation4 + $0xc0] sm:$0xff] %v4241
        %4250 = vst [vmem:[#allocation4 + $0xc8] sm:$0xff] %v4242
        %4251 = vst [vmem:[#allocation4 + $0xd0] sm:$0xff] %v4243
        %4252 = vst [vmem:[#allocation4 + $0xd8] sm:$0xff] %v4244
        %v4253 = vld [vmem:[#allocation2 + $0x10] sm:$0xff]
        %v4254 = vld [vmem:[#allocation2 + $0x18] sm:$0xff]
        %v4255 = vld [vmem:[#allocation2 + $0x20] sm:$0xff]
        %v4256 = vld [vmem:[#allocation2 + $0x40] sm:$0xff]
        %v4257 = vld [vmem:[#allocation2 + $0x48] sm:$0xff]
        %v4258 = vld [vmem:[#allocation2 + $0x50] sm:$0xff]
        %4265 = vrot.lane.b32.xlu0 %v4253, 29
        %v4266 = vpop.permute.xlu0 %4265
        %4267 = vrot.lane.b32.xlu0 %v4254, 29
        %v4268 = vpop.permute.xlu0 %4267
        %4269 = vrot.lane.b32.xlu0 %v4255, 29
        %v4270 = vpop.permute.xlu0 %4269
        %4271 = vrot.lane.b32.xlu0 %v4256, 29
        %v4272 = vpop.permute.xlu0 %4271
        %4273 = vrot.lane.b32.xlu0 %v4257, 29
        %v4274 = vpop.permute.xlu0 %4273
        %4275 = vrot.lane.b32.xlu0 %v4258, 29
        %v4276 = vpop.permute.xlu0 %4275
        %v4277 = vsel %vm766, %v4266, %v4268
        %v4278 = vsel %vm766, %v4268, %v4270
        %v4279 = vsel %vm766, %v4272, %v4274
        %v4280 = vsel %vm766, %v4274, %v4276
        %4285 = vst [vmem:[#allocation4 + $0xe0] sm:$0xff] %v4277
        %4286 = vst [vmem:[#allocation4 + $0xe8] sm:$0xff] %v4278
        %4287 = vst [vmem:[#allocation4 + $0xf0] sm:$0xff] %v4279
        %4288 = vst [vmem:[#allocation4 + $0xf8] sm:$0xff] %v4280
        %v4289 = vld [vmem:[%s5 + $0x4] sm:$0x3]
        %v4290 = vld [vmem:[#allocation4] sm:$0xff]
        %v4291 = vld [vmem:[#allocation4 + $0x8] sm:$0xff]
        %v4292 = vld [vmem:[#allocation4 + $0x10] sm:$0xff]
        %v4293 = vld [vmem:[#allocation4 + $0x18] sm:$0xff]
        %v4294 = vld [vmem:[#allocation4 + $0x20] sm:$0xff]
        %v4295 = vld [vmem:[#allocation4 + $0x28] sm:$0xff]
        %v4296 = vld [vmem:[#allocation4 + $0x30] sm:$0xff]
        %v4297 = vld [vmem:[#allocation4 + $0x38] sm:$0xff]
        %v4298 = vld [vmem:[#allocation4 + $0x40] sm:$0xff]
        %v4299 = vld [vmem:[#allocation4 + $0x48] sm:$0xff]
        %v4300 = vld [vmem:[#allocation4 + $0x50] sm:$0xff]
        %v4301 = vld [vmem:[#allocation4 + $0x58] sm:$0xff]
        %v4302 = vld [vmem:[#allocation4 + $0x60] sm:$0xff]
        %v4303 = vld [vmem:[#allocation4 + $0x68] sm:$0xff]
        %v4304 = vld [vmem:[#allocation4 + $0x70] sm:$0xff]
        %v4305 = vld [vmem:[#allocation4 + $0x78] sm:$0xff]
        %v4306 = vld [vmem:[#allocation4 + $0x80] sm:$0xff]
        %v4307 = vld [vmem:[#allocation4 + $0x88] sm:$0xff]
        %v4308 = vld [vmem:[#allocation4 + $0x90] sm:$0xff]
        %v4309 = vld [vmem:[#allocation4 + $0x98] sm:$0xff]
        %v4310 = vld [vmem:[#allocation4 + $0xa0] sm:$0xff]
        %v4311 = vld [vmem:[#allocation4 + $0xa8] sm:$0xff]
        %v4312 = vld [vmem:[#allocation4 + $0xb0] sm:$0xff]
        %v4313 = vld [vmem:[#allocation4 + $0xb8] sm:$0xff]
        %v4314 = vld [vmem:[#allocation4 + $0xc0] sm:$0xff]
        %v4315 = vld [vmem:[#allocation4 + $0xc8] sm:$0xff]
        %v4316 = vld [vmem:[#allocation4 + $0xd0] sm:$0xff]
        %v4317 = vld [vmem:[#allocation4 + $0xd8] sm:$0xff]
        %v4318 = vld [vmem:[#allocation4 + $0xe0] sm:$0xff]
        %v4319 = vld [vmem:[#allocation4 + $0xe8] sm:$0xff]
        %v4320 = vld [vmem:[#allocation4 + $0xf0] sm:$0xff]
        %v4321 = vld [vmem:[#allocation4 + $0xf8] sm:$0xff]
        %v4324 = vunpack.c.l.s4 1966171168
        %v4325 = vunpack.c.0.s8 %v4324
        %v4326 = vlaneseq
        %v4327 = vshrl.u32 %v4326, 7
        %v4328 = vsub.s32 %v4325, %v4327
        %v4329 = vrot.slane %v4289, %v4328
        %v4330 = vcombine.high %v4329, %v4329
        %v4332 = vunpack.c.l.s4 1966171168
        %v4333 = vunpack.c.0.s8 %v4332
        %v4334 = vlaneseq
        %v4335 = vshrl.u32 %v4334, 7
        %v4336 = vsub.s32 %v4333, %v4335
        %v4337 = vrot.slane %v4329, %v4336
        %v4339 = vunpack.c.l.s4 1966171168
        %v4340 = vunpack.c.0.s8 %v4339
        %v4341 = vlaneseq
        %v4342 = vshrl.u32 %v4341, 7
        %v4343 = vsub.s32 %v4340, %v4342
        %v4344 = vrot.slane %v4330, %v4343
        %4347 = vmatprep.subr.bf16.mxu0 %v4291
        %4348 = vmatpush1.bf16.msra.mxu0 %v4290
        %4349 = vmatprep.subr.bf16.mxu0 %v4293
        %4350 = vmatpush1.bf16.msra.mxu0 %v4292
        %4351 = vmatprep.subr.bf16.mxu0 %v4295
        %4352 = vmatpush1.bf16.msra.mxu0 %v4294
        %4353 = vmatprep.subr.bf16.mxu0 %v4297
        %4354 = vmatpush1.bf16.msra.mxu0 %v4296
        %4355 = vmatprep.subr.bf16.mxu0 %v4299
        %4356 = vmatpush1.bf16.msra.mxu0 %v4298
        %4357 = vmatprep.subr.bf16.mxu0 %v4301
        %4358 = vmatpush1.bf16.msra.mxu0 %v4300
        %4359 = vmatprep.subr.bf16.mxu0 %v4303
        %4360 = vmatpush1.bf16.msra.mxu0 %v4302
        %4361 = vmatprep.subr.bf16.mxu0 %v4305
        %4362 = vmatpush1.bf16.msra.mxu0 %v4304
        %4363 = vmatprep.subr.bf16.mxu0 %v4307
        %4364 = vmatpush1.bf16.msra.mxu0 %v4306
        %4365 = vmatprep.subr.bf16.mxu0 %v4309
        %4366 = vmatpush1.bf16.msra.mxu0 %v4308
        %4367 = vmatprep.subr.bf16.mxu0 %v4311
        %4368 = vmatpush1.bf16.msra.mxu0 %v4310
        %4369 = vmatprep.subr.bf16.mxu0 %v4313
        %4370 = vmatpush1.bf16.msra.mxu0 %v4312
        %4371 = vmatprep.subr.bf16.mxu0 %v4315
        %4372 = vmatpush1.bf16.msra.mxu0 %v4314
        %4373 = vmatprep.subr.bf16.mxu0 %v4317
        %4374 = vmatpush1.bf16.msra.mxu0 %v4316
        %4375 = vmatprep.subr.bf16.mxu0 %v4319
        %4376 = vmatpush1.bf16.msra.mxu0 %v4318
        %4377 = vmatprep.subr.bf16.mxu0 %v4321
        %4378 = vmatpush1.bf16.msra.mxu0 %v4320
        %4379 = vmatprep.mubr.bf16.mxu0 %v4344
        %4380 = vmatmul.mubr.bf16.gmra.mrb[0].mxu0 %v4337
        %v4381 = vpop.f32.mrb[0].mxu0
        %v4382 = vadd.f32 0.0, %v4381
        %v4383 = vpop.f32.mrb[0].mxu0
        %v4384 = vadd.f32 0.0, %v4383
        %v4385 = vpop.f32.mrb[0].mxu0
        %v4386 = vpop.f32.mrb[0].mxu0
        %4387 = vdwg.mxu0
        %v4388 = vadd.f32 %v4023, %v4382
        %v4389 = vadd.f32 %v4025, %v4384
        %v4390 = vld [vmem:[#allocation2 + $0x10] sm:$0xff]
        %v4391 = vld [vmem:[#allocation2 + $0x18] sm:$0xff]
        %v4392 = vld [vmem:[#allocation2 + $0x20] sm:$0xff]
        %v4393 = vld [vmem:[#allocation2 + $0x40] sm:$0xff]
        %v4394 = vld [vmem:[#allocation2 + $0x48] sm:$0xff]
        %v4395 = vld [vmem:[#allocation2 + $0x50] sm:$0xff]
        %4402 = vrot.lane.b32.xlu0 %v4390, 27
        %v4403 = vpop.permute.xlu0 %4402
        %4404 = vrot.lane.b32.xlu0 %v4391, 27
        %v4405 = vpop.permute.xlu0 %4404
        %4406 = vrot.lane.b32.xlu0 %v4392, 27
        %v4407 = vpop.permute.xlu0 %4406
        %4408 = vrot.lane.b32.xlu0 %v4393, 27
        %v4409 = vpop.permute.xlu0 %4408
        %4410 = vrot.lane.b32.xlu0 %v4394, 27
        %v4411 = vpop.permute.xlu0 %4410
        %4412 = vrot.lane.b32.xlu0 %v4395, 27
        %v4413 = vpop.permute.xlu0 %4412
        %v4414 = vsel %vm785, %v4403, %v4405
        %v4415 = vsel %vm785, %v4405, %v4407
        %v4416 = vsel %vm785, %v4409, %v4411
        %v4417 = vsel %vm785, %v4411, %v4413
        %4422 = vst [vmem:[#allocation4] sm:$0xff] %v4414
        %4423 = vst [vmem:[#allocation4 + $0x8] sm:$0xff] %v4415
        %4424 = vst [vmem:[#allocation4 + $0x10] sm:$0xff] %v4416
        %4425 = vst [vmem:[#allocation4 + $0x18] sm:$0xff] %v4417
        %v4426 = vld [vmem:[#allocation2 + $0x10] sm:$0xff]
        %v4427 = vld [vmem:[#allocation2 + $0x18] sm:$0xff]
        %v4428 = vld [vmem:[#allocation2 + $0x20] sm:$0xff]
        %v4429 = vld [vmem:[#allocation2 + $0x40] sm:$0xff]
        %v4430 = vld [vmem:[#allocation2 + $0x48] sm:$0xff]
        %v4431 = vld [vmem:[#allocation2 + $0x50] sm:$0xff]
        %4438 = vrot.lane.b32.xlu0 %v4426, 15
        %v4439 = vpop.permute.xlu0 %4438
        %4440 = vrot.lane.b32.xlu0 %v4427, 15
        %v4441 = vpop.permute.xlu0 %4440
        %4442 = vrot.lane.b32.xlu0 %v4428, 15
        %v4443 = vpop.permute.xlu0 %4442
        %4444 = vrot.lane.b32.xlu0 %v4429, 15
        %v4445 = vpop.permute.xlu0 %4444
        %4446 = vrot.lane.b32.xlu0 %v4430, 15
        %v4447 = vpop.permute.xlu0 %4446
        %4448 = vrot.lane.b32.xlu0 %v4431, 15
        %v4449 = vpop.permute.xlu0 %4448
        %v4450 = vsel %vm804, %v4439, %v4441
        %v4451 = vsel %vm804, %v4441, %v4443
        %v4452 = vsel %vm804, %v4445, %v4447
        %v4453 = vsel %vm804, %v4447, %v4449
        %4458 = vst [vmem:[#allocation4 + $0x20] sm:$0xff] %v4450
        %4459 = vst [vmem:[#allocation4 + $0x28] sm:$0xff] %v4451
        %4460 = vst [vmem:[#allocation4 + $0x30] sm:$0xff] %v4452
        %4461 = vst [vmem:[#allocation4 + $0x38] sm:$0xff] %v4453
        %v4462 = vld [vmem:[#allocation2 + $0x10] sm:$0xff]
        %v4463 = vld [vmem:[#allocation2 + $0x18] sm:$0xff]
        %v4464 = vld [vmem:[#allocation2 + $0x20] sm:$0xff]
        %v4465 = vld [vmem:[#allocation2 + $0x40] sm:$0xff]
        %v4466 = vld [vmem:[#allocation2 + $0x48] sm:$0xff]
        %v4467 = vld [vmem:[#allocation2 + $0x50] sm:$0xff]
        %4474 = vrot.lane.b32.xlu0 %v4462, 14
        %v4475 = vpop.permute.xlu0 %4474
        %4476 = vrot.lane.b32.xlu0 %v4463, 14
        %v4477 = vpop.permute.xlu0 %4476
        %4478 = vrot.lane.b32.xlu0 %v4464, 14
        %v4479 = vpop.permute.xlu0 %4478
        %4480 = vrot.lane.b32.xlu0 %v4465, 14
        %v4481 = vpop.permute.xlu0 %4480
        %4482 = vrot.lane.b32.xlu0 %v4466, 14
        %v4483 = vpop.permute.xlu0 %4482
        %4484 = vrot.lane.b32.xlu0 %v4467, 14
        %v4485 = vpop.permute.xlu0 %4484
        %v4486 = vsel %vm823, %v4475, %v4477
        %v4487 = vsel %vm823, %v4477, %v4479
        %v4488 = vsel %vm823, %v4481, %v4483
        %v4489 = vsel %vm823, %v4483, %v4485
        %4494 = vst [vmem:[#allocation4 + $0x40] sm:$0xff] %v4486
        %4495 = vst [vmem:[#allocation4 + $0x48] sm:$0xff] %v4487
        %4496 = vst [vmem:[#allocation4 + $0x50] sm:$0xff] %v4488
        %4497 = vst [vmem:[#allocation4 + $0x58] sm:$0xff] %v4489
        %v4498 = vld [vmem:[#allocation2 + $0x10] sm:$0xff]
        %v4499 = vld [vmem:[#allocation2 + $0x18] sm:$0xff]
        %v4500 = vld [vmem:[#allocation2 + $0x20] sm:$0xff]
        %v4501 = vld [vmem:[#allocation2 + $0x40] sm:$0xff]
        %v4502 = vld [vmem:[#allocation2 + $0x48] sm:$0xff]
        %v4503 = vld [vmem:[#allocation2 + $0x50] sm:$0xff]
        %4510 = vrot.lane.b32.xlu0 %v4498, 13
        %v4511 = vpop.permute.xlu0 %4510
        %4512 = vrot.lane.b32.xlu0 %v4499, 13
        %v4513 = vpop.permute.xlu0 %4512
        %4514 = vrot.lane.b32.xlu0 %v4500, 13
        %v4515 = vpop.permute.xlu0 %4514
        %4516 = vrot.lane.b32.xlu0 %v4501, 13
        %v4517 = vpop.permute.xlu0 %4516
        %4518 = vrot.lane.b32.xlu0 %v4502, 13
        %v4519 = vpop.permute.xlu0 %4518
        %4520 = vrot.lane.b32.xlu0 %v4503, 13
        %v4521 = vpop.permute.xlu0 %4520
        %v4522 = vsel %vm842, %v4511, %v4513
        %v4523 = vsel %vm842, %v4513, %v4515
        %v4524 = vsel %vm842, %v4517, %v4519
        %v4525 = vsel %vm842, %v4519, %v4521
        %4530 = vst [vmem:[#allocation4 + $0x60] sm:$0xff] %v4522
        %4531 = vst [vmem:[#allocation4 + $0x68] sm:$0xff] %v4523
        %4532 = vst [vmem:[#allocation4 + $0x70] sm:$0xff] %v4524
        %4533 = vst [vmem:[#allocation4 + $0x78] sm:$0xff] %v4525
        %v4534 = vld [vmem:[#allocation2 + $0x18] sm:$0xff]
        %v4535 = vld [vmem:[#allocation2 + $0x20] sm:$0xff]
        %v4536 = vld [vmem:[#allocation2 + $0x48] sm:$0xff]
        %v4537 = vld [vmem:[#allocation2 + $0x50] sm:$0xff]
        %4538 = vst [vmem:[#allocation4 + $0x80] sm:$0xff] %v4534
        %4539 = vst [vmem:[#allocation4 + $0x88] sm:$0xff] %v4535
        %4540 = vst [vmem:[#allocation4 + $0x90] sm:$0xff] %v4536
        %4541 = vst [vmem:[#allocation4 + $0x98] sm:$0xff] %v4537
        %v4542 = vld [vmem:[#allocation2 + $0x18] sm:$0xff]
        %v4543 = vld [vmem:[#allocation2 + $0x20] sm:$0xff]
        %v4544 = vld [vmem:[#allocation2 + $0x28] sm:$0xff]
        %v4545 = vld [vmem:[#allocation2 + $0x48] sm:$0xff]
        %v4546 = vld [vmem:[#allocation2 + $0x50] sm:$0xff]
        %v4547 = vld [vmem:[#allocation2 + $0x58] sm:$0xff]
        %4554 = vrot.lane.b32.xlu0 %v4542, 127
        %v4555 = vpop.permute.xlu0 %4554
        %4556 = vrot.lane.b32.xlu0 %v4543, 127
        %v4557 = vpop.permute.xlu0 %4556
        %4558 = vrot.lane.b32.xlu0 %v4544, 127
        %v4559 = vpop.permute.xlu0 %4558
        %4560 = vrot.lane.b32.xlu0 %v4545, 127
        %v4561 = vpop.permute.xlu0 %4560
        %4562 = vrot.lane.b32.xlu0 %v4546, 127
        %v4563 = vpop.permute.xlu0 %4562
        %4564 = vrot.lane.b32.xlu0 %v4547, 127
        %v4565 = vpop.permute.xlu0 %4564
        %v4566 = vsel %vm865, %v4555, %v4557
        %v4567 = vsel %vm865, %v4557, %v4559
        %v4568 = vsel %vm865, %v4561, %v4563
        %v4569 = vsel %vm865, %v4563, %v4565
        %4574 = vst [vmem:[#allocation4 + $0xa0] sm:$0xff] %v4566
        %4575 = vst [vmem:[#allocation4 + $0xa8] sm:$0xff] %v4567
        %4576 = vst [vmem:[#allocation4 + $0xb0] sm:$0xff] %v4568
        %4577 = vst [vmem:[#allocation4 + $0xb8] sm:$0xff] %v4569
        %v4578 = vld [vmem:[#allocation2 + $0x18] sm:$0xff]
        %v4579 = vld [vmem:[#allocation2 + $0x20] sm:$0xff]
        %v4580 = vld [vmem:[#allocation2 + $0x28] sm:$0xff]
        %v4581 = vld [vmem:[#allocation2 + $0x48] sm:$0xff]
        %v4582 = vld [vmem:[#allocation2 + $0x50] sm:$0xff]
        %v4583 = vld [vmem:[#allocation2 + $0x58] sm:$0xff]
        %4590 = vrot.lane.b32.xlu0 %v4578, 125
        %v4591 = vpop.permute.xlu0 %4590
        %4592 = vrot.lane.b32.xlu0 %v4579, 125
        %v4593 = vpop.permute.xlu0 %4592
        %4594 = vrot.lane.b32.xlu0 %v4580, 125
        %v4595 = vpop.permute.xlu0 %4594
        %4596 = vrot.lane.b32.xlu0 %v4581, 125
        %v4597 = vpop.permute.xlu0 %4596
        %4598 = vrot.lane.b32.xlu0 %v4582, 125
        %v4599 = vpop.permute.xlu0 %4598
        %4600 = vrot.lane.b32.xlu0 %v4583, 125
        %v4601 = vpop.permute.xlu0 %4600
        %v4602 = vsel %vm884, %v4591, %v4593
        %v4603 = vsel %vm884, %v4593, %v4595
        %v4604 = vsel %vm884, %v4597, %v4599
        %v4605 = vsel %vm884, %v4599, %v4601
        %4610 = vst [vmem:[#allocation4 + $0xc0] sm:$0xff] %v4602
        %4611 = vst [vmem:[#allocation4 + $0xc8] sm:$0xff] %v4603
        %4612 = vst [vmem:[#allocation4 + $0xd0] sm:$0xff] %v4604
        %4613 = vst [vmem:[#allocation4 + $0xd8] sm:$0xff] %v4605
        %v4614 = vld [vmem:[#allocation2 + $0x18] sm:$0xff]
        %v4615 = vld [vmem:[#allocation2 + $0x20] sm:$0xff]
        %v4616 = vld [vmem:[#allocation2 + $0x28] sm:$0xff]
        %v4617 = vld [vmem:[#allocation2 + $0x48] sm:$0xff]
        %v4618 = vld [vmem:[#allocation2 + $0x50] sm:$0xff]
        %v4619 = vld [vmem:[#allocation2 + $0x58] sm:$0xff]
        %4626 = vrot.lane.b32.xlu0 %v4614, 119
        %v4627 = vpop.permute.xlu0 %4626
        %4628 = vrot.lane.b32.xlu0 %v4615, 119
        %v4629 = vpop.permute.xlu0 %4628
        %4630 = vrot.lane.b32.xlu0 %v4616, 119
        %v4631 = vpop.permute.xlu0 %4630
        %4632 = vrot.lane.b32.xlu0 %v4617, 119
        %v4633 = vpop.permute.xlu0 %4632
        %4634 = vrot.lane.b32.xlu0 %v4618, 119
        %v4635 = vpop.permute.xlu0 %4634
        %4636 = vrot.lane.b32.xlu0 %v4619, 119
        %v4637 = vpop.permute.xlu0 %4636
        %v4638 = vsel %vm903, %v4627, %v4629
        %v4639 = vsel %vm903, %v4629, %v4631
        %v4640 = vsel %vm903, %v4633, %v4635
        %v4641 = vsel %vm903, %v4635, %v4637
        %4646 = vst [vmem:[#allocation4 + $0xe0] sm:$0xff] %v4638
        %4647 = vst [vmem:[#allocation4 + $0xe8] sm:$0xff] %v4639
        %4648 = vst [vmem:[#allocation4 + $0xf0] sm:$0xff] %v4640
        %4649 = vst [vmem:[#allocation4 + $0xf8] sm:$0xff] %v4641
        %v4650 = vld [vmem:[%s5 + $0x6] sm:$0x3]
        %v4651 = vld [vmem:[#allocation4] sm:$0xff]
        %v4652 = vld [vmem:[#allocation4 + $0x8] sm:$0xff]
        %v4653 = vld [vmem:[#allocation4 + $0x10] sm:$0xff]
        %v4654 = vld [vmem:[#allocation4 + $0x18] sm:$0xff]
        %v4655 = vld [vmem:[#allocation4 + $0x20] sm:$0xff]
        %v4656 = vld [vmem:[#allocation4 + $0x28] sm:$0xff]
        %v4657 = vld [vmem:[#allocation4 + $0x30] sm:$0xff]
        %v4658 = vld [vmem:[#allocation4 + $0x38] sm:$0xff]
        %v4659 = vld [vmem:[#allocation4 + $0x40] sm:$0xff]
        %v4660 = vld [vmem:[#allocation4 + $0x48] sm:$0xff]
        %v4661 = vld [vmem:[#allocation4 + $0x50] sm:$0xff]
        %v4662 = vld [vmem:[#allocation4 + $0x58] sm:$0xff]
        %v4663 = vld [vmem:[#allocation4 + $0x60] sm:$0xff]
        %v4664 = vld [vmem:[#allocation4 + $0x68] sm:$0xff]
        %v4665 = vld [vmem:[#allocation4 + $0x70] sm:$0xff]
        %v4666 = vld [vmem:[#allocation4 + $0x78] sm:$0xff]
        %v4667 = vld [vmem:[#allocation4 + $0x80] sm:$0xff]
        %v4668 = vld [vmem:[#allocation4 + $0x88] sm:$0xff]
        %v4669 = vld [vmem:[#allocation4 + $0x90] sm:$0xff]
        %v4670 = vld [vmem:[#allocation4 + $0x98] sm:$0xff]
        %v4671 = vld [vmem:[#allocation4 + $0xa0] sm:$0xff]
        %v4672 = vld [vmem:[#allocation4 + $0xa8] sm:$0xff]
        %v4673 = vld [vmem:[#allocation4 + $0xb0] sm:$0xff]
        %v4674 = vld [vmem:[#allocation4 + $0xb8] sm:$0xff]
        %v4675 = vld [vmem:[#allocation4 + $0xc0] sm:$0xff]
        %v4676 = vld [vmem:[#allocation4 + $0xc8] sm:$0xff]
        %v4677 = vld [vmem:[#allocation4 + $0xd0] sm:$0xff]
        %v4678 = vld [vmem:[#allocation4 + $0xd8] sm:$0xff]
        %v4679 = vld [vmem:[#allocation4 + $0xe0] sm:$0xff]
        %v4680 = vld [vmem:[#allocation4 + $0xe8] sm:$0xff]
        %v4681 = vld [vmem:[#allocation4 + $0xf0] sm:$0xff]
        %v4682 = vld [vmem:[#allocation4 + $0xf8] sm:$0xff]
        %v4685 = vunpack.c.l.s4 1966171168
        %v4686 = vunpack.c.0.s8 %v4685
        %v4687 = vlaneseq
        %v4688 = vshrl.u32 %v4687, 7
        %v4689 = vsub.s32 %v4686, %v4688
        %v4690 = vrot.slane %v4650, %v4689
        %v4691 = vcombine.high %v4690, %v4690
        %v4693 = vunpack.c.l.s4 1966171168
        %v4694 = vunpack.c.0.s8 %v4693
        %v4695 = vlaneseq
        %v4696 = vshrl.u32 %v4695, 7
        %v4697 = vsub.s32 %v4694, %v4696
        %v4698 = vrot.slane %v4690, %v4697
        %v4700 = vunpack.c.l.s4 1966171168
        %v4701 = vunpack.c.0.s8 %v4700
        %v4702 = vlaneseq
        %v4703 = vshrl.u32 %v4702, 7
        %v4704 = vsub.s32 %v4701, %v4703
        %v4705 = vrot.slane %v4691, %v4704
        %4708 = vmatprep.subr.bf16.mxu0 %v4652
        %4709 = vmatpush1.bf16.msra.mxu0 %v4651
        %4710 = vmatprep.subr.bf16.mxu0 %v4654
        %4711 = vmatpush1.bf16.msra.mxu0 %v4653
        %4712 = vmatprep.subr.bf16.mxu0 %v4656
        %4713 = vmatpush1.bf16.msra.mxu0 %v4655
        %4714 = vmatprep.subr.bf16.mxu0 %v4658
        %4715 = vmatpush1.bf16.msra.mxu0 %v4657
        %4716 = vmatprep.subr.bf16.mxu0 %v4660
        %4717 = vmatpush1.bf16.msra.mxu0 %v4659
        %4718 = vmatprep.subr.bf16.mxu0 %v4662
        %4719 = vmatpush1.bf16.msra.mxu0 %v4661
        %4720 = vmatprep.subr.bf16.mxu0 %v4664
        %4721 = vmatpush1.bf16.msra.mxu0 %v4663
        %4722 = vmatprep.subr.bf16.mxu0 %v4666
        %4723 = vmatpush1.bf16.msra.mxu0 %v4665
        %4724 = vmatprep.subr.bf16.mxu0 %v4668
        %4725 = vmatpush1.bf16.msra.mxu0 %v4667
        %4726 = vmatprep.subr.bf16.mxu0 %v4670
        %4727 = vmatpush1.bf16.msra.mxu0 %v4669
        %4728 = vmatprep.subr.bf16.mxu0 %v4672
        %4729 = vmatpush1.bf16.msra.mxu0 %v4671
        %4730 = vmatprep.subr.bf16.mxu0 %v4674
        %4731 = vmatpush1.bf16.msra.mxu0 %v4673
        %4732 = vmatprep.subr.bf16.mxu0 %v4676
        %4733 = vmatpush1.bf16.msra.mxu0 %v4675
        %4734 = vmatprep.subr.bf16.mxu0 %v4678
        %4735 = vmatpush1.bf16.msra.mxu0 %v4677
        %4736 = vmatprep.subr.bf16.mxu0 %v4680
        %4737 = vmatpush1.bf16.msra.mxu0 %v4679
        %4738 = vmatprep.subr.bf16.mxu0 %v4682
        %4739 = vmatpush1.bf16.msra.mxu0 %v4681
        %4740 = vmatprep.mubr.bf16.mxu0 %v4705
        %4741 = vmatmul.mubr.bf16.gmra.mrb[0].mxu0 %v4698
        %v4742 = vpop.f32.mrb[0].mxu0
        %v4743 = vadd.f32 0.0, %v4742
        %v4744 = vpop.f32.mrb[0].mxu0
        %v4745 = vadd.f32 0.0, %v4744
        %v4746 = vpop.f32.mrb[0].mxu0
        %v4747 = vpop.f32.mrb[0].mxu0
        %4748 = vdwg.mxu0
        %v4749 = vadd.f32 %v4388, %v4743
        %v4750 = vadd.f32 %v4389, %v4745
        %v4751 = vld [vmem:[#allocation2 + $0x18] sm:$0xff]
        %v4752 = vld [vmem:[#allocation2 + $0x20] sm:$0xff]
        %v4753 = vld [vmem:[#allocation2 + $0x28] sm:$0xff]
        %v4754 = vld [vmem:[#allocation2 + $0x48] sm:$0xff]
        %v4755 = vld [vmem:[#allocation2 + $0x50] sm:$0xff]
        %v4756 = vld [vmem:[#allocation2 + $0x58] sm:$0xff]
        %4763 = vrot.lane.b32.xlu0 %v4751, 109
        %v4764 = vpop.permute.xlu0 %4763
        %4765 = vrot.lane.b32.xlu0 %v4752, 109
        %v4766 = vpop.permute.xlu0 %4765
        %4767 = vrot.lane.b32.xlu0 %v4753, 109
        %v4768 = vpop.permute.xlu0 %4767
        %4769 = vrot.lane.b32.xlu0 %v4754, 109
        %v4770 = vpop.permute.xlu0 %4769
        %4771 = vrot.lane.b32.xlu0 %v4755, 109
        %v4772 = vpop.permute.xlu0 %4771
        %4773 = vrot.lane.b32.xlu0 %v4756, 109
        %v4774 = vpop.permute.xlu0 %4773
        %v4775 = vsel %vm1104, %v4764, %v4766
        %v4776 = vsel %vm1104, %v4766, %v4768
        %v4777 = vsel %vm1104, %v4770, %v4772
        %v4778 = vsel %vm1104, %v4772, %v4774
        %4783 = vst [vmem:[#allocation4] sm:$0xff] %v4775
        %4784 = vst [vmem:[#allocation4 + $0x8] sm:$0xff] %v4776
        %4785 = vst [vmem:[#allocation4 + $0x10] sm:$0xff] %v4777
        %4786 = vst [vmem:[#allocation4 + $0x18] sm:$0xff] %v4778
        %v4787 = vld [vmem:[#allocation2 + $0x18] sm:$0xff]
        %v4788 = vld [vmem:[#allocation2 + $0x20] sm:$0xff]
        %v4789 = vld [vmem:[#allocation2 + $0x28] sm:$0xff]
        %v4790 = vld [vmem:[#allocation2 + $0x48] sm:$0xff]
        %v4791 = vld [vmem:[#allocation2 + $0x50] sm:$0xff]
        %v4792 = vld [vmem:[#allocation2 + $0x58] sm:$0xff]
        %4799 = vrot.lane.b32.xlu0 %v4787, 100
        %v4800 = vpop.permute.xlu0 %4799
        %4801 = vrot.lane.b32.xlu0 %v4788, 100
        %v4802 = vpop.permute.xlu0 %4801
        %4803 = vrot.lane.b32.xlu0 %v4789, 100
        %v4804 = vpop.permute.xlu0 %4803
        %4805 = vrot.lane.b32.xlu0 %v4790, 100
        %v4806 = vpop.permute.xlu0 %4805
        %4807 = vrot.lane.b32.xlu0 %v4791, 100
        %v4808 = vpop.permute.xlu0 %4807
        %4809 = vrot.lane.b32.xlu0 %v4792, 100
        %v4810 = vpop.permute.xlu0 %4809
        %v4811 = vsel %vm1123, %v4800, %v4802
        %v4812 = vsel %vm1123, %v4802, %v4804
        %v4813 = vsel %vm1123, %v4806, %v4808
        %v4814 = vsel %vm1123, %v4808, %v4810
        %4819 = vst [vmem:[#allocation4 + $0x20] sm:$0xff] %v4811
        %4820 = vst [vmem:[#allocation4 + $0x28] sm:$0xff] %v4812
        %4821 = vst [vmem:[#allocation4 + $0x30] sm:$0xff] %v4813
        %4822 = vst [vmem:[#allocation4 + $0x38] sm:$0xff] %v4814
        %v4823 = vld [vmem:[#allocation2 + $0x18] sm:$0xff]
        %v4824 = vld [vmem:[#allocation2 + $0x20] sm:$0xff]
        %v4825 = vld [vmem:[#allocation2 + $0x28] sm:$0xff]
        %v4826 = vld [vmem:[#allocation2 + $0x48] sm:$0xff]
        %v4827 = vld [vmem:[#allocation2 + $0x50] sm:$0xff]
        %v4828 = vld [vmem:[#allocation2 + $0x58] sm:$0xff]
        %4835 = vrot.lane.b32.xlu0 %v4823, 96
        %v4836 = vpop.permute.xlu0 %4835
        %4837 = vrot.lane.b32.xlu0 %v4824, 96
        %v4838 = vpop.permute.xlu0 %4837
        %4839 = vrot.lane.b32.xlu0 %v4825, 96
        %v4840 = vpop.permute.xlu0 %4839
        %4841 = vrot.lane.b32.xlu0 %v4826, 96
        %v4842 = vpop.permute.xlu0 %4841
        %4843 = vrot.lane.b32.xlu0 %v4827, 96
        %v4844 = vpop.permute.xlu0 %4843
        %4845 = vrot.lane.b32.xlu0 %v4828, 96
        %v4846 = vpop.permute.xlu0 %4845
        %v4847 = vsel %vm1142, %v4836, %v4838
        %v4848 = vsel %vm1142, %v4838, %v4840
        %v4849 = vsel %vm1142, %v4842, %v4844
        %v4850 = vsel %vm1142, %v4844, %v4846
        %4855 = vst [vmem:[#allocation4 + $0x40] sm:$0xff] %v4847
        %4856 = vst [vmem:[#allocation4 + $0x48] sm:$0xff] %v4848
        %4857 = vst [vmem:[#allocation4 + $0x50] sm:$0xff] %v4849
        %4858 = vst [vmem:[#allocation4 + $0x58] sm:$0xff] %v4850
        %v4859 = vld [vmem:[#allocation2 + $0x18] sm:$0xff]
        %v4860 = vld [vmem:[#allocation2 + $0x20] sm:$0xff]
        %v4861 = vld [vmem:[#allocation2 + $0x28] sm:$0xff]
        %v4862 = vld [vmem:[#allocation2 + $0x48] sm:$0xff]
        %v4863 = vld [vmem:[#allocation2 + $0x50] sm:$0xff]
        %v4864 = vld [vmem:[#allocation2 + $0x58] sm:$0xff]
        %4871 = vrot.lane.b32.xlu0 %v4859, 93
        %v4872 = vpop.permute.xlu0 %4871
        %4873 = vrot.lane.b32.xlu0 %v4860, 93
        %v4874 = vpop.permute.xlu0 %4873
        %4875 = vrot.lane.b32.xlu0 %v4861, 93
        %v4876 = vpop.permute.xlu0 %4875
        %4877 = vrot.lane.b32.xlu0 %v4862, 93
        %v4878 = vpop.permute.xlu0 %4877
        %4879 = vrot.lane.b32.xlu0 %v4863, 93
        %v4880 = vpop.permute.xlu0 %4879
        %4881 = vrot.lane.b32.xlu0 %v4864, 93
        %v4882 = vpop.permute.xlu0 %4881
        %v4883 = vsel %vm1161, %v4872, %v4874
        %v4884 = vsel %vm1161, %v4874, %v4876
        %v4885 = vsel %vm1161, %v4878, %v4880
        %v4886 = vsel %vm1161, %v4880, %v4882
        %4891 = vst [vmem:[#allocation4 + $0x60] sm:$0xff] %v4883
        %4892 = vst [vmem:[#allocation4 + $0x68] sm:$0xff] %v4884
        %4893 = vst [vmem:[#allocation4 + $0x70] sm:$0xff] %v4885
        %4894 = vst [vmem:[#allocation4 + $0x78] sm:$0xff] %v4886
        %v4895 = vld [vmem:[#allocation2 + $0x18] sm:$0xff]
        %v4896 = vld [vmem:[#allocation2 + $0x20] sm:$0xff]
        %v4897 = vld [vmem:[#allocation2 + $0x28] sm:$0xff]
        %v4898 = vld [vmem:[#allocation2 + $0x48] sm:$0xff]
        %v4899 = vld [vmem:[#allocation2 + $0x50] sm:$0xff]
        %v4900 = vld [vmem:[#allocation2 + $0x58] sm:$0xff]
        %4907 = vrot.lane.b32.xlu0 %v4895, 70
        %v4908 = vpop.permute.xlu0 %4907
        %4909 = vrot.lane.b32.xlu0 %v4896, 70
        %v4910 = vpop.permute.xlu0 %4909
        %4911 = vrot.lane.b32.xlu0 %v4897, 70
        %v4912 = vpop.permute.xlu0 %4911
        %4913 = vrot.lane.b32.xlu0 %v4898, 70
        %v4914 = vpop.permute.xlu0 %4913
        %4915 = vrot.lane.b32.xlu0 %v4899, 70
        %v4916 = vpop.permute.xlu0 %4915
        %4917 = vrot.lane.b32.xlu0 %v4900, 70
        %v4918 = vpop.permute.xlu0 %4917
        %v4919 = vsel %vm1180, %v4908, %v4910
        %v4920 = vsel %vm1180, %v4910, %v4912
        %v4921 = vsel %vm1180, %v4914, %v4916
        %v4922 = vsel %vm1180, %v4916, %v4918
        %4927 = vst [vmem:[#allocation4 + $0x80] sm:$0xff] %v4919
        %4928 = vst [vmem:[#allocation4 + $0x88] sm:$0xff] %v4920
        %4929 = vst [vmem:[#allocation4 + $0x90] sm:$0xff] %v4921
        %4930 = vst [vmem:[#allocation4 + $0x98] sm:$0xff] %v4922
        %v4931 = vld [vmem:[%s5 + $0x8] sm:$0x3]
        %v4932 = vld [vmem:[#allocation4] sm:$0xff]
        %v4933 = vld [vmem:[#allocation4 + $0x8] sm:$0xff]
        %v4934 = vld [vmem:[#allocation4 + $0x10] sm:$0xff]
        %v4935 = vld [vmem:[#allocation4 + $0x18] sm:$0xff]
        %v4936 = vld [vmem:[#allocation4 + $0x20] sm:$0xff]
        %v4937 = vld [vmem:[#allocation4 + $0x28] sm:$0xff]
        %v4938 = vld [vmem:[#allocation4 + $0x30] sm:$0xff]
        %v4939 = vld [vmem:[#allocation4 + $0x38] sm:$0xff]
        %v4940 = vld [vmem:[#allocation4 + $0x40] sm:$0xff]
        %v4941 = vld [vmem:[#allocation4 + $0x48] sm:$0xff]
        %v4942 = vld [vmem:[#allocation4 + $0x50] sm:$0xff]
        %v4943 = vld [vmem:[#allocation4 + $0x58] sm:$0xff]
        %v4944 = vld [vmem:[#allocation4 + $0x60] sm:$0xff]
        %v4945 = vld [vmem:[#allocation4 + $0x68] sm:$0xff]
        %v4946 = vld [vmem:[#allocation4 + $0x70] sm:$0xff]
        %v4947 = vld [vmem:[#allocation4 + $0x78] sm:$0xff]
        %v4948 = vld [vmem:[#allocation4 + $0x80] sm:$0xff]
        %v4949 = vld [vmem:[#allocation4 + $0x88] sm:$0xff]
        %v4950 = vld [vmem:[#allocation4 + $0x90] sm:$0xff]
        %v4951 = vld [vmem:[#allocation4 + $0x98] sm:$0xff]
        %v4954 = vunpack.c.l.s4 1966171168
        %v4955 = vunpack.c.0.s8 %v4954
        %v4956 = vlaneseq
        %v4957 = vshrl.u32 %v4956, 7
        %v4958 = vsub.s32 %v4955, %v4957
        %v4959 = vrot.slane %v4931, %v4958
        %v4960 = vcombine.high %v4959, %v4959
        %v4962 = vunpack.c.l.s4 1966171168
        %v4963 = vunpack.c.0.s8 %v4962
        %v4964 = vlaneseq
        %v4965 = vshrl.u32 %v4964, 7
        %v4966 = vsub.s32 %v4963, %v4965
        %v4967 = vrot.slane %v4959, %v4966
        %v4969 = vunpack.c.l.s4 1966171168
        %v4970 = vunpack.c.0.s8 %v4969
        %v4971 = vlaneseq
        %v4972 = vshrl.u32 %v4971, 7
        %v4973 = vsub.s32 %v4970, %v4972
        %v4974 = vrot.slane %v4960, %v4973
        %v4977 = vsel %vm3110, %v4974, 0
        %4979 = vmatprep.subr.bf16.mxu0 %v4933
        %4980 = vmatpush1.bf16.msra.mxu0 %v4932
        %4981 = vmatprep.subr.bf16.mxu0 %v4935
        %4982 = vmatpush1.bf16.msra.mxu0 %v4934
        %4983 = vmatprep.subr.bf16.mxu0 %v4937
        %4984 = vmatpush1.bf16.msra.mxu0 %v4936
        %4985 = vmatprep.subr.bf16.mxu0 %v4939
        %4986 = vmatpush1.bf16.msra.mxu0 %v4938
        %4987 = vmatprep.subr.bf16.mxu0 %v4941
        %4988 = vmatpush1.bf16.msra.mxu0 %v4940
        %4989 = vmatprep.subr.bf16.mxu0 %v4943
        %4990 = vmatpush1.bf16.msra.mxu0 %v4942
        %4991 = vmatprep.subr.bf16.mxu0 %v4945
        %4992 = vmatpush1.bf16.msra.mxu0 %v4944
        %4993 = vmatprep.subr.bf16.mxu0 %v4947
        %4994 = vmatpush1.bf16.msra.mxu0 %v4946
        %4995 = vmatprep.subr.bf16.mxu0 %v4949
        %4996 = vmatpush1.bf16.msra.mxu0 %v4948
        %4997 = vmatprep.subr.bf16.mxu0 %v4951
        %4998 = vmatpush1.bf16.msra.mxu0 %v4950
        %4999 = vmatprep.subr.bf16.mxu0 0
        %5000 = vmatpush1.bf16.msra.mxu0 0
        %5001 = vmatprep.subr.bf16.mxu0 0
        %5002 = vmatpush1.bf16.msra.mxu0 0
        %5003 = vmatprep.subr.bf16.mxu0 0
        %5004 = vmatpush1.bf16.msra.mxu0 0
        %5005 = vmatprep.subr.bf16.mxu0 0
        %5006 = vmatpush1.bf16.msra.mxu0 0
        %5007 = vmatprep.subr.bf16.mxu0 0
        %5008 = vmatpush1.bf16.msra.mxu0 0
        %5009 = vmatprep.subr.bf16.mxu0 0
        %5010 = vmatpush1.bf16.msra.mxu0 0
        %5011 = vmatprep.mubr.bf16.mxu0 %v4977
        %5012 = vmatmul.mubr.bf16.gmra.mrb[0].mxu0 %v4967
        %v5013 = vpop.f32.mrb[0].mxu0
        %v5014 = vadd.f32 0.0, %v5013
        %v5015 = vpop.f32.mrb[0].mxu0
        %v5016 = vadd.f32 0.0, %v5015
        %v5017 = vpop.f32.mrb[0].mxu0
        %v5018 = vpop.f32.mrb[0].mxu0
        %5019 = vdwg.mxu0
        %v5020 = vadd.f32 %v4749, %v5014
        %v5021 = vadd.f32 %v4750, %v5016
        %v5022 = vld [vmem:[%s6] sm:$0x3]
        %5024 = vset.pattern.permute.xlu0 0
        %5025 = vperm.xlu0 %5024, %v5022
        %v5026 = vpop.permute.xlu0 %5025
        %v5028 = vadd.f32 %v5020, %v5026
        %v5029 = vadd.f32 %v5021, %v5026
        %v5032 = vcombine.low %v5028, %v5029
        %v5034 = vunpack.c.l.s4 1983009808
        %v5035 = vunpack.c.0.s8 %v5034
        %v5036 = vlaneseq
        %v5037 = vshrl.u32 %v5036, 7
        %v5038 = vsub.s32 %v5035, %v5037
        %v5039 = vrot.slane %v5032, %v5038
        %5041 = vst [vmem:[%s286] sm:$0xf] %v5039
        %s5042 = sand.u32 %s182, 1
        %s5043 = scalar_lea.sflag [#allocation7], %s5042
        %s5044 = sand.u32 %s182, 1
        %s5045 = smul.addr %s5044, 4
        %s5046 = scalar_lea.vmem [#allocation8], %s5045
        // Predicated region
        $region53: #{tpu_custom_call.1} parent=47 // pred_check
          %p5047 = pneg %p192
        $region54: #{tpu_custom_call.1} parent=47 // pred_check_branch
          %5049 = sbr.rel (%p5047) target = $region56
        $region55: #{tpu_custom_call.1} parent=47 // pred_region
          %s5051 = ssub.s32 64, 64
          %5052 = vsyncadd %s5043, %s5051
          %s5053 = smul.addr %s22, 2
          %s5054 = smul.addr %s5053, 32
          %s5055 = scalar_lea.hbm %s7, %s5054
          %s5057 = sshll.u32 %s5046, 4
          %s5058 = int_to_ptr.vmem [resolvable:$true] %s5057
          %5060 = dma.vmem_to_hbm [thread:$0]  %s5058, 64, %s5055, %s5043
        $region56: #{tpu_custom_call.1} parent=47 // pred_fallthru
          _
      $region48: #{tpu_custom_call.1} parent=5 // pred_fallthru
        _
      %p5061 = scmp.le.s32.totalorder 2, %s17
      // Predicated region
      $region57: #{tpu_custom_call.1} parent=5 // pred_check
        %p5062 = pneg %p5061
      $region58: #{tpu_custom_call.1} parent=5 // pred_check_branch
        %5064 = sbr.rel (%p5062) target = $region60
      $region59: #{tpu_custom_call.1} parent=5 // pred_region
        %s5065 = ssub.s32 %s17, 2
        // Predicated region
        $region61: #{tpu_custom_call.1} parent=59 // pred_check
          %p5066 = pneg %p198
        $region62: #{tpu_custom_call.1} parent=59 // pred_check_branch
          %5068 = sbr.rel (%p5066) target = $region64
        $region63: #{tpu_custom_call.1} parent=59 // pred_region
          %s5069 = sand.u32 %s183, 1
          %s5070 = scalar_lea.sflag [#allocation7], %s5069
          %s5071 = sand.u32 %s183, 1
          %s5072 = smul.addr %s5071, 4
          %s5073 = scalar_lea.vmem [#allocation8], %s5072
          %5074 = dma.done %s5070, 64
        $region64: #{tpu_custom_call.1} parent=59 // pred_fallthru
          _
      $region60: #{tpu_custom_call.1} parent=5 // pred_fallthru
        _
    $region6: #{tpu_custom_call.1} parent=1 // loop_footer
      %s21 = sadd.s32 1, %s17
    $region7: #{tpu_custom_call.1} parent=1 // loop_footer_branch
      %16 = sbr.rel target = $region3
    $region8: #{tpu_custom_call.1} parent=1 // loop_exit
      _
    %5075 = vsyncpa [#allocation6], 1
    %s5076 = scalar_lea.sflag [#allocation6], 1
    %5077 = vsyncpa %s5076, 1
    %5078 = vsyncpa [#allocation7], 1
    %s5079 = scalar_lea.sflag [#allocation7], 1
    %5080 = vsyncpa %s5079, 1

</llo_original>
